<compile_context>
chip_gen: v7x
topology: tpu7x:2x2x1
jax: 0.10.0
libtpu: 0.0.40
codegen_flags: <defaults>
</compile_context>

<pallas_src>
import functools

import jax
import jax.numpy as jnp
from jax import lax
from jax.experimental import pallas as pl
from jax.experimental.pallas import tpu as pltpu

EPS = 1e-5      # PyTorch BatchNorm2d default
LANES = 128     # pad output channels to a multiple of the TPU lane width


def _round_up(x, m):
    return (x + m - 1) // m * m


# --------------------------------------------------------------------------------------
# Pass A1: conv1 (im2col rows x weights) tile matmul + global per-channel sum / sumsq.
# Grid: row tiles of the flattened N*Ho*Wo axis, marked 'arbitrary' (stats accumulate).
# --------------------------------------------------------------------------------------
def conv1_stats_kernel(p_ref, w_ref, g_ref, be_ref, c_ref, ss_ref, sum_sc, sq_sc, *, inv_m):
    i = pl.program_id(0)

    @pl.when(i == 0)
    def _init():
        sum_sc[...] = jnp.zeros_like(sum_sc)
        sq_sc[...] = jnp.zeros_like(sq_sc)

    # conv-as-matmul on the MXU: default single-pass precision, f32 accumulation.
    acc = jnp.dot(p_ref[...], w_ref[...], preferred_element_type=jnp.float32)
    c_ref[...] = acc

    sum_sc[...] += jnp.sum(acc, axis=0, keepdims=True)
    sq_sc[...] += jnp.sum(acc * acc, axis=0, keepdims=True)

    @pl.when(i == pl.num_programs(0) - 1)
    def _finalize():
        mean = sum_sc[...] * inv_m
        var = sq_sc[...] * inv_m - mean * mean          # biased (training-mode) variance
        scale = g_ref[...] * lax.rsqrt(var + EPS)       # BN folded into one FMA
        ss_ref[0:1, :] = scale
        ss_ref[1:2, :] = be_ref[...] - mean * scale


# --------------------------------------------------------------------------------------
# Pass B1: y1 = relu(conv1 * scale + shift)    (row tiled, 'parallel' -> megacore on v7x)
# --------------------------------------------------------------------------------------
def bn_relu_kernel(c_ref, ss_ref, o_ref):
    o_ref[...] = jnp.maximum(c_ref[...] * ss_ref[0:1, :] + ss_ref[1:2, :], 0.0)


# --------------------------------------------------------------------------------------
# Pass A2: conv2 (3x3, stride 1, pad 1) built in-kernel from the spatially padded y1:
# 9 statically shifted flat row windows -> 9 accumulated MXU matmuls (no im2col in HBM),
# fused with the 1x1 shortcut matmul and both BatchNorm stats accumulations.
# Grid: one image per step, 'arbitrary' (stats accumulate across images).
# --------------------------------------------------------------------------------------
def conv2_shortcut_stats_kernel(y1f_ref, w2_ref, xs_ref, w3_ref, cmask_ref,
                                g2_ref, be2_ref, g3_ref, be3_ref,
                                c2_ref, s_ref, ss2_ref, ss3_ref,
                                sum2_sc, sq2_sc, sum3_sc, sq3_sc,
                                *, wp2, rows, inv_m):
    b = pl.program_id(0)

    @pl.when(b == 0)
    def _init():
        sum2_sc[...] = jnp.zeros_like(sum2_sc)
        sq2_sc[...] = jnp.zeros_like(sq2_sc)
        sum3_sc[...] = jnp.zeros_like(sum3_sc)
        sq3_sc[...] = jnp.zeros_like(sq3_sc)

    y1f = y1f_ref[0]                       # (P, Cp) spatially padded image, row-flattened
    cp = y1f.shape[-1]
    acc = jnp.zeros((rows, cp), jnp.float32)
    for k in range(9):                     # static unroll: 9 shifted windows of flat rows
        ky, kx = divmod(k, 3)
        shift = ky * wp2 + kx
        acc = acc + jnp.dot(y1f[shift:shift + rows, :], w2_ref[k],
                            preferred_element_type=jnp.float32)
    c2_ref[0] = acc

    # shortcut: 1x1 conv is a plain matmul on the strided-sampled input
    s = jnp.dot(xs_ref[0], w3_ref[...], preferred_element_type=jnp.float32)
    s_ref[0] = s

    # per-channel sum / sum-of-squares (global training-mode BN stats over N*Ho*Wo)
    mask = cmask_ref[0]                    # (rows, 1): zero the wrap-around columns
    accv = acc * mask
    sum2_sc[...] += jnp.sum(accv, axis=0, keepdims=True)
    sq2_sc[...] += jnp.sum(accv * accv, axis=0, keepdims=True)
    sum3_sc[...] += jnp.sum(s, axis=0, keepdims=True)      # s is already 0 on those columns
    sq3_sc[...] += jnp.sum(s * s, axis=0, keepdims=True)

    @pl.when(b == pl.num_programs(0) - 1)
    def _finalize():
        mean2 = sum2_sc[...] * inv_m
        var2 = sq2_sc[...] * inv_m - mean2 * mean2
        scale2 = g2_ref[...] * lax.rsqrt(var2 + EPS)
        ss2_ref[0:1, :] = scale2
        ss2_ref[1:2, :] = be2_ref[...] - mean2 * scale2

        mean3 = sum3_sc[...] * inv_m
        var3 = sq3_sc[...] * inv_m - mean3 * mean3
        scale3 = g3_ref[...] * lax.rsqrt(var3 + EPS)
        ss3_ref[0:1, :] = scale3
        ss3_ref[1:2, :] = be3_ref[...] - mean3 * scale3


# --------------------------------------------------------------------------------------
# Pass B2: out = relu(conv2*s2+t2 + shortcut*s3+t3)       ('parallel' over images)
# --------------------------------------------------------------------------------------
def residual_bn_relu_kernel(c2_ref, s_ref, ss2_ref, ss3_ref, o_ref):
    y = c2_ref[...] * ss2_ref[0:1, :] + ss2_ref[1:2, :]
    sc = s_ref[...] * ss3_ref[0:1, :] + ss3_ref[1:2, :]
    o_ref[...] = jnp.maximum(y + sc, 0.0)


# ------------------------------------ JAX glue ------------------------------------

def im2col(x_nhwc, ksize, stride, padding):
    """(N,H,W,C) -> (N*Ho*Wo, ksize*ksize*C) patches, column order (ky, kx, c)."""
    N, H, W, C = x_nhwc.shape
    xp = jnp.pad(x_nhwc, ((0, 0), (padding, padding), (padding, padding), (0, 0)))
    Ho = (H + 2 * padding - ksize) // stride + 1
    Wo = (W + 2 * padding - ksize) // stride + 1
    cols = []
    for ky in range(ksize):
        for kx in range(ksize):
            cols.append(xp[:, ky:ky + Ho * stride:stride, kx:kx + Wo * stride:stride, :])
    patches = jnp.concatenate(cols, axis=-1)
    return patches.reshape(N * Ho * Wo, ksize * ksize * C), (N, Ho, Wo)


def residual_block_forward(x_nchw, params, stride=1, row_tile=512):
    """ResidualBlock forward. x is NCHW (PyTorch layout); returns NCHW.

    row_tile: use 512-2048 for real shapes; keep double-buffered (tm x K) + (tm x Cp)
    tiles within the scoped VMEM limit (v7x has only 64 MiB physical VMEM per core).
    """
    (w1, b1, g1, be1, w2, b2, g2, be2, w3, b3, g3, be3) = params
    del b1, b2, b3   # conv bias before training-mode BatchNorm is a mathematical no-op
    N, Cin, H, W = x_nchw.shape
    Cout = w1.shape[-1]
    Cp = _round_up(Cout, LANES)                 # lane-dense output channels (unmasked vst)

    # TODO(synk): keep activations NHWC end-to-end in the surrounding model so these
    # boundary transposes disappear.
    x = jnp.transpose(x_nchw, (0, 2, 3, 1)).astype(jnp.float32)   # NHWC

    def pad_c(a):                               # zero-pad the last (channel) axis to Cp
        return jnp.pad(a, [(0, 0)] * (a.ndim - 1) + [(0, Cp - Cout)])

    w1p = pad_c(w1.reshape(9 * Cin, Cout))                                   # (9*Cin, Cp)
    w2p = jnp.pad(w2.reshape(9, Cout, Cout),
                  ((0, 0), (0, Cp - Cout), (0, Cp - Cout)))                  # (9, Cp, Cp)
    w3p = pad_c(w3.reshape(Cin, Cout))                                       # (Cin, Cp)
    g1p, be1p = pad_c(g1).reshape(1, Cp), pad_c(be1).reshape(1, Cp)
    g2p, be2p = pad_c(g2).reshape(1, Cp), pad_c(be2).reshape(1, Cp)
    g3p, be3p = pad_c(g3).reshape(1, Cp), pad_c(be3).reshape(1, Cp)

    # ---------------- conv1: row-tiled im2col matmul + global BN stats ----------------
    # TODO(synk): for stride==1 conv1 could reuse the in-kernel shifted-window scheme of
    # conv2 and drop this wrapper-side im2col as well.
    p1, (n, ho, wo) = im2col(x, 3, stride, 1)
    M = n * ho * wo
    K1 = 9 * Cin
    tm = min(row_tile, _round_up(M, 8))
    Mp = _round_up(M, tm)
    p1 = jnp.pad(p1, ((0, Mp - M), (0, 0)))     # zero rows contribute 0 to sum/sumsq
    grid_rows = Mp // tm

    c1, ss1 = pl.pallas_call(
        functools.partial(conv1_stats_kernel, inv_m=1.0 / M),
        out_shape=(jax.ShapeDtypeStruct((Mp, Cp), jnp.float32),
                   jax.ShapeDtypeStruct((2, Cp), jnp.float32)),
        grid_spec=pltpu.PrefetchScalarGridSpec(
            num_scalar_prefetch=0,
            grid=(grid_rows,),
            in_specs=[
                pl.BlockSpec((tm, K1), lambda i: (i, 0)),
                pl.BlockSpec((K1, Cp), lambda i: (0, 0)),
                pl.BlockSpec((1, Cp), lambda i: (0, 0)),
                pl.BlockSpec((1, Cp), lambda i: (0, 0)),
            ],
            out_specs=[pl.BlockSpec((tm, Cp), lambda i: (i, 0)),
                       pl.BlockSpec((2, Cp), lambda i: (0, 0))],
            scratch_shapes=[pltpu.VMEM((1, Cp), jnp.float32),
                            pltpu.VMEM((1, Cp), jnp.float32)]),
        compiler_params=pltpu.CompilerParams(
            dimension_semantics=("arbitrary",)),    # stats accumulate across row tiles
    )(p1, w1p, g1p, be1p)

    # ---------------- B1: y1 = relu(conv1 * scale + shift) ----------------
    y1 = pl.pallas_call(
        bn_relu_kernel,
        out_shape=jax.ShapeDtypeStruct((Mp, Cp), jnp.float32),
        grid_spec=pltpu.PrefetchScalarGridSpec(
            num_scalar_prefetch=0,
            grid=(grid_rows,),
            in_specs=[pl.BlockSpec((tm, Cp), lambda i: (i, 0)),
                      pl.BlockSpec((2, Cp), lambda i: (0, 0))],
            out_specs=pl.BlockSpec((tm, Cp), lambda i: (i, 0))),
        compiler_params=pltpu.CompilerParams(
            dimension_semantics=("parallel",)),     # independent tiles -> megacore split
    )(c1, ss1)

    # ---------------- conv2 + shortcut: in-kernel 3x3 patches ----------------
    wp2 = wo + 2                    # padded width
    rows = ho * wp2                 # flat output rows per image (incl. 2 wrap columns)
    pflat = (ho + 3) * wp2          # flat padded-input rows per image

    y1_img = y1[:M].reshape(n, ho, wo, Cp)
    # zero-pad H by (1,2) / W by (1,1): the extra bottom row keeps all 9 shifted flat
    # windows in-bounds; the wrap-around columns are masked out of the BN statistics.
    y1f = jnp.pad(y1_img, ((0, 0), (1, 2), (1, 1), (0, 0))).reshape(n, pflat, Cp)

    xs = x[:, ::stride, ::stride, :]                                   # 1x1 conv sampling
    xs = jnp.pad(xs, ((0, 0), (0, 0), (0, 2), (0, 0))).reshape(n, rows, Cin)
    cmask = (jnp.arange(rows) % wp2 < wo).astype(jnp.float32).reshape(1, rows, 1)

    c2, s, ss2, ss3 = pl.pallas_call(
        functools.partial(conv2_shortcut_stats_kernel, wp2=wp2, rows=rows, inv_m=1.0 / M),
        out_shape=(jax.ShapeDtypeStruct((n, rows, Cp), jnp.float32),
                   jax.ShapeDtypeStruct((n, rows, Cp), jnp.float32),
                   jax.ShapeDtypeStruct((2, Cp), jnp.float32),
                   jax.ShapeDtypeStruct((2, Cp), jnp.float32)),
        grid_spec=pltpu.PrefetchScalarGridSpec(
            num_scalar_prefetch=0,
            grid=(n,),
            in_specs=[
                pl.BlockSpec((1, pflat, Cp), lambda b: (b, 0, 0)),
                pl.BlockSpec((9, Cp, Cp), lambda b: (0, 0, 0)),
                pl.BlockSpec((1, rows, Cin), lambda b: (b, 0, 0)),
                pl.BlockSpec((Cin, Cp), lambda b: (0, 0)),
                pl.BlockSpec((1, rows, 1), lambda b: (0, 0, 0)),
                pl.BlockSpec((1, Cp), lambda b: (0, 0)),
                pl.BlockSpec((1, Cp), lambda b: (0, 0)),
                pl.BlockSpec((1, Cp), lambda b: (0, 0)),
                pl.BlockSpec((1, Cp), lambda b: (0, 0)),
            ],
            out_specs=[pl.BlockSpec((1, rows, Cp), lambda b: (b, 0, 0)),
                       pl.BlockSpec((1, rows, Cp), lambda b: (b, 0, 0)),
                       pl.BlockSpec((2, Cp), lambda b: (0, 0)),
                       pl.BlockSpec((2, Cp), lambda b: (0, 0))],
            scratch_shapes=[pltpu.VMEM((1, Cp), jnp.float32),
                            pltpu.VMEM((1, Cp), jnp.float32),
                            pltpu.VMEM((1, Cp), jnp.float32),
                            pltpu.VMEM((1, Cp), jnp.float32)]),
        compiler_params=pltpu.CompilerParams(
            dimension_semantics=("arbitrary",)),    # stats accumulate across images
    )(y1f, w2p, xs, w3p, cmask, g2p, be2p, g3p, be3p)

    # ---------------- B2: residual add + BN FMA + ReLU ----------------
    out = pl.pallas_call(
        residual_bn_relu_kernel,
        out_shape=jax.ShapeDtypeStruct((n, rows, Cp), jnp.float32),
        grid_spec=pltpu.PrefetchScalarGridSpec(
            num_scalar_prefetch=0,
            grid=(n,),
            in_specs=[pl.BlockSpec((1, rows, Cp), lambda b: (b, 0, 0)),
                      pl.BlockSpec((1, rows, Cp), lambda b: (b, 0, 0)),
                      pl.BlockSpec((2, Cp), lambda b: (0, 0)),
                      pl.BlockSpec((2, Cp), lambda b: (0, 0))],
            out_specs=pl.BlockSpec((1, rows, Cp), lambda b: (b, 0, 0))),
        compiler_params=pltpu.CompilerParams(
            dimension_semantics=("parallel",)),
    )(c2, s, ss2, ss3)

    out = out.reshape(n, ho, wp2, Cp)[:, :, :wo, :Cout]   # drop wrap columns + channel pad
    return jnp.transpose(out, (0, 3, 1, 2))               # back to NCHW


def init_params(key, cin, cout):
    k = jax.random.split(key, 6)
    w1 = jax.random.normal(k[0], (3, 3, cin, cout), jnp.float32) / jnp.sqrt(9.0 * cin)
    b1 = jax.random.normal(k[1], (cout,), jnp.float32) * 0.1
    w2 = jax.random.normal(k[2], (3, 3, cout, cout), jnp.float32) / jnp.sqrt(9.0 * cout)
    b2 = jax.random.normal(k[3], (cout,), jnp.float32) * 0.1
    w3 = jax.random.normal(k[4], (1, 1, cin, cout), jnp.float32) / jnp.sqrt(1.0 * cin)
    b3 = jax.random.normal(k[5], (cout,), jnp.float32) * 0.1
    ones, zeros = jnp.ones((cout,), jnp.float32), jnp.zeros((cout,), jnp.float32)
    # gamma=1, beta=0 is the PyTorch BatchNorm2d default init
    return (w1, b1, ones, zeros, w2, b2, ones, zeros, w3, b3, ones, zeros)


# ------------------------- pure-JAX reference for sanity check -------------------------

def reference(x_nchw, params, stride=1):
    (w1, b1, g1, be1, w2, b2, g2, be2, w3, b3, g3, be3) = params

    def conv(x, w_hwio, b, s, pad):
        w_oihw = jnp.transpose(w_hwio, (3, 2, 0, 1))
        y = lax.conv_general_dilated(x, w_oihw, (s, s), [(pad, pad), (pad, pad)],
                                     dimension_numbers=('NCHW', 'OIHW', 'NCHW'),
                                     precision=lax.Precision.HIGHEST)
        return y + b.reshape(1, -1, 1, 1)

    def bn(x, g, be):
        mean = jnp.mean(x, axis=(0, 2, 3), keepdims=True)
        var = jnp.mean(jnp.square(x - mean), axis=(0, 2, 3), keepdims=True)
        return (x - mean) * lax.rsqrt(var + EPS) * g.reshape(1, -1, 1, 1) + be.reshape(1, -1, 1, 1)

    y = jax.nn.relu(bn(conv(x_nchw, w1, b1, stride, 1), g1, be1))
    y = bn(conv(y, w2, b2, 1, 1), g2, be2)
    s = bn(conv(x_nchw, w3, b3, stride, 0), g3, be3)
    return jax.nn.relu(y + s)


if __name__ == "__main__":
    key = jax.random.PRNGKey(0)
    kx, kp = jax.random.split(key)
    N, Cin, H, W, Cout, stride = 2, 4, 16, 16, 8, 1

    x = jax.random.normal(kx, (N, Cin, H, W), jnp.float32)
    params = init_params(kp, Cin, Cout)

    # row_tile=128 here so the demo exercises a multi-step grid (accumulate/finalize path).
    fwd = jax.jit(functools.partial(residual_block_forward, stride=stride, row_tile=128))
    out = jax.block_until_ready(fwd(x, params))

    assert out.shape == (N, Cout, H, W), out.shape
    ref = reference(x, params, stride)
    err = float(jnp.max(jnp.abs(out - ref)))
    # kernel uses default single-pass bf16 MXU precision (f32 accumulate) vs f32 HIGHEST ref
    assert err < 5e-2, f"max abs err {err}"

    print("KERNEL_OK")
</pallas_src>

<mosaic_0001>
module attributes {stable_mosaic.version = 11 : i64} {
  func.func @conv1_stats_kernel(%arg0: i32, %arg1: memref<128x36xf32, #tpu.memory_space<vmem>>, %arg2: memref<36x128xf32, #tpu.memory_space<vmem>>, %arg3: memref<1x128xf32, #tpu.memory_space<vmem>>, %arg4: memref<1x128xf32, #tpu.memory_space<vmem>>, %arg5: memref<128x128xf32, #tpu.memory_space<vmem>>, %arg6: memref<2x128xf32, #tpu.memory_space<vmem>>, %arg7: memref<1x128xf32, #tpu.memory_space<vmem>>, %arg8: memref<1x128xf32, #tpu.memory_space<vmem>>) attributes {dimension_semantics = [#tpu.dimension_semantics<arbitrary>], iteration_bounds = array<i64: 4>, scalar_prefetch = 0 : i64, scratch_operands = 2 : i64, tpu.core_type = #tpu.core_type<tc>, window_params = [{transform_indices = @transform_0, window_bounds = array<i64: 128, 36>}, {pipeline_mode = #tpu.pipeline_mode<synchronous>, transform_indices = @transform_1, window_bounds = array<i64: 36, 128>}, {pipeline_mode = #tpu.pipeline_mode<synchronous>, transform_indices = @transform_2, window_bounds = array<i64: 1, 128>}, {pipeline_mode = #tpu.pipeline_mode<synchronous>, transform_indices = @transform_3, window_bounds = array<i64: 1, 128>}, {transform_indices = @transform_4, window_bounds = array<i64: 128, 128>}, {pipeline_mode = #tpu.pipeline_mode<synchronous>, transform_indices = @transform_5, window_bounds = array<i64: 2, 128>}]} {
    %c0_i32 = arith.constant 0 : i32
    %0 = arith.cmpi eq, %arg0, %c0_i32 : i32
    %1 = arith.extui %0 : i1 to i32
    %c0_i32_0 = arith.constant 0 : i32
    %2 = arith.cmpi ne, %1, %c0_i32_0 : i32
    scf.if %2 {
      %cst_17 = arith.constant 0.000000e+00 : f32
      %21 = vector.broadcast %cst_17 : f32 to vector<1x128xf32>
      %c0_18 = arith.constant 0 : index
      %c0_19 = arith.constant 0 : index
      %22 = vector.load %arg7[%c0_18, %c0_19] : memref<1x128xf32, #tpu.memory_space<vmem>>, vector<1x128xf32>
      tpu.vector_store %arg7[%c0_18, %c0_19], %21 {strides = array<i32>} : memref<1x128xf32, #tpu.memory_space<vmem>>, vector<1x128xf32>,
      %cst_20 = arith.constant 0.000000e+00 : f32
      %23 = vector.broadcast %cst_20 : f32 to vector<1x128xf32>
      %c0_21 = arith.constant 0 : index
      %c0_22 = arith.constant 0 : index
      %24 = vector.load %arg8[%c0_21, %c0_22] : memref<1x128xf32, #tpu.memory_space<vmem>>, vector<1x128xf32>
      tpu.vector_store %arg8[%c0_21, %c0_22], %23 {strides = array<i32>} : memref<1x128xf32, #tpu.memory_space<vmem>>, vector<1x128xf32>,
    } else {
    }
    %c0 = arith.constant 0 : index
    %c0_1 = arith.constant 0 : index
    %3 = vector.load %arg1[%c0, %c0_1] : memref<128x36xf32, #tpu.memory_space<vmem>>, vector<128x36xf32>
    %c0_2 = arith.constant 0 : index
    %c0_3 = arith.constant 0 : index
    %4 = vector.load %arg2[%c0_2, %c0_3] : memref<36x128xf32, #tpu.memory_space<vmem>>, vector<36x128xf32>
    %cst = arith.constant dense<0.000000e+00> : vector<128x128xf32>
    %5 = tpu.matmul %3, %4, %cst {dimension_numbers = #tpu.dot_dimension_numbers<[1], [0], [0], [1], [0, 0, 1, 1], [], []>} : vector<128x36xf32>, vector<36x128xf32>, vector<128x128xf32> -> vector<128x128xf32>
    %c0_4 = arith.constant 0 : index
    %c0_5 = arith.constant 0 : index
    %6 = vector.load %arg5[%c0_4, %c0_5] : memref<128x128xf32, #tpu.memory_space<vmem>>, vector<128x128xf32>
    tpu.vector_store %arg5[%c0_4, %c0_5], %5 {strides = array<i32>} : memref<128x128xf32, #tpu.memory_space<vmem>>, vector<128x128xf32>,
    %c0_6 = arith.constant 0 : index
    %c0_7 = arith.constant 0 : index
    %7 = vector.load %arg7[%c0_6, %c0_7] : memref<1x128xf32, #tpu.memory_space<vmem>>, vector<1x128xf32>
    %cst_8 = arith.constant dense<0.000000e+00> : vector<128xf32>
    %8 = vector.multi_reduction <add>, %5, %cst_8 [0] : vector<128x128xf32> to vector<128xf32>
    %9 = vector.shape_cast %8 : vector<128xf32> to vector<1x128xf32>
    %10 = arith.addf %7, %9 : vector<1x128xf32>
    %c0_9 = arith.constant 0 : index
    %c0_10 = arith.constant 0 : index
    %11 = vector.load %arg7[%c0_9, %c0_10] : memref<1x128xf32, #tpu.memory_space<vmem>>, vector<1x128xf32>
    tpu.vector_store %arg7[%c0_9, %c0_10], %10 {strides = array<i32>} : memref<1x128xf32, #tpu.memory_space<vmem>>, vector<1x128xf32>,
    %c0_11 = arith.constant 0 : index
    %c0_12 = arith.constant 0 : index
    %12 = vector.load %arg8[%c0_11, %c0_12] : memref<1x128xf32, #tpu.memory_space<vmem>>, vector<1x128xf32>
    %13 = arith.mulf %5, %5 : vector<128x128xf32>
    %cst_13 = arith.constant dense<0.000000e+00> : vector<128xf32>
    %14 = vector.multi_reduction <add>, %13, %cst_13 [0] : vector<128x128xf32> to vector<128xf32>
    %15 = vector.shape_cast %14 : vector<128xf32> to vector<1x128xf32>
    %16 = arith.addf %12, %15 : vector<1x128xf32>
    %c0_14 = arith.constant 0 : index
    %c0_15 = arith.constant 0 : index
    %17 = vector.load %arg8[%c0_14, %c0_15] : memref<1x128xf32, #tpu.memory_space<vmem>>, vector<1x128xf32>
    tpu.vector_store %arg8[%c0_14, %c0_15], %16 {strides = array<i32>} : memref<1x128xf32, #tpu.memory_space<vmem>>, vector<1x128xf32>,
    %c3_i32 = arith.constant 3 : i32
    %18 = arith.cmpi eq, %arg0, %c3_i32 : i32
    %19 = arith.extui %18 : i1 to i32
    %c0_i32_16 = arith.constant 0 : i32
    %20 = arith.cmpi ne, %19, %c0_i32_16 : i32
    scf.if %20 {
      %c0_17 = arith.constant 0 : index
      %c0_18 = arith.constant 0 : index
      %21 = vector.load %arg7[%c0_17, %c0_18] : memref<1x128xf32, #tpu.memory_space<vmem>>, vector<1x128xf32>
      %cst_19 = arith.constant 0.001953125 : f32
      %22 = vector.broadcast %cst_19 : f32 to vector<1x128xf32>
      %23 = arith.mulf %21, %22 : vector<1x128xf32>
      %c0_20 = arith.constant 0 : index
      %c0_21 = arith.constant 0 : index
      %24 = vector.load %arg8[%c0_20, %c0_21] : memref<1x128xf32, #tpu.memory_space<vmem>>, vector<1x128xf32>
      %cst_22 = arith.constant 0.001953125 : f32
      %25 = vector.broadcast %cst_22 : f32 to vector<1x128xf32>
      %26 = arith.mulf %24, %25 : vector<1x128xf32>
      %27 = arith.mulf %23, %23 : vector<1x128xf32>
      %28 = arith.subf %26, %27 : vector<1x128xf32>
      %c0_23 = arith.constant 0 : index
      %c0_24 = arith.constant 0 : index
      %29 = vector.load %arg3[%c0_23, %c0_24] : memref<1x128xf32, #tpu.memory_space<vmem>>, vector<1x128xf32>
      %cst_25 = arith.constant 9.99999974E-6 : f32
      %30 = vector.broadcast %cst_25 : f32 to vector<1x128xf32>
      %31 = arith.addf %28, %30 : vector<1x128xf32>
      %32 = math.rsqrt %31 : vector<1x128xf32>
      %33 = arith.mulf %29, %32 : vector<1x128xf32>
      %c0_26 = arith.constant 0 : index
      %c0_27 = arith.constant 0 : index
      %34 = vector.load %arg6[%c0_26, %c0_27] : memref<2x128xf32, #tpu.memory_space<vmem>>, vector<1x128xf32>
      tpu.vector_store %arg6[%c0_26, %c0_27], %33 {strides = array<i32>} : memref<2x128xf32, #tpu.memory_space<vmem>>, vector<1x128xf32>,
      %c0_28 = arith.constant 0 : index
      %c0_29 = arith.constant 0 : index
      %35 = vector.load %arg4[%c0_28, %c0_29] : memref<1x128xf32, #tpu.memory_space<vmem>>, vector<1x128xf32>
      %36 = arith.mulf %23, %33 : vector<1x128xf32>
      %37 = arith.subf %35, %36 : vector<1x128xf32>
      %c1 = arith.constant 1 : index
      %c0_30 = arith.constant 0 : index
      %38 = vector.load %arg6[%c1, %c0_30] : memref<2x128xf32, #tpu.memory_space<vmem>>, vector<1x128xf32>
      tpu.vector_store %arg6[%c1, %c0_30], %37 {strides = array<i32>} : memref<2x128xf32, #tpu.memory_space<vmem>>, vector<1x128xf32>,
    } else {
    }
    return
  }
  func.func @transform_0(%arg0: i32) -> (i32, i32) {
    %c0_i32 = arith.constant 0 : i32
    %c0_i32_0 = arith.constant 0 : i32
    return %arg0, %c0_i32 : i32, i32
  }
  func.func @transform_1(%arg0: i32) -> (i32, i32) {
    %c0_i32 = arith.constant 0 : i32
    %c0_i32_0 = arith.constant 0 : i32
    %c0_i32_1 = arith.constant 0 : i32
    return %c0_i32, %c0_i32_0 : i32, i32
  }
  func.func @transform_2(%arg0: i32) -> (i32, i32) {
    %c0_i32 = arith.constant 0 : i32
    %c0_i32_0 = arith.constant 0 : i32
    %c0_i32_1 = arith.constant 0 : i32
    return %c0_i32, %c0_i32_0 : i32, i32
  }
  func.func @transform_3(%arg0: i32) -> (i32, i32) {
    %c0_i32 = arith.constant 0 : i32
    %c0_i32_0 = arith.constant 0 : i32
    %c0_i32_1 = arith.constant 0 : i32
    return %c0_i32, %c0_i32_0 : i32, i32
  }
  func.func @transform_4(%arg0: i32) -> (i32, i32) {
    %c0_i32 = arith.constant 0 : i32
    %c0_i32_0 = arith.constant 0 : i32
    return %arg0, %c0_i32 : i32, i32
  }
  func.func @transform_5(%arg0: i32) -> (i32, i32) {
    %c0_i32 = arith.constant 0 : i32
    %c0_i32_0 = arith.constant 0 : i32
    %c0_i32_1 = arith.constant 0 : i32
    return %c0_i32, %c0_i32_0 : i32, i32
  }
}

module attributes {stable_mosaic.version = 11 : i64} {
  func.func @bn_relu_kernel(%arg0: i32, %arg1: memref<128x128xf32, #tpu.memory_space<vmem>>, %arg2: memref<2x128xf32, #tpu.memory_space<vmem>>, %arg3: memref<128x128xf32, #tpu.memory_space<vmem>>) attributes {dimension_semantics = [#tpu.dimension_semantics<parallel>], iteration_bounds = array<i64: 4>, scalar_prefetch = 0 : i64, scratch_operands = 0 : i64, tpu.core_type = #tpu.core_type<tc>, window_params = [{transform_indices = @transform_0, window_bounds = array<i64: 128, 128>}, {pipeline_mode = #tpu.pipeline_mode<synchronous>, transform_indices = @transform_1, window_bounds = array<i64: 2, 128>}, {transform_indices = @transform_2, window_bounds = array<i64: 128, 128>}]} {
    %c0 = arith.constant 0 : index
    %c0_0 = arith.constant 0 : index
    %0 = vector.load %arg1[%c0, %c0_0] : memref<128x128xf32, #tpu.memory_space<vmem>>, vector<128x128xf32>
    %c0_1 = arith.constant 0 : index
    %c0_2 = arith.constant 0 : index
    %1 = vector.load %arg2[%c0_1, %c0_2] : memref<2x128xf32, #tpu.memory_space<vmem>>, vector<1x128xf32>
    %2 = vector.broadcast %1 : vector<1x128xf32> to vector<128x128xf32>
    %3 = arith.mulf %0, %2 : vector<128x128xf32>
    %c1 = arith.constant 1 : index
    %c0_3 = arith.constant 0 : index
    %4 = vector.load %arg2[%c1, %c0_3] : memref<2x128xf32, #tpu.memory_space<vmem>>, vector<1x128xf32>
    %5 = vector.broadcast %4 : vector<1x128xf32> to vector<128x128xf32>
    %6 = arith.addf %3, %5 : vector<128x128xf32>
    %cst = arith.constant 0.000000e+00 : f32
    %7 = vector.broadcast %cst : f32 to vector<128x128xf32>
    %8 = arith.maximumf %6, %7 : vector<128x128xf32>
    %c0_4 = arith.constant 0 : index
    %c0_5 = arith.constant 0 : index
    %9 = vector.load %arg3[%c0_4, %c0_5] : memref<128x128xf32, #tpu.memory_space<vmem>>, vector<128x128xf32>
    tpu.vector_store %arg3[%c0_4, %c0_5], %8 {strides = array<i32>} : memref<128x128xf32, #tpu.memory_space<vmem>>, vector<128x128xf32>,
    return
  }
  func.func @transform_0(%arg0: i32) -> (i32, i32) {
    %c0_i32 = arith.constant 0 : i32
    %c0_i32_0 = arith.constant 0 : i32
    return %arg0, %c0_i32 : i32, i32
  }
  func.func @transform_1(%arg0: i32) -> (i32, i32) {
    %c0_i32 = arith.constant 0 : i32
    %c0_i32_0 = arith.constant 0 : i32
    %c0_i32_1 = arith.constant 0 : i32
    return %c0_i32, %c0_i32_0 : i32, i32
  }
  func.func @transform_2(%arg0: i32) -> (i32, i32) {
    %c0_i32 = arith.constant 0 : i32
    %c0_i32_0 = arith.constant 0 : i32
    return %arg0, %c0_i32 : i32, i32
  }
}

module attributes {stable_mosaic.version = 11 : i64} {
  func.func @residual_bn_relu_kernel(%arg0: i32, %arg1: memref<1x288x128xf32, #tpu.memory_space<vmem>>, %arg2: memref<1x288x128xf32, #tpu.memory_space<vmem>>, %arg3: memref<2x128xf32, #tpu.memory_space<vmem>>, %arg4: memref<2x128xf32, #tpu.memory_space<vmem>>, %arg5: memref<1x288x128xf32, #tpu.memory_space<vmem>>) attributes {dimension_semantics = [#tpu.dimension_semantics<parallel>], iteration_bounds = array<i64: 2>, scalar_prefetch = 0 : i64, scratch_operands = 0 : i64, tpu.core_type = #tpu.core_type<tc>, window_params = [{transform_indices = @transform_0, window_bounds = array<i64: 1, 288, 128>}, {transform_indices = @transform_1, window_bounds = array<i64: 1, 288, 128>}, {pipeline_mode = #tpu.pipeline_mode<synchronous>, transform_indices = @transform_2, window_bounds = array<i64: 2, 128>}, {pipeline_mode = #tpu.pipeline_mode<synchronous>, transform_indices = @transform_3, window_bounds = array<i64: 2, 128>}, {transform_indices = @transform_4, window_bounds = array<i64: 1, 288, 128>}]} {
    %c0 = arith.constant 0 : index
    %c0_0 = arith.constant 0 : index
    %c0_1 = arith.constant 0 : index
    %0 = vector.load %arg1[%c0, %c0_0, %c0_1] : memref<1x288x128xf32, #tpu.memory_space<vmem>>, vector<1x288x128xf32>
    %c0_2 = arith.constant 0 : index
    %c0_3 = arith.constant 0 : index
    %1 = vector.load %arg3[%c0_2, %c0_3] : memref<2x128xf32, #tpu.memory_space<vmem>>, vector<1x128xf32>
    %2 = vector.shape_cast %1 : vector<1x128xf32> to vector<1x1x128xf32>
    %3 = vector.broadcast %2 : vector<1x1x128xf32> to vector<1x288x128xf32>
    %4 = arith.mulf %0, %3 : vector<1x288x128xf32>
    %c1 = arith.constant 1 : index
    %c0_4 = arith.constant 0 : index
    %5 = vector.load %arg3[%c1, %c0_4] : memref<2x128xf32, #tpu.memory_space<vmem>>, vector<1x128xf32>
    %6 = vector.shape_cast %5 : vector<1x128xf32> to vector<1x1x128xf32>
    %7 = vector.broadcast %6 : vector<1x1x128xf32> to vector<1x288x128xf32>
    %8 = arith.addf %4, %7 : vector<1x288x128xf32>
    %c0_5 = arith.constant 0 : index
    %c0_6 = arith.constant 0 : index
    %c0_7 = arith.constant 0 : index
    %9 = vector.load %arg2[%c0_5, %c0_6, %c0_7] : memref<1x288x128xf32, #tpu.memory_space<vmem>>, vector<1x288x128xf32>
    %c0_8 = arith.constant 0 : index
    %c0_9 = arith.constant 0 : index
    %10 = vector.load %arg4[%c0_8, %c0_9] : memref<2x128xf32, #tpu.memory_space<vmem>>, vector<1x128xf32>
    %11 = vector.shape_cast %10 : vector<1x128xf32> to vector<1x1x128xf32>
    %12 = vector.broadcast %11 : vector<1x1x128xf32> to vector<1x288x128xf32>
    %13 = arith.mulf %9, %12 : vector<1x288x128xf32>
    %c1_10 = arith.constant 1 : index
    %c0_11 = arith.constant 0 : index
    %14 = vector.load %arg4[%c1_10, %c0_11] : memref<2x128xf32, #tpu.memory_space<vmem>>, vector<1x128xf32>
    %15 = vector.shape_cast %14 : vector<1x128xf32> to vector<1x1x128xf32>
    %16 = vector.broadcast %15 : vector<1x1x128xf32> to vector<1x288x128xf32>
    %17 = arith.addf %13, %16 : vector<1x288x128xf32>
    %18 = arith.addf %8, %17 : vector<1x288x128xf32>
    %cst = arith.constant 0.000000e+00 : f32
    %19 = vector.broadcast %cst : f32 to vector<1x288x128xf32>
    %20 = arith.maximumf %18, %19 : vector<1x288x128xf32>
    %c0_12 = arith.constant 0 : index
    %c0_13 = arith.constant 0 : index
    %c0_14 = arith.constant 0 : index
    %21 = vector.load %arg5[%c0_12, %c0_13, %c0_14] : memref<1x288x128xf32, #tpu.memory_space<vmem>>, vector<1x288x128xf32>
    tpu.vector_store %arg5[%c0_12, %c0_13, %c0_14], %20 {strides = array<i32>} : memref<1x288x128xf32, #tpu.memory_space<vmem>>, vector<1x288x128xf32>,
    return
  }
  func.func @transform_0(%arg0: i32) -> (i32, i32, i32) {
    %c0_i32 = arith.constant 0 : i32
    %c0_i32_0 = arith.constant 0 : i32
    %c0_i32_1 = arith.constant 0 : i32
    return %arg0, %c0_i32, %c0_i32_0 : i32, i32, i32
  }
  func.func @transform_1(%arg0: i32) -> (i32, i32, i32) {
    %c0_i32 = arith.constant 0 : i32
    %c0_i32_0 = arith.constant 0 : i32
    %c0_i32_1 = arith.constant 0 : i32
    return %arg0, %c0_i32, %c0_i32_0 : i32, i32, i32
  }
  func.func @transform_2(%arg0: i32) -> (i32, i32) {
    %c0_i32 = arith.constant 0 : i32
    %c0_i32_0 = arith.constant 0 : i32
    %c0_i32_1 = arith.constant 0 : i32
    return %c0_i32, %c0_i32_0 : i32, i32
  }
  func.func @transform_3(%arg0: i32) -> (i32, i32) {
    %c0_i32 = arith.constant 0 : i32
    %c0_i32_0 = arith.constant 0 : i32
    %c0_i32_1 = arith.constant 0 : i32
    return %c0_i32, %c0_i32_0 : i32, i32
  }
  func.func @transform_4(%arg0: i32) -> (i32, i32, i32) {
    %c0_i32 = arith.constant 0 : i32
    %c0_i32_0 = arith.constant 0 : i32
    %c0_i32_1 = arith.constant 0 : i32
    return %arg0, %c0_i32, %c0_i32_0 : i32, i32, i32
  }
}

module attributes {stable_mosaic.version = 11 : i64} {
  func.func @conv2_shortcut_stats_kernel(%arg0: i32, %arg1: memref<1x342x128xf32, #tpu.memory_space<vmem>>, %arg2: memref<9x128x128xf32, #tpu.memory_space<vmem>>, %arg3: memref<1x288x4xf32, #tpu.memory_space<vmem>>, %arg4: memref<4x128xf32, #tpu.memory_space<vmem>>, %arg5: memref<1x288x1xf32, #tpu.memory_space<vmem>>, %arg6: memref<1x128xf32, #tpu.memory_space<vmem>>, %arg7: memref<1x128xf32, #tpu.memory_space<vmem>>, %arg8: memref<1x128xf32, #tpu.memory_space<vmem>>, %arg9: memref<1x128xf32, #tpu.memory_space<vmem>>, %arg10: memref<1x288x128xf32, #tpu.memory_space<vmem>>, %arg11: memref<1x288x128xf32, #tpu.memory_space<vmem>>, %arg12: memref<2x128xf32, #tpu.memory_space<vmem>>, %arg13: memref<2x128xf32, #tpu.memory_space<vmem>>, %arg14: memref<1x128xf32, #tpu.memory_space<vmem>>, %arg15: memref<1x128xf32, #tpu.memory_space<vmem>>, %arg16: memref<1x128xf32, #tpu.memory_space<vmem>>, %arg17: memref<1x128xf32, #tpu.memory_space<vmem>>) attributes {dimension_semantics = [#tpu.dimension_semantics<arbitrary>], iteration_bounds = array<i64: 2>, scalar_prefetch = 0 : i64, scratch_operands = 4 : i64, tpu.core_type = #tpu.core_type<tc>, window_params = [{transform_indices = @transform_0, window_bounds = array<i64: 1, 342, 128>}, {pipeline_mode = #tpu.pipeline_mode<synchronous>, transform_indices = @transform_1, window_bounds = array<i64: 9, 128, 128>}, {transform_indices = @transform_2, window_bounds = array<i64: 1, 288, 4>}, {pipeline_mode = #tpu.pipeline_mode<synchronous>, transform_indices = @transform_3, window_bounds = array<i64: 4, 128>}, {pipeline_mode = #tpu.pipeline_mode<synchronous>, transform_indices = @transform_4, window_bounds = array<i64: 1, 288, 1>}, {pipeline_mode = #tpu.pipeline_mode<synchronous>, transform_indices = @transform_5, window_bounds = array<i64: 1, 128>}, {pipeline_mode = #tpu.pipeline_mode<synchronous>, transform_indices = @transform_6, window_bounds = array<i64: 1, 128>}, {pipeline_mode = #tpu.pipeline_mode<synchronous>, transform_indices = @transform_7, window_bounds = array<i64: 1, 128>}, {pipeline_mode = #tpu.pipeline_mode<synchronous>, transform_indices = @transform_8, window_bounds = array<i64: 1, 128>}, {transform_indices = @transform_9, window_bounds = array<i64: 1, 288, 128>}, {transform_indices = @transform_10, window_bounds = array<i64: 1, 288, 128>}, {pipeline_mode = #tpu.pipeline_mode<synchronous>, transform_indices = @transform_11, window_bounds = array<i64: 2, 128>}, {pipeline_mode = #tpu.pipeline_mode<synchronous>, transform_indices = @transform_12, window_bounds = array<i64: 2, 128>}]} {
    %c0_i32 = arith.constant 0 : i32
    %0 = arith.cmpi eq, %arg0, %c0_i32 : i32
    %1 = arith.extui %0 : i1 to i32
    %c0_i32_0 = arith.constant 0 : i32
    %2 = arith.cmpi ne, %1, %c0_i32_0 : i32
    scf.if %2 {
      %cst_67 = arith.constant 0.000000e+00 : f32
      %90 = vector.broadcast %cst_67 : f32 to vector<1x128xf32>
      %c0_68 = arith.constant 0 : index
      %c0_69 = arith.constant 0 : index
      %91 = vector.load %arg14[%c0_68, %c0_69] : memref<1x128xf32, #tpu.memory_space<vmem>>, vector<1x128xf32>
      tpu.vector_store %arg14[%c0_68, %c0_69], %90 {strides = array<i32>} : memref<1x128xf32, #tpu.memory_space<vmem>>, vector<1x128xf32>,
      %cst_70 = arith.constant 0.000000e+00 : f32
      %92 = vector.broadcast %cst_70 : f32 to vector<1x128xf32>
      %c0_71 = arith.constant 0 : index
      %c0_72 = arith.constant 0 : index
      %93 = vector.load %arg15[%c0_71, %c0_72] : memref<1x128xf32, #tpu.memory_space<vmem>>, vector<1x128xf32>
      tpu.vector_store %arg15[%c0_71, %c0_72], %92 {strides = array<i32>} : memref<1x128xf32, #tpu.memory_space<vmem>>, vector<1x128xf32>,
      %cst_73 = arith.constant 0.000000e+00 : f32
      %94 = vector.broadcast %cst_73 : f32 to vector<1x128xf32>
      %c0_74 = arith.constant 0 : index
      %c0_75 = arith.constant 0 : index
      %95 = vector.load %arg16[%c0_74, %c0_75] : memref<1x128xf32, #tpu.memory_space<vmem>>, vector<1x128xf32>
      tpu.vector_store %arg16[%c0_74, %c0_75], %94 {strides = array<i32>} : memref<1x128xf32, #tpu.memory_space<vmem>>, vector<1x128xf32>,
      %cst_76 = arith.constant 0.000000e+00 : f32
      %96 = vector.broadcast %cst_76 : f32 to vector<1x128xf32>
      %c0_77 = arith.constant 0 : index
      %c0_78 = arith.constant 0 : index
      %97 = vector.load %arg17[%c0_77, %c0_78] : memref<1x128xf32, #tpu.memory_space<vmem>>, vector<1x128xf32>
      tpu.vector_store %arg17[%c0_77, %c0_78], %96 {strides = array<i32>} : memref<1x128xf32, #tpu.memory_space<vmem>>, vector<1x128xf32>,
    } else {
    }
    %c0 = arith.constant 0 : index
    %c0_1 = arith.constant 0 : index
    %c0_2 = arith.constant 0 : index
    %3 = vector.load %arg1[%c0, %c0_1, %c0_2] : memref<1x342x128xf32, #tpu.memory_space<vmem>>, vector<1x342x128xf32>
    %4 = vector.shape_cast %3 : vector<1x342x128xf32> to vector<342x128xf32>
    %cst = arith.constant 0.000000e+00 : f32
    %5 = vector.broadcast %cst : f32 to vector<288x128xf32>
    %6 = vector.extract_strided_slice %4 {offsets = [0, 0], sizes = [288, 128], strides = [1, 1]} : vector<342x128xf32> to vector<288x128xf32>
    %c0_3 = arith.constant 0 : index
    %c0_4 = arith.constant 0 : index
    %c0_5 = arith.constant 0 : index
    %7 = vector.load %arg2[%c0_3, %c0_4, %c0_5] : memref<9x128x128xf32, #tpu.memory_space<vmem>>, vector<1x128x128xf32>
    %8 = vector.shape_cast %7 : vector<1x128x128xf32> to vector<128x128xf32>
    %cst_6 = arith.constant dense<0.000000e+00> : vector<288x128xf32>
    %9 = tpu.matmul %6, %8, %cst_6 {dimension_numbers = #tpu.dot_dimension_numbers<[1], [0], [0], [1], [0, 0, 1, 1], [], []>} : vector<288x128xf32>, vector<128x128xf32>, vector<288x128xf32> -> vector<288x128xf32>
    %10 = arith.addf %5, %9 : vector<288x128xf32>
    %11 = vector.extract_strided_slice %4 {offsets = [1, 0], sizes = [288, 128], strides = [1, 1]} : vector<342x128xf32> to vector<288x128xf32>
    %c1 = arith.constant 1 : index
    %c0_7 = arith.constant 0 : index
    %c0_8 = arith.constant 0 : index
    %12 = vector.load %arg2[%c1, %c0_7, %c0_8] : memref<9x128x128xf32, #tpu.memory_space<vmem>>, vector<1x128x128xf32>
    %13 = vector.shape_cast %12 : vector<1x128x128xf32> to vector<128x128xf32>
    %cst_9 = arith.constant dense<0.000000e+00> : vector<288x128xf32>
    %14 = tpu.matmul %11, %13, %cst_9 {dimension_numbers = #tpu.dot_dimension_numbers<[1], [0], [0], [1], [0, 0, 1, 1], [], []>} : vector<288x128xf32>, vector<128x128xf32>, vector<288x128xf32> -> vector<288x128xf32>
    %15 = arith.addf %10, %14 : vector<288x128xf32>
    %16 = vector.extract_strided_slice %4 {offsets = [2, 0], sizes = [288, 128], strides = [1, 1]} : vector<342x128xf32> to vector<288x128xf32>
    %c2 = arith.constant 2 : index
    %c0_10 = arith.constant 0 : index
    %c0_11 = arith.constant 0 : index
    %17 = vector.load %arg2[%c2, %c0_10, %c0_11] : memref<9x128x128xf32, #tpu.memory_space<vmem>>, vector<1x128x128xf32>
    %18 = vector.shape_cast %17 : vector<1x128x128xf32> to vector<128x128xf32>
    %cst_12 = arith.constant dense<0.000000e+00> : vector<288x128xf32>
    %19 = tpu.matmul %16, %18, %cst_12 {dimension_numbers = #tpu.dot_dimension_numbers<[1], [0], [0], [1], [0, 0, 1, 1], [], []>} : vector<288x128xf32>, vector<128x128xf32>, vector<288x128xf32> -> vector<288x128xf32>
    %20 = arith.addf %15, %19 : vector<288x128xf32>
    %21 = vector.extract_strided_slice %4 {offsets = [18, 0], sizes = [288, 128], strides = [1, 1]} : vector<342x128xf32> to vector<288x128xf32>
    %c3 = arith.constant 3 : index
    %c0_13 = arith.constant 0 : index
    %c0_14 = arith.constant 0 : index
    %22 = vector.load %arg2[%c3, %c0_13, %c0_14] : memref<9x128x128xf32, #tpu.memory_space<vmem>>, vector<1x128x128xf32>
    %23 = vector.shape_cast %22 : vector<1x128x128xf32> to vector<128x128xf32>
    %cst_15 = arith.constant dense<0.000000e+00> : vector<288x128xf32>
    %24 = tpu.matmul %21, %23, %cst_15 {dimension_numbers = #tpu.dot_dimension_numbers<[1], [0], [0], [1], [0, 0, 1, 1], [], []>} : vector<288x128xf32>, vector<128x128xf32>, vector<288x128xf32> -> vector<288x128xf32>
    %25 = arith.addf %20, %24 : vector<288x128xf32>
    %26 = vector.extract_strided_slice %4 {offsets = [19, 0], sizes = [288, 128], strides = [1, 1]} : vector<342x128xf32> to vector<288x128xf32>
    %c4 = arith.constant 4 : index
    %c0_16 = arith.constant 0 : index
    %c0_17 = arith.constant 0 : index
    %27 = vector.load %arg2[%c4, %c0_16, %c0_17] : memref<9x128x128xf32, #tpu.memory_space<vmem>>, vector<1x128x128xf32>
    %28 = vector.shape_cast %27 : vector<1x128x128xf32> to vector<128x128xf32>
    %cst_18 = arith.constant dense<0.000000e+00> : vector<288x128xf32>
    %29 = tpu.matmul %26, %28, %cst_18 {dimension_numbers = #tpu.dot_dimension_numbers<[1], [0], [0], [1], [0, 0, 1, 1], [], []>} : vector<288x128xf32>, vector<128x128xf32>, vector<288x128xf32> -> vector<288x128xf32>
    %30 = arith.addf %25, %29 : vector<288x128xf32>
    %31 = vector.extract_strided_slice %4 {offsets = [20, 0], sizes = [288, 128], strides = [1, 1]} : vector<342x128xf32> to vector<288x128xf32>
    %c5 = arith.constant 5 : index
    %c0_19 = arith.constant 0 : index
    %c0_20 = arith.constant 0 : index
    %32 = vector.load %arg2[%c5, %c0_19, %c0_20] : memref<9x128x128xf32, #tpu.memory_space<vmem>>, vector<1x128x128xf32>
    %33 = vector.shape_cast %32 : vector<1x128x128xf32> to vector<128x128xf32>
    %cst_21 = arith.constant dense<0.000000e+00> : vector<288x128xf32>
    %34 = tpu.matmul %31, %33, %cst_21 {dimension_numbers = #tpu.dot_dimension_numbers<[1], [0], [0], [1], [0, 0, 1, 1], [], []>} : vector<288x128xf32>, vector<128x128xf32>, vector<288x128xf32> -> vector<288x128xf32>
    %35 = arith.addf %30, %34 : vector<288x128xf32>
    %36 = vector.extract_strided_slice %4 {offsets = [36, 0], sizes = [288, 128], strides = [1, 1]} : vector<342x128xf32> to vector<288x128xf32>
    %c6 = arith.constant 6 : index
    %c0_22 = arith.constant 0 : index
    %c0_23 = arith.constant 0 : index
    %37 = vector.load %arg2[%c6, %c0_22, %c0_23] : memref<9x128x128xf32, #tpu.memory_space<vmem>>, vector<1x128x128xf32>
    %38 = vector.shape_cast %37 : vector<1x128x128xf32> to vector<128x128xf32>
    %cst_24 = arith.constant dense<0.000000e+00> : vector<288x128xf32>
    %39 = tpu.matmul %36, %38, %cst_24 {dimension_numbers = #tpu.dot_dimension_numbers<[1], [0], [0], [1], [0, 0, 1, 1], [], []>} : vector<288x128xf32>, vector<128x128xf32>, vector<288x128xf32> -> vector<288x128xf32>
    %40 = arith.addf %35, %39 : vector<288x128xf32>
    %41 = vector.extract_strided_slice %4 {offsets = [37, 0], sizes = [288, 128], strides = [1, 1]} : vector<342x128xf32> to vector<288x128xf32>
    %c7 = arith.constant 7 : index
    %c0_25 = arith.constant 0 : index
    %c0_26 = arith.constant 0 : index
    %42 = vector.load %arg2[%c7, %c0_25, %c0_26] : memref<9x128x128xf32, #tpu.memory_space<vmem>>, vector<1x128x128xf32>
    %43 = vector.shape_cast %42 : vector<1x128x128xf32> to vector<128x128xf32>
    %cst_27 = arith.constant dense<0.000000e+00> : vector<288x128xf32>
    %44 = tpu.matmul %41, %43, %cst_27 {dimension_numbers = #tpu.dot_dimension_numbers<[1], [0], [0], [1], [0, 0, 1, 1], [], []>} : vector<288x128xf32>, vector<128x128xf32>, vector<288x128xf32> -> vector<288x128xf32>
    %45 = arith.addf %40, %44 : vector<288x128xf32>
    %46 = vector.extract_strided_slice %4 {offsets = [38, 0], sizes = [288, 128], strides = [1, 1]} : vector<342x128xf32> to vector<288x128xf32>
    %c8 = arith.constant 8 : index
    %c0_28 = arith.constant 0 : index
    %c0_29 = arith.constant 0 : index
    %47 = vector.load %arg2[%c8, %c0_28, %c0_29] : memref<9x128x128xf32, #tpu.memory_space<vmem>>, vector<1x128x128xf32>
    %48 = vector.shape_cast %47 : vector<1x128x128xf32> to vector<128x128xf32>
    %cst_30 = arith.constant dense<0.000000e+00> : vector<288x128xf32>
    %49 = tpu.matmul %46, %48, %cst_30 {dimension_numbers = #tpu.dot_dimension_numbers<[1], [0], [0], [1], [0, 0, 1, 1], [], []>} : vector<288x128xf32>, vector<128x128xf32>, vector<288x128xf32> -> vector<288x128xf32>
    %50 = arith.addf %45, %49 : vector<288x128xf32>
    %c0_31 = arith.constant 0 : index
    %c0_32 = arith.constant 0 : index
    %c0_33 = arith.constant 0 : index
    %51 = vector.load %arg10[%c0_31, %c0_32, %c0_33] : memref<1x288x128xf32, #tpu.memory_space<vmem>>, vector<1x288x128xf32>
    %52 = vector.shape_cast %51 : vector<1x288x128xf32> to vector<288x128xf32>
    %53 = vector.shape_cast %50 : vector<288x128xf32> to vector<1x288x128xf32>
    tpu.vector_store %arg10[%c0_31, %c0_32, %c0_33], %53 {strides = array<i32>} : memref<1x288x128xf32, #tpu.memory_space<vmem>>, vector<1x288x128xf32>,
    %c0_34 = arith.constant 0 : index
    %c0_35 = arith.constant 0 : index
    %c0_36 = arith.constant 0 : index
    %54 = vector.load %arg3[%c0_34, %c0_35, %c0_36] : memref<1x288x4xf32, #tpu.memory_space<vmem>>, vector<1x288x4xf32>
    %55 = vector.shape_cast %54 : vector<1x288x4xf32> to vector<288x4xf32>
    %c0_37 = arith.constant 0 : index
    %c0_38 = arith.constant 0 : index
    %56 = vector.load %arg4[%c0_37, %c0_38] : memref<4x128xf32, #tpu.memory_space<vmem>>, vector<4x128xf32>
    %cst_39 = arith.constant dense<0.000000e+00> : vector<288x128xf32>
    %57 = tpu.matmul %55, %56, %cst_39 {dimension_numbers = #tpu.dot_dimension_numbers<[1], [0], [0], [1], [0, 0, 1, 1], [], []>} : vector<288x4xf32>, vector<4x128xf32>, vector<288x128xf32> -> vector<288x128xf32>
    %c0_40 = arith.constant 0 : index
    %c0_41 = arith.constant 0 : index
    %c0_42 = arith.constant 0 : index
    %58 = vector.load %arg11[%c0_40, %c0_41, %c0_42] : memref<1x288x128xf32, #tpu.memory_space<vmem>>, vector<1x288x128xf32>
    %59 = vector.shape_cast %58 : vector<1x288x128xf32> to vector<288x128xf32>
    %60 = vector.shape_cast %57 : vector<288x128xf32> to vector<1x288x128xf32>
    tpu.vector_store %arg11[%c0_40, %c0_41, %c0_42], %60 {strides = array<i32>} : memref<1x288x128xf32, #tpu.memory_space<vmem>>, vector<1x288x128xf32>,
    %c0_43 = arith.constant 0 : index
    %c0_44 = arith.constant 0 : index
    %c0_45 = arith.constant 0 : index
    %61 = vector.load %arg5[%c0_43, %c0_44, %c0_45] : memref<1x288x1xf32, #tpu.memory_space<vmem>>, vector<1x288x1xf32>
    %62 = vector.shape_cast %61 : vector<1x288x1xf32> to vector<288x1xf32>
    %63 = vector.broadcast %62 : vector<288x1xf32> to vector<288x128xf32>
    %64 = arith.mulf %50, %63 : vector<288x128xf32>
    %c0_46 = arith.constant 0 : index
    %c0_47 = arith.constant 0 : index
    %65 = vector.load %arg14[%c0_46, %c0_47] : memref<1x128xf32, #tpu.memory_space<vmem>>, vector<1x128xf32>
    %cst_48 = arith.constant dense<0.000000e+00> : vector<128xf32>
    %66 = vector.multi_reduction <add>, %64, %cst_48 [0] : vector<288x128xf32> to vector<128xf32>
    %67 = vector.shape_cast %66 : vector<128xf32> to vector<1x128xf32>
    %68 = arith.addf %65, %67 : vector<1x128xf32>
    %c0_49 = arith.constant 0 : index
    %c0_50 = arith.constant 0 : index
    %69 = vector.load %arg14[%c0_49, %c0_50] : memref<1x128xf32, #tpu.memory_space<vmem>>, vector<1x128xf32>
    tpu.vector_store %arg14[%c0_49, %c0_50], %68 {strides = array<i32>} : memref<1x128xf32, #tpu.memory_space<vmem>>, vector<1x128xf32>,
    %c0_51 = arith.constant 0 : index
    %c0_52 = arith.constant 0 : index
    %70 = vector.load %arg15[%c0_51, %c0_52] : memref<1x128xf32, #tpu.memory_space<vmem>>, vector<1x128xf32>
    %71 = arith.mulf %64, %64 : vector<288x128xf32>
    %cst_53 = arith.constant dense<0.000000e+00> : vector<128xf32>
    %72 = vector.multi_reduction <add>, %71, %cst_53 [0] : vector<288x128xf32> to vector<128xf32>
    %73 = vector.shape_cast %72 : vector<128xf32> to vector<1x128xf32>
    %74 = arith.addf %70, %73 : vector<1x128xf32>
    %c0_54 = arith.constant 0 : index
    %c0_55 = arith.constant 0 : index
    %75 = vector.load %arg15[%c0_54, %c0_55] : memref<1x128xf32, #tpu.memory_space<vmem>>, vector<1x128xf32>
    tpu.vector_store %arg15[%c0_54, %c0_55], %74 {strides = array<i32>} : memref<1x128xf32, #tpu.memory_space<vmem>>, vector<1x128xf32>,
    %c0_56 = arith.constant 0 : index
    %c0_57 = arith.constant 0 : index
    %76 = vector.load %arg16[%c0_56, %c0_57] : memref<1x128xf32, #tpu.memory_space<vmem>>, vector<1x128xf32>
    %cst_58 = arith.constant dense<0.000000e+00> : vector<128xf32>
    %77 = vector.multi_reduction <add>, %57, %cst_58 [0] : vector<288x128xf32> to vector<128xf32>
    %78 = vector.shape_cast %77 : vector<128xf32> to vector<1x128xf32>
    %79 = arith.addf %76, %78 : vector<1x128xf32>
    %c0_59 = arith.constant 0 : index
    %c0_60 = arith.constant 0 : index
    %80 = vector.load %arg16[%c0_59, %c0_60] : memref<1x128xf32, #tpu.memory_space<vmem>>, vector<1x128xf32>
    tpu.vector_store %arg16[%c0_59, %c0_60], %79 {strides = array<i32>} : memref<1x128xf32, #tpu.memory_space<vmem>>, vector<1x128xf32>,
    %c0_61 = arith.constant 0 : index
    %c0_62 = arith.constant 0 : index
    %81 = vector.load %arg17[%c0_61, %c0_62] : memref<1x128xf32, #tpu.memory_space<vmem>>, vector<1x128xf32>
    %82 = arith.mulf %57, %57 : vector<288x128xf32>
    %cst_63 = arith.constant dense<0.000000e+00> : vector<128xf32>
    %83 = vector.multi_reduction <add>, %82, %cst_63 [0] : vector<288x128xf32> to vector<128xf32>
    %84 = vector.shape_cast %83 : vector<128xf32> to vector<1x128xf32>
    %85 = arith.addf %81, %84 : vector<1x128xf32>
    %c0_64 = arith.constant 0 : index
    %c0_65 = arith.constant 0 : index
    %86 = vector.load %arg17[%c0_64, %c0_65] : memref<1x128xf32, #tpu.memory_space<vmem>>, vector<1x128xf32>
    tpu.vector_store %arg17[%c0_64, %c0_65], %85 {strides = array<i32>} : memref<1x128xf32, #tpu.memory_space<vmem>>, vector<1x128xf32>,
    %c1_i32 = arith.constant 1 : i32
    %87 = arith.cmpi eq, %arg0, %c1_i32 : i32
    %88 = arith.extui %87 : i1 to i32
    %c0_i32_66 = arith.constant 0 : i32
    %89 = arith.cmpi ne, %88, %c0_i32_66 : i32
    scf.if %89 {
      %c0_67 = arith.constant 0 : index
      %c0_68 = arith.constant 0 : index
      %90 = vector.load %arg14[%c0_67, %c0_68] : memref<1x128xf32, #tpu.memory_space<vmem>>, vector<1x128xf32>
      %cst_69 = arith.constant 0.001953125 : f32
      %91 = vector.broadcast %cst_69 : f32 to vector<1x128xf32>
      %92 = arith.mulf %90, %91 : vector<1x128xf32>
      %c0_70 = arith.constant 0 : index
      %c0_71 = arith.constant 0 : index
      %93 = vector.load %arg15[%c0_70, %c0_71] : memref<1x128xf32, #tpu.memory_space<vmem>>, vector<1x128xf32>
      %cst_72 = arith.constant 0.001953125 : f32
      %94 = vector.broadcast %cst_72 : f32 to vector<1x128xf32>
      %95 = arith.mulf %93, %94 : vector<1x128xf32>
      %96 = arith.mulf %92, %92 : vector<1x128xf32>
      %97 = arith.subf %95, %96 : vector<1x128xf32>
      %c0_73 = arith.constant 0 : index
      %c0_74 = arith.constant 0 : index
      %98 = vector.load %arg6[%c0_73, %c0_74] : memref<1x128xf32, #tpu.memory_space<vmem>>, vector<1x128xf32>
      %cst_75 = arith.constant 9.99999974E-6 : f32
      %99 = vector.broadcast %cst_75 : f32 to vector<1x128xf32>
      %100 = arith.addf %97, %99 : vector<1x128xf32>
      %101 = math.rsqrt %100 : vector<1x128xf32>
      %102 = arith.mulf %98, %101 : vector<1x128xf32>
      %c0_76 = arith.constant 0 : index
      %c0_77 = arith.constant 0 : index
      %103 = vector.load %arg12[%c0_76, %c0_77] : memref<2x128xf32, #tpu.memory_space<vmem>>, vector<1x128xf32>
      tpu.vector_store %arg12[%c0_76, %c0_77], %102 {strides = array<i32>} : memref<2x128xf32, #tpu.memory_space<vmem>>, vector<1x128xf32>,
      %c0_78 = arith.constant 0 : index
      %c0_79 = arith.constant 0 : index
      %104 = vector.load %arg7[%c0_78, %c0_79] : memref<1x128xf32, #tpu.memory_space<vmem>>, vector<1x128xf32>
      %105 = arith.mulf %92, %102 : vector<1x128xf32>
      %106 = arith.subf %104, %105 : vector<1x128xf32>
      %c1_80 = arith.constant 1 : index
      %c0_81 = arith.constant 0 : index
      %107 = vector.load %arg12[%c1_80, %c0_81] : memref<2x128xf32, #tpu.memory_space<vmem>>, vector<1x128xf32>
      tpu.vector_store %arg12[%c1_80, %c0_81], %106 {strides = array<i32>} : memref<2x128xf32, #tpu.memory_space<vmem>>, vector<1x128xf32>,
      %c0_82 = arith.constant 0 : index
      %c0_83 = arith.constant 0 : index
      %108 = vector.load %arg16[%c0_82, %c0_83] : memref<1x128xf32, #tpu.memory_space<vmem>>, vector<1x128xf32>
      %cst_84 = arith.constant 0.001953125 : f32
      %109 = vector.broadcast %cst_84 : f32 to vector<1x128xf32>
      %110 = arith.mulf %108, %109 : vector<1x128xf32>
      %c0_85 = arith.constant 0 : index
      %c0_86 = arith.constant 0 : index
      %111 = vector.load %arg17[%c0_85, %c0_86] : memref<1x128xf32, #tpu.memory_space<vmem>>, vector<1x128xf32>
      %cst_87 = arith.constant 0.001953125 : f32
      %112 = vector.broadcast %cst_87 : f32 to vector<1x128xf32>
      %113 = arith.mulf %111, %112 : vector<1x128xf32>
      %114 = arith.mulf %110, %110 : vector<1x128xf32>
      %115 = arith.subf %113, %114 : vector<1x128xf32>
      %c0_88 = arith.constant 0 : index
      %c0_89 = arith.constant 0 : index
      %116 = vector.load %arg8[%c0_88, %c0_89] : memref<1x128xf32, #tpu.memory_space<vmem>>, vector<1x128xf32>
      %cst_90 = arith.constant 9.99999974E-6 : f32
      %117 = vector.broadcast %cst_90 : f32 to vector<1x128xf32>
      %118 = arith.addf %115, %117 : vector<1x128xf32>
      %119 = math.rsqrt %118 : vector<1x128xf32>
      %120 = arith.mulf %116, %119 : vector<1x128xf32>
      %c0_91 = arith.constant 0 : index
      %c0_92 = arith.constant 0 : index
      %121 = vector.load %arg13[%c0_91, %c0_92] : memref<2x128xf32, #tpu.memory_space<vmem>>, vector<1x128xf32>
      tpu.vector_store %arg13[%c0_91, %c0_92], %120 {strides = array<i32>} : memref<2x128xf32, #tpu.memory_space<vmem>>, vector<1x128xf32>,
      %c0_93 = arith.constant 0 : index
      %c0_94 = arith.constant 0 : index
      %122 = vector.load %arg9[%c0_93, %c0_94] : memref<1x128xf32, #tpu.memory_space<vmem>>, vector<1x128xf32>
      %123 = arith.mulf %110, %120 : vector<1x128xf32>
      %124 = arith.subf %122, %123 : vector<1x128xf32>
      %c1_95 = arith.constant 1 : index
      %c0_96 = arith.constant 0 : index
      %125 = vector.load %arg13[%c1_95, %c0_96] : memref<2x128xf32, #tpu.memory_space<vmem>>, vector<1x128xf32>
      tpu.vector_store %arg13[%c1_95, %c0_96], %124 {strides = array<i32>} : memref<2x128xf32, #tpu.memory_space<vmem>>, vector<1x128xf32>,
    } else {
    }
    return
  }
  func.func @transform_0(%arg0: i32) -> (i32, i32, i32) {
    %c0_i32 = arith.constant 0 : i32
    %c0_i32_0 = arith.constant 0 : i32
    %c0_i32_1 = arith.constant 0 : i32
    return %arg0, %c0_i32, %c0_i32_0 : i32, i32, i32
  }
  func.func @transform_1(%arg0: i32) -> (i32, i32, i32) {
    %c0_i32 = arith.constant 0 : i32
    %c0_i32_0 = arith.constant 0 : i32
    %c0_i32_1 = arith.constant 0 : i32
    %c0_i32_2 = arith.constant 0 : i32
    return %c0_i32, %c0_i32_0, %c0_i32_1 : i32, i32, i32
  }
  func.func @transform_2(%arg0: i32) -> (i32, i32, i32) {
    %c0_i32 = arith.constant 0 : i32
    %c0_i32_0 = arith.constant 0 : i32
    %c0_i32_1 = arith.constant 0 : i32
    return %arg0, %c0_i32, %c0_i32_0 : i32, i32, i32
  }
  func.func @transform_3(%arg0: i32) -> (i32, i32) {
    %c0_i32 = arith.constant 0 : i32
    %c0_i32_0 = arith.constant 0 : i32
    %c0_i32_1 = arith.constant 0 : i32
    return %c0_i32, %c0_i32_0 : i32, i32
  }
  func.func @transform_4(%arg0: i32) -> (i32, i32, i32) {
    %c0_i32 = arith.constant 0 : i32
    %c0_i32_0 = arith.constant 0 : i32
    %c0_i32_1 = arith.constant 0 : i32
    %c0_i32_2 = arith.constant 0 : i32
    return %c0_i32, %c0_i32_0, %c0_i32_1 : i32, i32, i32
  }
  func.func @transform_5(%arg0: i32) -> (i32, i32) {
    %c0_i32 = arith.constant 0 : i32
    %c0_i32_0 = arith.constant 0 : i32
    %c0_i32_1 = arith.constant 0 : i32
    return %c0_i32, %c0_i32_0 : i32, i32
  }
  func.func @transform_6(%arg0: i32) -> (i32, i32) {
    %c0_i32 = arith.constant 0 : i32
    %c0_i32_0 = arith.constant 0 : i32
    %c0_i32_1 = arith.constant 0 : i32
    return %c0_i32, %c0_i32_0 : i32, i32
  }
  func.func @transform_7(%arg0: i32) -> (i32, i32) {
    %c0_i32 = arith.constant 0 : i32
    %c0_i32_0 = arith.constant 0 : i32
    %c0_i32_1 = arith.constant 0 : i32
    return %c0_i32, %c0_i32_0 : i32, i32
  }
  func.func @transform_8(%arg0: i32) -> (i32, i32) {
    %c0_i32 = arith.constant 0 : i32
    %c0_i32_0 = arith.constant 0 : i32
    %c0_i32_1 = arith.constant 0 : i32
    return %c0_i32, %c0_i32_0 : i32, i32
  }
  func.func @transform_9(%arg0: i32) -> (i32, i32, i32) {
    %c0_i32 = arith.constant 0 : i32
    %c0_i32_0 = arith.constant 0 : i32
    %c0_i32_1 = arith.constant 0 : i32
    return %arg0, %c0_i32, %c0_i32_0 : i32, i32, i32
  }
  func.func @transform_10(%arg0: i32) -> (i32, i32, i32) {
    %c0_i32 = arith.constant 0 : i32
    %c0_i32_0 = arith.constant 0 : i32
    %c0_i32_1 = arith.constant 0 : i32
    return %arg0, %c0_i32, %c0_i32_0 : i32, i32, i32
  }
  func.func @transform_11(%arg0: i32) -> (i32, i32) {
    %c0_i32 = arith.constant 0 : i32
    %c0_i32_0 = arith.constant 0 : i32
    %c0_i32_1 = arith.constant 0 : i32
    return %c0_i32, %c0_i32_0 : i32, i32
  }
  func.func @transform_12(%arg0: i32) -> (i32, i32) {
    %c0_i32 = arith.constant 0 : i32
    %c0_i32_0 = arith.constant 0 : i32
    %c0_i32_1 = arith.constant 0 : i32
    return %c0_i32, %c0_i32_0 : i32, i32
  }
}

</mosaic_0001>

<llo_original>
// kernel: residual_block_forward.5
$region0: #{residual_block_forward.5}
  #allocation0 [shape = 'u32[]', space=smem, size = 0x4, offset = 0x4, fixed_abs, tag = 'smem constant byte address 0x4 - core index']
  #allocation1 [shape = 'u32[144,128]{1,0:T(1,128)}', space=vmem, size = 0x12000, scoped, tag = 'internal scratch']
  %s0 = inlined_call_operand.vmem [shape: f32[512,128], index: 0, kind: input, shape index: {}]
  %s1 = inlined_call_operand.vmem [shape: f32[2,128], index: 1, kind: input, shape index: {}]
  %s2 = inlined_call_operand.vmem [shape: f32[512,128], index: 2, kind: output, shape index: {}]
  %s3 = sld [smem:[#allocation0]]
  $region41: #{residual_block_forward.5} parent=0
    _
  %s5 = ssub.s32 1, %s3
  %s6 = scalar_select 0, %s5, %s3
  loop: start=0, step=1, limit=6
  $region2: #{residual_block_forward.5} parent=0 // loop_pre_header
    _
  $region3: #{residual_block_forward.5} parent=0 // loop_header
    %s8 = sphi 0, %s12
    %p9 = scmp.ge.s32.totalorder %s8, 6
    %s18 = sphi 0, %s20
    %s21 = sphi 0, %s18
    %s22 = sphi 0, %s21
    %s38 = sphi 0, %s22
    %s42 = sphi 0, %s42
    %s44 = sphi 0, %s42
    %s45 = sphi 0, %s44
    %s59 = sphi 0, %s45
    %s65 = sphi 0, %s67
    %s68 = sphi 0, %s65
    %s69 = sphi 0, %s68
    %s85 = sphi 0, %s69
  $region4: #{residual_block_forward.5} parent=0 // loop_header_branch
    %11 = sbr.rel (%p9) target = $region8
  $region5: #{residual_block_forward.5} parent=0 // loop_body
    %s13 = ssub.s32 %s8, 1
    %s14 = ssub.s32 %s8, 2
    %s15 = sadd.s32 %s8, 1
    %s16 = ssub.s32 %s8, %s15
    %p17 = scmp.eq.s32.totalorder %s16, 0
    %s19 = sadd.s32 %s18, 1
    %s20 = scalar_select %p17, %s18, %s19
    %p23 = pneg %p17
    %p24 = scmp.eq.s32.totalorder %s8, 3
    %p25 = por %p23, %p24
    %p26 = scmp.ne.s32.totalorder %s18, %s21
    %p27 = scmp.eq.s32.totalorder %s8, 0
    %p28 = por %p26, %p27
    %p29 = scmp.ne.s32.totalorder %s18, %s21
    %p30 = scmp.eq.s32.totalorder %s13, 3
    %p31 = por %p29, %p30
    %p32 = scmp.ne.s32.totalorder %s21, %s22
    %p33 = scmp.eq.s32.totalorder %s13, 0
    %p34 = por %p32, %p33
    %p35 = scmp.ne.s32.totalorder %s21, %s22
    %p36 = scmp.eq.s32.totalorder %s14, 3
    %p37 = por %p35, %p36
    %p39 = scmp.ne.s32.totalorder %s22, %s38
    %p40 = scmp.eq.s32.totalorder %s14, 0
    %p41 = por %p39, %p40
    %s43 = sadd.s32 %s42, 1
    %p46 = scmp.eq.s32.totalorder %s8, 3
    %p47 = scmp.ne.s32.totalorder %s42, %s44
    %p48 = scmp.eq.s32.totalorder %s8, 0
    %p49 = por %p47, %p48
    %p50 = scmp.ne.s32.totalorder %s42, %s44
    %p51 = scmp.eq.s32.totalorder %s13, 3
    %p52 = por %p50, %p51
    %p53 = scmp.ne.s32.totalorder %s44, %s45
    %p54 = scmp.eq.s32.totalorder %s13, 0
    %p55 = por %p53, %p54
    %p56 = scmp.ne.s32.totalorder %s44, %s45
    %p57 = scmp.eq.s32.totalorder %s14, 3
    %p58 = por %p56, %p57
    %p60 = scmp.ne.s32.totalorder %s45, %s59
    %p61 = scmp.eq.s32.totalorder %s14, 0
    %p62 = por %p60, %p61
    %s63 = ssub.s32 %s8, %s15
    %p64 = scmp.eq.s32.totalorder %s63, 0
    %s66 = sadd.s32 %s65, 1
    %s67 = scalar_select %p64, %s65, %s66
    %p70 = pneg %p64
    %p71 = scmp.eq.s32.totalorder %s8, 3
    %p72 = por %p70, %p71
    %p73 = scmp.ne.s32.totalorder %s65, %s68
    %p74 = scmp.eq.s32.totalorder %s8, 0
    %p75 = por %p73, %p74
    %p76 = scmp.ne.s32.totalorder %s65, %s68
    %p77 = scmp.eq.s32.totalorder %s13, 3
    %p78 = por %p76, %p77
    %p79 = scmp.ne.s32.totalorder %s68, %s69
    %p80 = scmp.eq.s32.totalorder %s13, 0
    %p81 = por %p79, %p80
    %p82 = scmp.ne.s32.totalorder %s68, %s69
    %p83 = scmp.eq.s32.totalorder %s14, 3
    %p84 = por %p82, %p83
    %p86 = scmp.ne.s32.totalorder %s69, %s85
    %p87 = scmp.eq.s32.totalorder %s14, 0
    %p88 = por %p86, %p87
    %p89 = scmp.le.s32.totalorder 1, %s8
    %p90 = scmp.lt.s32.totalorder %s8, 5
    %p91 = pnand %p89, %p90
    %p92 = pneg %p91
    // Predicated region
    $region9: #{residual_block_forward.5} parent=5 // pred_check
      _
    $region10: #{residual_block_forward.5} parent=5 // pred_check_branch
      %94 = sbr.rel (%p91) target = $region12
    $region11: #{residual_block_forward.5} parent=5 // pred_region
      %s95 = ssub.s32 %s8, 1
      // Predicated region
      $region13: #{residual_block_forward.5} parent=11 // pred_check
        %p96 = pneg %p55
      $region14: #{residual_block_forward.5} parent=11 // pred_check_branch
        %98 = sbr.rel (%p96) target = $region16
      $region15: #{residual_block_forward.5} parent=11 // pred_region
        _
      $region16: #{residual_block_forward.5} parent=11 // pred_fallthru
        _
    $region12: #{residual_block_forward.5} parent=5 // pred_fallthru
      _
    %p99 = scmp.lt.s32.totalorder %s8, 4
    // Predicated region
    $region17: #{residual_block_forward.5} parent=5 // pred_check
      %p100 = pneg %p99
    $region18: #{residual_block_forward.5} parent=5 // pred_check_branch
      %102 = sbr.rel (%p100) target = $region20
    $region19: #{residual_block_forward.5} parent=5 // pred_region
      // Predicated region
      $region21: #{residual_block_forward.5} parent=19 // pred_check
        %p103 = pneg %p28
      $region22: #{residual_block_forward.5} parent=19 // pred_check_branch
        %105 = sbr.rel (%p103) target = $region24
      $region23: #{residual_block_forward.5} parent=19 // pred_region
        %s106 = smul.u32 16, %s8
        %p107 = scmp.lt.s32.totalorder %s106, 63
        %s108 = scalar_select %p107, %s106, 63
        %s109 = smul.addr %s108, 8
        %s110 = scalar_lea.vmem %s0, %s109
        %s111 = smul.u32 16, %s8
      $region24: #{residual_block_forward.5} parent=19 // pred_fallthru
        _
    $region20: #{residual_block_forward.5} parent=5 // pred_fallthru
      _
    %p112 = scmp.le.s32.totalorder 1, %s8
    %p113 = scmp.lt.s32.totalorder %s8, 5
    %p114 = pnand %p112, %p113
    %p115 = pneg %p114
    // Predicated region
    $region25: #{residual_block_forward.5} parent=5 // pred_check
      _
    $region26: #{residual_block_forward.5} parent=5 // pred_check_branch
      %117 = sbr.rel (%p114) target = $region28
    $region27: #{residual_block_forward.5} parent=5 // pred_region
      %s118 = ssub.s32 %s8, 1
      %s119 = smul.u32 16, %s13
      %p120 = scmp.lt.s32.totalorder %s119, 63
      %s121 = scalar_select %p120, %s119, 63
      %s122 = smul.addr %s121, 8
      %s123 = scalar_lea.vmem %s0, %s122
      %p124 = pneg %p34
      %p125 = pneg %p31
      %p126 = pneg %p55
      %p127 = pneg %p52
      %p128 = pneg %p81
      %p129 = pneg %p78
      %s130 = smul.u32 16, %s13
      %p131 = scmp.lt.s32.totalorder %s130, 63
      %s132 = scalar_select %p131, %s130, 63
      %s133 = smul.addr %s132, 8
      %s134 = scalar_lea.vmem %s2, %s133
      %s135 = smul.u32 16, %s13
      %p136 = scmp.lt.s32.totalorder %s135, 63
      %s137 = scalar_select %p136, %s135, 63
      %s138 = smul.addr %s137, 8
      %s139 = scalar_lea.vmem %s0, %s138
      %s140 = smul.u32 16, %s13
      %s141 = smul.u32 16, %s13
      %p142 = scmp.lt.s32.totalorder %s141, 63
      %s143 = scalar_select %p142, %s141, 63
      %s144 = smul.addr %s143, 8
      %s145 = scalar_lea.vmem %s2, %s144
      %s146 = smul.u32 16, %s13
      %v147 = vld [vmem:[%s139] sm:$0xff]
      %v148 = vld [vmem:[%s139 + $0x8] sm:$0xff]
      %v149 = vld [vmem:[%s139 + $0x10] sm:$0xff]
      %v150 = vld [vmem:[%s139 + $0x18] sm:$0xff]
      %v151 = vld [vmem:[%s139 + $0x20] sm:$0xff]
      %v152 = vld [vmem:[%s139 + $0x28] sm:$0xff]
      %v153 = vld [vmem:[%s139 + $0x30] sm:$0xff]
      %v154 = vld [vmem:[%s139 + $0x38] sm:$0xff]
      %v155 = vld [vmem:[%s139 + $0x40] sm:$0xff]
      %v156 = vld [vmem:[%s139 + $0x48] sm:$0xff]
      %v157 = vld [vmem:[%s139 + $0x50] sm:$0xff]
      %v158 = vld [vmem:[%s139 + $0x58] sm:$0xff]
      %v159 = vld [vmem:[%s139 + $0x60] sm:$0xff]
      %v160 = vld [vmem:[%s139 + $0x68] sm:$0xff]
      %v161 = vld [vmem:[%s139 + $0x70] sm:$0xff]
      %v162 = vld [vmem:[%s139 + $0x78] sm:$0xff]
      %v163 = vld [vmem:[%s1] sm:$0x1]
      %v164 = vlaneseq
      %v165 = vshrl.u32 %v164, 7
      %v166 = vsub.s32 0, %v165
      %v167 = vrot.slane %v163, %v166
      %v168 = vmul.f32 %v147, %v167
      %v169 = vmul.f32 %v148, %v167
      %v170 = vmul.f32 %v149, %v167
      %v171 = vmul.f32 %v150, %v167
      %v172 = vmul.f32 %v151, %v167
      %v173 = vmul.f32 %v152, %v167
      %v174 = vmul.f32 %v153, %v167
      %v175 = vmul.f32 %v154, %v167
      %v176 = vmul.f32 %v155, %v167
      %v177 = vmul.f32 %v156, %v167
      %v178 = vmul.f32 %v157, %v167
      %v179 = vmul.f32 %v158, %v167
      %v180 = vmul.f32 %v159, %v167
      %v181 = vmul.f32 %v160, %v167
      %v182 = vmul.f32 %v161, %v167
      %v183 = vmul.f32 %v162, %v167
      %v184 = vld [vmem:[%s1 + $0x1] sm:$0x1]
      %v185 = vlaneseq
      %v186 = vshrl.u32 %v185, 7
      %v187 = vsub.s32 0, %v186
      %v188 = vrot.slane %v184, %v187
      %v189 = vadd.f32 %v168, %v188
      %v190 = vadd.f32 %v169, %v188
      %v191 = vadd.f32 %v170, %v188
      %v192 = vadd.f32 %v171, %v188
      %v193 = vadd.f32 %v172, %v188
      %v194 = vadd.f32 %v173, %v188
      %v195 = vadd.f32 %v174, %v188
      %v196 = vadd.f32 %v175, %v188
      %v197 = vadd.f32 %v176, %v188
      %v198 = vadd.f32 %v177, %v188
      %v199 = vadd.f32 %v178, %v188
      %v200 = vadd.f32 %v179, %v188
      %v201 = vadd.f32 %v180, %v188
      %v202 = vadd.f32 %v181, %v188
      %v203 = vadd.f32 %v182, %v188
      %v204 = vadd.f32 %v183, %v188
      %v205 = vmax.f32 %v189, 0.0
      %v206 = vmax.f32 %v190, 0.0
      %v207 = vmax.f32 %v191, 0.0
      %v208 = vmax.f32 %v192, 0.0
      %v209 = vmax.f32 %v193, 0.0
      %v210 = vmax.f32 %v194, 0.0
      %v211 = vmax.f32 %v195, 0.0
      %v212 = vmax.f32 %v196, 0.0
      %v213 = vmax.f32 %v197, 0.0
      %v214 = vmax.f32 %v198, 0.0
      %v215 = vmax.f32 %v199, 0.0
      %v216 = vmax.f32 %v200, 0.0
      %v217 = vmax.f32 %v201, 0.0
      %v218 = vmax.f32 %v202, 0.0
      %v219 = vmax.f32 %v203, 0.0
      %v220 = vmax.f32 %v204, 0.0
      %221 = vst [vmem:[%s145] sm:$0xff] %v205
      %222 = vst [vmem:[%s145 + $0x8] sm:$0xff] %v206
      %223 = vst [vmem:[%s145 + $0x10] sm:$0xff] %v207
      %224 = vst [vmem:[%s145 + $0x18] sm:$0xff] %v208
      %225 = vst [vmem:[%s145 + $0x20] sm:$0xff] %v209
      %226 = vst [vmem:[%s145 + $0x28] sm:$0xff] %v210
      %227 = vst [vmem:[%s145 + $0x30] sm:$0xff] %v211
      %228 = vst [vmem:[%s145 + $0x38] sm:$0xff] %v212
      %229 = vst [vmem:[%s145 + $0x40] sm:$0xff] %v213
      %230 = vst [vmem:[%s145 + $0x48] sm:$0xff] %v214
      %231 = vst [vmem:[%s145 + $0x50] sm:$0xff] %v215
      %232 = vst [vmem:[%s145 + $0x58] sm:$0xff] %v216
      %233 = vst [vmem:[%s145 + $0x60] sm:$0xff] %v217
      %234 = vst [vmem:[%s145 + $0x68] sm:$0xff] %v218
      %235 = vst [vmem:[%s145 + $0x70] sm:$0xff] %v219
      %236 = vst [vmem:[%s145 + $0x78] sm:$0xff] %v220
      %s237 = smul.u32 16, %s13
      %p238 = scmp.lt.s32.totalorder %s237, 63
      %s239 = scalar_select %p238, %s237, 63
      %s240 = smul.addr %s239, 8
      %s241 = scalar_lea.vmem %s2, %s240
      // Predicated region
      $region29: #{residual_block_forward.5} parent=27 // pred_check
        %p242 = pneg %p78
      $region30: #{residual_block_forward.5} parent=27 // pred_check_branch
        %244 = sbr.rel (%p242) target = $region32
      $region31: #{residual_block_forward.5} parent=27 // pred_region
        %s245 = smul.u32 16, %s13
      $region32: #{residual_block_forward.5} parent=27 // pred_fallthru
        _
    $region28: #{residual_block_forward.5} parent=5 // pred_fallthru
      _
    %p246 = scmp.le.s32.totalorder 2, %s8
    // Predicated region
    $region33: #{residual_block_forward.5} parent=5 // pred_check
      %p247 = pneg %p246
    $region34: #{residual_block_forward.5} parent=5 // pred_check_branch
      %249 = sbr.rel (%p247) target = $region36
    $region35: #{residual_block_forward.5} parent=5 // pred_region
      %s250 = ssub.s32 %s8, 2
      // Predicated region
      $region37: #{residual_block_forward.5} parent=35 // pred_check
        %p251 = pneg %p84
      $region38: #{residual_block_forward.5} parent=35 // pred_check_branch
        %253 = sbr.rel (%p251) target = $region40
      $region39: #{residual_block_forward.5} parent=35 // pred_region
        %s254 = smul.u32 16, %s14
        %p255 = scmp.lt.s32.totalorder %s254, 63
        %s256 = scalar_select %p255, %s254, 63
        %s257 = smul.addr %s256, 8
        %s258 = scalar_lea.vmem %s2, %s257
      $region40: #{residual_block_forward.5} parent=35 // pred_fallthru
        _
    $region36: #{residual_block_forward.5} parent=5 // pred_fallthru
      _
  $region6: #{residual_block_forward.5} parent=0 // loop_footer
    %s12 = sadd.s32 1, %s8
  $region7: #{residual_block_forward.5} parent=0 // loop_footer_branch
    %7 = sbr.rel target = $region3
  $region8: #{residual_block_forward.5} parent=0 // loop_exit
    _

// kernel: residual_block_forward.4
$region0: #{residual_block_forward.4}
  #allocation0 [shape = 'u32[]', space=smem, size = 0x4, offset = 0x4, fixed_abs, tag = 'smem constant byte address 0x4 - core index']
  #allocation1 [shape = 'u32[144,128]{1,0:T(1,128)}', space=vmem, size = 0x12000, scoped, tag = 'internal scratch']
  #allocation2 [shape = 'f32[1,128]{1,0:T(1,128)}', space=vmem, size = 0x200, scoped, tag = 'scratch operand']
  #allocation3 [shape = 'f32[1,128]{1,0:T(1,128)}', space=vmem, size = 0x200, scoped, tag = 'scratch operand']
  %s0 = inlined_call_operand.vmem [shape: f32[512,36], index: 0, kind: input, shape index: {}]
  %s1 = inlined_call_operand.vmem [shape: f32[36,128], index: 1, kind: input, shape index: {}]
  %s2 = inlined_call_operand.vmem [shape: f32[1,128], index: 2, kind: input, shape index: {}]
  %s3 = inlined_call_operand.vmem [shape: f32[1,128], index: 3, kind: input, shape index: {}]
  %s4 = inlined_call_operand.vmem [shape: f32[512,128], index: 4, kind: output, shape index: {0}]
  %s5 = inlined_call_operand.vmem [shape: f32[2,128], index: 5, kind: output, shape index: {1}]
  %6 = xla_tuple %s4, %s5
  %s7 = sld [smem:[#allocation0]]
  $region65: #{residual_block_forward.4} parent=0
    _
  %s9 = ssub.s32 1, %s7
  %s10 = scalar_select 0, %s9, %s7
  loop: start=0, step=1, limit=6
  $region2: #{residual_block_forward.4} parent=0 // loop_pre_header
    _
  $region3: #{residual_block_forward.4} parent=0 // loop_header
    %s12 = sphi 0, %s16
    %p13 = scmp.ge.s32.totalorder %s12, 6
    %s22 = sphi 0, %s24
    %s25 = sphi 0, %s22
    %s26 = sphi 0, %s25
    %s42 = sphi 0, %s26
    %s46 = sphi 0, %s46
    %s48 = sphi 0, %s46
    %s49 = sphi 0, %s48
    %s63 = sphi 0, %s49
    %s67 = sphi 0, %s67
    %s69 = sphi 0, %s67
    %s70 = sphi 0, %s69
    %s84 = sphi 0, %s70
    %s88 = sphi 0, %s88
    %s90 = sphi 0, %s88
    %s91 = sphi 0, %s90
    %s105 = sphi 0, %s91
    %s111 = sphi 0, %s113
    %s114 = sphi 0, %s111
    %s115 = sphi 0, %s114
    %s131 = sphi 0, %s115
    %s135 = sphi 0, %s135
    %s137 = sphi 0, %s135
    %s138 = sphi 0, %s137
    %s152 = sphi 0, %s138
  $region4: #{residual_block_forward.4} parent=0 // loop_header_branch
    %15 = sbr.rel (%p13) target = $region8
  $region5: #{residual_block_forward.4} parent=0 // loop_body
    %s17 = ssub.s32 %s12, 1
    %s18 = ssub.s32 %s12, 2
    %s19 = sadd.s32 %s12, 1
    %s20 = ssub.s32 %s12, %s19
    %p21 = scmp.eq.s32.totalorder %s20, 0
    %s23 = sadd.s32 %s22, 1
    %s24 = scalar_select %p21, %s22, %s23
    %p27 = pneg %p21
    %p28 = scmp.eq.s32.totalorder %s12, 3
    %p29 = por %p27, %p28
    %p30 = scmp.ne.s32.totalorder %s22, %s25
    %p31 = scmp.eq.s32.totalorder %s12, 0
    %p32 = por %p30, %p31
    %p33 = scmp.ne.s32.totalorder %s22, %s25
    %p34 = scmp.eq.s32.totalorder %s17, 3
    %p35 = por %p33, %p34
    %p36 = scmp.ne.s32.totalorder %s25, %s26
    %p37 = scmp.eq.s32.totalorder %s17, 0
    %p38 = por %p36, %p37
    %p39 = scmp.ne.s32.totalorder %s25, %s26
    %p40 = scmp.eq.s32.totalorder %s18, 3
    %p41 = por %p39, %p40
    %p43 = scmp.ne.s32.totalorder %s26, %s42
    %p44 = scmp.eq.s32.totalorder %s18, 0
    %p45 = por %p43, %p44
    %s47 = sadd.s32 %s46, 1
    %p50 = scmp.eq.s32.totalorder %s12, 3
    %p51 = scmp.ne.s32.totalorder %s46, %s48
    %p52 = scmp.eq.s32.totalorder %s12, 0
    %p53 = por %p51, %p52
    %p54 = scmp.ne.s32.totalorder %s46, %s48
    %p55 = scmp.eq.s32.totalorder %s17, 3
    %p56 = por %p54, %p55
    %p57 = scmp.ne.s32.totalorder %s48, %s49
    %p58 = scmp.eq.s32.totalorder %s17, 0
    %p59 = por %p57, %p58
    %p60 = scmp.ne.s32.totalorder %s48, %s49
    %p61 = scmp.eq.s32.totalorder %s18, 3
    %p62 = por %p60, %p61
    %p64 = scmp.ne.s32.totalorder %s49, %s63
    %p65 = scmp.eq.s32.totalorder %s18, 0
    %p66 = por %p64, %p65
    %s68 = sadd.s32 %s67, 1
    %p71 = scmp.eq.s32.totalorder %s12, 3
    %p72 = scmp.ne.s32.totalorder %s67, %s69
    %p73 = scmp.eq.s32.totalorder %s12, 0
    %p74 = por %p72, %p73
    %p75 = scmp.ne.s32.totalorder %s67, %s69
    %p76 = scmp.eq.s32.totalorder %s17, 3
    %p77 = por %p75, %p76
    %p78 = scmp.ne.s32.totalorder %s69, %s70
    %p79 = scmp.eq.s32.totalorder %s17, 0
    %p80 = por %p78, %p79
    %p81 = scmp.ne.s32.totalorder %s69, %s70
    %p82 = scmp.eq.s32.totalorder %s18, 3
    %p83 = por %p81, %p82
    %p85 = scmp.ne.s32.totalorder %s70, %s84
    %p86 = scmp.eq.s32.totalorder %s18, 0
    %p87 = por %p85, %p86
    %s89 = sadd.s32 %s88, 1
    %p92 = scmp.eq.s32.totalorder %s12, 3
    %p93 = scmp.ne.s32.totalorder %s88, %s90
    %p94 = scmp.eq.s32.totalorder %s12, 0
    %p95 = por %p93, %p94
    %p96 = scmp.ne.s32.totalorder %s88, %s90
    %p97 = scmp.eq.s32.totalorder %s17, 3
    %p98 = por %p96, %p97
    %p99 = scmp.ne.s32.totalorder %s90, %s91
    %p100 = scmp.eq.s32.totalorder %s17, 0
    %p101 = por %p99, %p100
    %p102 = scmp.ne.s32.totalorder %s90, %s91
    %p103 = scmp.eq.s32.totalorder %s18, 3
    %p104 = por %p102, %p103
    %p106 = scmp.ne.s32.totalorder %s91, %s105
    %p107 = scmp.eq.s32.totalorder %s18, 0
    %p108 = por %p106, %p107
    %s109 = ssub.s32 %s12, %s19
    %p110 = scmp.eq.s32.totalorder %s109, 0
    %s112 = sadd.s32 %s111, 1
    %s113 = scalar_select %p110, %s111, %s112
    %p116 = pneg %p110
    %p117 = scmp.eq.s32.totalorder %s12, 3
    %p118 = por %p116, %p117
    %p119 = scmp.ne.s32.totalorder %s111, %s114
    %p120 = scmp.eq.s32.totalorder %s12, 0
    %p121 = por %p119, %p120
    %p122 = scmp.ne.s32.totalorder %s111, %s114
    %p123 = scmp.eq.s32.totalorder %s17, 3
    %p124 = por %p122, %p123
    %p125 = scmp.ne.s32.totalorder %s114, %s115
    %p126 = scmp.eq.s32.totalorder %s17, 0
    %p127 = por %p125, %p126
    %p128 = scmp.ne.s32.totalorder %s114, %s115
    %p129 = scmp.eq.s32.totalorder %s18, 3
    %p130 = por %p128, %p129
    %p132 = scmp.ne.s32.totalorder %s115, %s131
    %p133 = scmp.eq.s32.totalorder %s18, 0
    %p134 = por %p132, %p133
    %s136 = sadd.s32 %s135, 1
    %p139 = scmp.eq.s32.totalorder %s12, 3
    %p140 = scmp.ne.s32.totalorder %s135, %s137
    %p141 = scmp.eq.s32.totalorder %s12, 0
    %p142 = por %p140, %p141
    %p143 = scmp.ne.s32.totalorder %s135, %s137
    %p144 = scmp.eq.s32.totalorder %s17, 3
    %p145 = por %p143, %p144
    %p146 = scmp.ne.s32.totalorder %s137, %s138
    %p147 = scmp.eq.s32.totalorder %s17, 0
    %p148 = por %p146, %p147
    %p149 = scmp.ne.s32.totalorder %s137, %s138
    %p150 = scmp.eq.s32.totalorder %s18, 3
    %p151 = por %p149, %p150
    %p153 = scmp.ne.s32.totalorder %s138, %s152
    %p154 = scmp.eq.s32.totalorder %s18, 0
    %p155 = por %p153, %p154
    %p156 = scmp.le.s32.totalorder 1, %s12
    %p157 = scmp.lt.s32.totalorder %s12, 5
    %p158 = pnand %p156, %p157
    %p159 = pneg %p158
    // Predicated region
    $region9: #{residual_block_forward.4} parent=5 // pred_check
      _
    $region10: #{residual_block_forward.4} parent=5 // pred_check_branch
      %161 = sbr.rel (%p158) target = $region12
    $region11: #{residual_block_forward.4} parent=5 // pred_region
      %s162 = ssub.s32 %s12, 1
      // Predicated region
      $region13: #{residual_block_forward.4} parent=11 // pred_check
        %p163 = pneg %p59
      $region14: #{residual_block_forward.4} parent=11 // pred_check_branch
        %165 = sbr.rel (%p163) target = $region16
      $region15: #{residual_block_forward.4} parent=11 // pred_region
        _
      $region16: #{residual_block_forward.4} parent=11 // pred_fallthru
        _
      // Predicated region
      $region17: #{residual_block_forward.4} parent=11 // pred_check
        %p166 = pneg %p80
      $region18: #{residual_block_forward.4} parent=11 // pred_check_branch
        %168 = sbr.rel (%p166) target = $region20
      $region19: #{residual_block_forward.4} parent=11 // pred_region
        _
      $region20: #{residual_block_forward.4} parent=11 // pred_fallthru
        _
      // Predicated region
      $region21: #{residual_block_forward.4} parent=11 // pred_check
        %p169 = pneg %p101
      $region22: #{residual_block_forward.4} parent=11 // pred_check_branch
        %171 = sbr.rel (%p169) target = $region24
      $region23: #{residual_block_forward.4} parent=11 // pred_region
        _
      $region24: #{residual_block_forward.4} parent=11 // pred_fallthru
        _
    $region12: #{residual_block_forward.4} parent=5 // pred_fallthru
      _
    %p172 = scmp.lt.s32.totalorder %s12, 4
    // Predicated region
    $region25: #{residual_block_forward.4} parent=5 // pred_check
      %p173 = pneg %p172
    $region26: #{residual_block_forward.4} parent=5 // pred_check_branch
      %175 = sbr.rel (%p173) target = $region28
    $region27: #{residual_block_forward.4} parent=5 // pred_region
      // Predicated region
      $region29: #{residual_block_forward.4} parent=27 // pred_check
        %p176 = pneg %p32
      $region30: #{residual_block_forward.4} parent=27 // pred_check_branch
        %178 = sbr.rel (%p176) target = $region32
      $region31: #{residual_block_forward.4} parent=27 // pred_region
        %s179 = smul.u32 16, %s12
        %p180 = scmp.lt.s32.totalorder %s179, 63
        %s181 = scalar_select %p180, %s179, 63
        %s182 = smul.addr %s181, 8
        %s183 = scalar_lea.vmem %s0, %s182
        %s184 = smul.u32 16, %s12
      $region32: #{residual_block_forward.4} parent=27 // pred_fallthru
        _
    $region28: #{residual_block_forward.4} parent=5 // pred_fallthru
      _
    %p185 = scmp.le.s32.totalorder 1, %s12
    %p186 = scmp.lt.s32.totalorder %s12, 5
    %p187 = pnand %p185, %p186
    %p188 = pneg %p187
    // Predicated region
    $region33: #{residual_block_forward.4} parent=5 // pred_check
      _
    $region34: #{residual_block_forward.4} parent=5 // pred_check_branch
      %190 = sbr.rel (%p187) target = $region36
    $region35: #{residual_block_forward.4} parent=5 // pred_region
      %s191 = ssub.s32 %s12, 1
      %s192 = smul.u32 16, %s17
      %p193 = scmp.lt.s32.totalorder %s192, 63
      %s194 = scalar_select %p193, %s192, 63
      %s195 = smul.addr %s194, 8
      %s196 = scalar_lea.vmem %s0, %s195
      %p197 = pneg %p38
      %p198 = pneg %p35
      %p199 = pneg %p59
      %p200 = pneg %p56
      %p201 = pneg %p80
      %p202 = pneg %p77
      %p203 = pneg %p101
      %p204 = pneg %p98
      %p205 = pneg %p127
      %p206 = pneg %p124
      %s207 = smul.u32 16, %s17
      %p208 = scmp.lt.s32.totalorder %s207, 63
      %s209 = scalar_select %p208, %s207, 63
      %s210 = smul.addr %s209, 8
      %s211 = scalar_lea.vmem %s4, %s210
      %p212 = pneg %p148
      %p213 = pneg %p145
      %s214 = smul.u32 16, %s17
      %p215 = scmp.lt.s32.totalorder %s214, 63
      %s216 = scalar_select %p215, %s214, 63
      %s217 = smul.addr %s216, 8
      %s218 = scalar_lea.vmem %s0, %s217
      %s219 = smul.u32 16, %s17
      %s220 = smul.u32 16, %s17
      %p221 = scmp.lt.s32.totalorder %s220, 63
      %s222 = scalar_select %p221, %s220, 63
      %s223 = smul.addr %s222, 8
      %s224 = scalar_lea.vmem %s4, %s223
      %s225 = smul.u32 16, %s17
      %p226 = scmp.eq.s32.totalorder %s17, 0
      // Predicated region
      $region37: #{residual_block_forward.4} parent=35 // pred_check
        %p227 = pneg %p226
      $region38: #{residual_block_forward.4} parent=35 // pred_check_branch
        %229 = sbr.rel (%p227) target = $region40
      $region39: #{residual_block_forward.4} parent=35 // pred_region
        %230 = vst [vmem:[#allocation2] sm:$0x1] 0.0
        %231 = vst [vmem:[#allocation3] sm:$0x1] 0.0
      $region40: #{residual_block_forward.4} parent=35 // pred_fallthru
        _
      %v232 = vld [vmem:[%s218] sm:$0xff]
      %v233 = vld [vmem:[%s218 + $0x8] sm:$0xff]
      %v234 = vld [vmem:[%s218 + $0x10] sm:$0xff]
      %v235 = vld [vmem:[%s218 + $0x18] sm:$0xff]
      %v236 = vld [vmem:[%s218 + $0x20] sm:$0xff]
      %v237 = vld [vmem:[%s218 + $0x28] sm:$0xff]
      %v238 = vld [vmem:[%s218 + $0x30] sm:$0xff]
      %v239 = vld [vmem:[%s218 + $0x38] sm:$0xff]
      %v240 = vld [vmem:[%s218 + $0x40] sm:$0xff]
      %v241 = vld [vmem:[%s218 + $0x48] sm:$0xff]
      %v242 = vld [vmem:[%s218 + $0x50] sm:$0xff]
      %v243 = vld [vmem:[%s218 + $0x58] sm:$0xff]
      %v244 = vld [vmem:[%s218 + $0x60] sm:$0xff]
      %v245 = vld [vmem:[%s218 + $0x68] sm:$0xff]
      %v246 = vld [vmem:[%s218 + $0x70] sm:$0xff]
      %v247 = vld [vmem:[%s218 + $0x78] sm:$0xff]
      %v248 = vld [vmem:[%s1] sm:$0xff]
      %v249 = vld [vmem:[%s1 + $0x8] sm:$0xff]
      %v250 = vld [vmem:[%s1 + $0x10] sm:$0xff]
      %v251 = vld [vmem:[%s1 + $0x18] sm:$0xff]
      %v252 = vld [vmem:[%s1 + $0x20] sm:$0xf]
      %vm253 = vcmask 293888
      %v255 = vsel %vm253, %v232, 0
      %v258 = vsel %vm253, %v233, 0
      %v261 = vsel %vm253, %v234, 0
      %v264 = vsel %vm253, %v235, 0
      %v267 = vsel %vm253, %v236, 0
      %v270 = vsel %vm253, %v237, 0
      %v273 = vsel %vm253, %v238, 0
      %v276 = vsel %vm253, %v239, 0
      %v279 = vsel %vm253, %v240, 0
      %v282 = vsel %vm253, %v241, 0
      %v285 = vsel %vm253, %v242, 0
      %v288 = vsel %vm253, %v243, 0
      %v291 = vsel %vm253, %v244, 0
      %v294 = vsel %vm253, %v245, 0
      %v297 = vsel %vm253, %v246, 0
      %v300 = vsel %vm253, %v247, 0
      %vm302 = vcmask 1043456
      %v304 = vsel %vm302, %v252, 0
      %306 = vmatprep.subr.mxu0 0.0
      %307 = vmatpush1.msra.mxu0 %v248
      %308 = vmatprep.subr.mxu0 0.0
      %309 = vmatpush1.msra.mxu0 %v249
      %310 = vmatprep.subr.mxu0 0.0
      %311 = vmatpush1.msra.mxu0 %v250
      %312 = vmatprep.subr.mxu0 0.0
      %313 = vmatpush1.msra.mxu0 %v251
      %314 = vmatprep.subr.mxu0 0.0
      %315 = vmatpush1.msra.mxu0 %v304
      %316 = vmatprep.subr.mxu0 0.0
      %317 = vmatpush1.msra.mxu0 0.0
      %318 = vmatprep.subr.mxu0 0.0
      %319 = vmatpush1.msra.mxu0 0.0
      %320 = vmatprep.subr.mxu0 0.0
      %321 = vmatpush1.msra.mxu0 0.0
      %322 = vmatprep.subr.mxu0 0.0
      %323 = vmatpush1.msra.mxu0 0.0
      %324 = vmatprep.subr.mxu0 0.0
      %325 = vmatpush1.msra.mxu0 0.0
      %326 = vmatprep.subr.mxu0 0.0
      %327 = vmatpush1.msra.mxu0 0.0
      %328 = vmatprep.subr.mxu0 0.0
      %329 = vmatpush1.msra.mxu0 0.0
      %330 = vmatprep.subr.mxu0 0.0
      %331 = vmatpush1.msra.mxu0 0.0
      %332 = vmatprep.subr.mxu0 0.0
      %333 = vmatpush1.msra.mxu0 0.0
      %334 = vmatprep.subr.mxu0 0.0
      %335 = vmatpush1.msra.mxu0 0.0
      %336 = vmatprep.subr.mxu0 0.0
      %337 = vmatpush1.msra.mxu0 0.0
      %338 = vmatprep.subr.mxu0 0.0
      %339 = vmatpush1.msra.mxu0 0.0
      %340 = vmatprep.subr.mxu0 0.0
      %341 = vmatpush1.msra.mxu0 0.0
      %342 = vmatprep.subr.mxu0 0.0
      %343 = vmatpush1.msra.mxu0 0.0
      %344 = vmatprep.subr.mxu0 0.0
      %345 = vmatpush1.msra.mxu0 0.0
      %346 = vmatprep.subr.mxu0 0.0
      %347 = vmatpush1.msra.mxu0 0.0
      %348 = vmatprep.subr.mxu0 0.0
      %349 = vmatpush1.msra.mxu0 0.0
      %350 = vmatprep.subr.mxu0 0.0
      %351 = vmatpush1.msra.mxu0 0.0
      %352 = vmatprep.subr.mxu0 0.0
      %353 = vmatpush1.msra.mxu0 0.0
      %354 = vmatprep.subr.mxu0 0.0
      %355 = vmatpush1.msra.mxu0 0.0
      %356 = vmatprep.subr.mxu0 0.0
      %357 = vmatpush1.msra.mxu0 0.0
      %358 = vmatprep.subr.mxu0 0.0
      %359 = vmatpush1.msra.mxu0 0.0
      %360 = vmatprep.subr.mxu0 0.0
      %361 = vmatpush1.msra.mxu0 0.0
      %362 = vmatprep.subr.mxu0 0.0
      %363 = vmatpush1.msra.mxu0 0.0
      %364 = vmatprep.subr.mxu0 0.0
      %365 = vmatpush1.msra.mxu0 0.0
      %366 = vmatprep.subr.mxu0 0.0
      %367 = vmatpush1.msra.mxu0 0.0
      %368 = vmatprep.subr.mxu0 0.0
      %369 = vmatpush1.msra.mxu0 0.0
      %370 = vmatprep.mubr.f32.mxu0 0.0
      %371 = vmatmul.mubr.f32.gmra.mrb[0].mxu0 %v255
      %v372 = vpop.f32.mrb[0].mxu0
      %v373 = vadd.f32 0.0, %v372
      %v374 = vpop.f32.mrb[0].mxu0
      %375 = vmatprep.mubr.f32.mxu0 0.0
      %376 = vmatmul.mubr.f32.gmra.mrb[0].mxu0 %v258
      %v377 = vpop.f32.mrb[0].mxu0
      %v378 = vadd.f32 0.0, %v377
      %v379 = vpop.f32.mrb[0].mxu0
      %380 = vmatprep.mubr.f32.mxu0 0.0
      %381 = vmatmul.mubr.f32.gmra.mrb[0].mxu0 %v261
      %v382 = vpop.f32.mrb[0].mxu0
      %v383 = vadd.f32 0.0, %v382
      %v384 = vpop.f32.mrb[0].mxu0
      %385 = vmatprep.mubr.f32.mxu0 0.0
      %386 = vmatmul.mubr.f32.gmra.mrb[0].mxu0 %v264
      %v387 = vpop.f32.mrb[0].mxu0
      %v388 = vadd.f32 0.0, %v387
      %v389 = vpop.f32.mrb[0].mxu0
      %390 = vmatprep.mubr.f32.mxu0 0.0
      %391 = vmatmul.mubr.f32.gmra.mrb[0].mxu0 %v267
      %v392 = vpop.f32.mrb[0].mxu0
      %v393 = vadd.f32 0.0, %v392
      %v394 = vpop.f32.mrb[0].mxu0
      %395 = vmatprep.mubr.f32.mxu0 0.0
      %396 = vmatmul.mubr.f32.gmra.mrb[0].mxu0 %v270
      %v397 = vpop.f32.mrb[0].mxu0
      %v398 = vadd.f32 0.0, %v397
      %v399 = vpop.f32.mrb[0].mxu0
      %400 = vmatprep.mubr.f32.mxu0 0.0
      %401 = vmatmul.mubr.f32.gmra.mrb[0].mxu0 %v273
      %v402 = vpop.f32.mrb[0].mxu0
      %v403 = vadd.f32 0.0, %v402
      %v404 = vpop.f32.mrb[0].mxu0
      %405 = vmatprep.mubr.f32.mxu0 0.0
      %406 = vmatmul.mubr.f32.gmra.mrb[0].mxu0 %v276
      %v407 = vpop.f32.mrb[0].mxu0
      %v408 = vadd.f32 0.0, %v407
      %v409 = vpop.f32.mrb[0].mxu0
      %410 = vmatprep.mubr.f32.mxu0 0.0
      %411 = vmatmul.mubr.f32.gmra.mrb[0].mxu0 %v279
      %v412 = vpop.f32.mrb[0].mxu0
      %v413 = vadd.f32 0.0, %v412
      %v414 = vpop.f32.mrb[0].mxu0
      %415 = vmatprep.mubr.f32.mxu0 0.0
      %416 = vmatmul.mubr.f32.gmra.mrb[0].mxu0 %v282
      %v417 = vpop.f32.mrb[0].mxu0
      %v418 = vadd.f32 0.0, %v417
      %v419 = vpop.f32.mrb[0].mxu0
      %420 = vmatprep.mubr.f32.mxu0 0.0
      %421 = vmatmul.mubr.f32.gmra.mrb[0].mxu0 %v285
      %v422 = vpop.f32.mrb[0].mxu0
      %v423 = vadd.f32 0.0, %v422
      %v424 = vpop.f32.mrb[0].mxu0
      %425 = vmatprep.mubr.f32.mxu0 0.0
      %426 = vmatmul.mubr.f32.gmra.mrb[0].mxu0 %v288
      %v427 = vpop.f32.mrb[0].mxu0
      %v428 = vadd.f32 0.0, %v427
      %v429 = vpop.f32.mrb[0].mxu0
      %430 = vmatprep.mubr.f32.mxu0 0.0
      %431 = vmatmul.mubr.f32.gmra.mrb[0].mxu0 %v291
      %v432 = vpop.f32.mrb[0].mxu0
      %v433 = vadd.f32 0.0, %v432
      %v434 = vpop.f32.mrb[0].mxu0
      %435 = vmatprep.mubr.f32.mxu0 0.0
      %436 = vmatmul.mubr.f32.gmra.mrb[0].mxu0 %v294
      %v437 = vpop.f32.mrb[0].mxu0
      %v438 = vadd.f32 0.0, %v437
      %v439 = vpop.f32.mrb[0].mxu0
      %440 = vmatprep.mubr.f32.mxu0 0.0
      %441 = vmatmul.mubr.f32.gmra.mrb[0].mxu0 %v297
      %v442 = vpop.f32.mrb[0].mxu0
      %v443 = vadd.f32 0.0, %v442
      %v444 = vpop.f32.mrb[0].mxu0
      %445 = vmatprep.mubr.f32.mxu0 0.0
      %446 = vmatmul.mubr.f32.gmra.mrb[0].mxu0 %v300
      %v447 = vpop.f32.mrb[0].mxu0
      %v448 = vadd.f32 0.0, %v447
      %v449 = vpop.f32.mrb[0].mxu0
      %450 = vdwg.mxu0
      %451 = vst [vmem:[%s224] sm:$0xff] %v373
      %452 = vst [vmem:[%s224 + $0x8] sm:$0xff] %v378
      %453 = vst [vmem:[%s224 + $0x10] sm:$0xff] %v383
      %454 = vst [vmem:[%s224 + $0x18] sm:$0xff] %v388
      %455 = vst [vmem:[%s224 + $0x20] sm:$0xff] %v393
      %456 = vst [vmem:[%s224 + $0x28] sm:$0xff] %v398
      %457 = vst [vmem:[%s224 + $0x30] sm:$0xff] %v403
      %458 = vst [vmem:[%s224 + $0x38] sm:$0xff] %v408
      %459 = vst [vmem:[%s224 + $0x40] sm:$0xff] %v413
      %460 = vst [vmem:[%s224 + $0x48] sm:$0xff] %v418
      %461 = vst [vmem:[%s224 + $0x50] sm:$0xff] %v423
      %462 = vst [vmem:[%s224 + $0x58] sm:$0xff] %v428
      %463 = vst [vmem:[%s224 + $0x60] sm:$0xff] %v433
      %464 = vst [vmem:[%s224 + $0x68] sm:$0xff] %v438
      %465 = vst [vmem:[%s224 + $0x70] sm:$0xff] %v443
      %466 = vst [vmem:[%s224 + $0x78] sm:$0xff] %v448
      %v467 = vld [vmem:[#allocation2] sm:$0x1]
      %v468 = vadd.f32 %v373, %v378
      %v469 = vadd.f32 %v468, %v383
      %v470 = vadd.f32 %v469, %v388
      %v471 = vadd.f32 %v470, %v393
      %v472 = vadd.f32 %v471, %v398
      %v473 = vadd.f32 %v472, %v403
      %v474 = vadd.f32 %v473, %v408
      %v475 = vadd.f32 %v474, %v413
      %v476 = vadd.f32 %v475, %v418
      %v477 = vadd.f32 %v476, %v423
      %v478 = vadd.f32 %v477, %v428
      %v479 = vadd.f32 %v478, %v433
      %v480 = vadd.f32 %v479, %v438
      %v481 = vadd.f32 %v480, %v443
      %v482 = vadd.f32 %v481, %v448
      %v483 = vrot.slane %v482, 4
      %v484 = vadd.f32 %v482, %v483
      %v485 = vrot.slane %v484, 2
      %v486 = vadd.f32 %v484, %v485
      %v487 = vrot.slane %v486, 1
      %v488 = vadd.f32 %v486, %v487
      %v489 = vadd.f32 %v467, %v488
      %490 = vst [vmem:[#allocation2] sm:$0x1] %v489
      %v491 = vld [vmem:[#allocation3] sm:$0x1]
      %v492 = vmul.f32 %v373, %v373
      %v493 = vmul.f32 %v378, %v378
      %v494 = vmul.f32 %v383, %v383
      %v495 = vmul.f32 %v388, %v388
      %v496 = vmul.f32 %v393, %v393
      %v497 = vmul.f32 %v398, %v398
      %v498 = vmul.f32 %v403, %v403
      %v499 = vmul.f32 %v408, %v408
      %v500 = vmul.f32 %v413, %v413
      %v501 = vmul.f32 %v418, %v418
      %v502 = vmul.f32 %v423, %v423
      %v503 = vmul.f32 %v428, %v428
      %v504 = vmul.f32 %v433, %v433
      %v505 = vmul.f32 %v438, %v438
      %v506 = vmul.f32 %v443, %v443
      %v507 = vmul.f32 %v448, %v448
      %v508 = vadd.f32 %v492, %v493
      %v509 = vadd.f32 %v508, %v494
      %v510 = vadd.f32 %v509, %v495
      %v511 = vadd.f32 %v510, %v496
      %v512 = vadd.f32 %v511, %v497
      %v513 = vadd.f32 %v512, %v498
      %v514 = vadd.f32 %v513, %v499
      %v515 = vadd.f32 %v514, %v500
      %v516 = vadd.f32 %v515, %v501
      %v517 = vadd.f32 %v516, %v502
      %v518 = vadd.f32 %v517, %v503
      %v519 = vadd.f32 %v518, %v504
      %v520 = vadd.f32 %v519, %v505
      %v521 = vadd.f32 %v520, %v506
      %v522 = vadd.f32 %v521, %v507
      %v523 = vrot.slane %v522, 4
      %v524 = vadd.f32 %v522, %v523
      %v525 = vrot.slane %v524, 2
      %v526 = vadd.f32 %v524, %v525
      %v527 = vrot.slane %v526, 1
      %v528 = vadd.f32 %v526, %v527
      %v529 = vadd.f32 %v491, %v528
      %530 = vst [vmem:[#allocation3] sm:$0x1] %v529
      %p531 = scmp.eq.s32.totalorder %s17, 3
      // Predicated region
      $region41: #{residual_block_forward.4} parent=35 // pred_check
        %p532 = pneg %p531
      $region42: #{residual_block_forward.4} parent=35 // pred_check_branch
        %534 = sbr.rel (%p532) target = $region44
      $region43: #{residual_block_forward.4} parent=35 // pred_region
        %v535 = vld [vmem:[#allocation2] sm:$0x1]
        %v536 = vmul.f32 %v535, 0.001953125
        %v537 = vld [vmem:[#allocation3] sm:$0x1]
        %v538 = vmul.f32 %v537, 0.001953125
        %v539 = vmul.f32 %v536, %v536
        %v540 = vsub.f32 %v538, %v539
        %v541 = vld [vmem:[%s2] sm:$0x1]
        %v542 = vadd.f32 %v540, 1e-05
        %v543 = vrsqrt.pop %v542
        %v544 = vmul.f32 %v541, %v543
        %545 = vst [vmem:[%s5] sm:$0x1] %v544
        %v546 = vld [vmem:[%s3] sm:$0x1]
        %v547 = vmul.f32 %v536, %v544
        %v548 = vsub.f32 %v546, %v547
        %549 = vst [vmem:[%s5 + $0x1] sm:$0x1] %v548
      $region44: #{residual_block_forward.4} parent=35 // pred_fallthru
        _
      %s550 = smul.u32 16, %s17
      %p551 = scmp.lt.s32.totalorder %s550, 63
      %s552 = scalar_select %p551, %s550, 63
      %s553 = smul.addr %s552, 8
      %s554 = scalar_lea.vmem %s4, %s553
      // Predicated region
      $region45: #{residual_block_forward.4} parent=35 // pred_check
        %p555 = pneg %p124
      $region46: #{residual_block_forward.4} parent=35 // pred_check_branch
        %557 = sbr.rel (%p555) target = $region48
      $region47: #{residual_block_forward.4} parent=35 // pred_region
        %s558 = smul.u32 16, %s17
      $region48: #{residual_block_forward.4} parent=35 // pred_fallthru
        _
      // Predicated region
      $region49: #{residual_block_forward.4} parent=35 // pred_check
        %p559 = pneg %p145
      $region50: #{residual_block_forward.4} parent=35 // pred_check_branch
        %561 = sbr.rel (%p559) target = $region52
      $region51: #{residual_block_forward.4} parent=35 // pred_region
        _
      $region52: #{residual_block_forward.4} parent=35 // pred_fallthru
        _
      // Predicated region
      $region53: #{residual_block_forward.4} parent=35 // pred_check
        %p562 = pneg %p145
      $region54: #{residual_block_forward.4} parent=35 // pred_check_branch
        %564 = sbr.rel (%p562) target = $region56
      $region55: #{residual_block_forward.4} parent=35 // pred_region
        _
      $region56: #{residual_block_forward.4} parent=35 // pred_fallthru
        _
    $region36: #{residual_block_forward.4} parent=5 // pred_fallthru
      _
    %p565 = scmp.le.s32.totalorder 2, %s12
    // Predicated region
    $region57: #{residual_block_forward.4} parent=5 // pred_check
      %p566 = pneg %p565
    $region58: #{residual_block_forward.4} parent=5 // pred_check_branch
      %568 = sbr.rel (%p566) target = $region60
    $region59: #{residual_block_forward.4} parent=5 // pred_region
      %s569 = ssub.s32 %s12, 2
      // Predicated region
      $region61: #{residual_block_forward.4} parent=59 // pred_check
        %p570 = pneg %p130
      $region62: #{residual_block_forward.4} parent=59 // pred_check_branch
        %572 = sbr.rel (%p570) target = $region64
      $region63: #{residual_block_forward.4} parent=59 // pred_region
        %s573 = smul.u32 16, %s18
        %p574 = scmp.lt.s32.totalorder %s573, 63
        %s575 = scalar_select %p574, %s573, 63
        %s576 = smul.addr %s575, 8
        %s577 = scalar_lea.vmem %s4, %s576
      $region64: #{residual_block_forward.4} parent=59 // pred_fallthru
        _
    $region60: #{residual_block_forward.4} parent=5 // pred_fallthru
      _
  $region6: #{residual_block_forward.4} parent=0 // loop_footer
    %s16 = sadd.s32 1, %s12
  $region7: #{residual_block_forward.4} parent=0 // loop_footer_branch
    %11 = sbr.rel target = $region3
  $region8: #{residual_block_forward.4} parent=0 // loop_exit
    _

// kernel: residual_block_forward.7
$region0: #{residual_block_forward.7}
  #allocation0 [shape = 'u32[]', space=smem, size = 0x4, offset = 0x4, fixed_abs, tag = 'smem constant byte address 0x4 - core index']
  #allocation1 [shape = 'u32[144,128]{1,0:T(1,128)}', space=vmem, size = 0x12000, scoped, tag = 'internal scratch']
  %s0 = inlined_call_operand.vmem [shape: f32[2,288,128], index: 0, kind: input, shape index: {}]
  %s1 = inlined_call_operand.vmem [shape: f32[2,288,128], index: 1, kind: input, shape index: {}]
  %s2 = inlined_call_operand.vmem [shape: f32[2,128], index: 2, kind: input, shape index: {}]
  %s3 = inlined_call_operand.vmem [shape: f32[2,128], index: 3, kind: input, shape index: {}]
  %s4 = inlined_call_operand.vmem [shape: f32[2,288,128], index: 4, kind: output, shape index: {}]
  %s5 = sld [smem:[#allocation0]]
  $region49: #{residual_block_forward.7} parent=0
    _
  %s7 = ssub.s32 1, %s5
  %s8 = scalar_select 0, %s7, %s5
  loop: start=0, step=1, limit=4
  $region2: #{residual_block_forward.7} parent=0 // loop_pre_header
    _
  $region3: #{residual_block_forward.7} parent=0 // loop_header
    %s10 = sphi 0, %s14
    %p11 = scmp.ge.s32.totalorder %s10, 4
    %s20 = sphi 0, %s22
    %s23 = sphi 0, %s20
    %s24 = sphi 0, %s23
    %s40 = sphi 0, %s24
    %s46 = sphi 0, %s48
    %s49 = sphi 0, %s46
    %s50 = sphi 0, %s49
    %s66 = sphi 0, %s50
    %s70 = sphi 0, %s70
    %s72 = sphi 0, %s70
    %s73 = sphi 0, %s72
    %s87 = sphi 0, %s73
    %s91 = sphi 0, %s91
    %s93 = sphi 0, %s91
    %s94 = sphi 0, %s93
    %s108 = sphi 0, %s94
    %s114 = sphi 0, %s116
    %s117 = sphi 0, %s114
    %s118 = sphi 0, %s117
    %s134 = sphi 0, %s118
  $region4: #{residual_block_forward.7} parent=0 // loop_header_branch
    %13 = sbr.rel (%p11) target = $region8
  $region5: #{residual_block_forward.7} parent=0 // loop_body
    %s15 = ssub.s32 %s10, 1
    %s16 = ssub.s32 %s10, 2
    %s17 = sadd.s32 %s10, 1
    %s18 = ssub.s32 %s10, %s17
    %p19 = scmp.eq.s32.totalorder %s18, 0
    %s21 = sadd.s32 %s20, 1
    %s22 = scalar_select %p19, %s20, %s21
    %p25 = pneg %p19
    %p26 = scmp.eq.s32.totalorder %s10, 1
    %p27 = por %p25, %p26
    %p28 = scmp.ne.s32.totalorder %s20, %s23
    %p29 = scmp.eq.s32.totalorder %s10, 0
    %p30 = por %p28, %p29
    %p31 = scmp.ne.s32.totalorder %s20, %s23
    %p32 = scmp.eq.s32.totalorder %s15, 1
    %p33 = por %p31, %p32
    %p34 = scmp.ne.s32.totalorder %s23, %s24
    %p35 = scmp.eq.s32.totalorder %s15, 0
    %p36 = por %p34, %p35
    %p37 = scmp.ne.s32.totalorder %s23, %s24
    %p38 = scmp.eq.s32.totalorder %s16, 1
    %p39 = por %p37, %p38
    %p41 = scmp.ne.s32.totalorder %s24, %s40
    %p42 = scmp.eq.s32.totalorder %s16, 0
    %p43 = por %p41, %p42
    %s44 = ssub.s32 %s10, %s17
    %p45 = scmp.eq.s32.totalorder %s44, 0
    %s47 = sadd.s32 %s46, 1
    %s48 = scalar_select %p45, %s46, %s47
    %p51 = pneg %p45
    %p52 = scmp.eq.s32.totalorder %s10, 1
    %p53 = por %p51, %p52
    %p54 = scmp.ne.s32.totalorder %s46, %s49
    %p55 = scmp.eq.s32.totalorder %s10, 0
    %p56 = por %p54, %p55
    %p57 = scmp.ne.s32.totalorder %s46, %s49
    %p58 = scmp.eq.s32.totalorder %s15, 1
    %p59 = por %p57, %p58
    %p60 = scmp.ne.s32.totalorder %s49, %s50
    %p61 = scmp.eq.s32.totalorder %s15, 0
    %p62 = por %p60, %p61
    %p63 = scmp.ne.s32.totalorder %s49, %s50
    %p64 = scmp.eq.s32.totalorder %s16, 1
    %p65 = por %p63, %p64
    %p67 = scmp.ne.s32.totalorder %s50, %s66
    %p68 = scmp.eq.s32.totalorder %s16, 0
    %p69 = por %p67, %p68
    %s71 = sadd.s32 %s70, 1
    %p74 = scmp.eq.s32.totalorder %s10, 1
    %p75 = scmp.ne.s32.totalorder %s70, %s72
    %p76 = scmp.eq.s32.totalorder %s10, 0
    %p77 = por %p75, %p76
    %p78 = scmp.ne.s32.totalorder %s70, %s72
    %p79 = scmp.eq.s32.totalorder %s15, 1
    %p80 = por %p78, %p79
    %p81 = scmp.ne.s32.totalorder %s72, %s73
    %p82 = scmp.eq.s32.totalorder %s15, 0
    %p83 = por %p81, %p82
    %p84 = scmp.ne.s32.totalorder %s72, %s73
    %p85 = scmp.eq.s32.totalorder %s16, 1
    %p86 = por %p84, %p85
    %p88 = scmp.ne.s32.totalorder %s73, %s87
    %p89 = scmp.eq.s32.totalorder %s16, 0
    %p90 = por %p88, %p89
    %s92 = sadd.s32 %s91, 1
    %p95 = scmp.eq.s32.totalorder %s10, 1
    %p96 = scmp.ne.s32.totalorder %s91, %s93
    %p97 = scmp.eq.s32.totalorder %s10, 0
    %p98 = por %p96, %p97
    %p99 = scmp.ne.s32.totalorder %s91, %s93
    %p100 = scmp.eq.s32.totalorder %s15, 1
    %p101 = por %p99, %p100
    %p102 = scmp.ne.s32.totalorder %s93, %s94
    %p103 = scmp.eq.s32.totalorder %s15, 0
    %p104 = por %p102, %p103
    %p105 = scmp.ne.s32.totalorder %s93, %s94
    %p106 = scmp.eq.s32.totalorder %s16, 1
    %p107 = por %p105, %p106
    %p109 = scmp.ne.s32.totalorder %s94, %s108
    %p110 = scmp.eq.s32.totalorder %s16, 0
    %p111 = por %p109, %p110
    %s112 = ssub.s32 %s10, %s17
    %p113 = scmp.eq.s32.totalorder %s112, 0
    %s115 = sadd.s32 %s114, 1
    %s116 = scalar_select %p113, %s114, %s115
    %p119 = pneg %p113
    %p120 = scmp.eq.s32.totalorder %s10, 1
    %p121 = por %p119, %p120
    %p122 = scmp.ne.s32.totalorder %s114, %s117
    %p123 = scmp.eq.s32.totalorder %s10, 0
    %p124 = por %p122, %p123
    %p125 = scmp.ne.s32.totalorder %s114, %s117
    %p126 = scmp.eq.s32.totalorder %s15, 1
    %p127 = por %p125, %p126
    %p128 = scmp.ne.s32.totalorder %s117, %s118
    %p129 = scmp.eq.s32.totalorder %s15, 0
    %p130 = por %p128, %p129
    %p131 = scmp.ne.s32.totalorder %s117, %s118
    %p132 = scmp.eq.s32.totalorder %s16, 1
    %p133 = por %p131, %p132
    %p135 = scmp.ne.s32.totalorder %s118, %s134
    %p136 = scmp.eq.s32.totalorder %s16, 0
    %p137 = por %p135, %p136
    %p138 = scmp.le.s32.totalorder 1, %s10
    %p139 = scmp.lt.s32.totalorder %s10, 3
    %p140 = pnand %p138, %p139
    %p141 = pneg %p140
    // Predicated region
    $region9: #{residual_block_forward.7} parent=5 // pred_check
      _
    $region10: #{residual_block_forward.7} parent=5 // pred_check_branch
      %143 = sbr.rel (%p140) target = $region12
    $region11: #{residual_block_forward.7} parent=5 // pred_region
      %s144 = ssub.s32 %s10, 1
      // Predicated region
      $region13: #{residual_block_forward.7} parent=11 // pred_check
        %p145 = pneg %p83
      $region14: #{residual_block_forward.7} parent=11 // pred_check_branch
        %147 = sbr.rel (%p145) target = $region16
      $region15: #{residual_block_forward.7} parent=11 // pred_region
        _
      $region16: #{residual_block_forward.7} parent=11 // pred_fallthru
        _
      // Predicated region
      $region17: #{residual_block_forward.7} parent=11 // pred_check
        %p148 = pneg %p104
      $region18: #{residual_block_forward.7} parent=11 // pred_check_branch
        %150 = sbr.rel (%p148) target = $region20
      $region19: #{residual_block_forward.7} parent=11 // pred_region
        _
      $region20: #{residual_block_forward.7} parent=11 // pred_fallthru
        _
    $region12: #{residual_block_forward.7} parent=5 // pred_fallthru
      _
    %p151 = scmp.lt.s32.totalorder %s10, 2
    // Predicated region
    $region21: #{residual_block_forward.7} parent=5 // pred_check
      %p152 = pneg %p151
    $region22: #{residual_block_forward.7} parent=5 // pred_check_branch
      %154 = sbr.rel (%p152) target = $region24
    $region23: #{residual_block_forward.7} parent=5 // pred_region
      // Predicated region
      $region25: #{residual_block_forward.7} parent=23 // pred_check
        %p155 = pneg %p30
      $region26: #{residual_block_forward.7} parent=23 // pred_check_branch
        %157 = sbr.rel (%p155) target = $region28
      $region27: #{residual_block_forward.7} parent=23 // pred_region
        %p158 = scmp.lt.s32.totalorder %s10, 1
        %s159 = scalar_select %p158, %s10, 1
        %s160 = smul.addr %s159, 36
        %s161 = smul.addr %s160, 8
        %s162 = scalar_lea.vmem %s0, %s161
      $region28: #{residual_block_forward.7} parent=23 // pred_fallthru
        _
      // Predicated region
      $region29: #{residual_block_forward.7} parent=23 // pred_check
        %p163 = pneg %p56
      $region30: #{residual_block_forward.7} parent=23 // pred_check_branch
        %165 = sbr.rel (%p163) target = $region32
      $region31: #{residual_block_forward.7} parent=23 // pred_region
        %p166 = scmp.lt.s32.totalorder %s10, 1
        %s167 = scalar_select %p166, %s10, 1
        %s168 = smul.addr %s167, 36
        %s169 = smul.addr %s168, 8
        %s170 = scalar_lea.vmem %s1, %s169
      $region32: #{residual_block_forward.7} parent=23 // pred_fallthru
        _
    $region24: #{residual_block_forward.7} parent=5 // pred_fallthru
      _
    %p171 = scmp.le.s32.totalorder 1, %s10
    %p172 = scmp.lt.s32.totalorder %s10, 3
    %p173 = pnand %p171, %p172
    %p174 = pneg %p173
    // Predicated region
    $region33: #{residual_block_forward.7} parent=5 // pred_check
      _
    $region34: #{residual_block_forward.7} parent=5 // pred_check_branch
      %176 = sbr.rel (%p173) target = $region36
    $region35: #{residual_block_forward.7} parent=5 // pred_region
      %s177 = ssub.s32 %s10, 1
      %p178 = scmp.lt.s32.totalorder %s15, 1
      %s179 = scalar_select %p178, %s15, 1
      %s180 = smul.addr %s179, 36
      %s181 = smul.addr %s180, 8
      %s182 = scalar_lea.vmem %s0, %s181
      %p183 = pneg %p36
      %p184 = pneg %p33
      %p185 = scmp.lt.s32.totalorder %s15, 1
      %s186 = scalar_select %p185, %s15, 1
      %s187 = smul.addr %s186, 36
      %s188 = smul.addr %s187, 8
      %s189 = scalar_lea.vmem %s1, %s188
      %p190 = pneg %p62
      %p191 = pneg %p59
      %p192 = pneg %p83
      %p193 = pneg %p80
      %p194 = pneg %p104
      %p195 = pneg %p101
      %p196 = pneg %p130
      %p197 = pneg %p127
      %p198 = scmp.lt.s32.totalorder %s15, 1
      %s199 = scalar_select %p198, %s15, 1
      %s200 = smul.addr %s199, 36
      %s201 = smul.addr %s200, 8
      %s202 = scalar_lea.vmem %s4, %s201
      %p203 = scmp.lt.s32.totalorder %s15, 1
      %s204 = scalar_select %p203, %s15, 1
      %s205 = smul.addr %s204, 36
      %s206 = smul.addr %s205, 8
      %s207 = scalar_lea.vmem %s0, %s206
      %p208 = scmp.lt.s32.totalorder %s15, 1
      %s209 = scalar_select %p208, %s15, 1
      %s210 = smul.addr %s209, 36
      %s211 = smul.addr %s210, 8
      %s212 = scalar_lea.vmem %s1, %s211
      %p213 = scmp.lt.s32.totalorder %s15, 1
      %s214 = scalar_select %p213, %s15, 1
      %s215 = smul.addr %s214, 36
      %s216 = smul.addr %s215, 8
      %s217 = scalar_lea.vmem %s4, %s216
      %v218 = vld [vmem:[%s207] sm:$0xff]
      %v219 = vld [vmem:[%s207 + $0x8] sm:$0xff]
      %v220 = vld [vmem:[%s207 + $0x10] sm:$0xff]
      %v221 = vld [vmem:[%s207 + $0x18] sm:$0xff]
      %v222 = vld [vmem:[%s207 + $0x20] sm:$0xff]
      %v223 = vld [vmem:[%s207 + $0x28] sm:$0xff]
      %v224 = vld [vmem:[%s207 + $0x30] sm:$0xff]
      %v225 = vld [vmem:[%s207 + $0x38] sm:$0xff]
      %v226 = vld [vmem:[%s207 + $0x40] sm:$0xff]
      %v227 = vld [vmem:[%s207 + $0x48] sm:$0xff]
      %v228 = vld [vmem:[%s207 + $0x50] sm:$0xff]
      %v229 = vld [vmem:[%s207 + $0x58] sm:$0xff]
      %v230 = vld [vmem:[%s207 + $0x60] sm:$0xff]
      %v231 = vld [vmem:[%s207 + $0x68] sm:$0xff]
      %v232 = vld [vmem:[%s207 + $0x70] sm:$0xff]
      %v233 = vld [vmem:[%s207 + $0x78] sm:$0xff]
      %v234 = vld [vmem:[%s207 + $0x80] sm:$0xff]
      %v235 = vld [vmem:[%s207 + $0x88] sm:$0xff]
      %v236 = vld [vmem:[%s207 + $0x90] sm:$0xff]
      %v237 = vld [vmem:[%s207 + $0x98] sm:$0xff]
      %v238 = vld [vmem:[%s207 + $0xa0] sm:$0xff]
      %v239 = vld [vmem:[%s207 + $0xa8] sm:$0xff]
      %v240 = vld [vmem:[%s207 + $0xb0] sm:$0xff]
      %v241 = vld [vmem:[%s207 + $0xb8] sm:$0xff]
      %v242 = vld [vmem:[%s207 + $0xc0] sm:$0xff]
      %v243 = vld [vmem:[%s207 + $0xc8] sm:$0xff]
      %v244 = vld [vmem:[%s207 + $0xd0] sm:$0xff]
      %v245 = vld [vmem:[%s207 + $0xd8] sm:$0xff]
      %v246 = vld [vmem:[%s207 + $0xe0] sm:$0xff]
      %v247 = vld [vmem:[%s207 + $0xe8] sm:$0xff]
      %v248 = vld [vmem:[%s207 + $0xf0] sm:$0xff]
      %v249 = vld [vmem:[%s207 + $0xf8] sm:$0xff]
      %v250 = vld [vmem:[%s207 + $0x100] sm:$0xff]
      %v251 = vld [vmem:[%s207 + $0x108] sm:$0xff]
      %v252 = vld [vmem:[%s207 + $0x110] sm:$0xff]
      %v253 = vld [vmem:[%s207 + $0x118] sm:$0xff]
      %v254 = vld [vmem:[%s2] sm:$0x1]
      %v255 = vlaneseq
      %v256 = vshrl.u32 %v255, 7
      %v257 = vsub.s32 0, %v256
      %v258 = vrot.slane %v254, %v257
      %v259 = vmul.f32 %v218, %v258
      %v260 = vmul.f32 %v219, %v258
      %v261 = vmul.f32 %v220, %v258
      %v262 = vmul.f32 %v221, %v258
      %v263 = vmul.f32 %v222, %v258
      %v264 = vmul.f32 %v223, %v258
      %v265 = vmul.f32 %v224, %v258
      %v266 = vmul.f32 %v225, %v258
      %v267 = vmul.f32 %v226, %v258
      %v268 = vmul.f32 %v227, %v258
      %v269 = vmul.f32 %v228, %v258
      %v270 = vmul.f32 %v229, %v258
      %v271 = vmul.f32 %v230, %v258
      %v272 = vmul.f32 %v231, %v258
      %v273 = vmul.f32 %v232, %v258
      %v274 = vmul.f32 %v233, %v258
      %v275 = vmul.f32 %v234, %v258
      %v276 = vmul.f32 %v235, %v258
      %v277 = vmul.f32 %v236, %v258
      %v278 = vmul.f32 %v237, %v258
      %v279 = vmul.f32 %v238, %v258
      %v280 = vmul.f32 %v239, %v258
      %v281 = vmul.f32 %v240, %v258
      %v282 = vmul.f32 %v241, %v258
      %v283 = vmul.f32 %v242, %v258
      %v284 = vmul.f32 %v243, %v258
      %v285 = vmul.f32 %v244, %v258
      %v286 = vmul.f32 %v245, %v258
      %v287 = vmul.f32 %v246, %v258
      %v288 = vmul.f32 %v247, %v258
      %v289 = vmul.f32 %v248, %v258
      %v290 = vmul.f32 %v249, %v258
      %v291 = vmul.f32 %v250, %v258
      %v292 = vmul.f32 %v251, %v258
      %v293 = vmul.f32 %v252, %v258
      %v294 = vmul.f32 %v253, %v258
      %v295 = vld [vmem:[%s2 + $0x1] sm:$0x1]
      %v296 = vlaneseq
      %v297 = vshrl.u32 %v296, 7
      %v298 = vsub.s32 0, %v297
      %v299 = vrot.slane %v295, %v298
      %v300 = vadd.f32 %v259, %v299
      %v301 = vadd.f32 %v260, %v299
      %v302 = vadd.f32 %v261, %v299
      %v303 = vadd.f32 %v262, %v299
      %v304 = vadd.f32 %v263, %v299
      %v305 = vadd.f32 %v264, %v299
      %v306 = vadd.f32 %v265, %v299
      %v307 = vadd.f32 %v266, %v299
      %v308 = vadd.f32 %v267, %v299
      %v309 = vadd.f32 %v268, %v299
      %v310 = vadd.f32 %v269, %v299
      %v311 = vadd.f32 %v270, %v299
      %v312 = vadd.f32 %v271, %v299
      %v313 = vadd.f32 %v272, %v299
      %v314 = vadd.f32 %v273, %v299
      %v315 = vadd.f32 %v274, %v299
      %v316 = vadd.f32 %v275, %v299
      %v317 = vadd.f32 %v276, %v299
      %v318 = vadd.f32 %v277, %v299
      %v319 = vadd.f32 %v278, %v299
      %v320 = vadd.f32 %v279, %v299
      %v321 = vadd.f32 %v280, %v299
      %v322 = vadd.f32 %v281, %v299
      %v323 = vadd.f32 %v282, %v299
      %v324 = vadd.f32 %v283, %v299
      %v325 = vadd.f32 %v284, %v299
      %v326 = vadd.f32 %v285, %v299
      %v327 = vadd.f32 %v286, %v299
      %v328 = vadd.f32 %v287, %v299
      %v329 = vadd.f32 %v288, %v299
      %v330 = vadd.f32 %v289, %v299
      %v331 = vadd.f32 %v290, %v299
      %v332 = vadd.f32 %v291, %v299
      %v333 = vadd.f32 %v292, %v299
      %v334 = vadd.f32 %v293, %v299
      %v335 = vadd.f32 %v294, %v299
      %v336 = vld [vmem:[%s212] sm:$0xff]
      %v337 = vld [vmem:[%s212 + $0x8] sm:$0xff]
      %v338 = vld [vmem:[%s212 + $0x10] sm:$0xff]
      %v339 = vld [vmem:[%s212 + $0x18] sm:$0xff]
      %v340 = vld [vmem:[%s212 + $0x20] sm:$0xff]
      %v341 = vld [vmem:[%s212 + $0x28] sm:$0xff]
      %v342 = vld [vmem:[%s212 + $0x30] sm:$0xff]
      %v343 = vld [vmem:[%s212 + $0x38] sm:$0xff]
      %v344 = vld [vmem:[%s212 + $0x40] sm:$0xff]
      %v345 = vld [vmem:[%s212 + $0x48] sm:$0xff]
      %v346 = vld [vmem:[%s212 + $0x50] sm:$0xff]
      %v347 = vld [vmem:[%s212 + $0x58] sm:$0xff]
      %v348 = vld [vmem:[%s212 + $0x60] sm:$0xff]
      %v349 = vld [vmem:[%s212 + $0x68] sm:$0xff]
      %v350 = vld [vmem:[%s212 + $0x70] sm:$0xff]
      %v351 = vld [vmem:[%s212 + $0x78] sm:$0xff]
      %v352 = vld [vmem:[%s212 + $0x80] sm:$0xff]
      %v353 = vld [vmem:[%s212 + $0x88] sm:$0xff]
      %v354 = vld [vmem:[%s212 + $0x90] sm:$0xff]
      %v355 = vld [vmem:[%s212 + $0x98] sm:$0xff]
      %v356 = vld [vmem:[%s212 + $0xa0] sm:$0xff]
      %v357 = vld [vmem:[%s212 + $0xa8] sm:$0xff]
      %v358 = vld [vmem:[%s212 + $0xb0] sm:$0xff]
      %v359 = vld [vmem:[%s212 + $0xb8] sm:$0xff]
      %v360 = vld [vmem:[%s212 + $0xc0] sm:$0xff]
      %v361 = vld [vmem:[%s212 + $0xc8] sm:$0xff]
      %v362 = vld [vmem:[%s212 + $0xd0] sm:$0xff]
      %v363 = vld [vmem:[%s212 + $0xd8] sm:$0xff]
      %v364 = vld [vmem:[%s212 + $0xe0] sm:$0xff]
      %v365 = vld [vmem:[%s212 + $0xe8] sm:$0xff]
      %v366 = vld [vmem:[%s212 + $0xf0] sm:$0xff]
      %v367 = vld [vmem:[%s212 + $0xf8] sm:$0xff]
      %v368 = vld [vmem:[%s212 + $0x100] sm:$0xff]
      %v369 = vld [vmem:[%s212 + $0x108] sm:$0xff]
      %v370 = vld [vmem:[%s212 + $0x110] sm:$0xff]
      %v371 = vld [vmem:[%s212 + $0x118] sm:$0xff]
      %v372 = vld [vmem:[%s3] sm:$0x1]
      %v373 = vlaneseq
      %v374 = vshrl.u32 %v373, 7
      %v375 = vsub.s32 0, %v374
      %v376 = vrot.slane %v372, %v375
      %v377 = vmul.f32 %v336, %v376
      %v378 = vmul.f32 %v337, %v376
      %v379 = vmul.f32 %v338, %v376
      %v380 = vmul.f32 %v339, %v376
      %v381 = vmul.f32 %v340, %v376
      %v382 = vmul.f32 %v341, %v376
      %v383 = vmul.f32 %v342, %v376
      %v384 = vmul.f32 %v343, %v376
      %v385 = vmul.f32 %v344, %v376
      %v386 = vmul.f32 %v345, %v376
      %v387 = vmul.f32 %v346, %v376
      %v388 = vmul.f32 %v347, %v376
      %v389 = vmul.f32 %v348, %v376
      %v390 = vmul.f32 %v349, %v376
      %v391 = vmul.f32 %v350, %v376
      %v392 = vmul.f32 %v351, %v376
      %v393 = vmul.f32 %v352, %v376
      %v394 = vmul.f32 %v353, %v376
      %v395 = vmul.f32 %v354, %v376
      %v396 = vmul.f32 %v355, %v376
      %v397 = vmul.f32 %v356, %v376
      %v398 = vmul.f32 %v357, %v376
      %v399 = vmul.f32 %v358, %v376
      %v400 = vmul.f32 %v359, %v376
      %v401 = vmul.f32 %v360, %v376
      %v402 = vmul.f32 %v361, %v376
      %v403 = vmul.f32 %v362, %v376
      %v404 = vmul.f32 %v363, %v376
      %v405 = vmul.f32 %v364, %v376
      %v406 = vmul.f32 %v365, %v376
      %v407 = vmul.f32 %v366, %v376
      %v408 = vmul.f32 %v367, %v376
      %v409 = vmul.f32 %v368, %v376
      %v410 = vmul.f32 %v369, %v376
      %v411 = vmul.f32 %v370, %v376
      %v412 = vmul.f32 %v371, %v376
      %v413 = vld [vmem:[%s3 + $0x1] sm:$0x1]
      %v414 = vlaneseq
      %v415 = vshrl.u32 %v414, 7
      %v416 = vsub.s32 0, %v415
      %v417 = vrot.slane %v413, %v416
      %v418 = vadd.f32 %v377, %v417
      %v419 = vadd.f32 %v378, %v417
      %v420 = vadd.f32 %v379, %v417
      %v421 = vadd.f32 %v380, %v417
      %v422 = vadd.f32 %v381, %v417
      %v423 = vadd.f32 %v382, %v417
      %v424 = vadd.f32 %v383, %v417
      %v425 = vadd.f32 %v384, %v417
      %v426 = vadd.f32 %v385, %v417
      %v427 = vadd.f32 %v386, %v417
      %v428 = vadd.f32 %v387, %v417
      %v429 = vadd.f32 %v388, %v417
      %v430 = vadd.f32 %v389, %v417
      %v431 = vadd.f32 %v390, %v417
      %v432 = vadd.f32 %v391, %v417
      %v433 = vadd.f32 %v392, %v417
      %v434 = vadd.f32 %v393, %v417
      %v435 = vadd.f32 %v394, %v417
      %v436 = vadd.f32 %v395, %v417
      %v437 = vadd.f32 %v396, %v417
      %v438 = vadd.f32 %v397, %v417
      %v439 = vadd.f32 %v398, %v417
      %v440 = vadd.f32 %v399, %v417
      %v441 = vadd.f32 %v400, %v417
      %v442 = vadd.f32 %v401, %v417
      %v443 = vadd.f32 %v402, %v417
      %v444 = vadd.f32 %v403, %v417
      %v445 = vadd.f32 %v404, %v417
      %v446 = vadd.f32 %v405, %v417
      %v447 = vadd.f32 %v406, %v417
      %v448 = vadd.f32 %v407, %v417
      %v449 = vadd.f32 %v408, %v417
      %v450 = vadd.f32 %v409, %v417
      %v451 = vadd.f32 %v410, %v417
      %v452 = vadd.f32 %v411, %v417
      %v453 = vadd.f32 %v412, %v417
      %v454 = vadd.f32 %v300, %v418
      %v455 = vadd.f32 %v301, %v419
      %v456 = vadd.f32 %v302, %v420
      %v457 = vadd.f32 %v303, %v421
      %v458 = vadd.f32 %v304, %v422
      %v459 = vadd.f32 %v305, %v423
      %v460 = vadd.f32 %v306, %v424
      %v461 = vadd.f32 %v307, %v425
      %v462 = vadd.f32 %v308, %v426
      %v463 = vadd.f32 %v309, %v427
      %v464 = vadd.f32 %v310, %v428
      %v465 = vadd.f32 %v311, %v429
      %v466 = vadd.f32 %v312, %v430
      %v467 = vadd.f32 %v313, %v431
      %v468 = vadd.f32 %v314, %v432
      %v469 = vadd.f32 %v315, %v433
      %v470 = vadd.f32 %v316, %v434
      %v471 = vadd.f32 %v317, %v435
      %v472 = vadd.f32 %v318, %v436
      %v473 = vadd.f32 %v319, %v437
      %v474 = vadd.f32 %v320, %v438
      %v475 = vadd.f32 %v321, %v439
      %v476 = vadd.f32 %v322, %v440
      %v477 = vadd.f32 %v323, %v441
      %v478 = vadd.f32 %v324, %v442
      %v479 = vadd.f32 %v325, %v443
      %v480 = vadd.f32 %v326, %v444
      %v481 = vadd.f32 %v327, %v445
      %v482 = vadd.f32 %v328, %v446
      %v483 = vadd.f32 %v329, %v447
      %v484 = vadd.f32 %v330, %v448
      %v485 = vadd.f32 %v331, %v449
      %v486 = vadd.f32 %v332, %v450
      %v487 = vadd.f32 %v333, %v451
      %v488 = vadd.f32 %v334, %v452
      %v489 = vadd.f32 %v335, %v453
      %v490 = vmax.f32 %v454, 0.0
      %v491 = vmax.f32 %v455, 0.0
      %v492 = vmax.f32 %v456, 0.0
      %v493 = vmax.f32 %v457, 0.0
      %v494 = vmax.f32 %v458, 0.0
      %v495 = vmax.f32 %v459, 0.0
      %v496 = vmax.f32 %v460, 0.0
      %v497 = vmax.f32 %v461, 0.0
      %v498 = vmax.f32 %v462, 0.0
      %v499 = vmax.f32 %v463, 0.0
      %v500 = vmax.f32 %v464, 0.0
      %v501 = vmax.f32 %v465, 0.0
      %v502 = vmax.f32 %v466, 0.0
      %v503 = vmax.f32 %v467, 0.0
      %v504 = vmax.f32 %v468, 0.0
      %v505 = vmax.f32 %v469, 0.0
      %v506 = vmax.f32 %v470, 0.0
      %v507 = vmax.f32 %v471, 0.0
      %v508 = vmax.f32 %v472, 0.0
      %v509 = vmax.f32 %v473, 0.0
      %v510 = vmax.f32 %v474, 0.0
      %v511 = vmax.f32 %v475, 0.0
      %v512 = vmax.f32 %v476, 0.0
      %v513 = vmax.f32 %v477, 0.0
      %v514 = vmax.f32 %v478, 0.0
      %v515 = vmax.f32 %v479, 0.0
      %v516 = vmax.f32 %v480, 0.0
      %v517 = vmax.f32 %v481, 0.0
      %v518 = vmax.f32 %v482, 0.0
      %v519 = vmax.f32 %v483, 0.0
      %v520 = vmax.f32 %v484, 0.0
      %v521 = vmax.f32 %v485, 0.0
      %v522 = vmax.f32 %v486, 0.0
      %v523 = vmax.f32 %v487, 0.0
      %v524 = vmax.f32 %v488, 0.0
      %v525 = vmax.f32 %v489, 0.0
      %526 = vst [vmem:[%s217] sm:$0xff] %v490
      %527 = vst [vmem:[%s217 + $0x8] sm:$0xff] %v491
      %528 = vst [vmem:[%s217 + $0x10] sm:$0xff] %v492
      %529 = vst [vmem:[%s217 + $0x18] sm:$0xff] %v493
      %530 = vst [vmem:[%s217 + $0x20] sm:$0xff] %v494
      %531 = vst [vmem:[%s217 + $0x28] sm:$0xff] %v495
      %532 = vst [vmem:[%s217 + $0x30] sm:$0xff] %v496
      %533 = vst [vmem:[%s217 + $0x38] sm:$0xff] %v497
      %534 = vst [vmem:[%s217 + $0x40] sm:$0xff] %v498
      %535 = vst [vmem:[%s217 + $0x48] sm:$0xff] %v499
      %536 = vst [vmem:[%s217 + $0x50] sm:$0xff] %v500
      %537 = vst [vmem:[%s217 + $0x58] sm:$0xff] %v501
      %538 = vst [vmem:[%s217 + $0x60] sm:$0xff] %v502
      %539 = vst [vmem:[%s217 + $0x68] sm:$0xff] %v503
      %540 = vst [vmem:[%s217 + $0x70] sm:$0xff] %v504
      %541 = vst [vmem:[%s217 + $0x78] sm:$0xff] %v505
      %542 = vst [vmem:[%s217 + $0x80] sm:$0xff] %v506
      %543 = vst [vmem:[%s217 + $0x88] sm:$0xff] %v507
      %544 = vst [vmem:[%s217 + $0x90] sm:$0xff] %v508
      %545 = vst [vmem:[%s217 + $0x98] sm:$0xff] %v509
      %546 = vst [vmem:[%s217 + $0xa0] sm:$0xff] %v510
      %547 = vst [vmem:[%s217 + $0xa8] sm:$0xff] %v511
      %548 = vst [vmem:[%s217 + $0xb0] sm:$0xff] %v512
      %549 = vst [vmem:[%s217 + $0xb8] sm:$0xff] %v513
      %550 = vst [vmem:[%s217 + $0xc0] sm:$0xff] %v514
      %551 = vst [vmem:[%s217 + $0xc8] sm:$0xff] %v515
      %552 = vst [vmem:[%s217 + $0xd0] sm:$0xff] %v516
      %553 = vst [vmem:[%s217 + $0xd8] sm:$0xff] %v517
      %554 = vst [vmem:[%s217 + $0xe0] sm:$0xff] %v518
      %555 = vst [vmem:[%s217 + $0xe8] sm:$0xff] %v519
      %556 = vst [vmem:[%s217 + $0xf0] sm:$0xff] %v520
      %557 = vst [vmem:[%s217 + $0xf8] sm:$0xff] %v521
      %558 = vst [vmem:[%s217 + $0x100] sm:$0xff] %v522
      %559 = vst [vmem:[%s217 + $0x108] sm:$0xff] %v523
      %560 = vst [vmem:[%s217 + $0x110] sm:$0xff] %v524
      %561 = vst [vmem:[%s217 + $0x118] sm:$0xff] %v525
      %p562 = scmp.lt.s32.totalorder %s15, 1
      %s563 = scalar_select %p562, %s15, 1
      %s564 = smul.addr %s563, 36
      %s565 = smul.addr %s564, 8
      %s566 = scalar_lea.vmem %s4, %s565
      // Predicated region
      $region37: #{residual_block_forward.7} parent=35 // pred_check
        %p567 = pneg %p127
      $region38: #{residual_block_forward.7} parent=35 // pred_check_branch
        %569 = sbr.rel (%p567) target = $region40
      $region39: #{residual_block_forward.7} parent=35 // pred_region
        _
      $region40: #{residual_block_forward.7} parent=35 // pred_fallthru
        _
    $region36: #{residual_block_forward.7} parent=5 // pred_fallthru
      _
    %p570 = scmp.le.s32.totalorder 2, %s10
    // Predicated region
    $region41: #{residual_block_forward.7} parent=5 // pred_check
      %p571 = pneg %p570
    $region42: #{residual_block_forward.7} parent=5 // pred_check_branch
      %573 = sbr.rel (%p571) target = $region44
    $region43: #{residual_block_forward.7} parent=5 // pred_region
      %s574 = ssub.s32 %s10, 2
      // Predicated region
      $region45: #{residual_block_forward.7} parent=43 // pred_check
        %p575 = pneg %p133
      $region46: #{residual_block_forward.7} parent=43 // pred_check_branch
        %577 = sbr.rel (%p575) target = $region48
      $region47: #{residual_block_forward.7} parent=43 // pred_region
        %p578 = scmp.lt.s32.totalorder %s16, 1
        %s579 = scalar_select %p578, %s16, 1
        %s580 = smul.addr %s579, 36
        %s581 = smul.addr %s580, 8
        %s582 = scalar_lea.vmem %s4, %s581
      $region48: #{residual_block_forward.7} parent=43 // pred_fallthru
        _
    $region44: #{residual_block_forward.7} parent=5 // pred_fallthru
      _
  $region6: #{residual_block_forward.7} parent=0 // loop_footer
    %s14 = sadd.s32 1, %s10
  $region7: #{residual_block_forward.7} parent=0 // loop_footer_branch
    %9 = sbr.rel target = $region3
  $region8: #{residual_block_forward.7} parent=0 // loop_exit
    _

// kernel: residual_block_forward.6
$region0: #{residual_block_forward.6}
  #allocation0 [shape = 'u32[]', space=smem, size = 0x4, offset = 0x4, fixed_abs, tag = 'smem constant byte address 0x4 - core index']
  #allocation1 [shape = 'u32[144,128]{1,0:T(1,128)}', space=vmem, size = 0x12000, scoped, tag = 'internal scratch']
  #allocation2 [shape = 'f32[1,128]{1,0:T(1,128)}', space=vmem, size = 0x200, scoped, tag = 'scratch operand']
  #allocation3 [shape = 'f32[1,128]{1,0:T(1,128)}', space=vmem, size = 0x200, scoped, tag = 'scratch operand']
  #allocation4 [shape = 'f32[1,128]{1,0:T(1,128)}', space=vmem, size = 0x200, scoped, tag = 'scratch operand']
  #allocation5 [shape = 'f32[1,128]{1,0:T(1,128)}', space=vmem, size = 0x200, scoped, tag = 'scratch operand']
  %s0 = inlined_call_operand.vmem [shape: f32[2,342,128], index: 0, kind: input, shape index: {}]
  %s1 = inlined_call_operand.vmem [shape: f32[9,128,128], index: 1, kind: input, shape index: {}]
  %s2 = inlined_call_operand.vmem [shape: f32[2,288,4], index: 2, kind: input, shape index: {}]
  %s3 = inlined_call_operand.vmem [shape: f32[4,128], index: 3, kind: input, shape index: {}]
  %s4 = inlined_call_operand.vmem [shape: f32[1,288,1], index: 4, kind: input, shape index: {}]
  %s5 = inlined_call_operand.vmem [shape: f32[1,128], index: 5, kind: input, shape index: {}]
  %s6 = inlined_call_operand.vmem [shape: f32[1,128], index: 6, kind: input, shape index: {}]
  %s7 = inlined_call_operand.vmem [shape: f32[1,128], index: 7, kind: input, shape index: {}]
  %s8 = inlined_call_operand.vmem [shape: f32[1,128], index: 8, kind: input, shape index: {}]
  %s9 = inlined_call_operand.vmem [shape: f32[2,288,128], index: 9, kind: output, shape index: {0}]
  %s10 = inlined_call_operand.vmem [shape: f32[2,288,128], index: 10, kind: output, shape index: {1}]
  %s11 = inlined_call_operand.vmem [shape: f32[2,128], index: 11, kind: output, shape index: {2}]
  %s12 = inlined_call_operand.vmem [shape: f32[2,128], index: 12, kind: output, shape index: {3}]
  %13 = xla_tuple %s9, %s10, %s11, %s12
  %s14 = sld [smem:[#allocation0]]
  $region101: #{residual_block_forward.6} parent=0
    _
  %s16 = ssub.s32 1, %s14
  %s17 = scalar_select 0, %s16, %s14
  loop: start=0, step=1, limit=4
  $region2: #{residual_block_forward.6} parent=0 // loop_pre_header
    _
  $region3: #{residual_block_forward.6} parent=0 // loop_header
    %s19 = sphi 0, %s23
    %p20 = scmp.ge.s32.totalorder %s19, 4
    %s29 = sphi 0, %s31
    %s32 = sphi 0, %s29
    %s33 = sphi 0, %s32
    %s49 = sphi 0, %s33
    %s53 = sphi 0, %s53
    %s55 = sphi 0, %s53
    %s56 = sphi 0, %s55
    %s70 = sphi 0, %s56
    %s76 = sphi 0, %s78
    %s79 = sphi 0, %s76
    %s80 = sphi 0, %s79
    %s96 = sphi 0, %s80
    %s100 = sphi 0, %s100
    %s102 = sphi 0, %s100
    %s103 = sphi 0, %s102
    %s117 = sphi 0, %s103
    %s121 = sphi 0, %s121
    %s123 = sphi 0, %s121
    %s124 = sphi 0, %s123
    %s138 = sphi 0, %s124
    %s142 = sphi 0, %s142
    %s144 = sphi 0, %s142
    %s145 = sphi 0, %s144
    %s159 = sphi 0, %s145
    %s163 = sphi 0, %s163
    %s165 = sphi 0, %s163
    %s166 = sphi 0, %s165
    %s180 = sphi 0, %s166
    %s184 = sphi 0, %s184
    %s186 = sphi 0, %s184
    %s187 = sphi 0, %s186
    %s201 = sphi 0, %s187
    %s205 = sphi 0, %s205
    %s207 = sphi 0, %s205
    %s208 = sphi 0, %s207
    %s222 = sphi 0, %s208
    %s228 = sphi 0, %s230
    %s231 = sphi 0, %s228
    %s232 = sphi 0, %s231
    %s248 = sphi 0, %s232
    %s254 = sphi 0, %s256
    %s257 = sphi 0, %s254
    %s258 = sphi 0, %s257
    %s274 = sphi 0, %s258
    %s278 = sphi 0, %s278
    %s280 = sphi 0, %s278
    %s281 = sphi 0, %s280
    %s295 = sphi 0, %s281
    %s299 = sphi 0, %s299
    %s301 = sphi 0, %s299
    %s302 = sphi 0, %s301
    %s316 = sphi 0, %s302
  $region4: #{residual_block_forward.6} parent=0 // loop_header_branch
    %22 = sbr.rel (%p20) target = $region8
  $region5: #{residual_block_forward.6} parent=0 // loop_body
    %s24 = ssub.s32 %s19, 1
    %s25 = ssub.s32 %s19, 2
    %s26 = sadd.s32 %s19, 1
    %s27 = ssub.s32 %s19, %s26
    %p28 = scmp.eq.s32.totalorder %s27, 0
    %s30 = sadd.s32 %s29, 1
    %s31 = scalar_select %p28, %s29, %s30
    %p34 = pneg %p28
    %p35 = scmp.eq.s32.totalorder %s19, 1
    %p36 = por %p34, %p35
    %p37 = scmp.ne.s32.totalorder %s29, %s32
    %p38 = scmp.eq.s32.totalorder %s19, 0
    %p39 = por %p37, %p38
    %p40 = scmp.ne.s32.totalorder %s29, %s32
    %p41 = scmp.eq.s32.totalorder %s24, 1
    %p42 = por %p40, %p41
    %p43 = scmp.ne.s32.totalorder %s32, %s33
    %p44 = scmp.eq.s32.totalorder %s24, 0
    %p45 = por %p43, %p44
    %p46 = scmp.ne.s32.totalorder %s32, %s33
    %p47 = scmp.eq.s32.totalorder %s25, 1
    %p48 = por %p46, %p47
    %p50 = scmp.ne.s32.totalorder %s33, %s49
    %p51 = scmp.eq.s32.totalorder %s25, 0
    %p52 = por %p50, %p51
    %s54 = sadd.s32 %s53, 1
    %p57 = scmp.eq.s32.totalorder %s19, 1
    %p58 = scmp.ne.s32.totalorder %s53, %s55
    %p59 = scmp.eq.s32.totalorder %s19, 0
    %p60 = por %p58, %p59
    %p61 = scmp.ne.s32.totalorder %s53, %s55
    %p62 = scmp.eq.s32.totalorder %s24, 1
    %p63 = por %p61, %p62
    %p64 = scmp.ne.s32.totalorder %s55, %s56
    %p65 = scmp.eq.s32.totalorder %s24, 0
    %p66 = por %p64, %p65
    %p67 = scmp.ne.s32.totalorder %s55, %s56
    %p68 = scmp.eq.s32.totalorder %s25, 1
    %p69 = por %p67, %p68
    %p71 = scmp.ne.s32.totalorder %s56, %s70
    %p72 = scmp.eq.s32.totalorder %s25, 0
    %p73 = por %p71, %p72
    %s74 = ssub.s32 %s19, %s26
    %p75 = scmp.eq.s32.totalorder %s74, 0
    %s77 = sadd.s32 %s76, 1
    %s78 = scalar_select %p75, %s76, %s77
    %p81 = pneg %p75
    %p82 = scmp.eq.s32.totalorder %s19, 1
    %p83 = por %p81, %p82
    %p84 = scmp.ne.s32.totalorder %s76, %s79
    %p85 = scmp.eq.s32.totalorder %s19, 0
    %p86 = por %p84, %p85
    %p87 = scmp.ne.s32.totalorder %s76, %s79
    %p88 = scmp.eq.s32.totalorder %s24, 1
    %p89 = por %p87, %p88
    %p90 = scmp.ne.s32.totalorder %s79, %s80
    %p91 = scmp.eq.s32.totalorder %s24, 0
    %p92 = por %p90, %p91
    %p93 = scmp.ne.s32.totalorder %s79, %s80
    %p94 = scmp.eq.s32.totalorder %s25, 1
    %p95 = por %p93, %p94
    %p97 = scmp.ne.s32.totalorder %s80, %s96
    %p98 = scmp.eq.s32.totalorder %s25, 0
    %p99 = por %p97, %p98
    %s101 = sadd.s32 %s100, 1
    %p104 = scmp.eq.s32.totalorder %s19, 1
    %p105 = scmp.ne.s32.totalorder %s100, %s102
    %p106 = scmp.eq.s32.totalorder %s19, 0
    %p107 = por %p105, %p106
    %p108 = scmp.ne.s32.totalorder %s100, %s102
    %p109 = scmp.eq.s32.totalorder %s24, 1
    %p110 = por %p108, %p109
    %p111 = scmp.ne.s32.totalorder %s102, %s103
    %p112 = scmp.eq.s32.totalorder %s24, 0
    %p113 = por %p111, %p112
    %p114 = scmp.ne.s32.totalorder %s102, %s103
    %p115 = scmp.eq.s32.totalorder %s25, 1
    %p116 = por %p114, %p115
    %p118 = scmp.ne.s32.totalorder %s103, %s117
    %p119 = scmp.eq.s32.totalorder %s25, 0
    %p120 = por %p118, %p119
    %s122 = sadd.s32 %s121, 1
    %p125 = scmp.eq.s32.totalorder %s19, 1
    %p126 = scmp.ne.s32.totalorder %s121, %s123
    %p127 = scmp.eq.s32.totalorder %s19, 0
    %p128 = por %p126, %p127
    %p129 = scmp.ne.s32.totalorder %s121, %s123
    %p130 = scmp.eq.s32.totalorder %s24, 1
    %p131 = por %p129, %p130
    %p132 = scmp.ne.s32.totalorder %s123, %s124
    %p133 = scmp.eq.s32.totalorder %s24, 0
    %p134 = por %p132, %p133
    %p135 = scmp.ne.s32.totalorder %s123, %s124
    %p136 = scmp.eq.s32.totalorder %s25, 1
    %p137 = por %p135, %p136
    %p139 = scmp.ne.s32.totalorder %s124, %s138
    %p140 = scmp.eq.s32.totalorder %s25, 0
    %p141 = por %p139, %p140
    %s143 = sadd.s32 %s142, 1
    %p146 = scmp.eq.s32.totalorder %s19, 1
    %p147 = scmp.ne.s32.totalorder %s142, %s144
    %p148 = scmp.eq.s32.totalorder %s19, 0
    %p149 = por %p147, %p148
    %p150 = scmp.ne.s32.totalorder %s142, %s144
    %p151 = scmp.eq.s32.totalorder %s24, 1
    %p152 = por %p150, %p151
    %p153 = scmp.ne.s32.totalorder %s144, %s145
    %p154 = scmp.eq.s32.totalorder %s24, 0
    %p155 = por %p153, %p154
    %p156 = scmp.ne.s32.totalorder %s144, %s145
    %p157 = scmp.eq.s32.totalorder %s25, 1
    %p158 = por %p156, %p157
    %p160 = scmp.ne.s32.totalorder %s145, %s159
    %p161 = scmp.eq.s32.totalorder %s25, 0
    %p162 = por %p160, %p161
    %s164 = sadd.s32 %s163, 1
    %p167 = scmp.eq.s32.totalorder %s19, 1
    %p168 = scmp.ne.s32.totalorder %s163, %s165
    %p169 = scmp.eq.s32.totalorder %s19, 0
    %p170 = por %p168, %p169
    %p171 = scmp.ne.s32.totalorder %s163, %s165
    %p172 = scmp.eq.s32.totalorder %s24, 1
    %p173 = por %p171, %p172
    %p174 = scmp.ne.s32.totalorder %s165, %s166
    %p175 = scmp.eq.s32.totalorder %s24, 0
    %p176 = por %p174, %p175
    %p177 = scmp.ne.s32.totalorder %s165, %s166
    %p178 = scmp.eq.s32.totalorder %s25, 1
    %p179 = por %p177, %p178
    %p181 = scmp.ne.s32.totalorder %s166, %s180
    %p182 = scmp.eq.s32.totalorder %s25, 0
    %p183 = por %p181, %p182
    %s185 = sadd.s32 %s184, 1
    %p188 = scmp.eq.s32.totalorder %s19, 1
    %p189 = scmp.ne.s32.totalorder %s184, %s186
    %p190 = scmp.eq.s32.totalorder %s19, 0
    %p191 = por %p189, %p190
    %p192 = scmp.ne.s32.totalorder %s184, %s186
    %p193 = scmp.eq.s32.totalorder %s24, 1
    %p194 = por %p192, %p193
    %p195 = scmp.ne.s32.totalorder %s186, %s187
    %p196 = scmp.eq.s32.totalorder %s24, 0
    %p197 = por %p195, %p196
    %p198 = scmp.ne.s32.totalorder %s186, %s187
    %p199 = scmp.eq.s32.totalorder %s25, 1
    %p200 = por %p198, %p199
    %p202 = scmp.ne.s32.totalorder %s187, %s201
    %p203 = scmp.eq.s32.totalorder %s25, 0
    %p204 = por %p202, %p203
    %s206 = sadd.s32 %s205, 1
    %p209 = scmp.eq.s32.totalorder %s19, 1
    %p210 = scmp.ne.s32.totalorder %s205, %s207
    %p211 = scmp.eq.s32.totalorder %s19, 0
    %p212 = por %p210, %p211
    %p213 = scmp.ne.s32.totalorder %s205, %s207
    %p214 = scmp.eq.s32.totalorder %s24, 1
    %p215 = por %p213, %p214
    %p216 = scmp.ne.s32.totalorder %s207, %s208
    %p217 = scmp.eq.s32.totalorder %s24, 0
    %p218 = por %p216, %p217
    %p219 = scmp.ne.s32.totalorder %s207, %s208
    %p220 = scmp.eq.s32.totalorder %s25, 1
    %p221 = por %p219, %p220
    %p223 = scmp.ne.s32.totalorder %s208, %s222
    %p224 = scmp.eq.s32.totalorder %s25, 0
    %p225 = por %p223, %p224
    %s226 = ssub.s32 %s19, %s26
    %p227 = scmp.eq.s32.totalorder %s226, 0
    %s229 = sadd.s32 %s228, 1
    %s230 = scalar_select %p227, %s228, %s229
    %p233 = pneg %p227
    %p234 = scmp.eq.s32.totalorder %s19, 1
    %p235 = por %p233, %p234
    %p236 = scmp.ne.s32.totalorder %s228, %s231
    %p237 = scmp.eq.s32.totalorder %s19, 0
    %p238 = por %p236, %p237
    %p239 = scmp.ne.s32.totalorder %s228, %s231
    %p240 = scmp.eq.s32.totalorder %s24, 1
    %p241 = por %p239, %p240
    %p242 = scmp.ne.s32.totalorder %s231, %s232
    %p243 = scmp.eq.s32.totalorder %s24, 0
    %p244 = por %p242, %p243
    %p245 = scmp.ne.s32.totalorder %s231, %s232
    %p246 = scmp.eq.s32.totalorder %s25, 1
    %p247 = por %p245, %p246
    %p249 = scmp.ne.s32.totalorder %s232, %s248
    %p250 = scmp.eq.s32.totalorder %s25, 0
    %p251 = por %p249, %p250
    %s252 = ssub.s32 %s19, %s26
    %p253 = scmp.eq.s32.totalorder %s252, 0
    %s255 = sadd.s32 %s254, 1
    %s256 = scalar_select %p253, %s254, %s255
    %p259 = pneg %p253
    %p260 = scmp.eq.s32.totalorder %s19, 1
    %p261 = por %p259, %p260
    %p262 = scmp.ne.s32.totalorder %s254, %s257
    %p263 = scmp.eq.s32.totalorder %s19, 0
    %p264 = por %p262, %p263
    %p265 = scmp.ne.s32.totalorder %s254, %s257
    %p266 = scmp.eq.s32.totalorder %s24, 1
    %p267 = por %p265, %p266
    %p268 = scmp.ne.s32.totalorder %s257, %s258
    %p269 = scmp.eq.s32.totalorder %s24, 0
    %p270 = por %p268, %p269
    %p271 = scmp.ne.s32.totalorder %s257, %s258
    %p272 = scmp.eq.s32.totalorder %s25, 1
    %p273 = por %p271, %p272
    %p275 = scmp.ne.s32.totalorder %s258, %s274
    %p276 = scmp.eq.s32.totalorder %s25, 0
    %p277 = por %p275, %p276
    %s279 = sadd.s32 %s278, 1
    %p282 = scmp.eq.s32.totalorder %s19, 1
    %p283 = scmp.ne.s32.totalorder %s278, %s280
    %p284 = scmp.eq.s32.totalorder %s19, 0
    %p285 = por %p283, %p284
    %p286 = scmp.ne.s32.totalorder %s278, %s280
    %p287 = scmp.eq.s32.totalorder %s24, 1
    %p288 = por %p286, %p287
    %p289 = scmp.ne.s32.totalorder %s280, %s281
    %p290 = scmp.eq.s32.totalorder %s24, 0
    %p291 = por %p289, %p290
    %p292 = scmp.ne.s32.totalorder %s280, %s281
    %p293 = scmp.eq.s32.totalorder %s25, 1
    %p294 = por %p292, %p293
    %p296 = scmp.ne.s32.totalorder %s281, %s295
    %p297 = scmp.eq.s32.totalorder %s25, 0
    %p298 = por %p296, %p297
    %s300 = sadd.s32 %s299, 1
    %p303 = scmp.eq.s32.totalorder %s19, 1
    %p304 = scmp.ne.s32.totalorder %s299, %s301
    %p305 = scmp.eq.s32.totalorder %s19, 0
    %p306 = por %p304, %p305
    %p307 = scmp.ne.s32.totalorder %s299, %s301
    %p308 = scmp.eq.s32.totalorder %s24, 1
    %p309 = por %p307, %p308
    %p310 = scmp.ne.s32.totalorder %s301, %s302
    %p311 = scmp.eq.s32.totalorder %s24, 0
    %p312 = por %p310, %p311
    %p313 = scmp.ne.s32.totalorder %s301, %s302
    %p314 = scmp.eq.s32.totalorder %s25, 1
    %p315 = por %p313, %p314
    %p317 = scmp.ne.s32.totalorder %s302, %s316
    %p318 = scmp.eq.s32.totalorder %s25, 0
    %p319 = por %p317, %p318
    %p320 = scmp.le.s32.totalorder 1, %s19
    %p321 = scmp.lt.s32.totalorder %s19, 3
    %p322 = pnand %p320, %p321
    %p323 = pneg %p322
    // Predicated region
    $region9: #{residual_block_forward.6} parent=5 // pred_check
      _
    $region10: #{residual_block_forward.6} parent=5 // pred_check_branch
      %325 = sbr.rel (%p322) target = $region12
    $region11: #{residual_block_forward.6} parent=5 // pred_region
      %s326 = ssub.s32 %s19, 1
      // Predicated region
      $region13: #{residual_block_forward.6} parent=11 // pred_check
        %p327 = pneg %p66
      $region14: #{residual_block_forward.6} parent=11 // pred_check_branch
        %329 = sbr.rel (%p327) target = $region16
      $region15: #{residual_block_forward.6} parent=11 // pred_region
        _
      $region16: #{residual_block_forward.6} parent=11 // pred_fallthru
        _
      // Predicated region
      $region17: #{residual_block_forward.6} parent=11 // pred_check
        %p330 = pneg %p113
      $region18: #{residual_block_forward.6} parent=11 // pred_check_branch
        %332 = sbr.rel (%p330) target = $region20
      $region19: #{residual_block_forward.6} parent=11 // pred_region
        _
      $region20: #{residual_block_forward.6} parent=11 // pred_fallthru
        _
      // Predicated region
      $region21: #{residual_block_forward.6} parent=11 // pred_check
        %p333 = pneg %p134
      $region22: #{residual_block_forward.6} parent=11 // pred_check_branch
        %335 = sbr.rel (%p333) target = $region24
      $region23: #{residual_block_forward.6} parent=11 // pred_region
        _
      $region24: #{residual_block_forward.6} parent=11 // pred_fallthru
        _
      // Predicated region
      $region25: #{residual_block_forward.6} parent=11 // pred_check
        %p336 = pneg %p155
      $region26: #{residual_block_forward.6} parent=11 // pred_check_branch
        %338 = sbr.rel (%p336) target = $region28
      $region27: #{residual_block_forward.6} parent=11 // pred_region
        _
      $region28: #{residual_block_forward.6} parent=11 // pred_fallthru
        _
      // Predicated region
      $region29: #{residual_block_forward.6} parent=11 // pred_check
        %p339 = pneg %p176
      $region30: #{residual_block_forward.6} parent=11 // pred_check_branch
        %341 = sbr.rel (%p339) target = $region32
      $region31: #{residual_block_forward.6} parent=11 // pred_region
        _
      $region32: #{residual_block_forward.6} parent=11 // pred_fallthru
        _
      // Predicated region
      $region33: #{residual_block_forward.6} parent=11 // pred_check
        %p342 = pneg %p197
      $region34: #{residual_block_forward.6} parent=11 // pred_check_branch
        %344 = sbr.rel (%p342) target = $region36
      $region35: #{residual_block_forward.6} parent=11 // pred_region
        _
      $region36: #{residual_block_forward.6} parent=11 // pred_fallthru
        _
      // Predicated region
      $region37: #{residual_block_forward.6} parent=11 // pred_check
        %p345 = pneg %p218
      $region38: #{residual_block_forward.6} parent=11 // pred_check_branch
        %347 = sbr.rel (%p345) target = $region40
      $region39: #{residual_block_forward.6} parent=11 // pred_region
        _
      $region40: #{residual_block_forward.6} parent=11 // pred_fallthru
        _
    $region12: #{residual_block_forward.6} parent=5 // pred_fallthru
      _
    %p348 = scmp.lt.s32.totalorder %s19, 2
    // Predicated region
    $region41: #{residual_block_forward.6} parent=5 // pred_check
      %p349 = pneg %p348
    $region42: #{residual_block_forward.6} parent=5 // pred_check_branch
      %351 = sbr.rel (%p349) target = $region44
    $region43: #{residual_block_forward.6} parent=5 // pred_region
      // Predicated region
      $region45: #{residual_block_forward.6} parent=43 // pred_check
        %p352 = pneg %p39
      $region46: #{residual_block_forward.6} parent=43 // pred_check_branch
        %354 = sbr.rel (%p352) target = $region48
      $region47: #{residual_block_forward.6} parent=43 // pred_region
        %p355 = scmp.lt.s32.totalorder %s19, 1
        %s356 = scalar_select %p355, %s19, 1
        %s357 = smul.addr %s356, 43
        %s358 = smul.addr %s357, 8
        %s359 = scalar_lea.vmem %s0, %s358
      $region48: #{residual_block_forward.6} parent=43 // pred_fallthru
        _
      // Predicated region
      $region49: #{residual_block_forward.6} parent=43 // pred_check
        %p360 = pneg %p86
      $region50: #{residual_block_forward.6} parent=43 // pred_check_branch
        %362 = sbr.rel (%p360) target = $region52
      $region51: #{residual_block_forward.6} parent=43 // pred_region
        %p363 = scmp.lt.s32.totalorder %s19, 1
        %s364 = scalar_select %p363, %s19, 1
        %s365 = smul.addr %s364, 36
        %s366 = smul.addr %s365, 8
        %s367 = scalar_lea.vmem %s2, %s366
      $region52: #{residual_block_forward.6} parent=43 // pred_fallthru
        _
    $region44: #{residual_block_forward.6} parent=5 // pred_fallthru
      _
    %p368 = scmp.le.s32.totalorder 1, %s19
    %p369 = scmp.lt.s32.totalorder %s19, 3
    %p370 = pnand %p368, %p369
    %p371 = pneg %p370
    // Predicated region
    $region53: #{residual_block_forward.6} parent=5 // pred_check
      _
    $region54: #{residual_block_forward.6} parent=5 // pred_check_branch
      %373 = sbr.rel (%p370) target = $region56
    $region55: #{residual_block_forward.6} parent=5 // pred_region
      %s374 = ssub.s32 %s19, 1
      %p375 = scmp.lt.s32.totalorder %s24, 1
      %s376 = scalar_select %p375, %s24, 1
      %s377 = smul.addr %s376, 43
      %s378 = smul.addr %s377, 8
      %s379 = scalar_lea.vmem %s0, %s378
      %p380 = pneg %p45
      %p381 = pneg %p42
      %p382 = pneg %p66
      %p383 = pneg %p63
      %p384 = scmp.lt.s32.totalorder %s24, 1
      %s385 = scalar_select %p384, %s24, 1
      %s386 = smul.addr %s385, 36
      %s387 = smul.addr %s386, 8
      %s388 = scalar_lea.vmem %s2, %s387
      %p389 = pneg %p92
      %p390 = pneg %p89
      %p391 = pneg %p113
      %p392 = pneg %p110
      %p393 = pneg %p134
      %p394 = pneg %p131
      %p395 = pneg %p155
      %p396 = pneg %p152
      %p397 = pneg %p176
      %p398 = pneg %p173
      %p399 = pneg %p197
      %p400 = pneg %p194
      %p401 = pneg %p218
      %p402 = pneg %p215
      %p403 = pneg %p244
      %p404 = pneg %p241
      %p405 = scmp.lt.s32.totalorder %s24, 1
      %s406 = scalar_select %p405, %s24, 1
      %s407 = smul.addr %s406, 36
      %s408 = smul.addr %s407, 8
      %s409 = scalar_lea.vmem %s9, %s408
      %p410 = pneg %p270
      %p411 = pneg %p267
      %p412 = scmp.lt.s32.totalorder %s24, 1
      %s413 = scalar_select %p412, %s24, 1
      %s414 = smul.addr %s413, 36
      %s415 = smul.addr %s414, 8
      %s416 = scalar_lea.vmem %s10, %s415
      %p417 = pneg %p291
      %p418 = pneg %p288
      %p419 = pneg %p312
      %p420 = pneg %p309
      %p421 = scmp.lt.s32.totalorder %s24, 1
      %s422 = scalar_select %p421, %s24, 1
      %s423 = smul.addr %s422, 43
      %s424 = smul.addr %s423, 8
      %s425 = scalar_lea.vmem %s0, %s424
      %p426 = scmp.lt.s32.totalorder %s24, 1
      %s427 = scalar_select %p426, %s24, 1
      %s428 = smul.addr %s427, 36
      %s429 = smul.addr %s428, 8
      %s430 = scalar_lea.vmem %s2, %s429
      %p431 = scmp.lt.s32.totalorder %s24, 1
      %s432 = scalar_select %p431, %s24, 1
      %s433 = smul.addr %s432, 36
      %s434 = smul.addr %s433, 8
      %s435 = scalar_lea.vmem %s9, %s434
      %p436 = scmp.lt.s32.totalorder %s24, 1
      %s437 = scalar_select %p436, %s24, 1
      %s438 = smul.addr %s437, 36
      %s439 = smul.addr %s438, 8
      %s440 = scalar_lea.vmem %s10, %s439
      %p441 = scmp.eq.s32.totalorder %s24, 0
      // Predicated region
      $region57: #{residual_block_forward.6} parent=55 // pred_check
        %p442 = pneg %p441
      $region58: #{residual_block_forward.6} parent=55 // pred_check_branch
        %444 = sbr.rel (%p442) target = $region60
      $region59: #{residual_block_forward.6} parent=55 // pred_region
        %445 = vst [vmem:[#allocation2] sm:$0x1] 0.0
        %446 = vst [vmem:[#allocation3] sm:$0x1] 0.0
        %447 = vst [vmem:[#allocation4] sm:$0x1] 0.0
        %448 = vst [vmem:[#allocation5] sm:$0x1] 0.0
      $region60: #{residual_block_forward.6} parent=55 // pred_fallthru
        _
      %v449 = vld [vmem:[%s425] sm:$0xff]
      %v450 = vld [vmem:[%s425 + $0x8] sm:$0xff]
      %v451 = vld [vmem:[%s425 + $0x10] sm:$0xff]
      %v452 = vld [vmem:[%s425 + $0x18] sm:$0xff]
      %v453 = vld [vmem:[%s425 + $0x20] sm:$0xff]
      %v454 = vld [vmem:[%s425 + $0x28] sm:$0xff]
      %v455 = vld [vmem:[%s425 + $0x30] sm:$0xff]
      %v456 = vld [vmem:[%s425 + $0x38] sm:$0xff]
      %v457 = vld [vmem:[%s425 + $0x40] sm:$0xff]
      %v458 = vld [vmem:[%s425 + $0x48] sm:$0xff]
      %v459 = vld [vmem:[%s425 + $0x50] sm:$0xff]
      %v460 = vld [vmem:[%s425 + $0x58] sm:$0xff]
      %v461 = vld [vmem:[%s425 + $0x60] sm:$0xff]
      %v462 = vld [vmem:[%s425 + $0x68] sm:$0xff]
      %v463 = vld [vmem:[%s425 + $0x70] sm:$0xff]
      %v464 = vld [vmem:[%s425 + $0x78] sm:$0xff]
      %v465 = vld [vmem:[%s425 + $0x80] sm:$0xff]
      %v466 = vld [vmem:[%s425 + $0x88] sm:$0xff]
      %v467 = vld [vmem:[%s425 + $0x90] sm:$0xff]
      %v468 = vld [vmem:[%s425 + $0x98] sm:$0xff]
      %v469 = vld [vmem:[%s425 + $0xa0] sm:$0xff]
      %v470 = vld [vmem:[%s425 + $0xa8] sm:$0xff]
      %v471 = vld [vmem:[%s425 + $0xb0] sm:$0xff]
      %v472 = vld [vmem:[%s425 + $0xb8] sm:$0xff]
      %v473 = vld [vmem:[%s425 + $0xc0] sm:$0xff]
      %v474 = vld [vmem:[%s425 + $0xc8] sm:$0xff]
      %v475 = vld [vmem:[%s425 + $0xd0] sm:$0xff]
      %v476 = vld [vmem:[%s425 + $0xd8] sm:$0xff]
      %v477 = vld [vmem:[%s425 + $0xe0] sm:$0xff]
      %v478 = vld [vmem:[%s425 + $0xe8] sm:$0xff]
      %v479 = vld [vmem:[%s425 + $0xf0] sm:$0xff]
      %v480 = vld [vmem:[%s425 + $0xf8] sm:$0xff]
      %v481 = vld [vmem:[%s425 + $0x100] sm:$0xff]
      %v482 = vld [vmem:[%s425 + $0x108] sm:$0xff]
      %v483 = vld [vmem:[%s425 + $0x110] sm:$0xff]
      %v484 = vld [vmem:[%s425 + $0x118] sm:$0xff]
      %v485 = vld [vmem:[%s425 + $0x120] sm:$0xff]
      %v486 = vld [vmem:[%s425 + $0x128] sm:$0xff]
      %v487 = vld [vmem:[%s425 + $0x130] sm:$0xff]
      %v488 = vld [vmem:[%s425 + $0x138] sm:$0xff]
      %v489 = vld [vmem:[%s425 + $0x140] sm:$0xff]
      %v490 = vld [vmem:[%s1] sm:$0xff]
      %v491 = vld [vmem:[%s1 + $0x8] sm:$0xff]
      %v492 = vld [vmem:[%s1 + $0x10] sm:$0xff]
      %v493 = vld [vmem:[%s1 + $0x18] sm:$0xff]
      %v494 = vld [vmem:[%s1 + $0x20] sm:$0xff]
      %v495 = vld [vmem:[%s1 + $0x28] sm:$0xff]
      %v496 = vld [vmem:[%s1 + $0x30] sm:$0xff]
      %v497 = vld [vmem:[%s1 + $0x38] sm:$0xff]
      %v498 = vld [vmem:[%s1 + $0x40] sm:$0xff]
      %v499 = vld [vmem:[%s1 + $0x48] sm:$0xff]
      %v500 = vld [vmem:[%s1 + $0x50] sm:$0xff]
      %v501 = vld [vmem:[%s1 + $0x58] sm:$0xff]
      %v502 = vld [vmem:[%s1 + $0x60] sm:$0xff]
      %v503 = vld [vmem:[%s1 + $0x68] sm:$0xff]
      %v504 = vld [vmem:[%s1 + $0x70] sm:$0xff]
      %v505 = vld [vmem:[%s1 + $0x78] sm:$0xff]
      %s506 = scalar_lea.vmem %s1, 128
      %v507 = vld [vmem:[%s506] sm:$0xff]
      %v508 = vld [vmem:[%s506 + $0x8] sm:$0xff]
      %v509 = vld [vmem:[%s506 + $0x10] sm:$0xff]
      %v510 = vld [vmem:[%s506 + $0x18] sm:$0xff]
      %v511 = vld [vmem:[%s506 + $0x20] sm:$0xff]
      %v512 = vld [vmem:[%s506 + $0x28] sm:$0xff]
      %v513 = vld [vmem:[%s506 + $0x30] sm:$0xff]
      %v514 = vld [vmem:[%s506 + $0x38] sm:$0xff]
      %v515 = vld [vmem:[%s506 + $0x40] sm:$0xff]
      %v516 = vld [vmem:[%s506 + $0x48] sm:$0xff]
      %v517 = vld [vmem:[%s506 + $0x50] sm:$0xff]
      %v518 = vld [vmem:[%s506 + $0x58] sm:$0xff]
      %v519 = vld [vmem:[%s506 + $0x60] sm:$0xff]
      %v520 = vld [vmem:[%s506 + $0x68] sm:$0xff]
      %v521 = vld [vmem:[%s506 + $0x70] sm:$0xff]
      %v522 = vld [vmem:[%s506 + $0x78] sm:$0xff]
      %vm560 = vcmask 1046528
      %v561 = vrot.slane %v449, 1
      %v562 = vrot.slane %v450, 1
      %v563 = vsel %vm560, %v561, %v562
      %v564 = vrot.slane %v451, 1
      %v565 = vsel %vm560, %v562, %v564
      %v566 = vrot.slane %v452, 1
      %v567 = vsel %vm560, %v564, %v566
      %v568 = vrot.slane %v453, 1
      %v569 = vsel %vm560, %v566, %v568
      %v570 = vrot.slane %v454, 1
      %v571 = vsel %vm560, %v568, %v570
      %v572 = vrot.slane %v455, 1
      %v573 = vsel %vm560, %v570, %v572
      %v574 = vrot.slane %v456, 1
      %v575 = vsel %vm560, %v572, %v574
      %v576 = vrot.slane %v457, 1
      %v577 = vsel %vm560, %v574, %v576
      %v578 = vrot.slane %v458, 1
      %v579 = vsel %vm560, %v576, %v578
      %v580 = vrot.slane %v459, 1
      %v581 = vsel %vm560, %v578, %v580
      %v582 = vrot.slane %v460, 1
      %v583 = vsel %vm560, %v580, %v582
      %v584 = vrot.slane %v461, 1
      %v585 = vsel %vm560, %v582, %v584
      %v586 = vrot.slane %v462, 1
      %v587 = vsel %vm560, %v584, %v586
      %v588 = vrot.slane %v463, 1
      %v589 = vsel %vm560, %v586, %v588
      %v590 = vrot.slane %v464, 1
      %v591 = vsel %vm560, %v588, %v590
      %v592 = vrot.slane %v465, 1
      %v593 = vsel %vm560, %v590, %v592
      %v594 = vrot.slane %v466, 1
      %v595 = vsel %vm560, %v592, %v594
      %v596 = vrot.slane %v467, 1
      %v597 = vsel %vm560, %v594, %v596
      %v598 = vrot.slane %v468, 1
      %v599 = vsel %vm560, %v596, %v598
      %v600 = vrot.slane %v469, 1
      %v601 = vsel %vm560, %v598, %v600
      %v602 = vrot.slane %v470, 1
      %v603 = vsel %vm560, %v600, %v602
      %v604 = vrot.slane %v471, 1
      %v605 = vsel %vm560, %v602, %v604
      %v606 = vrot.slane %v472, 1
      %v607 = vsel %vm560, %v604, %v606
      %v608 = vrot.slane %v473, 1
      %v609 = vsel %vm560, %v606, %v608
      %v610 = vrot.slane %v474, 1
      %v611 = vsel %vm560, %v608, %v610
      %v612 = vrot.slane %v475, 1
      %v613 = vsel %vm560, %v610, %v612
      %v614 = vrot.slane %v476, 1
      %v615 = vsel %vm560, %v612, %v614
      %v616 = vrot.slane %v477, 1
      %v617 = vsel %vm560, %v614, %v616
      %v618 = vrot.slane %v478, 1
      %v619 = vsel %vm560, %v616, %v618
      %v620 = vrot.slane %v479, 1
      %v621 = vsel %vm560, %v618, %v620
      %v622 = vrot.slane %v480, 1
      %v623 = vsel %vm560, %v620, %v622
      %v624 = vrot.slane %v481, 1
      %v625 = vsel %vm560, %v622, %v624
      %v626 = vrot.slane %v482, 1
      %v627 = vsel %vm560, %v624, %v626
      %v628 = vrot.slane %v483, 1
      %v629 = vsel %vm560, %v626, %v628
      %v630 = vrot.slane %v484, 1
      %v631 = vsel %vm560, %v628, %v630
      %v632 = vrot.slane %v485, 1
      %v633 = vsel %vm560, %v630, %v632
      %670 = vmatprep.subr.mxu0 0.0
      %671 = vmatpush1.msra.mxu0 %v507
      %672 = vmatprep.subr.mxu0 0.0
      %673 = vmatpush1.msra.mxu0 %v508
      %674 = vmatprep.subr.mxu0 0.0
      %675 = vmatpush1.msra.mxu0 %v509
      %676 = vmatprep.subr.mxu0 0.0
      %677 = vmatpush1.msra.mxu0 %v510
      %678 = vmatprep.subr.mxu0 0.0
      %679 = vmatpush1.msra.mxu0 %v511
      %680 = vmatprep.subr.mxu0 0.0
      %681 = vmatpush1.msra.mxu0 %v512
      %682 = vmatprep.subr.mxu0 0.0
      %683 = vmatpush1.msra.mxu0 %v513
      %684 = vmatprep.subr.mxu0 0.0
      %685 = vmatpush1.msra.mxu0 %v514
      %686 = vmatprep.subr.mxu0 0.0
      %687 = vmatpush1.msra.mxu0 %v515
      %688 = vmatprep.subr.mxu0 0.0
      %689 = vmatpush1.msra.mxu0 %v516
      %690 = vmatprep.subr.mxu0 0.0
      %691 = vmatpush1.msra.mxu0 %v517
      %692 = vmatprep.subr.mxu0 0.0
      %693 = vmatpush1.msra.mxu0 %v518
      %694 = vmatprep.subr.mxu0 0.0
      %695 = vmatpush1.msra.mxu0 %v519
      %696 = vmatprep.subr.mxu0 0.0
      %697 = vmatpush1.msra.mxu0 %v520
      %698 = vmatprep.subr.mxu0 0.0
      %699 = vmatpush1.msra.mxu0 %v521
      %700 = vmatprep.subr.mxu0 0.0
      %701 = vmatpush1.msra.mxu0 %v522
      %702 = vmatprep.subr.mxu0 0.0
      %703 = vmatpush1.msra.mxu0 0.0
      %704 = vmatprep.subr.mxu0 0.0
      %705 = vmatpush1.msra.mxu0 0.0
      %706 = vmatprep.subr.mxu0 0.0
      %707 = vmatpush1.msra.mxu0 0.0
      %708 = vmatprep.subr.mxu0 0.0
      %709 = vmatpush1.msra.mxu0 0.0
      %710 = vmatprep.subr.mxu0 0.0
      %711 = vmatpush1.msra.mxu0 0.0
      %712 = vmatprep.subr.mxu0 0.0
      %713 = vmatpush1.msra.mxu0 0.0
      %714 = vmatprep.subr.mxu0 0.0
      %715 = vmatpush1.msra.mxu0 0.0
      %716 = vmatprep.subr.mxu0 0.0
      %717 = vmatpush1.msra.mxu0 0.0
      %718 = vmatprep.subr.mxu0 0.0
      %719 = vmatpush1.msra.mxu0 0.0
      %720 = vmatprep.subr.mxu0 0.0
      %721 = vmatpush1.msra.mxu0 0.0
      %722 = vmatprep.subr.mxu0 0.0
      %723 = vmatpush1.msra.mxu0 0.0
      %724 = vmatprep.subr.mxu0 0.0
      %725 = vmatpush1.msra.mxu0 0.0
      %726 = vmatprep.subr.mxu0 0.0
      %727 = vmatpush1.msra.mxu0 0.0
      %728 = vmatprep.subr.mxu0 0.0
      %729 = vmatpush1.msra.mxu0 0.0
      %730 = vmatprep.subr.mxu0 0.0
      %731 = vmatpush1.msra.mxu0 0.0
      %732 = vmatprep.subr.mxu0 0.0
      %733 = vmatpush1.msra.mxu0 0.0
      %734 = vmatprep.mubr.f32.mxu0 0.0
      %735 = vmatmul.mubr.f32.gmra.mrb[0].mxu0 %v563
      %v736 = vpop.f32.mrb[0].mxu0
      %v737 = vadd.f32 0.0, %v736
      %v738 = vpop.f32.mrb[0].mxu0
      %739 = vmatprep.mubr.f32.mxu0 0.0
      %740 = vmatmul.mubr.f32.gmra.mrb[0].mxu0 %v565
      %v741 = vpop.f32.mrb[0].mxu0
      %v742 = vadd.f32 0.0, %v741
      %v743 = vpop.f32.mrb[0].mxu0
      %744 = vmatprep.mubr.f32.mxu0 0.0
      %745 = vmatmul.mubr.f32.gmra.mrb[0].mxu0 %v567
      %v746 = vpop.f32.mrb[0].mxu0
      %v747 = vadd.f32 0.0, %v746
      %v748 = vpop.f32.mrb[0].mxu0
      %749 = vmatprep.mubr.f32.mxu0 0.0
      %750 = vmatmul.mubr.f32.gmra.mrb[0].mxu0 %v569
      %v751 = vpop.f32.mrb[0].mxu0
      %v752 = vadd.f32 0.0, %v751
      %v753 = vpop.f32.mrb[0].mxu0
      %754 = vmatprep.mubr.f32.mxu0 0.0
      %755 = vmatmul.mubr.f32.gmra.mrb[0].mxu0 %v571
      %v756 = vpop.f32.mrb[0].mxu0
      %v757 = vadd.f32 0.0, %v756
      %v758 = vpop.f32.mrb[0].mxu0
      %759 = vmatprep.mubr.f32.mxu0 0.0
      %760 = vmatmul.mubr.f32.gmra.mrb[0].mxu0 %v573
      %v761 = vpop.f32.mrb[0].mxu0
      %v762 = vadd.f32 0.0, %v761
      %v763 = vpop.f32.mrb[0].mxu0
      %764 = vmatprep.mubr.f32.mxu0 0.0
      %765 = vmatmul.mubr.f32.gmra.mrb[0].mxu0 %v575
      %v766 = vpop.f32.mrb[0].mxu0
      %v767 = vadd.f32 0.0, %v766
      %v768 = vpop.f32.mrb[0].mxu0
      %769 = vmatprep.mubr.f32.mxu0 0.0
      %770 = vmatmul.mubr.f32.gmra.mrb[0].mxu0 %v577
      %v771 = vpop.f32.mrb[0].mxu0
      %v772 = vadd.f32 0.0, %v771
      %v773 = vpop.f32.mrb[0].mxu0
      %774 = vmatprep.mubr.f32.mxu0 0.0
      %775 = vmatmul.mubr.f32.gmra.mrb[0].mxu0 %v579
      %v776 = vpop.f32.mrb[0].mxu0
      %v777 = vadd.f32 0.0, %v776
      %v778 = vpop.f32.mrb[0].mxu0
      %779 = vmatprep.mubr.f32.mxu0 0.0
      %780 = vmatmul.mubr.f32.gmra.mrb[0].mxu0 %v581
      %v781 = vpop.f32.mrb[0].mxu0
      %v782 = vadd.f32 0.0, %v781
      %v783 = vpop.f32.mrb[0].mxu0
      %784 = vmatprep.mubr.f32.mxu0 0.0
      %785 = vmatmul.mubr.f32.gmra.mrb[0].mxu0 %v583
      %v786 = vpop.f32.mrb[0].mxu0
      %v787 = vadd.f32 0.0, %v786
      %v788 = vpop.f32.mrb[0].mxu0
      %789 = vmatprep.mubr.f32.mxu0 0.0
      %790 = vmatmul.mubr.f32.gmra.mrb[0].mxu0 %v585
      %v791 = vpop.f32.mrb[0].mxu0
      %v792 = vadd.f32 0.0, %v791
      %v793 = vpop.f32.mrb[0].mxu0
      %794 = vmatprep.mubr.f32.mxu0 0.0
      %795 = vmatmul.mubr.f32.gmra.mrb[0].mxu0 %v587
      %v796 = vpop.f32.mrb[0].mxu0
      %v797 = vadd.f32 0.0, %v796
      %v798 = vpop.f32.mrb[0].mxu0
      %799 = vmatprep.mubr.f32.mxu0 0.0
      %800 = vmatmul.mubr.f32.gmra.mrb[0].mxu0 %v589
      %v801 = vpop.f32.mrb[0].mxu0
      %v802 = vadd.f32 0.0, %v801
      %v803 = vpop.f32.mrb[0].mxu0
      %804 = vmatprep.mubr.f32.mxu0 0.0
      %805 = vmatmul.mubr.f32.gmra.mrb[0].mxu0 %v591
      %v806 = vpop.f32.mrb[0].mxu0
      %v807 = vadd.f32 0.0, %v806
      %v808 = vpop.f32.mrb[0].mxu0
      %809 = vmatprep.mubr.f32.mxu0 0.0
      %810 = vmatmul.mubr.f32.gmra.mrb[0].mxu0 %v593
      %v811 = vpop.f32.mrb[0].mxu0
      %v812 = vadd.f32 0.0, %v811
      %v813 = vpop.f32.mrb[0].mxu0
      %814 = vmatprep.mubr.f32.mxu0 0.0
      %815 = vmatmul.mubr.f32.gmra.mrb[0].mxu0 %v595
      %v816 = vpop.f32.mrb[0].mxu0
      %v817 = vadd.f32 0.0, %v816
      %v818 = vpop.f32.mrb[0].mxu0
      %819 = vmatprep.mubr.f32.mxu0 0.0
      %820 = vmatmul.mubr.f32.gmra.mrb[0].mxu0 %v597
      %v821 = vpop.f32.mrb[0].mxu0
      %v822 = vadd.f32 0.0, %v821
      %v823 = vpop.f32.mrb[0].mxu0
      %824 = vmatprep.mubr.f32.mxu0 0.0
      %825 = vmatmul.mubr.f32.gmra.mrb[0].mxu0 %v599
      %v826 = vpop.f32.mrb[0].mxu0
      %v827 = vadd.f32 0.0, %v826
      %v828 = vpop.f32.mrb[0].mxu0
      %829 = vmatprep.mubr.f32.mxu0 0.0
      %830 = vmatmul.mubr.f32.gmra.mrb[0].mxu0 %v601
      %v831 = vpop.f32.mrb[0].mxu0
      %v832 = vadd.f32 0.0, %v831
      %v833 = vpop.f32.mrb[0].mxu0
      %834 = vmatprep.mubr.f32.mxu0 0.0
      %835 = vmatmul.mubr.f32.gmra.mrb[0].mxu0 %v603
      %v836 = vpop.f32.mrb[0].mxu0
      %v837 = vadd.f32 0.0, %v836
      %v838 = vpop.f32.mrb[0].mxu0
      %839 = vmatprep.mubr.f32.mxu0 0.0
      %840 = vmatmul.mubr.f32.gmra.mrb[0].mxu0 %v605
      %v841 = vpop.f32.mrb[0].mxu0
      %v842 = vadd.f32 0.0, %v841
      %v843 = vpop.f32.mrb[0].mxu0
      %844 = vmatprep.mubr.f32.mxu0 0.0
      %845 = vmatmul.mubr.f32.gmra.mrb[0].mxu0 %v607
      %v846 = vpop.f32.mrb[0].mxu0
      %v847 = vadd.f32 0.0, %v846
      %v848 = vpop.f32.mrb[0].mxu0
      %849 = vmatprep.mubr.f32.mxu0 0.0
      %850 = vmatmul.mubr.f32.gmra.mrb[0].mxu0 %v609
      %v851 = vpop.f32.mrb[0].mxu0
      %v852 = vadd.f32 0.0, %v851
      %v853 = vpop.f32.mrb[0].mxu0
      %854 = vmatprep.mubr.f32.mxu0 0.0
      %855 = vmatmul.mubr.f32.gmra.mrb[0].mxu0 %v611
      %v856 = vpop.f32.mrb[0].mxu0
      %v857 = vadd.f32 0.0, %v856
      %v858 = vpop.f32.mrb[0].mxu0
      %859 = vmatprep.mubr.f32.mxu0 0.0
      %860 = vmatmul.mubr.f32.gmra.mrb[0].mxu0 %v613
      %v861 = vpop.f32.mrb[0].mxu0
      %v862 = vadd.f32 0.0, %v861
      %v863 = vpop.f32.mrb[0].mxu0
      %864 = vmatprep.mubr.f32.mxu0 0.0
      %865 = vmatmul.mubr.f32.gmra.mrb[0].mxu0 %v615
      %v866 = vpop.f32.mrb[0].mxu0
      %v867 = vadd.f32 0.0, %v866
      %v868 = vpop.f32.mrb[0].mxu0
      %869 = vmatprep.mubr.f32.mxu0 0.0
      %870 = vmatmul.mubr.f32.gmra.mrb[0].mxu0 %v617
      %v871 = vpop.f32.mrb[0].mxu0
      %v872 = vadd.f32 0.0, %v871
      %v873 = vpop.f32.mrb[0].mxu0
      %874 = vmatprep.mubr.f32.mxu0 0.0
      %875 = vmatmul.mubr.f32.gmra.mrb[0].mxu0 %v619
      %v876 = vpop.f32.mrb[0].mxu0
      %v877 = vadd.f32 0.0, %v876
      %v878 = vpop.f32.mrb[0].mxu0
      %879 = vmatprep.mubr.f32.mxu0 0.0
      %880 = vmatmul.mubr.f32.gmra.mrb[0].mxu0 %v621
      %v881 = vpop.f32.mrb[0].mxu0
      %v882 = vadd.f32 0.0, %v881
      %v883 = vpop.f32.mrb[0].mxu0
      %884 = vmatprep.mubr.f32.mxu0 0.0
      %885 = vmatmul.mubr.f32.gmra.mrb[0].mxu0 %v623
      %v886 = vpop.f32.mrb[0].mxu0
      %v887 = vadd.f32 0.0, %v886
      %v888 = vpop.f32.mrb[0].mxu0
      %889 = vmatprep.mubr.f32.mxu0 0.0
      %890 = vmatmul.mubr.f32.gmra.mrb[0].mxu0 %v625
      %v891 = vpop.f32.mrb[0].mxu0
      %v892 = vadd.f32 0.0, %v891
      %v893 = vpop.f32.mrb[0].mxu0
      %894 = vmatprep.mubr.f32.mxu0 0.0
      %895 = vmatmul.mubr.f32.gmra.mrb[0].mxu0 %v627
      %v896 = vpop.f32.mrb[0].mxu0
      %v897 = vadd.f32 0.0, %v896
      %v898 = vpop.f32.mrb[0].mxu0
      %899 = vmatprep.mubr.f32.mxu0 0.0
      %900 = vmatmul.mubr.f32.gmra.mrb[0].mxu0 %v629
      %v901 = vpop.f32.mrb[0].mxu0
      %v902 = vadd.f32 0.0, %v901
      %v903 = vpop.f32.mrb[0].mxu0
      %904 = vmatprep.mubr.f32.mxu0 0.0
      %905 = vmatmul.mubr.f32.gmra.mrb[0].mxu0 %v631
      %v906 = vpop.f32.mrb[0].mxu0
      %v907 = vadd.f32 0.0, %v906
      %v908 = vpop.f32.mrb[0].mxu0
      %909 = vmatprep.mubr.f32.mxu0 0.0
      %910 = vmatmul.mubr.f32.gmra.mrb[0].mxu0 %v633
      %v911 = vpop.f32.mrb[0].mxu0
      %v912 = vadd.f32 0.0, %v911
      %v913 = vpop.f32.mrb[0].mxu0
      %914 = vdwg.mxu0
      %915 = vmatprep.subr.mxu0 0.0
      %916 = vmatpush1.msra.mxu0 %v490
      %917 = vmatprep.subr.mxu0 0.0
      %918 = vmatpush1.msra.mxu0 %v491
      %919 = vmatprep.subr.mxu0 0.0
      %920 = vmatpush1.msra.mxu0 %v492
      %921 = vmatprep.subr.mxu0 0.0
      %922 = vmatpush1.msra.mxu0 %v493
      %923 = vmatprep.subr.mxu0 0.0
      %924 = vmatpush1.msra.mxu0 %v494
      %925 = vmatprep.subr.mxu0 0.0
      %926 = vmatpush1.msra.mxu0 %v495
      %927 = vmatprep.subr.mxu0 0.0
      %928 = vmatpush1.msra.mxu0 %v496
      %929 = vmatprep.subr.mxu0 0.0
      %930 = vmatpush1.msra.mxu0 %v497
      %931 = vmatprep.subr.mxu0 0.0
      %932 = vmatpush1.msra.mxu0 %v498
      %933 = vmatprep.subr.mxu0 0.0
      %934 = vmatpush1.msra.mxu0 %v499
      %935 = vmatprep.subr.mxu0 0.0
      %936 = vmatpush1.msra.mxu0 %v500
      %937 = vmatprep.subr.mxu0 0.0
      %938 = vmatpush1.msra.mxu0 %v501
      %939 = vmatprep.subr.mxu0 0.0
      %940 = vmatpush1.msra.mxu0 %v502
      %941 = vmatprep.subr.mxu0 0.0
      %942 = vmatpush1.msra.mxu0 %v503
      %943 = vmatprep.subr.mxu0 0.0
      %944 = vmatpush1.msra.mxu0 %v504
      %945 = vmatprep.subr.mxu0 0.0
      %946 = vmatpush1.msra.mxu0 %v505
      %947 = vmatprep.subr.mxu0 0.0
      %948 = vmatpush1.msra.mxu0 0.0
      %949 = vmatprep.subr.mxu0 0.0
      %950 = vmatpush1.msra.mxu0 0.0
      %951 = vmatprep.subr.mxu0 0.0
      %952 = vmatpush1.msra.mxu0 0.0
      %953 = vmatprep.subr.mxu0 0.0
      %954 = vmatpush1.msra.mxu0 0.0
      %955 = vmatprep.subr.mxu0 0.0
      %956 = vmatpush1.msra.mxu0 0.0
      %957 = vmatprep.subr.mxu0 0.0
      %958 = vmatpush1.msra.mxu0 0.0
      %959 = vmatprep.subr.mxu0 0.0
      %960 = vmatpush1.msra.mxu0 0.0
      %961 = vmatprep.subr.mxu0 0.0
      %962 = vmatpush1.msra.mxu0 0.0
      %963 = vmatprep.subr.mxu0 0.0
      %964 = vmatpush1.msra.mxu0 0.0
      %965 = vmatprep.subr.mxu0 0.0
      %966 = vmatpush1.msra.mxu0 0.0
      %967 = vmatprep.subr.mxu0 0.0
      %968 = vmatpush1.msra.mxu0 0.0
      %969 = vmatprep.subr.mxu0 0.0
      %970 = vmatpush1.msra.mxu0 0.0
      %971 = vmatprep.subr.mxu0 0.0
      %972 = vmatpush1.msra.mxu0 0.0
      %973 = vmatprep.subr.mxu0 0.0
      %974 = vmatpush1.msra.mxu0 0.0
      %975 = vmatprep.subr.mxu0 0.0
      %976 = vmatpush1.msra.mxu0 0.0
      %977 = vmatprep.subr.mxu0 0.0
      %978 = vmatpush1.msra.mxu0 0.0
      %979 = vmatprep.mubr.f32.mxu0 0.0
      %980 = vmatmul.mubr.f32.gmra.mrb[0].mxu0 %v449
      %v981 = vpop.f32.mrb[0].mxu0
      %v982 = vadd.f32 %v737, %v981
      %v983 = vpop.f32.mrb[0].mxu0
      %984 = vmatprep.mubr.f32.mxu0 0.0
      %985 = vmatmul.mubr.f32.gmra.mrb[0].mxu0 %v450
      %v986 = vpop.f32.mrb[0].mxu0
      %v987 = vadd.f32 %v742, %v986
      %v988 = vpop.f32.mrb[0].mxu0
      %989 = vmatprep.mubr.f32.mxu0 0.0
      %990 = vmatmul.mubr.f32.gmra.mrb[0].mxu0 %v451
      %v991 = vpop.f32.mrb[0].mxu0
      %v992 = vadd.f32 %v747, %v991
      %v993 = vpop.f32.mrb[0].mxu0
      %994 = vmatprep.mubr.f32.mxu0 0.0
      %995 = vmatmul.mubr.f32.gmra.mrb[0].mxu0 %v452
      %v996 = vpop.f32.mrb[0].mxu0
      %v997 = vadd.f32 %v752, %v996
      %v998 = vpop.f32.mrb[0].mxu0
      %999 = vmatprep.mubr.f32.mxu0 0.0
      %1000 = vmatmul.mubr.f32.gmra.mrb[0].mxu0 %v453
      %v1001 = vpop.f32.mrb[0].mxu0
      %v1002 = vadd.f32 %v757, %v1001
      %v1003 = vpop.f32.mrb[0].mxu0
      %1004 = vmatprep.mubr.f32.mxu0 0.0
      %1005 = vmatmul.mubr.f32.gmra.mrb[0].mxu0 %v454
      %v1006 = vpop.f32.mrb[0].mxu0
      %v1007 = vadd.f32 %v762, %v1006
      %v1008 = vpop.f32.mrb[0].mxu0
      %1009 = vmatprep.mubr.f32.mxu0 0.0
      %1010 = vmatmul.mubr.f32.gmra.mrb[0].mxu0 %v455
      %v1011 = vpop.f32.mrb[0].mxu0
      %v1012 = vadd.f32 %v767, %v1011
      %v1013 = vpop.f32.mrb[0].mxu0
      %1014 = vmatprep.mubr.f32.mxu0 0.0
      %1015 = vmatmul.mubr.f32.gmra.mrb[0].mxu0 %v456
      %v1016 = vpop.f32.mrb[0].mxu0
      %v1017 = vadd.f32 %v772, %v1016
      %v1018 = vpop.f32.mrb[0].mxu0
      %1019 = vmatprep.mubr.f32.mxu0 0.0
      %1020 = vmatmul.mubr.f32.gmra.mrb[0].mxu0 %v457
      %v1021 = vpop.f32.mrb[0].mxu0
      %v1022 = vadd.f32 %v777, %v1021
      %v1023 = vpop.f32.mrb[0].mxu0
      %1024 = vmatprep.mubr.f32.mxu0 0.0
      %1025 = vmatmul.mubr.f32.gmra.mrb[0].mxu0 %v458
      %v1026 = vpop.f32.mrb[0].mxu0
      %v1027 = vadd.f32 %v782, %v1026
      %v1028 = vpop.f32.mrb[0].mxu0
      %1029 = vmatprep.mubr.f32.mxu0 0.0
      %1030 = vmatmul.mubr.f32.gmra.mrb[0].mxu0 %v459
      %v1031 = vpop.f32.mrb[0].mxu0
      %v1032 = vadd.f32 %v787, %v1031
      %v1033 = vpop.f32.mrb[0].mxu0
      %1034 = vmatprep.mubr.f32.mxu0 0.0
      %1035 = vmatmul.mubr.f32.gmra.mrb[0].mxu0 %v460
      %v1036 = vpop.f32.mrb[0].mxu0
      %v1037 = vadd.f32 %v792, %v1036
      %v1038 = vpop.f32.mrb[0].mxu0
      %1039 = vmatprep.mubr.f32.mxu0 0.0
      %1040 = vmatmul.mubr.f32.gmra.mrb[0].mxu0 %v461
      %v1041 = vpop.f32.mrb[0].mxu0
      %v1042 = vadd.f32 %v797, %v1041
      %v1043 = vpop.f32.mrb[0].mxu0
      %1044 = vmatprep.mubr.f32.mxu0 0.0
      %1045 = vmatmul.mubr.f32.gmra.mrb[0].mxu0 %v462
      %v1046 = vpop.f32.mrb[0].mxu0
      %v1047 = vadd.f32 %v802, %v1046
      %v1048 = vpop.f32.mrb[0].mxu0
      %1049 = vmatprep.mubr.f32.mxu0 0.0
      %1050 = vmatmul.mubr.f32.gmra.mrb[0].mxu0 %v463
      %v1051 = vpop.f32.mrb[0].mxu0
      %v1052 = vadd.f32 %v807, %v1051
      %v1053 = vpop.f32.mrb[0].mxu0
      %1054 = vmatprep.mubr.f32.mxu0 0.0
      %1055 = vmatmul.mubr.f32.gmra.mrb[0].mxu0 %v464
      %v1056 = vpop.f32.mrb[0].mxu0
      %v1057 = vadd.f32 %v812, %v1056
      %v1058 = vpop.f32.mrb[0].mxu0
      %1059 = vmatprep.mubr.f32.mxu0 0.0
      %1060 = vmatmul.mubr.f32.gmra.mrb[0].mxu0 %v465
      %v1061 = vpop.f32.mrb[0].mxu0
      %v1062 = vadd.f32 %v817, %v1061
      %v1063 = vpop.f32.mrb[0].mxu0
      %1064 = vmatprep.mubr.f32.mxu0 0.0
      %1065 = vmatmul.mubr.f32.gmra.mrb[0].mxu0 %v466
      %v1066 = vpop.f32.mrb[0].mxu0
      %v1067 = vadd.f32 %v822, %v1066
      %v1068 = vpop.f32.mrb[0].mxu0
      %1069 = vmatprep.mubr.f32.mxu0 0.0
      %1070 = vmatmul.mubr.f32.gmra.mrb[0].mxu0 %v467
      %v1071 = vpop.f32.mrb[0].mxu0
      %v1072 = vadd.f32 %v827, %v1071
      %v1073 = vpop.f32.mrb[0].mxu0
      %1074 = vmatprep.mubr.f32.mxu0 0.0
      %1075 = vmatmul.mubr.f32.gmra.mrb[0].mxu0 %v468
      %v1076 = vpop.f32.mrb[0].mxu0
      %v1077 = vadd.f32 %v832, %v1076
      %v1078 = vpop.f32.mrb[0].mxu0
      %1079 = vmatprep.mubr.f32.mxu0 0.0
      %1080 = vmatmul.mubr.f32.gmra.mrb[0].mxu0 %v469
      %v1081 = vpop.f32.mrb[0].mxu0
      %v1082 = vadd.f32 %v837, %v1081
      %v1083 = vpop.f32.mrb[0].mxu0
      %1084 = vmatprep.mubr.f32.mxu0 0.0
      %1085 = vmatmul.mubr.f32.gmra.mrb[0].mxu0 %v470
      %v1086 = vpop.f32.mrb[0].mxu0
      %v1087 = vadd.f32 %v842, %v1086
      %v1088 = vpop.f32.mrb[0].mxu0
      %1089 = vmatprep.mubr.f32.mxu0 0.0
      %1090 = vmatmul.mubr.f32.gmra.mrb[0].mxu0 %v471
      %v1091 = vpop.f32.mrb[0].mxu0
      %v1092 = vadd.f32 %v847, %v1091
      %v1093 = vpop.f32.mrb[0].mxu0
      %1094 = vmatprep.mubr.f32.mxu0 0.0
      %1095 = vmatmul.mubr.f32.gmra.mrb[0].mxu0 %v472
      %v1096 = vpop.f32.mrb[0].mxu0
      %v1097 = vadd.f32 %v852, %v1096
      %v1098 = vpop.f32.mrb[0].mxu0
      %1099 = vmatprep.mubr.f32.mxu0 0.0
      %1100 = vmatmul.mubr.f32.gmra.mrb[0].mxu0 %v473
      %v1101 = vpop.f32.mrb[0].mxu0
      %v1102 = vadd.f32 %v857, %v1101
      %v1103 = vpop.f32.mrb[0].mxu0
      %1104 = vmatprep.mubr.f32.mxu0 0.0
      %1105 = vmatmul.mubr.f32.gmra.mrb[0].mxu0 %v474
      %v1106 = vpop.f32.mrb[0].mxu0
      %v1107 = vadd.f32 %v862, %v1106
      %v1108 = vpop.f32.mrb[0].mxu0
      %1109 = vmatprep.mubr.f32.mxu0 0.0
      %1110 = vmatmul.mubr.f32.gmra.mrb[0].mxu0 %v475
      %v1111 = vpop.f32.mrb[0].mxu0
      %v1112 = vadd.f32 %v867, %v1111
      %v1113 = vpop.f32.mrb[0].mxu0
      %1114 = vmatprep.mubr.f32.mxu0 0.0
      %1115 = vmatmul.mubr.f32.gmra.mrb[0].mxu0 %v476
      %v1116 = vpop.f32.mrb[0].mxu0
      %v1117 = vadd.f32 %v872, %v1116
      %v1118 = vpop.f32.mrb[0].mxu0
      %1119 = vmatprep.mubr.f32.mxu0 0.0
      %1120 = vmatmul.mubr.f32.gmra.mrb[0].mxu0 %v477
      %v1121 = vpop.f32.mrb[0].mxu0
      %v1122 = vadd.f32 %v877, %v1121
      %v1123 = vpop.f32.mrb[0].mxu0
      %1124 = vmatprep.mubr.f32.mxu0 0.0
      %1125 = vmatmul.mubr.f32.gmra.mrb[0].mxu0 %v478
      %v1126 = vpop.f32.mrb[0].mxu0
      %v1127 = vadd.f32 %v882, %v1126
      %v1128 = vpop.f32.mrb[0].mxu0
      %1129 = vmatprep.mubr.f32.mxu0 0.0
      %1130 = vmatmul.mubr.f32.gmra.mrb[0].mxu0 %v479
      %v1131 = vpop.f32.mrb[0].mxu0
      %v1132 = vadd.f32 %v887, %v1131
      %v1133 = vpop.f32.mrb[0].mxu0
      %1134 = vmatprep.mubr.f32.mxu0 0.0
      %1135 = vmatmul.mubr.f32.gmra.mrb[0].mxu0 %v480
      %v1136 = vpop.f32.mrb[0].mxu0
      %v1137 = vadd.f32 %v892, %v1136
      %v1138 = vpop.f32.mrb[0].mxu0
      %1139 = vmatprep.mubr.f32.mxu0 0.0
      %1140 = vmatmul.mubr.f32.gmra.mrb[0].mxu0 %v481
      %v1141 = vpop.f32.mrb[0].mxu0
      %v1142 = vadd.f32 %v897, %v1141
      %v1143 = vpop.f32.mrb[0].mxu0
      %1144 = vmatprep.mubr.f32.mxu0 0.0
      %1145 = vmatmul.mubr.f32.gmra.mrb[0].mxu0 %v482
      %v1146 = vpop.f32.mrb[0].mxu0
      %v1147 = vadd.f32 %v902, %v1146
      %v1148 = vpop.f32.mrb[0].mxu0
      %1149 = vmatprep.mubr.f32.mxu0 0.0
      %1150 = vmatmul.mubr.f32.gmra.mrb[0].mxu0 %v483
      %v1151 = vpop.f32.mrb[0].mxu0
      %v1152 = vadd.f32 %v907, %v1151
      %v1153 = vpop.f32.mrb[0].mxu0
      %1154 = vmatprep.mubr.f32.mxu0 0.0
      %1155 = vmatmul.mubr.f32.gmra.mrb[0].mxu0 %v484
      %v1156 = vpop.f32.mrb[0].mxu0
      %v1157 = vadd.f32 %v912, %v1156
      %v1158 = vpop.f32.mrb[0].mxu0
      %1159 = vdwg.mxu0
      %s1160 = scalar_lea.vmem %s1, 256
      %v1161 = vld [vmem:[%s1160] sm:$0xff]
      %v1162 = vld [vmem:[%s1160 + $0x8] sm:$0xff]
      %v1163 = vld [vmem:[%s1160 + $0x10] sm:$0xff]
      %v1164 = vld [vmem:[%s1160 + $0x18] sm:$0xff]
      %v1165 = vld [vmem:[%s1160 + $0x20] sm:$0xff]
      %v1166 = vld [vmem:[%s1160 + $0x28] sm:$0xff]
      %v1167 = vld [vmem:[%s1160 + $0x30] sm:$0xff]
      %v1168 = vld [vmem:[%s1160 + $0x38] sm:$0xff]
      %v1169 = vld [vmem:[%s1160 + $0x40] sm:$0xff]
      %v1170 = vld [vmem:[%s1160 + $0x48] sm:$0xff]
      %v1171 = vld [vmem:[%s1160 + $0x50] sm:$0xff]
      %v1172 = vld [vmem:[%s1160 + $0x58] sm:$0xff]
      %v1173 = vld [vmem:[%s1160 + $0x60] sm:$0xff]
      %v1174 = vld [vmem:[%s1160 + $0x68] sm:$0xff]
      %v1175 = vld [vmem:[%s1160 + $0x70] sm:$0xff]
      %v1176 = vld [vmem:[%s1160 + $0x78] sm:$0xff]
      %vm1177 = vcmask 1045504
      %v1178 = vrot.slane %v449, 2
      %v1179 = vrot.slane %v450, 2
      %v1180 = vsel %vm1177, %v1178, %v1179
      %v1181 = vrot.slane %v451, 2
      %v1182 = vsel %vm1177, %v1179, %v1181
      %v1183 = vrot.slane %v452, 2
      %v1184 = vsel %vm1177, %v1181, %v1183
      %v1185 = vrot.slane %v453, 2
      %v1186 = vsel %vm1177, %v1183, %v1185
      %v1187 = vrot.slane %v454, 2
      %v1188 = vsel %vm1177, %v1185, %v1187
      %v1189 = vrot.slane %v455, 2
      %v1190 = vsel %vm1177, %v1187, %v1189
      %v1191 = vrot.slane %v456, 2
      %v1192 = vsel %vm1177, %v1189, %v1191
      %v1193 = vrot.slane %v457, 2
      %v1194 = vsel %vm1177, %v1191, %v1193
      %v1195 = vrot.slane %v458, 2
      %v1196 = vsel %vm1177, %v1193, %v1195
      %v1197 = vrot.slane %v459, 2
      %v1198 = vsel %vm1177, %v1195, %v1197
      %v1199 = vrot.slane %v460, 2
      %v1200 = vsel %vm1177, %v1197, %v1199
      %v1201 = vrot.slane %v461, 2
      %v1202 = vsel %vm1177, %v1199, %v1201
      %v1203 = vrot.slane %v462, 2
      %v1204 = vsel %vm1177, %v1201, %v1203
      %v1205 = vrot.slane %v463, 2
      %v1206 = vsel %vm1177, %v1203, %v1205
      %v1207 = vrot.slane %v464, 2
      %v1208 = vsel %vm1177, %v1205, %v1207
      %v1209 = vrot.slane %v465, 2
      %v1210 = vsel %vm1177, %v1207, %v1209
      %v1211 = vrot.slane %v466, 2
      %v1212 = vsel %vm1177, %v1209, %v1211
      %v1213 = vrot.slane %v467, 2
      %v1214 = vsel %vm1177, %v1211, %v1213
      %v1215 = vrot.slane %v468, 2
      %v1216 = vsel %vm1177, %v1213, %v1215
      %v1217 = vrot.slane %v469, 2
      %v1218 = vsel %vm1177, %v1215, %v1217
      %v1219 = vrot.slane %v470, 2
      %v1220 = vsel %vm1177, %v1217, %v1219
      %v1221 = vrot.slane %v471, 2
      %v1222 = vsel %vm1177, %v1219, %v1221
      %v1223 = vrot.slane %v472, 2
      %v1224 = vsel %vm1177, %v1221, %v1223
      %v1225 = vrot.slane %v473, 2
      %v1226 = vsel %vm1177, %v1223, %v1225
      %v1227 = vrot.slane %v474, 2
      %v1228 = vsel %vm1177, %v1225, %v1227
      %v1229 = vrot.slane %v475, 2
      %v1230 = vsel %vm1177, %v1227, %v1229
      %v1231 = vrot.slane %v476, 2
      %v1232 = vsel %vm1177, %v1229, %v1231
      %v1233 = vrot.slane %v477, 2
      %v1234 = vsel %vm1177, %v1231, %v1233
      %v1235 = vrot.slane %v478, 2
      %v1236 = vsel %vm1177, %v1233, %v1235
      %v1237 = vrot.slane %v479, 2
      %v1238 = vsel %vm1177, %v1235, %v1237
      %v1239 = vrot.slane %v480, 2
      %v1240 = vsel %vm1177, %v1237, %v1239
      %v1241 = vrot.slane %v481, 2
      %v1242 = vsel %vm1177, %v1239, %v1241
      %v1243 = vrot.slane %v482, 2
      %v1244 = vsel %vm1177, %v1241, %v1243
      %v1245 = vrot.slane %v483, 2
      %v1246 = vsel %vm1177, %v1243, %v1245
      %v1247 = vrot.slane %v484, 2
      %v1248 = vsel %vm1177, %v1245, %v1247
      %v1249 = vrot.slane %v485, 2
      %v1250 = vsel %vm1177, %v1247, %v1249
      %1287 = vmatprep.subr.mxu0 0.0
      %1288 = vmatpush1.msra.mxu0 %v1161
      %1289 = vmatprep.subr.mxu0 0.0
      %1290 = vmatpush1.msra.mxu0 %v1162
      %1291 = vmatprep.subr.mxu0 0.0
      %1292 = vmatpush1.msra.mxu0 %v1163
      %1293 = vmatprep.subr.mxu0 0.0
      %1294 = vmatpush1.msra.mxu0 %v1164
      %1295 = vmatprep.subr.mxu0 0.0
      %1296 = vmatpush1.msra.mxu0 %v1165
      %1297 = vmatprep.subr.mxu0 0.0
      %1298 = vmatpush1.msra.mxu0 %v1166
      %1299 = vmatprep.subr.mxu0 0.0
      %1300 = vmatpush1.msra.mxu0 %v1167
      %1301 = vmatprep.subr.mxu0 0.0
      %1302 = vmatpush1.msra.mxu0 %v1168
      %1303 = vmatprep.subr.mxu0 0.0
      %1304 = vmatpush1.msra.mxu0 %v1169
      %1305 = vmatprep.subr.mxu0 0.0
      %1306 = vmatpush1.msra.mxu0 %v1170
      %1307 = vmatprep.subr.mxu0 0.0
      %1308 = vmatpush1.msra.mxu0 %v1171
      %1309 = vmatprep.subr.mxu0 0.0
      %1310 = vmatpush1.msra.mxu0 %v1172
      %1311 = vmatprep.subr.mxu0 0.0
      %1312 = vmatpush1.msra.mxu0 %v1173
      %1313 = vmatprep.subr.mxu0 0.0
      %1314 = vmatpush1.msra.mxu0 %v1174
      %1315 = vmatprep.subr.mxu0 0.0
      %1316 = vmatpush1.msra.mxu0 %v1175
      %1317 = vmatprep.subr.mxu0 0.0
      %1318 = vmatpush1.msra.mxu0 %v1176
      %1319 = vmatprep.subr.mxu0 0.0
      %1320 = vmatpush1.msra.mxu0 0.0
      %1321 = vmatprep.subr.mxu0 0.0
      %1322 = vmatpush1.msra.mxu0 0.0
      %1323 = vmatprep.subr.mxu0 0.0
      %1324 = vmatpush1.msra.mxu0 0.0
      %1325 = vmatprep.subr.mxu0 0.0
      %1326 = vmatpush1.msra.mxu0 0.0
      %1327 = vmatprep.subr.mxu0 0.0
      %1328 = vmatpush1.msra.mxu0 0.0
      %1329 = vmatprep.subr.mxu0 0.0
      %1330 = vmatpush1.msra.mxu0 0.0
      %1331 = vmatprep.subr.mxu0 0.0
      %1332 = vmatpush1.msra.mxu0 0.0
      %1333 = vmatprep.subr.mxu0 0.0
      %1334 = vmatpush1.msra.mxu0 0.0
      %1335 = vmatprep.subr.mxu0 0.0
      %1336 = vmatpush1.msra.mxu0 0.0
      %1337 = vmatprep.subr.mxu0 0.0
      %1338 = vmatpush1.msra.mxu0 0.0
      %1339 = vmatprep.subr.mxu0 0.0
      %1340 = vmatpush1.msra.mxu0 0.0
      %1341 = vmatprep.subr.mxu0 0.0
      %1342 = vmatpush1.msra.mxu0 0.0
      %1343 = vmatprep.subr.mxu0 0.0
      %1344 = vmatpush1.msra.mxu0 0.0
      %1345 = vmatprep.subr.mxu0 0.0
      %1346 = vmatpush1.msra.mxu0 0.0
      %1347 = vmatprep.subr.mxu0 0.0
      %1348 = vmatpush1.msra.mxu0 0.0
      %1349 = vmatprep.subr.mxu0 0.0
      %1350 = vmatpush1.msra.mxu0 0.0
      %1351 = vmatprep.mubr.f32.mxu0 0.0
      %1352 = vmatmul.mubr.f32.gmra.mrb[0].mxu0 %v1180
      %v1353 = vpop.f32.mrb[0].mxu0
      %v1354 = vadd.f32 0.0, %v1353
      %v1355 = vpop.f32.mrb[0].mxu0
      %1356 = vmatprep.mubr.f32.mxu0 0.0
      %1357 = vmatmul.mubr.f32.gmra.mrb[0].mxu0 %v1182
      %v1358 = vpop.f32.mrb[0].mxu0
      %v1359 = vadd.f32 0.0, %v1358
      %v1360 = vpop.f32.mrb[0].mxu0
      %1361 = vmatprep.mubr.f32.mxu0 0.0
      %1362 = vmatmul.mubr.f32.gmra.mrb[0].mxu0 %v1184
      %v1363 = vpop.f32.mrb[0].mxu0
      %v1364 = vadd.f32 0.0, %v1363
      %v1365 = vpop.f32.mrb[0].mxu0
      %1366 = vmatprep.mubr.f32.mxu0 0.0
      %1367 = vmatmul.mubr.f32.gmra.mrb[0].mxu0 %v1186
      %v1368 = vpop.f32.mrb[0].mxu0
      %v1369 = vadd.f32 0.0, %v1368
      %v1370 = vpop.f32.mrb[0].mxu0
      %1371 = vmatprep.mubr.f32.mxu0 0.0
      %1372 = vmatmul.mubr.f32.gmra.mrb[0].mxu0 %v1188
      %v1373 = vpop.f32.mrb[0].mxu0
      %v1374 = vadd.f32 0.0, %v1373
      %v1375 = vpop.f32.mrb[0].mxu0
      %1376 = vmatprep.mubr.f32.mxu0 0.0
      %1377 = vmatmul.mubr.f32.gmra.mrb[0].mxu0 %v1190
      %v1378 = vpop.f32.mrb[0].mxu0
      %v1379 = vadd.f32 0.0, %v1378
      %v1380 = vpop.f32.mrb[0].mxu0
      %1381 = vmatprep.mubr.f32.mxu0 0.0
      %1382 = vmatmul.mubr.f32.gmra.mrb[0].mxu0 %v1192
      %v1383 = vpop.f32.mrb[0].mxu0
      %v1384 = vadd.f32 0.0, %v1383
      %v1385 = vpop.f32.mrb[0].mxu0
      %1386 = vmatprep.mubr.f32.mxu0 0.0
      %1387 = vmatmul.mubr.f32.gmra.mrb[0].mxu0 %v1194
      %v1388 = vpop.f32.mrb[0].mxu0
      %v1389 = vadd.f32 0.0, %v1388
      %v1390 = vpop.f32.mrb[0].mxu0
      %1391 = vmatprep.mubr.f32.mxu0 0.0
      %1392 = vmatmul.mubr.f32.gmra.mrb[0].mxu0 %v1196
      %v1393 = vpop.f32.mrb[0].mxu0
      %v1394 = vadd.f32 0.0, %v1393
      %v1395 = vpop.f32.mrb[0].mxu0
      %1396 = vmatprep.mubr.f32.mxu0 0.0
      %1397 = vmatmul.mubr.f32.gmra.mrb[0].mxu0 %v1198
      %v1398 = vpop.f32.mrb[0].mxu0
      %v1399 = vadd.f32 0.0, %v1398
      %v1400 = vpop.f32.mrb[0].mxu0
      %1401 = vmatprep.mubr.f32.mxu0 0.0
      %1402 = vmatmul.mubr.f32.gmra.mrb[0].mxu0 %v1200
      %v1403 = vpop.f32.mrb[0].mxu0
      %v1404 = vadd.f32 0.0, %v1403
      %v1405 = vpop.f32.mrb[0].mxu0
      %1406 = vmatprep.mubr.f32.mxu0 0.0
      %1407 = vmatmul.mubr.f32.gmra.mrb[0].mxu0 %v1202
      %v1408 = vpop.f32.mrb[0].mxu0
      %v1409 = vadd.f32 0.0, %v1408
      %v1410 = vpop.f32.mrb[0].mxu0
      %1411 = vmatprep.mubr.f32.mxu0 0.0
      %1412 = vmatmul.mubr.f32.gmra.mrb[0].mxu0 %v1204
      %v1413 = vpop.f32.mrb[0].mxu0
      %v1414 = vadd.f32 0.0, %v1413
      %v1415 = vpop.f32.mrb[0].mxu0
      %1416 = vmatprep.mubr.f32.mxu0 0.0
      %1417 = vmatmul.mubr.f32.gmra.mrb[0].mxu0 %v1206
      %v1418 = vpop.f32.mrb[0].mxu0
      %v1419 = vadd.f32 0.0, %v1418
      %v1420 = vpop.f32.mrb[0].mxu0
      %1421 = vmatprep.mubr.f32.mxu0 0.0
      %1422 = vmatmul.mubr.f32.gmra.mrb[0].mxu0 %v1208
      %v1423 = vpop.f32.mrb[0].mxu0
      %v1424 = vadd.f32 0.0, %v1423
      %v1425 = vpop.f32.mrb[0].mxu0
      %1426 = vmatprep.mubr.f32.mxu0 0.0
      %1427 = vmatmul.mubr.f32.gmra.mrb[0].mxu0 %v1210
      %v1428 = vpop.f32.mrb[0].mxu0
      %v1429 = vadd.f32 0.0, %v1428
      %v1430 = vpop.f32.mrb[0].mxu0
      %1431 = vmatprep.mubr.f32.mxu0 0.0
      %1432 = vmatmul.mubr.f32.gmra.mrb[0].mxu0 %v1212
      %v1433 = vpop.f32.mrb[0].mxu0
      %v1434 = vadd.f32 0.0, %v1433
      %v1435 = vpop.f32.mrb[0].mxu0
      %1436 = vmatprep.mubr.f32.mxu0 0.0
      %1437 = vmatmul.mubr.f32.gmra.mrb[0].mxu0 %v1214
      %v1438 = vpop.f32.mrb[0].mxu0
      %v1439 = vadd.f32 0.0, %v1438
      %v1440 = vpop.f32.mrb[0].mxu0
      %1441 = vmatprep.mubr.f32.mxu0 0.0
      %1442 = vmatmul.mubr.f32.gmra.mrb[0].mxu0 %v1216
      %v1443 = vpop.f32.mrb[0].mxu0
      %v1444 = vadd.f32 0.0, %v1443
      %v1445 = vpop.f32.mrb[0].mxu0
      %1446 = vmatprep.mubr.f32.mxu0 0.0
      %1447 = vmatmul.mubr.f32.gmra.mrb[0].mxu0 %v1218
      %v1448 = vpop.f32.mrb[0].mxu0
      %v1449 = vadd.f32 0.0, %v1448
      %v1450 = vpop.f32.mrb[0].mxu0
      %1451 = vmatprep.mubr.f32.mxu0 0.0
      %1452 = vmatmul.mubr.f32.gmra.mrb[0].mxu0 %v1220
      %v1453 = vpop.f32.mrb[0].mxu0
      %v1454 = vadd.f32 0.0, %v1453
      %v1455 = vpop.f32.mrb[0].mxu0
      %1456 = vmatprep.mubr.f32.mxu0 0.0
      %1457 = vmatmul.mubr.f32.gmra.mrb[0].mxu0 %v1222
      %v1458 = vpop.f32.mrb[0].mxu0
      %v1459 = vadd.f32 0.0, %v1458
      %v1460 = vpop.f32.mrb[0].mxu0
      %1461 = vmatprep.mubr.f32.mxu0 0.0
      %1462 = vmatmul.mubr.f32.gmra.mrb[0].mxu0 %v1224
      %v1463 = vpop.f32.mrb[0].mxu0
      %v1464 = vadd.f32 0.0, %v1463
      %v1465 = vpop.f32.mrb[0].mxu0
      %1466 = vmatprep.mubr.f32.mxu0 0.0
      %1467 = vmatmul.mubr.f32.gmra.mrb[0].mxu0 %v1226
      %v1468 = vpop.f32.mrb[0].mxu0
      %v1469 = vadd.f32 0.0, %v1468
      %v1470 = vpop.f32.mrb[0].mxu0
      %1471 = vmatprep.mubr.f32.mxu0 0.0
      %1472 = vmatmul.mubr.f32.gmra.mrb[0].mxu0 %v1228
      %v1473 = vpop.f32.mrb[0].mxu0
      %v1474 = vadd.f32 0.0, %v1473
      %v1475 = vpop.f32.mrb[0].mxu0
      %1476 = vmatprep.mubr.f32.mxu0 0.0
      %1477 = vmatmul.mubr.f32.gmra.mrb[0].mxu0 %v1230
      %v1478 = vpop.f32.mrb[0].mxu0
      %v1479 = vadd.f32 0.0, %v1478
      %v1480 = vpop.f32.mrb[0].mxu0
      %1481 = vmatprep.mubr.f32.mxu0 0.0
      %1482 = vmatmul.mubr.f32.gmra.mrb[0].mxu0 %v1232
      %v1483 = vpop.f32.mrb[0].mxu0
      %v1484 = vadd.f32 0.0, %v1483
      %v1485 = vpop.f32.mrb[0].mxu0
      %1486 = vmatprep.mubr.f32.mxu0 0.0
      %1487 = vmatmul.mubr.f32.gmra.mrb[0].mxu0 %v1234
      %v1488 = vpop.f32.mrb[0].mxu0
      %v1489 = vadd.f32 0.0, %v1488
      %v1490 = vpop.f32.mrb[0].mxu0
      %1491 = vmatprep.mubr.f32.mxu0 0.0
      %1492 = vmatmul.mubr.f32.gmra.mrb[0].mxu0 %v1236
      %v1493 = vpop.f32.mrb[0].mxu0
      %v1494 = vadd.f32 0.0, %v1493
      %v1495 = vpop.f32.mrb[0].mxu0
      %1496 = vmatprep.mubr.f32.mxu0 0.0
      %1497 = vmatmul.mubr.f32.gmra.mrb[0].mxu0 %v1238
      %v1498 = vpop.f32.mrb[0].mxu0
      %v1499 = vadd.f32 0.0, %v1498
      %v1500 = vpop.f32.mrb[0].mxu0
      %1501 = vmatprep.mubr.f32.mxu0 0.0
      %1502 = vmatmul.mubr.f32.gmra.mrb[0].mxu0 %v1240
      %v1503 = vpop.f32.mrb[0].mxu0
      %v1504 = vadd.f32 0.0, %v1503
      %v1505 = vpop.f32.mrb[0].mxu0
      %1506 = vmatprep.mubr.f32.mxu0 0.0
      %1507 = vmatmul.mubr.f32.gmra.mrb[0].mxu0 %v1242
      %v1508 = vpop.f32.mrb[0].mxu0
      %v1509 = vadd.f32 0.0, %v1508
      %v1510 = vpop.f32.mrb[0].mxu0
      %1511 = vmatprep.mubr.f32.mxu0 0.0
      %1512 = vmatmul.mubr.f32.gmra.mrb[0].mxu0 %v1244
      %v1513 = vpop.f32.mrb[0].mxu0
      %v1514 = vadd.f32 0.0, %v1513
      %v1515 = vpop.f32.mrb[0].mxu0
      %1516 = vmatprep.mubr.f32.mxu0 0.0
      %1517 = vmatmul.mubr.f32.gmra.mrb[0].mxu0 %v1246
      %v1518 = vpop.f32.mrb[0].mxu0
      %v1519 = vadd.f32 0.0, %v1518
      %v1520 = vpop.f32.mrb[0].mxu0
      %1521 = vmatprep.mubr.f32.mxu0 0.0
      %1522 = vmatmul.mubr.f32.gmra.mrb[0].mxu0 %v1248
      %v1523 = vpop.f32.mrb[0].mxu0
      %v1524 = vadd.f32 0.0, %v1523
      %v1525 = vpop.f32.mrb[0].mxu0
      %1526 = vmatprep.mubr.f32.mxu0 0.0
      %1527 = vmatmul.mubr.f32.gmra.mrb[0].mxu0 %v1250
      %v1528 = vpop.f32.mrb[0].mxu0
      %v1529 = vadd.f32 0.0, %v1528
      %v1530 = vpop.f32.mrb[0].mxu0
      %1531 = vdwg.mxu0
      %v1532 = vadd.f32 %v982, %v1354
      %v1533 = vadd.f32 %v987, %v1359
      %v1534 = vadd.f32 %v992, %v1364
      %v1535 = vadd.f32 %v997, %v1369
      %v1536 = vadd.f32 %v1002, %v1374
      %v1537 = vadd.f32 %v1007, %v1379
      %v1538 = vadd.f32 %v1012, %v1384
      %v1539 = vadd.f32 %v1017, %v1389
      %v1540 = vadd.f32 %v1022, %v1394
      %v1541 = vadd.f32 %v1027, %v1399
      %v1542 = vadd.f32 %v1032, %v1404
      %v1543 = vadd.f32 %v1037, %v1409
      %v1544 = vadd.f32 %v1042, %v1414
      %v1545 = vadd.f32 %v1047, %v1419
      %v1546 = vadd.f32 %v1052, %v1424
      %v1547 = vadd.f32 %v1057, %v1429
      %v1548 = vadd.f32 %v1062, %v1434
      %v1549 = vadd.f32 %v1067, %v1439
      %v1550 = vadd.f32 %v1072, %v1444
      %v1551 = vadd.f32 %v1077, %v1449
      %v1552 = vadd.f32 %v1082, %v1454
      %v1553 = vadd.f32 %v1087, %v1459
      %v1554 = vadd.f32 %v1092, %v1464
      %v1555 = vadd.f32 %v1097, %v1469
      %v1556 = vadd.f32 %v1102, %v1474
      %v1557 = vadd.f32 %v1107, %v1479
      %v1558 = vadd.f32 %v1112, %v1484
      %v1559 = vadd.f32 %v1117, %v1489
      %v1560 = vadd.f32 %v1122, %v1494
      %v1561 = vadd.f32 %v1127, %v1499
      %v1562 = vadd.f32 %v1132, %v1504
      %v1563 = vadd.f32 %v1137, %v1509
      %v1564 = vadd.f32 %v1142, %v1514
      %v1565 = vadd.f32 %v1147, %v1519
      %v1566 = vadd.f32 %v1152, %v1524
      %v1567 = vadd.f32 %v1157, %v1529
      %s1568 = scalar_lea.vmem %s1, 384
      %v1569 = vld [vmem:[%s1568] sm:$0xff]
      %v1570 = vld [vmem:[%s1568 + $0x8] sm:$0xff]
      %v1571 = vld [vmem:[%s1568 + $0x10] sm:$0xff]
      %v1572 = vld [vmem:[%s1568 + $0x18] sm:$0xff]
      %v1573 = vld [vmem:[%s1568 + $0x20] sm:$0xff]
      %v1574 = vld [vmem:[%s1568 + $0x28] sm:$0xff]
      %v1575 = vld [vmem:[%s1568 + $0x30] sm:$0xff]
      %v1576 = vld [vmem:[%s1568 + $0x38] sm:$0xff]
      %v1577 = vld [vmem:[%s1568 + $0x40] sm:$0xff]
      %v1578 = vld [vmem:[%s1568 + $0x48] sm:$0xff]
      %v1579 = vld [vmem:[%s1568 + $0x50] sm:$0xff]
      %v1580 = vld [vmem:[%s1568 + $0x58] sm:$0xff]
      %v1581 = vld [vmem:[%s1568 + $0x60] sm:$0xff]
      %v1582 = vld [vmem:[%s1568 + $0x68] sm:$0xff]
      %v1583 = vld [vmem:[%s1568 + $0x70] sm:$0xff]
      %v1584 = vld [vmem:[%s1568 + $0x78] sm:$0xff]
      %v1587 = vrot.slane %v486, 2
      %v1588 = vsel %vm1177, %v1249, %v1587
      %v1589 = vrot.slane %v487, 2
      %v1590 = vsel %vm1177, %v1587, %v1589
      %1593 = vmatprep.subr.mxu0 0.0
      %1594 = vmatpush1.msra.mxu0 %v1569
      %1595 = vmatprep.subr.mxu0 0.0
      %1596 = vmatpush1.msra.mxu0 %v1570
      %1597 = vmatprep.subr.mxu0 0.0
      %1598 = vmatpush1.msra.mxu0 %v1571
      %1599 = vmatprep.subr.mxu0 0.0
      %1600 = vmatpush1.msra.mxu0 %v1572
      %1601 = vmatprep.subr.mxu0 0.0
      %1602 = vmatpush1.msra.mxu0 %v1573
      %1603 = vmatprep.subr.mxu0 0.0
      %1604 = vmatpush1.msra.mxu0 %v1574
      %1605 = vmatprep.subr.mxu0 0.0
      %1606 = vmatpush1.msra.mxu0 %v1575
      %1607 = vmatprep.subr.mxu0 0.0
      %1608 = vmatpush1.msra.mxu0 %v1576
      %1609 = vmatprep.subr.mxu0 0.0
      %1610 = vmatpush1.msra.mxu0 %v1577
      %1611 = vmatprep.subr.mxu0 0.0
      %1612 = vmatpush1.msra.mxu0 %v1578
      %1613 = vmatprep.subr.mxu0 0.0
      %1614 = vmatpush1.msra.mxu0 %v1579
      %1615 = vmatprep.subr.mxu0 0.0
      %1616 = vmatpush1.msra.mxu0 %v1580
      %1617 = vmatprep.subr.mxu0 0.0
      %1618 = vmatpush1.msra.mxu0 %v1581
      %1619 = vmatprep.subr.mxu0 0.0
      %1620 = vmatpush1.msra.mxu0 %v1582
      %1621 = vmatprep.subr.mxu0 0.0
      %1622 = vmatpush1.msra.mxu0 %v1583
      %1623 = vmatprep.subr.mxu0 0.0
      %1624 = vmatpush1.msra.mxu0 %v1584
      %1625 = vmatprep.subr.mxu0 0.0
      %1626 = vmatpush1.msra.mxu0 0.0
      %1627 = vmatprep.subr.mxu0 0.0
      %1628 = vmatpush1.msra.mxu0 0.0
      %1629 = vmatprep.subr.mxu0 0.0
      %1630 = vmatpush1.msra.mxu0 0.0
      %1631 = vmatprep.subr.mxu0 0.0
      %1632 = vmatpush1.msra.mxu0 0.0
      %1633 = vmatprep.subr.mxu0 0.0
      %1634 = vmatpush1.msra.mxu0 0.0
      %1635 = vmatprep.subr.mxu0 0.0
      %1636 = vmatpush1.msra.mxu0 0.0
      %1637 = vmatprep.subr.mxu0 0.0
      %1638 = vmatpush1.msra.mxu0 0.0
      %1639 = vmatprep.subr.mxu0 0.0
      %1640 = vmatpush1.msra.mxu0 0.0
      %1641 = vmatprep.subr.mxu0 0.0
      %1642 = vmatpush1.msra.mxu0 0.0
      %1643 = vmatprep.subr.mxu0 0.0
      %1644 = vmatpush1.msra.mxu0 0.0
      %1645 = vmatprep.subr.mxu0 0.0
      %1646 = vmatpush1.msra.mxu0 0.0
      %1647 = vmatprep.subr.mxu0 0.0
      %1648 = vmatpush1.msra.mxu0 0.0
      %1649 = vmatprep.subr.mxu0 0.0
      %1650 = vmatpush1.msra.mxu0 0.0
      %1651 = vmatprep.subr.mxu0 0.0
      %1652 = vmatpush1.msra.mxu0 0.0
      %1653 = vmatprep.subr.mxu0 0.0
      %1654 = vmatpush1.msra.mxu0 0.0
      %1655 = vmatprep.subr.mxu0 0.0
      %1656 = vmatpush1.msra.mxu0 0.0
      %1657 = vmatprep.mubr.f32.mxu0 0.0
      %1658 = vmatmul.mubr.f32.gmra.mrb[0].mxu0 %v1184
      %v1659 = vpop.f32.mrb[0].mxu0
      %v1660 = vadd.f32 0.0, %v1659
      %v1661 = vpop.f32.mrb[0].mxu0
      %1662 = vmatprep.mubr.f32.mxu0 0.0
      %1663 = vmatmul.mubr.f32.gmra.mrb[0].mxu0 %v1186
      %v1664 = vpop.f32.mrb[0].mxu0
      %v1665 = vadd.f32 0.0, %v1664
      %v1666 = vpop.f32.mrb[0].mxu0
      %1667 = vmatprep.mubr.f32.mxu0 0.0
      %1668 = vmatmul.mubr.f32.gmra.mrb[0].mxu0 %v1188
      %v1669 = vpop.f32.mrb[0].mxu0
      %v1670 = vadd.f32 0.0, %v1669
      %v1671 = vpop.f32.mrb[0].mxu0
      %1672 = vmatprep.mubr.f32.mxu0 0.0
      %1673 = vmatmul.mubr.f32.gmra.mrb[0].mxu0 %v1190
      %v1674 = vpop.f32.mrb[0].mxu0
      %v1675 = vadd.f32 0.0, %v1674
      %v1676 = vpop.f32.mrb[0].mxu0
      %1677 = vmatprep.mubr.f32.mxu0 0.0
      %1678 = vmatmul.mubr.f32.gmra.mrb[0].mxu0 %v1192
      %v1679 = vpop.f32.mrb[0].mxu0
      %v1680 = vadd.f32 0.0, %v1679
      %v1681 = vpop.f32.mrb[0].mxu0
      %1682 = vmatprep.mubr.f32.mxu0 0.0
      %1683 = vmatmul.mubr.f32.gmra.mrb[0].mxu0 %v1194
      %v1684 = vpop.f32.mrb[0].mxu0
      %v1685 = vadd.f32 0.0, %v1684
      %v1686 = vpop.f32.mrb[0].mxu0
      %1687 = vmatprep.mubr.f32.mxu0 0.0
      %1688 = vmatmul.mubr.f32.gmra.mrb[0].mxu0 %v1196
      %v1689 = vpop.f32.mrb[0].mxu0
      %v1690 = vadd.f32 0.0, %v1689
      %v1691 = vpop.f32.mrb[0].mxu0
      %1692 = vmatprep.mubr.f32.mxu0 0.0
      %1693 = vmatmul.mubr.f32.gmra.mrb[0].mxu0 %v1198
      %v1694 = vpop.f32.mrb[0].mxu0
      %v1695 = vadd.f32 0.0, %v1694
      %v1696 = vpop.f32.mrb[0].mxu0
      %1697 = vmatprep.mubr.f32.mxu0 0.0
      %1698 = vmatmul.mubr.f32.gmra.mrb[0].mxu0 %v1200
      %v1699 = vpop.f32.mrb[0].mxu0
      %v1700 = vadd.f32 0.0, %v1699
      %v1701 = vpop.f32.mrb[0].mxu0
      %1702 = vmatprep.mubr.f32.mxu0 0.0
      %1703 = vmatmul.mubr.f32.gmra.mrb[0].mxu0 %v1202
      %v1704 = vpop.f32.mrb[0].mxu0
      %v1705 = vadd.f32 0.0, %v1704
      %v1706 = vpop.f32.mrb[0].mxu0
      %1707 = vmatprep.mubr.f32.mxu0 0.0
      %1708 = vmatmul.mubr.f32.gmra.mrb[0].mxu0 %v1204
      %v1709 = vpop.f32.mrb[0].mxu0
      %v1710 = vadd.f32 0.0, %v1709
      %v1711 = vpop.f32.mrb[0].mxu0
      %1712 = vmatprep.mubr.f32.mxu0 0.0
      %1713 = vmatmul.mubr.f32.gmra.mrb[0].mxu0 %v1206
      %v1714 = vpop.f32.mrb[0].mxu0
      %v1715 = vadd.f32 0.0, %v1714
      %v1716 = vpop.f32.mrb[0].mxu0
      %1717 = vmatprep.mubr.f32.mxu0 0.0
      %1718 = vmatmul.mubr.f32.gmra.mrb[0].mxu0 %v1208
      %v1719 = vpop.f32.mrb[0].mxu0
      %v1720 = vadd.f32 0.0, %v1719
      %v1721 = vpop.f32.mrb[0].mxu0
      %1722 = vmatprep.mubr.f32.mxu0 0.0
      %1723 = vmatmul.mubr.f32.gmra.mrb[0].mxu0 %v1210
      %v1724 = vpop.f32.mrb[0].mxu0
      %v1725 = vadd.f32 0.0, %v1724
      %v1726 = vpop.f32.mrb[0].mxu0
      %1727 = vmatprep.mubr.f32.mxu0 0.0
      %1728 = vmatmul.mubr.f32.gmra.mrb[0].mxu0 %v1212
      %v1729 = vpop.f32.mrb[0].mxu0
      %v1730 = vadd.f32 0.0, %v1729
      %v1731 = vpop.f32.mrb[0].mxu0
      %1732 = vmatprep.mubr.f32.mxu0 0.0
      %1733 = vmatmul.mubr.f32.gmra.mrb[0].mxu0 %v1214
      %v1734 = vpop.f32.mrb[0].mxu0
      %v1735 = vadd.f32 0.0, %v1734
      %v1736 = vpop.f32.mrb[0].mxu0
      %1737 = vmatprep.mubr.f32.mxu0 0.0
      %1738 = vmatmul.mubr.f32.gmra.mrb[0].mxu0 %v1216
      %v1739 = vpop.f32.mrb[0].mxu0
      %v1740 = vadd.f32 0.0, %v1739
      %v1741 = vpop.f32.mrb[0].mxu0
      %1742 = vmatprep.mubr.f32.mxu0 0.0
      %1743 = vmatmul.mubr.f32.gmra.mrb[0].mxu0 %v1218
      %v1744 = vpop.f32.mrb[0].mxu0
      %v1745 = vadd.f32 0.0, %v1744
      %v1746 = vpop.f32.mrb[0].mxu0
      %1747 = vmatprep.mubr.f32.mxu0 0.0
      %1748 = vmatmul.mubr.f32.gmra.mrb[0].mxu0 %v1220
      %v1749 = vpop.f32.mrb[0].mxu0
      %v1750 = vadd.f32 0.0, %v1749
      %v1751 = vpop.f32.mrb[0].mxu0
      %1752 = vmatprep.mubr.f32.mxu0 0.0
      %1753 = vmatmul.mubr.f32.gmra.mrb[0].mxu0 %v1222
      %v1754 = vpop.f32.mrb[0].mxu0
      %v1755 = vadd.f32 0.0, %v1754
      %v1756 = vpop.f32.mrb[0].mxu0
      %1757 = vmatprep.mubr.f32.mxu0 0.0
      %1758 = vmatmul.mubr.f32.gmra.mrb[0].mxu0 %v1224
      %v1759 = vpop.f32.mrb[0].mxu0
      %v1760 = vadd.f32 0.0, %v1759
      %v1761 = vpop.f32.mrb[0].mxu0
      %1762 = vmatprep.mubr.f32.mxu0 0.0
      %1763 = vmatmul.mubr.f32.gmra.mrb[0].mxu0 %v1226
      %v1764 = vpop.f32.mrb[0].mxu0
      %v1765 = vadd.f32 0.0, %v1764
      %v1766 = vpop.f32.mrb[0].mxu0
      %1767 = vmatprep.mubr.f32.mxu0 0.0
      %1768 = vmatmul.mubr.f32.gmra.mrb[0].mxu0 %v1228
      %v1769 = vpop.f32.mrb[0].mxu0
      %v1770 = vadd.f32 0.0, %v1769
      %v1771 = vpop.f32.mrb[0].mxu0
      %1772 = vmatprep.mubr.f32.mxu0 0.0
      %1773 = vmatmul.mubr.f32.gmra.mrb[0].mxu0 %v1230
      %v1774 = vpop.f32.mrb[0].mxu0
      %v1775 = vadd.f32 0.0, %v1774
      %v1776 = vpop.f32.mrb[0].mxu0
      %1777 = vmatprep.mubr.f32.mxu0 0.0
      %1778 = vmatmul.mubr.f32.gmra.mrb[0].mxu0 %v1232
      %v1779 = vpop.f32.mrb[0].mxu0
      %v1780 = vadd.f32 0.0, %v1779
      %v1781 = vpop.f32.mrb[0].mxu0
      %1782 = vmatprep.mubr.f32.mxu0 0.0
      %1783 = vmatmul.mubr.f32.gmra.mrb[0].mxu0 %v1234
      %v1784 = vpop.f32.mrb[0].mxu0
      %v1785 = vadd.f32 0.0, %v1784
      %v1786 = vpop.f32.mrb[0].mxu0
      %1787 = vmatprep.mubr.f32.mxu0 0.0
      %1788 = vmatmul.mubr.f32.gmra.mrb[0].mxu0 %v1236
      %v1789 = vpop.f32.mrb[0].mxu0
      %v1790 = vadd.f32 0.0, %v1789
      %v1791 = vpop.f32.mrb[0].mxu0
      %1792 = vmatprep.mubr.f32.mxu0 0.0
      %1793 = vmatmul.mubr.f32.gmra.mrb[0].mxu0 %v1238
      %v1794 = vpop.f32.mrb[0].mxu0
      %v1795 = vadd.f32 0.0, %v1794
      %v1796 = vpop.f32.mrb[0].mxu0
      %1797 = vmatprep.mubr.f32.mxu0 0.0
      %1798 = vmatmul.mubr.f32.gmra.mrb[0].mxu0 %v1240
      %v1799 = vpop.f32.mrb[0].mxu0
      %v1800 = vadd.f32 0.0, %v1799
      %v1801 = vpop.f32.mrb[0].mxu0
      %1802 = vmatprep.mubr.f32.mxu0 0.0
      %1803 = vmatmul.mubr.f32.gmra.mrb[0].mxu0 %v1242
      %v1804 = vpop.f32.mrb[0].mxu0
      %v1805 = vadd.f32 0.0, %v1804
      %v1806 = vpop.f32.mrb[0].mxu0
      %1807 = vmatprep.mubr.f32.mxu0 0.0
      %1808 = vmatmul.mubr.f32.gmra.mrb[0].mxu0 %v1244
      %v1809 = vpop.f32.mrb[0].mxu0
      %v1810 = vadd.f32 0.0, %v1809
      %v1811 = vpop.f32.mrb[0].mxu0
      %1812 = vmatprep.mubr.f32.mxu0 0.0
      %1813 = vmatmul.mubr.f32.gmra.mrb[0].mxu0 %v1246
      %v1814 = vpop.f32.mrb[0].mxu0
      %v1815 = vadd.f32 0.0, %v1814
      %v1816 = vpop.f32.mrb[0].mxu0
      %1817 = vmatprep.mubr.f32.mxu0 0.0
      %1818 = vmatmul.mubr.f32.gmra.mrb[0].mxu0 %v1248
      %v1819 = vpop.f32.mrb[0].mxu0
      %v1820 = vadd.f32 0.0, %v1819
      %v1821 = vpop.f32.mrb[0].mxu0
      %1822 = vmatprep.mubr.f32.mxu0 0.0
      %1823 = vmatmul.mubr.f32.gmra.mrb[0].mxu0 %v1250
      %v1824 = vpop.f32.mrb[0].mxu0
      %v1825 = vadd.f32 0.0, %v1824
      %v1826 = vpop.f32.mrb[0].mxu0
      %1827 = vmatprep.mubr.f32.mxu0 0.0
      %1828 = vmatmul.mubr.f32.gmra.mrb[0].mxu0 %v1588
      %v1829 = vpop.f32.mrb[0].mxu0
      %v1830 = vadd.f32 0.0, %v1829
      %v1831 = vpop.f32.mrb[0].mxu0
      %1832 = vmatprep.mubr.f32.mxu0 0.0
      %1833 = vmatmul.mubr.f32.gmra.mrb[0].mxu0 %v1590
      %v1834 = vpop.f32.mrb[0].mxu0
      %v1835 = vadd.f32 0.0, %v1834
      %v1836 = vpop.f32.mrb[0].mxu0
      %1837 = vdwg.mxu0
      %v1838 = vadd.f32 %v1532, %v1660
      %v1839 = vadd.f32 %v1533, %v1665
      %v1840 = vadd.f32 %v1534, %v1670
      %v1841 = vadd.f32 %v1535, %v1675
      %v1842 = vadd.f32 %v1536, %v1680
      %v1843 = vadd.f32 %v1537, %v1685
      %v1844 = vadd.f32 %v1538, %v1690
      %v1845 = vadd.f32 %v1539, %v1695
      %v1846 = vadd.f32 %v1540, %v1700
      %v1847 = vadd.f32 %v1541, %v1705
      %v1848 = vadd.f32 %v1542, %v1710
      %v1849 = vadd.f32 %v1543, %v1715
      %v1850 = vadd.f32 %v1544, %v1720
      %v1851 = vadd.f32 %v1545, %v1725
      %v1852 = vadd.f32 %v1546, %v1730
      %v1853 = vadd.f32 %v1547, %v1735
      %v1854 = vadd.f32 %v1548, %v1740
      %v1855 = vadd.f32 %v1549, %v1745
      %v1856 = vadd.f32 %v1550, %v1750
      %v1857 = vadd.f32 %v1551, %v1755
      %v1858 = vadd.f32 %v1552, %v1760
      %v1859 = vadd.f32 %v1553, %v1765
      %v1860 = vadd.f32 %v1554, %v1770
      %v1861 = vadd.f32 %v1555, %v1775
      %v1862 = vadd.f32 %v1556, %v1780
      %v1863 = vadd.f32 %v1557, %v1785
      %v1864 = vadd.f32 %v1558, %v1790
      %v1865 = vadd.f32 %v1559, %v1795
      %v1866 = vadd.f32 %v1560, %v1800
      %v1867 = vadd.f32 %v1561, %v1805
      %v1868 = vadd.f32 %v1562, %v1810
      %v1869 = vadd.f32 %v1563, %v1815
      %v1870 = vadd.f32 %v1564, %v1820
      %v1871 = vadd.f32 %v1565, %v1825
      %v1872 = vadd.f32 %v1566, %v1830
      %v1873 = vadd.f32 %v1567, %v1835
      %s1874 = scalar_lea.vmem %s1, 512
      %v1875 = vld [vmem:[%s1874] sm:$0xff]
      %v1876 = vld [vmem:[%s1874 + $0x8] sm:$0xff]
      %v1877 = vld [vmem:[%s1874 + $0x10] sm:$0xff]
      %v1878 = vld [vmem:[%s1874 + $0x18] sm:$0xff]
      %v1879 = vld [vmem:[%s1874 + $0x20] sm:$0xff]
      %v1880 = vld [vmem:[%s1874 + $0x28] sm:$0xff]
      %v1881 = vld [vmem:[%s1874 + $0x30] sm:$0xff]
      %v1882 = vld [vmem:[%s1874 + $0x38] sm:$0xff]
      %v1883 = vld [vmem:[%s1874 + $0x40] sm:$0xff]
      %v1884 = vld [vmem:[%s1874 + $0x48] sm:$0xff]
      %v1885 = vld [vmem:[%s1874 + $0x50] sm:$0xff]
      %v1886 = vld [vmem:[%s1874 + $0x58] sm:$0xff]
      %v1887 = vld [vmem:[%s1874 + $0x60] sm:$0xff]
      %v1888 = vld [vmem:[%s1874 + $0x68] sm:$0xff]
      %v1889 = vld [vmem:[%s1874 + $0x70] sm:$0xff]
      %v1890 = vld [vmem:[%s1874 + $0x78] sm:$0xff]
      %vm1891 = vcmask 1044480
      %v1892 = vrot.slane %v451, 3
      %v1893 = vrot.slane %v452, 3
      %v1894 = vsel %vm1891, %v1892, %v1893
      %v1895 = vrot.slane %v453, 3
      %v1896 = vsel %vm1891, %v1893, %v1895
      %v1897 = vrot.slane %v454, 3
      %v1898 = vsel %vm1891, %v1895, %v1897
      %v1899 = vrot.slane %v455, 3
      %v1900 = vsel %vm1891, %v1897, %v1899
      %v1901 = vrot.slane %v456, 3
      %v1902 = vsel %vm1891, %v1899, %v1901
      %v1903 = vrot.slane %v457, 3
      %v1904 = vsel %vm1891, %v1901, %v1903
      %v1905 = vrot.slane %v458, 3
      %v1906 = vsel %vm1891, %v1903, %v1905
      %v1907 = vrot.slane %v459, 3
      %v1908 = vsel %vm1891, %v1905, %v1907
      %v1909 = vrot.slane %v460, 3
      %v1910 = vsel %vm1891, %v1907, %v1909
      %v1911 = vrot.slane %v461, 3
      %v1912 = vsel %vm1891, %v1909, %v1911
      %v1913 = vrot.slane %v462, 3
      %v1914 = vsel %vm1891, %v1911, %v1913
      %v1915 = vrot.slane %v463, 3
      %v1916 = vsel %vm1891, %v1913, %v1915
      %v1917 = vrot.slane %v464, 3
      %v1918 = vsel %vm1891, %v1915, %v1917
      %v1919 = vrot.slane %v465, 3
      %v1920 = vsel %vm1891, %v1917, %v1919
      %v1921 = vrot.slane %v466, 3
      %v1922 = vsel %vm1891, %v1919, %v1921
      %v1923 = vrot.slane %v467, 3
      %v1924 = vsel %vm1891, %v1921, %v1923
      %v1925 = vrot.slane %v468, 3
      %v1926 = vsel %vm1891, %v1923, %v1925
      %v1927 = vrot.slane %v469, 3
      %v1928 = vsel %vm1891, %v1925, %v1927
      %v1929 = vrot.slane %v470, 3
      %v1930 = vsel %vm1891, %v1927, %v1929
      %v1931 = vrot.slane %v471, 3
      %v1932 = vsel %vm1891, %v1929, %v1931
      %v1933 = vrot.slane %v472, 3
      %v1934 = vsel %vm1891, %v1931, %v1933
      %v1935 = vrot.slane %v473, 3
      %v1936 = vsel %vm1891, %v1933, %v1935
      %v1937 = vrot.slane %v474, 3
      %v1938 = vsel %vm1891, %v1935, %v1937
      %v1939 = vrot.slane %v475, 3
      %v1940 = vsel %vm1891, %v1937, %v1939
      %v1941 = vrot.slane %v476, 3
      %v1942 = vsel %vm1891, %v1939, %v1941
      %v1943 = vrot.slane %v477, 3
      %v1944 = vsel %vm1891, %v1941, %v1943
      %v1945 = vrot.slane %v478, 3
      %v1946 = vsel %vm1891, %v1943, %v1945
      %v1947 = vrot.slane %v479, 3
      %v1948 = vsel %vm1891, %v1945, %v1947
      %v1949 = vrot.slane %v480, 3
      %v1950 = vsel %vm1891, %v1947, %v1949
      %v1951 = vrot.slane %v481, 3
      %v1952 = vsel %vm1891, %v1949, %v1951
      %v1953 = vrot.slane %v482, 3
      %v1954 = vsel %vm1891, %v1951, %v1953
      %v1955 = vrot.slane %v483, 3
      %v1956 = vsel %vm1891, %v1953, %v1955
      %v1957 = vrot.slane %v484, 3
      %v1958 = vsel %vm1891, %v1955, %v1957
      %v1959 = vrot.slane %v485, 3
      %v1960 = vsel %vm1891, %v1957, %v1959
      %v1961 = vrot.slane %v486, 3
      %v1962 = vsel %vm1891, %v1959, %v1961
      %v1963 = vrot.slane %v487, 3
      %v1964 = vsel %vm1891, %v1961, %v1963
      %2001 = vmatprep.subr.mxu0 0.0
      %2002 = vmatpush1.msra.mxu0 %v1875
      %2003 = vmatprep.subr.mxu0 0.0
      %2004 = vmatpush1.msra.mxu0 %v1876
      %2005 = vmatprep.subr.mxu0 0.0
      %2006 = vmatpush1.msra.mxu0 %v1877
      %2007 = vmatprep.subr.mxu0 0.0
      %2008 = vmatpush1.msra.mxu0 %v1878
      %2009 = vmatprep.subr.mxu0 0.0
      %2010 = vmatpush1.msra.mxu0 %v1879
      %2011 = vmatprep.subr.mxu0 0.0
      %2012 = vmatpush1.msra.mxu0 %v1880
      %2013 = vmatprep.subr.mxu0 0.0
      %2014 = vmatpush1.msra.mxu0 %v1881
      %2015 = vmatprep.subr.mxu0 0.0
      %2016 = vmatpush1.msra.mxu0 %v1882
      %2017 = vmatprep.subr.mxu0 0.0
      %2018 = vmatpush1.msra.mxu0 %v1883
      %2019 = vmatprep.subr.mxu0 0.0
      %2020 = vmatpush1.msra.mxu0 %v1884
      %2021 = vmatprep.subr.mxu0 0.0
      %2022 = vmatpush1.msra.mxu0 %v1885
      %2023 = vmatprep.subr.mxu0 0.0
      %2024 = vmatpush1.msra.mxu0 %v1886
      %2025 = vmatprep.subr.mxu0 0.0
      %2026 = vmatpush1.msra.mxu0 %v1887
      %2027 = vmatprep.subr.mxu0 0.0
      %2028 = vmatpush1.msra.mxu0 %v1888
      %2029 = vmatprep.subr.mxu0 0.0
      %2030 = vmatpush1.msra.mxu0 %v1889
      %2031 = vmatprep.subr.mxu0 0.0
      %2032 = vmatpush1.msra.mxu0 %v1890
      %2033 = vmatprep.subr.mxu0 0.0
      %2034 = vmatpush1.msra.mxu0 0.0
      %2035 = vmatprep.subr.mxu0 0.0
      %2036 = vmatpush1.msra.mxu0 0.0
      %2037 = vmatprep.subr.mxu0 0.0
      %2038 = vmatpush1.msra.mxu0 0.0
      %2039 = vmatprep.subr.mxu0 0.0
      %2040 = vmatpush1.msra.mxu0 0.0
      %2041 = vmatprep.subr.mxu0 0.0
      %2042 = vmatpush1.msra.mxu0 0.0
      %2043 = vmatprep.subr.mxu0 0.0
      %2044 = vmatpush1.msra.mxu0 0.0
      %2045 = vmatprep.subr.mxu0 0.0
      %2046 = vmatpush1.msra.mxu0 0.0
      %2047 = vmatprep.subr.mxu0 0.0
      %2048 = vmatpush1.msra.mxu0 0.0
      %2049 = vmatprep.subr.mxu0 0.0
      %2050 = vmatpush1.msra.mxu0 0.0
      %2051 = vmatprep.subr.mxu0 0.0
      %2052 = vmatpush1.msra.mxu0 0.0
      %2053 = vmatprep.subr.mxu0 0.0
      %2054 = vmatpush1.msra.mxu0 0.0
      %2055 = vmatprep.subr.mxu0 0.0
      %2056 = vmatpush1.msra.mxu0 0.0
      %2057 = vmatprep.subr.mxu0 0.0
      %2058 = vmatpush1.msra.mxu0 0.0
      %2059 = vmatprep.subr.mxu0 0.0
      %2060 = vmatpush1.msra.mxu0 0.0
      %2061 = vmatprep.subr.mxu0 0.0
      %2062 = vmatpush1.msra.mxu0 0.0
      %2063 = vmatprep.subr.mxu0 0.0
      %2064 = vmatpush1.msra.mxu0 0.0
      %2065 = vmatprep.mubr.f32.mxu0 0.0
      %2066 = vmatmul.mubr.f32.gmra.mrb[0].mxu0 %v1894
      %v2067 = vpop.f32.mrb[0].mxu0
      %v2068 = vadd.f32 0.0, %v2067
      %v2069 = vpop.f32.mrb[0].mxu0
      %2070 = vmatprep.mubr.f32.mxu0 0.0
      %2071 = vmatmul.mubr.f32.gmra.mrb[0].mxu0 %v1896
      %v2072 = vpop.f32.mrb[0].mxu0
      %v2073 = vadd.f32 0.0, %v2072
      %v2074 = vpop.f32.mrb[0].mxu0
      %2075 = vmatprep.mubr.f32.mxu0 0.0
      %2076 = vmatmul.mubr.f32.gmra.mrb[0].mxu0 %v1898
      %v2077 = vpop.f32.mrb[0].mxu0
      %v2078 = vadd.f32 0.0, %v2077
      %v2079 = vpop.f32.mrb[0].mxu0
      %2080 = vmatprep.mubr.f32.mxu0 0.0
      %2081 = vmatmul.mubr.f32.gmra.mrb[0].mxu0 %v1900
      %v2082 = vpop.f32.mrb[0].mxu0
      %v2083 = vadd.f32 0.0, %v2082
      %v2084 = vpop.f32.mrb[0].mxu0
      %2085 = vmatprep.mubr.f32.mxu0 0.0
      %2086 = vmatmul.mubr.f32.gmra.mrb[0].mxu0 %v1902
      %v2087 = vpop.f32.mrb[0].mxu0
      %v2088 = vadd.f32 0.0, %v2087
      %v2089 = vpop.f32.mrb[0].mxu0
      %2090 = vmatprep.mubr.f32.mxu0 0.0
      %2091 = vmatmul.mubr.f32.gmra.mrb[0].mxu0 %v1904
      %v2092 = vpop.f32.mrb[0].mxu0
      %v2093 = vadd.f32 0.0, %v2092
      %v2094 = vpop.f32.mrb[0].mxu0
      %2095 = vmatprep.mubr.f32.mxu0 0.0
      %2096 = vmatmul.mubr.f32.gmra.mrb[0].mxu0 %v1906
      %v2097 = vpop.f32.mrb[0].mxu0
      %v2098 = vadd.f32 0.0, %v2097
      %v2099 = vpop.f32.mrb[0].mxu0
      %2100 = vmatprep.mubr.f32.mxu0 0.0
      %2101 = vmatmul.mubr.f32.gmra.mrb[0].mxu0 %v1908
      %v2102 = vpop.f32.mrb[0].mxu0
      %v2103 = vadd.f32 0.0, %v2102
      %v2104 = vpop.f32.mrb[0].mxu0
      %2105 = vmatprep.mubr.f32.mxu0 0.0
      %2106 = vmatmul.mubr.f32.gmra.mrb[0].mxu0 %v1910
      %v2107 = vpop.f32.mrb[0].mxu0
      %v2108 = vadd.f32 0.0, %v2107
      %v2109 = vpop.f32.mrb[0].mxu0
      %2110 = vmatprep.mubr.f32.mxu0 0.0
      %2111 = vmatmul.mubr.f32.gmra.mrb[0].mxu0 %v1912
      %v2112 = vpop.f32.mrb[0].mxu0
      %v2113 = vadd.f32 0.0, %v2112
      %v2114 = vpop.f32.mrb[0].mxu0
      %2115 = vmatprep.mubr.f32.mxu0 0.0
      %2116 = vmatmul.mubr.f32.gmra.mrb[0].mxu0 %v1914
      %v2117 = vpop.f32.mrb[0].mxu0
      %v2118 = vadd.f32 0.0, %v2117
      %v2119 = vpop.f32.mrb[0].mxu0
      %2120 = vmatprep.mubr.f32.mxu0 0.0
      %2121 = vmatmul.mubr.f32.gmra.mrb[0].mxu0 %v1916
      %v2122 = vpop.f32.mrb[0].mxu0
      %v2123 = vadd.f32 0.0, %v2122
      %v2124 = vpop.f32.mrb[0].mxu0
      %2125 = vmatprep.mubr.f32.mxu0 0.0
      %2126 = vmatmul.mubr.f32.gmra.mrb[0].mxu0 %v1918
      %v2127 = vpop.f32.mrb[0].mxu0
      %v2128 = vadd.f32 0.0, %v2127
      %v2129 = vpop.f32.mrb[0].mxu0
      %2130 = vmatprep.mubr.f32.mxu0 0.0
      %2131 = vmatmul.mubr.f32.gmra.mrb[0].mxu0 %v1920
      %v2132 = vpop.f32.mrb[0].mxu0
      %v2133 = vadd.f32 0.0, %v2132
      %v2134 = vpop.f32.mrb[0].mxu0
      %2135 = vmatprep.mubr.f32.mxu0 0.0
      %2136 = vmatmul.mubr.f32.gmra.mrb[0].mxu0 %v1922
      %v2137 = vpop.f32.mrb[0].mxu0
      %v2138 = vadd.f32 0.0, %v2137
      %v2139 = vpop.f32.mrb[0].mxu0
      %2140 = vmatprep.mubr.f32.mxu0 0.0
      %2141 = vmatmul.mubr.f32.gmra.mrb[0].mxu0 %v1924
      %v2142 = vpop.f32.mrb[0].mxu0
      %v2143 = vadd.f32 0.0, %v2142
      %v2144 = vpop.f32.mrb[0].mxu0
      %2145 = vmatprep.mubr.f32.mxu0 0.0
      %2146 = vmatmul.mubr.f32.gmra.mrb[0].mxu0 %v1926
      %v2147 = vpop.f32.mrb[0].mxu0
      %v2148 = vadd.f32 0.0, %v2147
      %v2149 = vpop.f32.mrb[0].mxu0
      %2150 = vmatprep.mubr.f32.mxu0 0.0
      %2151 = vmatmul.mubr.f32.gmra.mrb[0].mxu0 %v1928
      %v2152 = vpop.f32.mrb[0].mxu0
      %v2153 = vadd.f32 0.0, %v2152
      %v2154 = vpop.f32.mrb[0].mxu0
      %2155 = vmatprep.mubr.f32.mxu0 0.0
      %2156 = vmatmul.mubr.f32.gmra.mrb[0].mxu0 %v1930
      %v2157 = vpop.f32.mrb[0].mxu0
      %v2158 = vadd.f32 0.0, %v2157
      %v2159 = vpop.f32.mrb[0].mxu0
      %2160 = vmatprep.mubr.f32.mxu0 0.0
      %2161 = vmatmul.mubr.f32.gmra.mrb[0].mxu0 %v1932
      %v2162 = vpop.f32.mrb[0].mxu0
      %v2163 = vadd.f32 0.0, %v2162
      %v2164 = vpop.f32.mrb[0].mxu0
      %2165 = vmatprep.mubr.f32.mxu0 0.0
      %2166 = vmatmul.mubr.f32.gmra.mrb[0].mxu0 %v1934
      %v2167 = vpop.f32.mrb[0].mxu0
      %v2168 = vadd.f32 0.0, %v2167
      %v2169 = vpop.f32.mrb[0].mxu0
      %2170 = vmatprep.mubr.f32.mxu0 0.0
      %2171 = vmatmul.mubr.f32.gmra.mrb[0].mxu0 %v1936
      %v2172 = vpop.f32.mrb[0].mxu0
      %v2173 = vadd.f32 0.0, %v2172
      %v2174 = vpop.f32.mrb[0].mxu0
      %2175 = vmatprep.mubr.f32.mxu0 0.0
      %2176 = vmatmul.mubr.f32.gmra.mrb[0].mxu0 %v1938
      %v2177 = vpop.f32.mrb[0].mxu0
      %v2178 = vadd.f32 0.0, %v2177
      %v2179 = vpop.f32.mrb[0].mxu0
      %2180 = vmatprep.mubr.f32.mxu0 0.0
      %2181 = vmatmul.mubr.f32.gmra.mrb[0].mxu0 %v1940
      %v2182 = vpop.f32.mrb[0].mxu0
      %v2183 = vadd.f32 0.0, %v2182
      %v2184 = vpop.f32.mrb[0].mxu0
      %2185 = vmatprep.mubr.f32.mxu0 0.0
      %2186 = vmatmul.mubr.f32.gmra.mrb[0].mxu0 %v1942
      %v2187 = vpop.f32.mrb[0].mxu0
      %v2188 = vadd.f32 0.0, %v2187
      %v2189 = vpop.f32.mrb[0].mxu0
      %2190 = vmatprep.mubr.f32.mxu0 0.0
      %2191 = vmatmul.mubr.f32.gmra.mrb[0].mxu0 %v1944
      %v2192 = vpop.f32.mrb[0].mxu0
      %v2193 = vadd.f32 0.0, %v2192
      %v2194 = vpop.f32.mrb[0].mxu0
      %2195 = vmatprep.mubr.f32.mxu0 0.0
      %2196 = vmatmul.mubr.f32.gmra.mrb[0].mxu0 %v1946
      %v2197 = vpop.f32.mrb[0].mxu0
      %v2198 = vadd.f32 0.0, %v2197
      %v2199 = vpop.f32.mrb[0].mxu0
      %2200 = vmatprep.mubr.f32.mxu0 0.0
      %2201 = vmatmul.mubr.f32.gmra.mrb[0].mxu0 %v1948
      %v2202 = vpop.f32.mrb[0].mxu0
      %v2203 = vadd.f32 0.0, %v2202
      %v2204 = vpop.f32.mrb[0].mxu0
      %2205 = vmatprep.mubr.f32.mxu0 0.0
      %2206 = vmatmul.mubr.f32.gmra.mrb[0].mxu0 %v1950
      %v2207 = vpop.f32.mrb[0].mxu0
      %v2208 = vadd.f32 0.0, %v2207
      %v2209 = vpop.f32.mrb[0].mxu0
      %2210 = vmatprep.mubr.f32.mxu0 0.0
      %2211 = vmatmul.mubr.f32.gmra.mrb[0].mxu0 %v1952
      %v2212 = vpop.f32.mrb[0].mxu0
      %v2213 = vadd.f32 0.0, %v2212
      %v2214 = vpop.f32.mrb[0].mxu0
      %2215 = vmatprep.mubr.f32.mxu0 0.0
      %2216 = vmatmul.mubr.f32.gmra.mrb[0].mxu0 %v1954
      %v2217 = vpop.f32.mrb[0].mxu0
      %v2218 = vadd.f32 0.0, %v2217
      %v2219 = vpop.f32.mrb[0].mxu0
      %2220 = vmatprep.mubr.f32.mxu0 0.0
      %2221 = vmatmul.mubr.f32.gmra.mrb[0].mxu0 %v1956
      %v2222 = vpop.f32.mrb[0].mxu0
      %v2223 = vadd.f32 0.0, %v2222
      %v2224 = vpop.f32.mrb[0].mxu0
      %2225 = vmatprep.mubr.f32.mxu0 0.0
      %2226 = vmatmul.mubr.f32.gmra.mrb[0].mxu0 %v1958
      %v2227 = vpop.f32.mrb[0].mxu0
      %v2228 = vadd.f32 0.0, %v2227
      %v2229 = vpop.f32.mrb[0].mxu0
      %2230 = vmatprep.mubr.f32.mxu0 0.0
      %2231 = vmatmul.mubr.f32.gmra.mrb[0].mxu0 %v1960
      %v2232 = vpop.f32.mrb[0].mxu0
      %v2233 = vadd.f32 0.0, %v2232
      %v2234 = vpop.f32.mrb[0].mxu0
      %2235 = vmatprep.mubr.f32.mxu0 0.0
      %2236 = vmatmul.mubr.f32.gmra.mrb[0].mxu0 %v1962
      %v2237 = vpop.f32.mrb[0].mxu0
      %v2238 = vadd.f32 0.0, %v2237
      %v2239 = vpop.f32.mrb[0].mxu0
      %2240 = vmatprep.mubr.f32.mxu0 0.0
      %2241 = vmatmul.mubr.f32.gmra.mrb[0].mxu0 %v1964
      %v2242 = vpop.f32.mrb[0].mxu0
      %v2243 = vadd.f32 0.0, %v2242
      %v2244 = vpop.f32.mrb[0].mxu0
      %2245 = vdwg.mxu0
      %v2246 = vadd.f32 %v1838, %v2068
      %v2247 = vadd.f32 %v1839, %v2073
      %v2248 = vadd.f32 %v1840, %v2078
      %v2249 = vadd.f32 %v1841, %v2083
      %v2250 = vadd.f32 %v1842, %v2088
      %v2251 = vadd.f32 %v1843, %v2093
      %v2252 = vadd.f32 %v1844, %v2098
      %v2253 = vadd.f32 %v1845, %v2103
      %v2254 = vadd.f32 %v1846, %v2108
      %v2255 = vadd.f32 %v1847, %v2113
      %v2256 = vadd.f32 %v1848, %v2118
      %v2257 = vadd.f32 %v1849, %v2123
      %v2258 = vadd.f32 %v1850, %v2128
      %v2259 = vadd.f32 %v1851, %v2133
      %v2260 = vadd.f32 %v1852, %v2138
      %v2261 = vadd.f32 %v1853, %v2143
      %v2262 = vadd.f32 %v1854, %v2148
      %v2263 = vadd.f32 %v1855, %v2153
      %v2264 = vadd.f32 %v1856, %v2158
      %v2265 = vadd.f32 %v1857, %v2163
      %v2266 = vadd.f32 %v1858, %v2168
      %v2267 = vadd.f32 %v1859, %v2173
      %v2268 = vadd.f32 %v1860, %v2178
      %v2269 = vadd.f32 %v1861, %v2183
      %v2270 = vadd.f32 %v1862, %v2188
      %v2271 = vadd.f32 %v1863, %v2193
      %v2272 = vadd.f32 %v1864, %v2198
      %v2273 = vadd.f32 %v1865, %v2203
      %v2274 = vadd.f32 %v1866, %v2208
      %v2275 = vadd.f32 %v1867, %v2213
      %v2276 = vadd.f32 %v1868, %v2218
      %v2277 = vadd.f32 %v1869, %v2223
      %v2278 = vadd.f32 %v1870, %v2228
      %v2279 = vadd.f32 %v1871, %v2233
      %v2280 = vadd.f32 %v1872, %v2238
      %v2281 = vadd.f32 %v1873, %v2243
      %s2282 = scalar_lea.vmem %s1, 640
      %v2283 = vld [vmem:[%s2282] sm:$0xff]
      %v2284 = vld [vmem:[%s2282 + $0x8] sm:$0xff]
      %v2285 = vld [vmem:[%s2282 + $0x10] sm:$0xff]
      %v2286 = vld [vmem:[%s2282 + $0x18] sm:$0xff]
      %v2287 = vld [vmem:[%s2282 + $0x20] sm:$0xff]
      %v2288 = vld [vmem:[%s2282 + $0x28] sm:$0xff]
      %v2289 = vld [vmem:[%s2282 + $0x30] sm:$0xff]
      %v2290 = vld [vmem:[%s2282 + $0x38] sm:$0xff]
      %v2291 = vld [vmem:[%s2282 + $0x40] sm:$0xff]
      %v2292 = vld [vmem:[%s2282 + $0x48] sm:$0xff]
      %v2293 = vld [vmem:[%s2282 + $0x50] sm:$0xff]
      %v2294 = vld [vmem:[%s2282 + $0x58] sm:$0xff]
      %v2295 = vld [vmem:[%s2282 + $0x60] sm:$0xff]
      %v2296 = vld [vmem:[%s2282 + $0x68] sm:$0xff]
      %v2297 = vld [vmem:[%s2282 + $0x70] sm:$0xff]
      %v2298 = vld [vmem:[%s2282 + $0x78] sm:$0xff]
      %vm2299 = vcmask 1043456
      %v2300 = vrot.slane %v451, 4
      %v2301 = vrot.slane %v452, 4
      %v2302 = vsel %vm2299, %v2300, %v2301
      %v2303 = vrot.slane %v453, 4
      %v2304 = vsel %vm2299, %v2301, %v2303
      %v2305 = vrot.slane %v454, 4
      %v2306 = vsel %vm2299, %v2303, %v2305
      %v2307 = vrot.slane %v455, 4
      %v2308 = vsel %vm2299, %v2305, %v2307
      %v2309 = vrot.slane %v456, 4
      %v2310 = vsel %vm2299, %v2307, %v2309
      %v2311 = vrot.slane %v457, 4
      %v2312 = vsel %vm2299, %v2309, %v2311
      %v2313 = vrot.slane %v458, 4
      %v2314 = vsel %vm2299, %v2311, %v2313
      %v2315 = vrot.slane %v459, 4
      %v2316 = vsel %vm2299, %v2313, %v2315
      %v2317 = vrot.slane %v460, 4
      %v2318 = vsel %vm2299, %v2315, %v2317
      %v2319 = vrot.slane %v461, 4
      %v2320 = vsel %vm2299, %v2317, %v2319
      %v2321 = vrot.slane %v462, 4
      %v2322 = vsel %vm2299, %v2319, %v2321
      %v2323 = vrot.slane %v463, 4
      %v2324 = vsel %vm2299, %v2321, %v2323
      %v2325 = vrot.slane %v464, 4
      %v2326 = vsel %vm2299, %v2323, %v2325
      %v2327 = vrot.slane %v465, 4
      %v2328 = vsel %vm2299, %v2325, %v2327
      %v2329 = vrot.slane %v466, 4
      %v2330 = vsel %vm2299, %v2327, %v2329
      %v2331 = vrot.slane %v467, 4
      %v2332 = vsel %vm2299, %v2329, %v2331
      %v2333 = vrot.slane %v468, 4
      %v2334 = vsel %vm2299, %v2331, %v2333
      %v2335 = vrot.slane %v469, 4
      %v2336 = vsel %vm2299, %v2333, %v2335
      %v2337 = vrot.slane %v470, 4
      %v2338 = vsel %vm2299, %v2335, %v2337
      %v2339 = vrot.slane %v471, 4
      %v2340 = vsel %vm2299, %v2337, %v2339
      %v2341 = vrot.slane %v472, 4
      %v2342 = vsel %vm2299, %v2339, %v2341
      %v2343 = vrot.slane %v473, 4
      %v2344 = vsel %vm2299, %v2341, %v2343
      %v2345 = vrot.slane %v474, 4
      %v2346 = vsel %vm2299, %v2343, %v2345
      %v2347 = vrot.slane %v475, 4
      %v2348 = vsel %vm2299, %v2345, %v2347
      %v2349 = vrot.slane %v476, 4
      %v2350 = vsel %vm2299, %v2347, %v2349
      %v2351 = vrot.slane %v477, 4
      %v2352 = vsel %vm2299, %v2349, %v2351
      %v2353 = vrot.slane %v478, 4
      %v2354 = vsel %vm2299, %v2351, %v2353
      %v2355 = vrot.slane %v479, 4
      %v2356 = vsel %vm2299, %v2353, %v2355
      %v2357 = vrot.slane %v480, 4
      %v2358 = vsel %vm2299, %v2355, %v2357
      %v2359 = vrot.slane %v481, 4
      %v2360 = vsel %vm2299, %v2357, %v2359
      %v2361 = vrot.slane %v482, 4
      %v2362 = vsel %vm2299, %v2359, %v2361
      %v2363 = vrot.slane %v483, 4
      %v2364 = vsel %vm2299, %v2361, %v2363
      %v2365 = vrot.slane %v484, 4
      %v2366 = vsel %vm2299, %v2363, %v2365
      %v2367 = vrot.slane %v485, 4
      %v2368 = vsel %vm2299, %v2365, %v2367
      %v2369 = vrot.slane %v486, 4
      %v2370 = vsel %vm2299, %v2367, %v2369
      %v2371 = vrot.slane %v487, 4
      %v2372 = vsel %vm2299, %v2369, %v2371
      %2409 = vmatprep.subr.mxu0 0.0
      %2410 = vmatpush1.msra.mxu0 %v2283
      %2411 = vmatprep.subr.mxu0 0.0
      %2412 = vmatpush1.msra.mxu0 %v2284
      %2413 = vmatprep.subr.mxu0 0.0
      %2414 = vmatpush1.msra.mxu0 %v2285
      %2415 = vmatprep.subr.mxu0 0.0
      %2416 = vmatpush1.msra.mxu0 %v2286
      %2417 = vmatprep.subr.mxu0 0.0
      %2418 = vmatpush1.msra.mxu0 %v2287
      %2419 = vmatprep.subr.mxu0 0.0
      %2420 = vmatpush1.msra.mxu0 %v2288
      %2421 = vmatprep.subr.mxu0 0.0
      %2422 = vmatpush1.msra.mxu0 %v2289
      %2423 = vmatprep.subr.mxu0 0.0
      %2424 = vmatpush1.msra.mxu0 %v2290
      %2425 = vmatprep.subr.mxu0 0.0
      %2426 = vmatpush1.msra.mxu0 %v2291
      %2427 = vmatprep.subr.mxu0 0.0
      %2428 = vmatpush1.msra.mxu0 %v2292
      %2429 = vmatprep.subr.mxu0 0.0
      %2430 = vmatpush1.msra.mxu0 %v2293
      %2431 = vmatprep.subr.mxu0 0.0
      %2432 = vmatpush1.msra.mxu0 %v2294
      %2433 = vmatprep.subr.mxu0 0.0
      %2434 = vmatpush1.msra.mxu0 %v2295
      %2435 = vmatprep.subr.mxu0 0.0
      %2436 = vmatpush1.msra.mxu0 %v2296
      %2437 = vmatprep.subr.mxu0 0.0
      %2438 = vmatpush1.msra.mxu0 %v2297
      %2439 = vmatprep.subr.mxu0 0.0
      %2440 = vmatpush1.msra.mxu0 %v2298
      %2441 = vmatprep.subr.mxu0 0.0
      %2442 = vmatpush1.msra.mxu0 0.0
      %2443 = vmatprep.subr.mxu0 0.0
      %2444 = vmatpush1.msra.mxu0 0.0
      %2445 = vmatprep.subr.mxu0 0.0
      %2446 = vmatpush1.msra.mxu0 0.0
      %2447 = vmatprep.subr.mxu0 0.0
      %2448 = vmatpush1.msra.mxu0 0.0
      %2449 = vmatprep.subr.mxu0 0.0
      %2450 = vmatpush1.msra.mxu0 0.0
      %2451 = vmatprep.subr.mxu0 0.0
      %2452 = vmatpush1.msra.mxu0 0.0
      %2453 = vmatprep.subr.mxu0 0.0
      %2454 = vmatpush1.msra.mxu0 0.0
      %2455 = vmatprep.subr.mxu0 0.0
      %2456 = vmatpush1.msra.mxu0 0.0
      %2457 = vmatprep.subr.mxu0 0.0
      %2458 = vmatpush1.msra.mxu0 0.0
      %2459 = vmatprep.subr.mxu0 0.0
      %2460 = vmatpush1.msra.mxu0 0.0
      %2461 = vmatprep.subr.mxu0 0.0
      %2462 = vmatpush1.msra.mxu0 0.0
      %2463 = vmatprep.subr.mxu0 0.0
      %2464 = vmatpush1.msra.mxu0 0.0
      %2465 = vmatprep.subr.mxu0 0.0
      %2466 = vmatpush1.msra.mxu0 0.0
      %2467 = vmatprep.subr.mxu0 0.0
      %2468 = vmatpush1.msra.mxu0 0.0
      %2469 = vmatprep.subr.mxu0 0.0
      %2470 = vmatpush1.msra.mxu0 0.0
      %2471 = vmatprep.subr.mxu0 0.0
      %2472 = vmatpush1.msra.mxu0 0.0
      %2473 = vmatprep.mubr.f32.mxu0 0.0
      %2474 = vmatmul.mubr.f32.gmra.mrb[0].mxu0 %v2302
      %v2475 = vpop.f32.mrb[0].mxu0
      %v2476 = vadd.f32 0.0, %v2475
      %v2477 = vpop.f32.mrb[0].mxu0
      %2478 = vmatprep.mubr.f32.mxu0 0.0
      %2479 = vmatmul.mubr.f32.gmra.mrb[0].mxu0 %v2304
      %v2480 = vpop.f32.mrb[0].mxu0
      %v2481 = vadd.f32 0.0, %v2480
      %v2482 = vpop.f32.mrb[0].mxu0
      %2483 = vmatprep.mubr.f32.mxu0 0.0
      %2484 = vmatmul.mubr.f32.gmra.mrb[0].mxu0 %v2306
      %v2485 = vpop.f32.mrb[0].mxu0
      %v2486 = vadd.f32 0.0, %v2485
      %v2487 = vpop.f32.mrb[0].mxu0
      %2488 = vmatprep.mubr.f32.mxu0 0.0
      %2489 = vmatmul.mubr.f32.gmra.mrb[0].mxu0 %v2308
      %v2490 = vpop.f32.mrb[0].mxu0
      %v2491 = vadd.f32 0.0, %v2490
      %v2492 = vpop.f32.mrb[0].mxu0
      %2493 = vmatprep.mubr.f32.mxu0 0.0
      %2494 = vmatmul.mubr.f32.gmra.mrb[0].mxu0 %v2310
      %v2495 = vpop.f32.mrb[0].mxu0
      %v2496 = vadd.f32 0.0, %v2495
      %v2497 = vpop.f32.mrb[0].mxu0
      %2498 = vmatprep.mubr.f32.mxu0 0.0
      %2499 = vmatmul.mubr.f32.gmra.mrb[0].mxu0 %v2312
      %v2500 = vpop.f32.mrb[0].mxu0
      %v2501 = vadd.f32 0.0, %v2500
      %v2502 = vpop.f32.mrb[0].mxu0
      %2503 = vmatprep.mubr.f32.mxu0 0.0
      %2504 = vmatmul.mubr.f32.gmra.mrb[0].mxu0 %v2314
      %v2505 = vpop.f32.mrb[0].mxu0
      %v2506 = vadd.f32 0.0, %v2505
      %v2507 = vpop.f32.mrb[0].mxu0
      %2508 = vmatprep.mubr.f32.mxu0 0.0
      %2509 = vmatmul.mubr.f32.gmra.mrb[0].mxu0 %v2316
      %v2510 = vpop.f32.mrb[0].mxu0
      %v2511 = vadd.f32 0.0, %v2510
      %v2512 = vpop.f32.mrb[0].mxu0
      %2513 = vmatprep.mubr.f32.mxu0 0.0
      %2514 = vmatmul.mubr.f32.gmra.mrb[0].mxu0 %v2318
      %v2515 = vpop.f32.mrb[0].mxu0
      %v2516 = vadd.f32 0.0, %v2515
      %v2517 = vpop.f32.mrb[0].mxu0
      %2518 = vmatprep.mubr.f32.mxu0 0.0
      %2519 = vmatmul.mubr.f32.gmra.mrb[0].mxu0 %v2320
      %v2520 = vpop.f32.mrb[0].mxu0
      %v2521 = vadd.f32 0.0, %v2520
      %v2522 = vpop.f32.mrb[0].mxu0
      %2523 = vmatprep.mubr.f32.mxu0 0.0
      %2524 = vmatmul.mubr.f32.gmra.mrb[0].mxu0 %v2322
      %v2525 = vpop.f32.mrb[0].mxu0
      %v2526 = vadd.f32 0.0, %v2525
      %v2527 = vpop.f32.mrb[0].mxu0
      %2528 = vmatprep.mubr.f32.mxu0 0.0
      %2529 = vmatmul.mubr.f32.gmra.mrb[0].mxu0 %v2324
      %v2530 = vpop.f32.mrb[0].mxu0
      %v2531 = vadd.f32 0.0, %v2530
      %v2532 = vpop.f32.mrb[0].mxu0
      %2533 = vmatprep.mubr.f32.mxu0 0.0
      %2534 = vmatmul.mubr.f32.gmra.mrb[0].mxu0 %v2326
      %v2535 = vpop.f32.mrb[0].mxu0
      %v2536 = vadd.f32 0.0, %v2535
      %v2537 = vpop.f32.mrb[0].mxu0
      %2538 = vmatprep.mubr.f32.mxu0 0.0
      %2539 = vmatmul.mubr.f32.gmra.mrb[0].mxu0 %v2328
      %v2540 = vpop.f32.mrb[0].mxu0
      %v2541 = vadd.f32 0.0, %v2540
      %v2542 = vpop.f32.mrb[0].mxu0
      %2543 = vmatprep.mubr.f32.mxu0 0.0
      %2544 = vmatmul.mubr.f32.gmra.mrb[0].mxu0 %v2330
      %v2545 = vpop.f32.mrb[0].mxu0
      %v2546 = vadd.f32 0.0, %v2545
      %v2547 = vpop.f32.mrb[0].mxu0
      %2548 = vmatprep.mubr.f32.mxu0 0.0
      %2549 = vmatmul.mubr.f32.gmra.mrb[0].mxu0 %v2332
      %v2550 = vpop.f32.mrb[0].mxu0
      %v2551 = vadd.f32 0.0, %v2550
      %v2552 = vpop.f32.mrb[0].mxu0
      %2553 = vmatprep.mubr.f32.mxu0 0.0
      %2554 = vmatmul.mubr.f32.gmra.mrb[0].mxu0 %v2334
      %v2555 = vpop.f32.mrb[0].mxu0
      %v2556 = vadd.f32 0.0, %v2555
      %v2557 = vpop.f32.mrb[0].mxu0
      %2558 = vmatprep.mubr.f32.mxu0 0.0
      %2559 = vmatmul.mubr.f32.gmra.mrb[0].mxu0 %v2336
      %v2560 = vpop.f32.mrb[0].mxu0
      %v2561 = vadd.f32 0.0, %v2560
      %v2562 = vpop.f32.mrb[0].mxu0
      %2563 = vmatprep.mubr.f32.mxu0 0.0
      %2564 = vmatmul.mubr.f32.gmra.mrb[0].mxu0 %v2338
      %v2565 = vpop.f32.mrb[0].mxu0
      %v2566 = vadd.f32 0.0, %v2565
      %v2567 = vpop.f32.mrb[0].mxu0
      %2568 = vmatprep.mubr.f32.mxu0 0.0
      %2569 = vmatmul.mubr.f32.gmra.mrb[0].mxu0 %v2340
      %v2570 = vpop.f32.mrb[0].mxu0
      %v2571 = vadd.f32 0.0, %v2570
      %v2572 = vpop.f32.mrb[0].mxu0
      %2573 = vmatprep.mubr.f32.mxu0 0.0
      %2574 = vmatmul.mubr.f32.gmra.mrb[0].mxu0 %v2342
      %v2575 = vpop.f32.mrb[0].mxu0
      %v2576 = vadd.f32 0.0, %v2575
      %v2577 = vpop.f32.mrb[0].mxu0
      %2578 = vmatprep.mubr.f32.mxu0 0.0
      %2579 = vmatmul.mubr.f32.gmra.mrb[0].mxu0 %v2344
      %v2580 = vpop.f32.mrb[0].mxu0
      %v2581 = vadd.f32 0.0, %v2580
      %v2582 = vpop.f32.mrb[0].mxu0
      %2583 = vmatprep.mubr.f32.mxu0 0.0
      %2584 = vmatmul.mubr.f32.gmra.mrb[0].mxu0 %v2346
      %v2585 = vpop.f32.mrb[0].mxu0
      %v2586 = vadd.f32 0.0, %v2585
      %v2587 = vpop.f32.mrb[0].mxu0
      %2588 = vmatprep.mubr.f32.mxu0 0.0
      %2589 = vmatmul.mubr.f32.gmra.mrb[0].mxu0 %v2348
      %v2590 = vpop.f32.mrb[0].mxu0
      %v2591 = vadd.f32 0.0, %v2590
      %v2592 = vpop.f32.mrb[0].mxu0
      %2593 = vmatprep.mubr.f32.mxu0 0.0
      %2594 = vmatmul.mubr.f32.gmra.mrb[0].mxu0 %v2350
      %v2595 = vpop.f32.mrb[0].mxu0
      %v2596 = vadd.f32 0.0, %v2595
      %v2597 = vpop.f32.mrb[0].mxu0
      %2598 = vmatprep.mubr.f32.mxu0 0.0
      %2599 = vmatmul.mubr.f32.gmra.mrb[0].mxu0 %v2352
      %v2600 = vpop.f32.mrb[0].mxu0
      %v2601 = vadd.f32 0.0, %v2600
      %v2602 = vpop.f32.mrb[0].mxu0
      %2603 = vmatprep.mubr.f32.mxu0 0.0
      %2604 = vmatmul.mubr.f32.gmra.mrb[0].mxu0 %v2354
      %v2605 = vpop.f32.mrb[0].mxu0
      %v2606 = vadd.f32 0.0, %v2605
      %v2607 = vpop.f32.mrb[0].mxu0
      %2608 = vmatprep.mubr.f32.mxu0 0.0
      %2609 = vmatmul.mubr.f32.gmra.mrb[0].mxu0 %v2356
      %v2610 = vpop.f32.mrb[0].mxu0
      %v2611 = vadd.f32 0.0, %v2610
      %v2612 = vpop.f32.mrb[0].mxu0
      %2613 = vmatprep.mubr.f32.mxu0 0.0
      %2614 = vmatmul.mubr.f32.gmra.mrb[0].mxu0 %v2358
      %v2615 = vpop.f32.mrb[0].mxu0
      %v2616 = vadd.f32 0.0, %v2615
      %v2617 = vpop.f32.mrb[0].mxu0
      %2618 = vmatprep.mubr.f32.mxu0 0.0
      %2619 = vmatmul.mubr.f32.gmra.mrb[0].mxu0 %v2360
      %v2620 = vpop.f32.mrb[0].mxu0
      %v2621 = vadd.f32 0.0, %v2620
      %v2622 = vpop.f32.mrb[0].mxu0
      %2623 = vmatprep.mubr.f32.mxu0 0.0
      %2624 = vmatmul.mubr.f32.gmra.mrb[0].mxu0 %v2362
      %v2625 = vpop.f32.mrb[0].mxu0
      %v2626 = vadd.f32 0.0, %v2625
      %v2627 = vpop.f32.mrb[0].mxu0
      %2628 = vmatprep.mubr.f32.mxu0 0.0
      %2629 = vmatmul.mubr.f32.gmra.mrb[0].mxu0 %v2364
      %v2630 = vpop.f32.mrb[0].mxu0
      %v2631 = vadd.f32 0.0, %v2630
      %v2632 = vpop.f32.mrb[0].mxu0
      %2633 = vmatprep.mubr.f32.mxu0 0.0
      %2634 = vmatmul.mubr.f32.gmra.mrb[0].mxu0 %v2366
      %v2635 = vpop.f32.mrb[0].mxu0
      %v2636 = vadd.f32 0.0, %v2635
      %v2637 = vpop.f32.mrb[0].mxu0
      %2638 = vmatprep.mubr.f32.mxu0 0.0
      %2639 = vmatmul.mubr.f32.gmra.mrb[0].mxu0 %v2368
      %v2640 = vpop.f32.mrb[0].mxu0
      %v2641 = vadd.f32 0.0, %v2640
      %v2642 = vpop.f32.mrb[0].mxu0
      %2643 = vmatprep.mubr.f32.mxu0 0.0
      %2644 = vmatmul.mubr.f32.gmra.mrb[0].mxu0 %v2370
      %v2645 = vpop.f32.mrb[0].mxu0
      %v2646 = vadd.f32 0.0, %v2645
      %v2647 = vpop.f32.mrb[0].mxu0
      %2648 = vmatprep.mubr.f32.mxu0 0.0
      %2649 = vmatmul.mubr.f32.gmra.mrb[0].mxu0 %v2372
      %v2650 = vpop.f32.mrb[0].mxu0
      %v2651 = vadd.f32 0.0, %v2650
      %v2652 = vpop.f32.mrb[0].mxu0
      %2653 = vdwg.mxu0
      %v2654 = vadd.f32 %v2246, %v2476
      %v2655 = vadd.f32 %v2247, %v2481
      %v2656 = vadd.f32 %v2248, %v2486
      %v2657 = vadd.f32 %v2249, %v2491
      %v2658 = vadd.f32 %v2250, %v2496
      %v2659 = vadd.f32 %v2251, %v2501
      %v2660 = vadd.f32 %v2252, %v2506
      %v2661 = vadd.f32 %v2253, %v2511
      %v2662 = vadd.f32 %v2254, %v2516
      %v2663 = vadd.f32 %v2255, %v2521
      %v2664 = vadd.f32 %v2256, %v2526
      %v2665 = vadd.f32 %v2257, %v2531
      %v2666 = vadd.f32 %v2258, %v2536
      %v2667 = vadd.f32 %v2259, %v2541
      %v2668 = vadd.f32 %v2260, %v2546
      %v2669 = vadd.f32 %v2261, %v2551
      %v2670 = vadd.f32 %v2262, %v2556
      %v2671 = vadd.f32 %v2263, %v2561
      %v2672 = vadd.f32 %v2264, %v2566
      %v2673 = vadd.f32 %v2265, %v2571
      %v2674 = vadd.f32 %v2266, %v2576
      %v2675 = vadd.f32 %v2267, %v2581
      %v2676 = vadd.f32 %v2268, %v2586
      %v2677 = vadd.f32 %v2269, %v2591
      %v2678 = vadd.f32 %v2270, %v2596
      %v2679 = vadd.f32 %v2271, %v2601
      %v2680 = vadd.f32 %v2272, %v2606
      %v2681 = vadd.f32 %v2273, %v2611
      %v2682 = vadd.f32 %v2274, %v2616
      %v2683 = vadd.f32 %v2275, %v2621
      %v2684 = vadd.f32 %v2276, %v2626
      %v2685 = vadd.f32 %v2277, %v2631
      %v2686 = vadd.f32 %v2278, %v2636
      %v2687 = vadd.f32 %v2279, %v2641
      %v2688 = vadd.f32 %v2280, %v2646
      %v2689 = vadd.f32 %v2281, %v2651
      %s2690 = scalar_lea.vmem %s1, 768
      %v2691 = vld [vmem:[%s2690] sm:$0xff]
      %v2692 = vld [vmem:[%s2690 + $0x8] sm:$0xff]
      %v2693 = vld [vmem:[%s2690 + $0x10] sm:$0xff]
      %v2694 = vld [vmem:[%s2690 + $0x18] sm:$0xff]
      %v2695 = vld [vmem:[%s2690 + $0x20] sm:$0xff]
      %v2696 = vld [vmem:[%s2690 + $0x28] sm:$0xff]
      %v2697 = vld [vmem:[%s2690 + $0x30] sm:$0xff]
      %v2698 = vld [vmem:[%s2690 + $0x38] sm:$0xff]
      %v2699 = vld [vmem:[%s2690 + $0x40] sm:$0xff]
      %v2700 = vld [vmem:[%s2690 + $0x48] sm:$0xff]
      %v2701 = vld [vmem:[%s2690 + $0x50] sm:$0xff]
      %v2702 = vld [vmem:[%s2690 + $0x58] sm:$0xff]
      %v2703 = vld [vmem:[%s2690 + $0x60] sm:$0xff]
      %v2704 = vld [vmem:[%s2690 + $0x68] sm:$0xff]
      %v2705 = vld [vmem:[%s2690 + $0x70] sm:$0xff]
      %v2706 = vld [vmem:[%s2690 + $0x78] sm:$0xff]
      %v2709 = vrot.slane %v488, 4
      %v2710 = vsel %vm2299, %v2371, %v2709
      %v2711 = vrot.slane %v489, 4
      %v2712 = vsel %vm2299, %v2709, %v2711
      %2715 = vmatprep.subr.mxu0 0.0
      %2716 = vmatpush1.msra.mxu0 %v2691
      %2717 = vmatprep.subr.mxu0 0.0
      %2718 = vmatpush1.msra.mxu0 %v2692
      %2719 = vmatprep.subr.mxu0 0.0
      %2720 = vmatpush1.msra.mxu0 %v2693
      %2721 = vmatprep.subr.mxu0 0.0
      %2722 = vmatpush1.msra.mxu0 %v2694
      %2723 = vmatprep.subr.mxu0 0.0
      %2724 = vmatpush1.msra.mxu0 %v2695
      %2725 = vmatprep.subr.mxu0 0.0
      %2726 = vmatpush1.msra.mxu0 %v2696
      %2727 = vmatprep.subr.mxu0 0.0
      %2728 = vmatpush1.msra.mxu0 %v2697
      %2729 = vmatprep.subr.mxu0 0.0
      %2730 = vmatpush1.msra.mxu0 %v2698
      %2731 = vmatprep.subr.mxu0 0.0
      %2732 = vmatpush1.msra.mxu0 %v2699
      %2733 = vmatprep.subr.mxu0 0.0
      %2734 = vmatpush1.msra.mxu0 %v2700
      %2735 = vmatprep.subr.mxu0 0.0
      %2736 = vmatpush1.msra.mxu0 %v2701
      %2737 = vmatprep.subr.mxu0 0.0
      %2738 = vmatpush1.msra.mxu0 %v2702
      %2739 = vmatprep.subr.mxu0 0.0
      %2740 = vmatpush1.msra.mxu0 %v2703
      %2741 = vmatprep.subr.mxu0 0.0
      %2742 = vmatpush1.msra.mxu0 %v2704
      %2743 = vmatprep.subr.mxu0 0.0
      %2744 = vmatpush1.msra.mxu0 %v2705
      %2745 = vmatprep.subr.mxu0 0.0
      %2746 = vmatpush1.msra.mxu0 %v2706
      %2747 = vmatprep.subr.mxu0 0.0
      %2748 = vmatpush1.msra.mxu0 0.0
      %2749 = vmatprep.subr.mxu0 0.0
      %2750 = vmatpush1.msra.mxu0 0.0
      %2751 = vmatprep.subr.mxu0 0.0
      %2752 = vmatpush1.msra.mxu0 0.0
      %2753 = vmatprep.subr.mxu0 0.0
      %2754 = vmatpush1.msra.mxu0 0.0
      %2755 = vmatprep.subr.mxu0 0.0
      %2756 = vmatpush1.msra.mxu0 0.0
      %2757 = vmatprep.subr.mxu0 0.0
      %2758 = vmatpush1.msra.mxu0 0.0
      %2759 = vmatprep.subr.mxu0 0.0
      %2760 = vmatpush1.msra.mxu0 0.0
      %2761 = vmatprep.subr.mxu0 0.0
      %2762 = vmatpush1.msra.mxu0 0.0
      %2763 = vmatprep.subr.mxu0 0.0
      %2764 = vmatpush1.msra.mxu0 0.0
      %2765 = vmatprep.subr.mxu0 0.0
      %2766 = vmatpush1.msra.mxu0 0.0
      %2767 = vmatprep.subr.mxu0 0.0
      %2768 = vmatpush1.msra.mxu0 0.0
      %2769 = vmatprep.subr.mxu0 0.0
      %2770 = vmatpush1.msra.mxu0 0.0
      %2771 = vmatprep.subr.mxu0 0.0
      %2772 = vmatpush1.msra.mxu0 0.0
      %2773 = vmatprep.subr.mxu0 0.0
      %2774 = vmatpush1.msra.mxu0 0.0
      %2775 = vmatprep.subr.mxu0 0.0
      %2776 = vmatpush1.msra.mxu0 0.0
      %2777 = vmatprep.subr.mxu0 0.0
      %2778 = vmatpush1.msra.mxu0 0.0
      %2779 = vmatprep.mubr.f32.mxu0 0.0
      %2780 = vmatmul.mubr.f32.gmra.mrb[0].mxu0 %v2306
      %v2781 = vpop.f32.mrb[0].mxu0
      %v2782 = vadd.f32 0.0, %v2781
      %v2783 = vpop.f32.mrb[0].mxu0
      %2784 = vmatprep.mubr.f32.mxu0 0.0
      %2785 = vmatmul.mubr.f32.gmra.mrb[0].mxu0 %v2308
      %v2786 = vpop.f32.mrb[0].mxu0
      %v2787 = vadd.f32 0.0, %v2786
      %v2788 = vpop.f32.mrb[0].mxu0
      %2789 = vmatprep.mubr.f32.mxu0 0.0
      %2790 = vmatmul.mubr.f32.gmra.mrb[0].mxu0 %v2310
      %v2791 = vpop.f32.mrb[0].mxu0
      %v2792 = vadd.f32 0.0, %v2791
      %v2793 = vpop.f32.mrb[0].mxu0
      %2794 = vmatprep.mubr.f32.mxu0 0.0
      %2795 = vmatmul.mubr.f32.gmra.mrb[0].mxu0 %v2312
      %v2796 = vpop.f32.mrb[0].mxu0
      %v2797 = vadd.f32 0.0, %v2796
      %v2798 = vpop.f32.mrb[0].mxu0
      %2799 = vmatprep.mubr.f32.mxu0 0.0
      %2800 = vmatmul.mubr.f32.gmra.mrb[0].mxu0 %v2314
      %v2801 = vpop.f32.mrb[0].mxu0
      %v2802 = vadd.f32 0.0, %v2801
      %v2803 = vpop.f32.mrb[0].mxu0
      %2804 = vmatprep.mubr.f32.mxu0 0.0
      %2805 = vmatmul.mubr.f32.gmra.mrb[0].mxu0 %v2316
      %v2806 = vpop.f32.mrb[0].mxu0
      %v2807 = vadd.f32 0.0, %v2806
      %v2808 = vpop.f32.mrb[0].mxu0
      %2809 = vmatprep.mubr.f32.mxu0 0.0
      %2810 = vmatmul.mubr.f32.gmra.mrb[0].mxu0 %v2318
      %v2811 = vpop.f32.mrb[0].mxu0
      %v2812 = vadd.f32 0.0, %v2811
      %v2813 = vpop.f32.mrb[0].mxu0
      %2814 = vmatprep.mubr.f32.mxu0 0.0
      %2815 = vmatmul.mubr.f32.gmra.mrb[0].mxu0 %v2320
      %v2816 = vpop.f32.mrb[0].mxu0
      %v2817 = vadd.f32 0.0, %v2816
      %v2818 = vpop.f32.mrb[0].mxu0
      %2819 = vmatprep.mubr.f32.mxu0 0.0
      %2820 = vmatmul.mubr.f32.gmra.mrb[0].mxu0 %v2322
      %v2821 = vpop.f32.mrb[0].mxu0
      %v2822 = vadd.f32 0.0, %v2821
      %v2823 = vpop.f32.mrb[0].mxu0
      %2824 = vmatprep.mubr.f32.mxu0 0.0
      %2825 = vmatmul.mubr.f32.gmra.mrb[0].mxu0 %v2324
      %v2826 = vpop.f32.mrb[0].mxu0
      %v2827 = vadd.f32 0.0, %v2826
      %v2828 = vpop.f32.mrb[0].mxu0
      %2829 = vmatprep.mubr.f32.mxu0 0.0
      %2830 = vmatmul.mubr.f32.gmra.mrb[0].mxu0 %v2326
      %v2831 = vpop.f32.mrb[0].mxu0
      %v2832 = vadd.f32 0.0, %v2831
      %v2833 = vpop.f32.mrb[0].mxu0
      %2834 = vmatprep.mubr.f32.mxu0 0.0
      %2835 = vmatmul.mubr.f32.gmra.mrb[0].mxu0 %v2328
      %v2836 = vpop.f32.mrb[0].mxu0
      %v2837 = vadd.f32 0.0, %v2836
      %v2838 = vpop.f32.mrb[0].mxu0
      %2839 = vmatprep.mubr.f32.mxu0 0.0
      %2840 = vmatmul.mubr.f32.gmra.mrb[0].mxu0 %v2330
      %v2841 = vpop.f32.mrb[0].mxu0
      %v2842 = vadd.f32 0.0, %v2841
      %v2843 = vpop.f32.mrb[0].mxu0
      %2844 = vmatprep.mubr.f32.mxu0 0.0
      %2845 = vmatmul.mubr.f32.gmra.mrb[0].mxu0 %v2332
      %v2846 = vpop.f32.mrb[0].mxu0
      %v2847 = vadd.f32 0.0, %v2846
      %v2848 = vpop.f32.mrb[0].mxu0
      %2849 = vmatprep.mubr.f32.mxu0 0.0
      %2850 = vmatmul.mubr.f32.gmra.mrb[0].mxu0 %v2334
      %v2851 = vpop.f32.mrb[0].mxu0
      %v2852 = vadd.f32 0.0, %v2851
      %v2853 = vpop.f32.mrb[0].mxu0
      %2854 = vmatprep.mubr.f32.mxu0 0.0
      %2855 = vmatmul.mubr.f32.gmra.mrb[0].mxu0 %v2336
      %v2856 = vpop.f32.mrb[0].mxu0
      %v2857 = vadd.f32 0.0, %v2856
      %v2858 = vpop.f32.mrb[0].mxu0
      %2859 = vmatprep.mubr.f32.mxu0 0.0
      %2860 = vmatmul.mubr.f32.gmra.mrb[0].mxu0 %v2338
      %v2861 = vpop.f32.mrb[0].mxu0
      %v2862 = vadd.f32 0.0, %v2861
      %v2863 = vpop.f32.mrb[0].mxu0
      %2864 = vmatprep.mubr.f32.mxu0 0.0
      %2865 = vmatmul.mubr.f32.gmra.mrb[0].mxu0 %v2340
      %v2866 = vpop.f32.mrb[0].mxu0
      %v2867 = vadd.f32 0.0, %v2866
      %v2868 = vpop.f32.mrb[0].mxu0
      %2869 = vmatprep.mubr.f32.mxu0 0.0
      %2870 = vmatmul.mubr.f32.gmra.mrb[0].mxu0 %v2342
      %v2871 = vpop.f32.mrb[0].mxu0
      %v2872 = vadd.f32 0.0, %v2871
      %v2873 = vpop.f32.mrb[0].mxu0
      %2874 = vmatprep.mubr.f32.mxu0 0.0
      %2875 = vmatmul.mubr.f32.gmra.mrb[0].mxu0 %v2344
      %v2876 = vpop.f32.mrb[0].mxu0
      %v2877 = vadd.f32 0.0, %v2876
      %v2878 = vpop.f32.mrb[0].mxu0
      %2879 = vmatprep.mubr.f32.mxu0 0.0
      %2880 = vmatmul.mubr.f32.gmra.mrb[0].mxu0 %v2346
      %v2881 = vpop.f32.mrb[0].mxu0
      %v2882 = vadd.f32 0.0, %v2881
      %v2883 = vpop.f32.mrb[0].mxu0
      %2884 = vmatprep.mubr.f32.mxu0 0.0
      %2885 = vmatmul.mubr.f32.gmra.mrb[0].mxu0 %v2348
      %v2886 = vpop.f32.mrb[0].mxu0
      %v2887 = vadd.f32 0.0, %v2886
      %v2888 = vpop.f32.mrb[0].mxu0
      %2889 = vmatprep.mubr.f32.mxu0 0.0
      %2890 = vmatmul.mubr.f32.gmra.mrb[0].mxu0 %v2350
      %v2891 = vpop.f32.mrb[0].mxu0
      %v2892 = vadd.f32 0.0, %v2891
      %v2893 = vpop.f32.mrb[0].mxu0
      %2894 = vmatprep.mubr.f32.mxu0 0.0
      %2895 = vmatmul.mubr.f32.gmra.mrb[0].mxu0 %v2352
      %v2896 = vpop.f32.mrb[0].mxu0
      %v2897 = vadd.f32 0.0, %v2896
      %v2898 = vpop.f32.mrb[0].mxu0
      %2899 = vmatprep.mubr.f32.mxu0 0.0
      %2900 = vmatmul.mubr.f32.gmra.mrb[0].mxu0 %v2354
      %v2901 = vpop.f32.mrb[0].mxu0
      %v2902 = vadd.f32 0.0, %v2901
      %v2903 = vpop.f32.mrb[0].mxu0
      %2904 = vmatprep.mubr.f32.mxu0 0.0
      %2905 = vmatmul.mubr.f32.gmra.mrb[0].mxu0 %v2356
      %v2906 = vpop.f32.mrb[0].mxu0
      %v2907 = vadd.f32 0.0, %v2906
      %v2908 = vpop.f32.mrb[0].mxu0
      %2909 = vmatprep.mubr.f32.mxu0 0.0
      %2910 = vmatmul.mubr.f32.gmra.mrb[0].mxu0 %v2358
      %v2911 = vpop.f32.mrb[0].mxu0
      %v2912 = vadd.f32 0.0, %v2911
      %v2913 = vpop.f32.mrb[0].mxu0
      %2914 = vmatprep.mubr.f32.mxu0 0.0
      %2915 = vmatmul.mubr.f32.gmra.mrb[0].mxu0 %v2360
      %v2916 = vpop.f32.mrb[0].mxu0
      %v2917 = vadd.f32 0.0, %v2916
      %v2918 = vpop.f32.mrb[0].mxu0
      %2919 = vmatprep.mubr.f32.mxu0 0.0
      %2920 = vmatmul.mubr.f32.gmra.mrb[0].mxu0 %v2362
      %v2921 = vpop.f32.mrb[0].mxu0
      %v2922 = vadd.f32 0.0, %v2921
      %v2923 = vpop.f32.mrb[0].mxu0
      %2924 = vmatprep.mubr.f32.mxu0 0.0
      %2925 = vmatmul.mubr.f32.gmra.mrb[0].mxu0 %v2364
      %v2926 = vpop.f32.mrb[0].mxu0
      %v2927 = vadd.f32 0.0, %v2926
      %v2928 = vpop.f32.mrb[0].mxu0
      %2929 = vmatprep.mubr.f32.mxu0 0.0
      %2930 = vmatmul.mubr.f32.gmra.mrb[0].mxu0 %v2366
      %v2931 = vpop.f32.mrb[0].mxu0
      %v2932 = vadd.f32 0.0, %v2931
      %v2933 = vpop.f32.mrb[0].mxu0
      %2934 = vmatprep.mubr.f32.mxu0 0.0
      %2935 = vmatmul.mubr.f32.gmra.mrb[0].mxu0 %v2368
      %v2936 = vpop.f32.mrb[0].mxu0
      %v2937 = vadd.f32 0.0, %v2936
      %v2938 = vpop.f32.mrb[0].mxu0
      %2939 = vmatprep.mubr.f32.mxu0 0.0
      %2940 = vmatmul.mubr.f32.gmra.mrb[0].mxu0 %v2370
      %v2941 = vpop.f32.mrb[0].mxu0
      %v2942 = vadd.f32 0.0, %v2941
      %v2943 = vpop.f32.mrb[0].mxu0
      %2944 = vmatprep.mubr.f32.mxu0 0.0
      %2945 = vmatmul.mubr.f32.gmra.mrb[0].mxu0 %v2372
      %v2946 = vpop.f32.mrb[0].mxu0
      %v2947 = vadd.f32 0.0, %v2946
      %v2948 = vpop.f32.mrb[0].mxu0
      %2949 = vmatprep.mubr.f32.mxu0 0.0
      %2950 = vmatmul.mubr.f32.gmra.mrb[0].mxu0 %v2710
      %v2951 = vpop.f32.mrb[0].mxu0
      %v2952 = vadd.f32 0.0, %v2951
      %v2953 = vpop.f32.mrb[0].mxu0
      %2954 = vmatprep.mubr.f32.mxu0 0.0
      %2955 = vmatmul.mubr.f32.gmra.mrb[0].mxu0 %v2712
      %v2956 = vpop.f32.mrb[0].mxu0
      %v2957 = vadd.f32 0.0, %v2956
      %v2958 = vpop.f32.mrb[0].mxu0
      %2959 = vdwg.mxu0
      %v2960 = vadd.f32 %v2654, %v2782
      %v2961 = vadd.f32 %v2655, %v2787
      %v2962 = vadd.f32 %v2656, %v2792
      %v2963 = vadd.f32 %v2657, %v2797
      %v2964 = vadd.f32 %v2658, %v2802
      %v2965 = vadd.f32 %v2659, %v2807
      %v2966 = vadd.f32 %v2660, %v2812
      %v2967 = vadd.f32 %v2661, %v2817
      %v2968 = vadd.f32 %v2662, %v2822
      %v2969 = vadd.f32 %v2663, %v2827
      %v2970 = vadd.f32 %v2664, %v2832
      %v2971 = vadd.f32 %v2665, %v2837
      %v2972 = vadd.f32 %v2666, %v2842
      %v2973 = vadd.f32 %v2667, %v2847
      %v2974 = vadd.f32 %v2668, %v2852
      %v2975 = vadd.f32 %v2669, %v2857
      %v2976 = vadd.f32 %v2670, %v2862
      %v2977 = vadd.f32 %v2671, %v2867
      %v2978 = vadd.f32 %v2672, %v2872
      %v2979 = vadd.f32 %v2673, %v2877
      %v2980 = vadd.f32 %v2674, %v2882
      %v2981 = vadd.f32 %v2675, %v2887
      %v2982 = vadd.f32 %v2676, %v2892
      %v2983 = vadd.f32 %v2677, %v2897
      %v2984 = vadd.f32 %v2678, %v2902
      %v2985 = vadd.f32 %v2679, %v2907
      %v2986 = vadd.f32 %v2680, %v2912
      %v2987 = vadd.f32 %v2681, %v2917
      %v2988 = vadd.f32 %v2682, %v2922
      %v2989 = vadd.f32 %v2683, %v2927
      %v2990 = vadd.f32 %v2684, %v2932
      %v2991 = vadd.f32 %v2685, %v2937
      %v2992 = vadd.f32 %v2686, %v2942
      %v2993 = vadd.f32 %v2687, %v2947
      %v2994 = vadd.f32 %v2688, %v2952
      %v2995 = vadd.f32 %v2689, %v2957
      %s2996 = scalar_lea.vmem %s1, 896
      %v2997 = vld [vmem:[%s2996] sm:$0xff]
      %v2998 = vld [vmem:[%s2996 + $0x8] sm:$0xff]
      %v2999 = vld [vmem:[%s2996 + $0x10] sm:$0xff]
      %v3000 = vld [vmem:[%s2996 + $0x18] sm:$0xff]
      %v3001 = vld [vmem:[%s2996 + $0x20] sm:$0xff]
      %v3002 = vld [vmem:[%s2996 + $0x28] sm:$0xff]
      %v3003 = vld [vmem:[%s2996 + $0x30] sm:$0xff]
      %v3004 = vld [vmem:[%s2996 + $0x38] sm:$0xff]
      %v3005 = vld [vmem:[%s2996 + $0x40] sm:$0xff]
      %v3006 = vld [vmem:[%s2996 + $0x48] sm:$0xff]
      %v3007 = vld [vmem:[%s2996 + $0x50] sm:$0xff]
      %v3008 = vld [vmem:[%s2996 + $0x58] sm:$0xff]
      %v3009 = vld [vmem:[%s2996 + $0x60] sm:$0xff]
      %v3010 = vld [vmem:[%s2996 + $0x68] sm:$0xff]
      %v3011 = vld [vmem:[%s2996 + $0x70] sm:$0xff]
      %v3012 = vld [vmem:[%s2996 + $0x78] sm:$0xff]
      %vm3013 = vcmask 1042432
      %v3014 = vrot.slane %v453, 5
      %v3015 = vrot.slane %v454, 5
      %v3016 = vsel %vm3013, %v3014, %v3015
      %v3017 = vrot.slane %v455, 5
      %v3018 = vsel %vm3013, %v3015, %v3017
      %v3019 = vrot.slane %v456, 5
      %v3020 = vsel %vm3013, %v3017, %v3019
      %v3021 = vrot.slane %v457, 5
      %v3022 = vsel %vm3013, %v3019, %v3021
      %v3023 = vrot.slane %v458, 5
      %v3024 = vsel %vm3013, %v3021, %v3023
      %v3025 = vrot.slane %v459, 5
      %v3026 = vsel %vm3013, %v3023, %v3025
      %v3027 = vrot.slane %v460, 5
      %v3028 = vsel %vm3013, %v3025, %v3027
      %v3029 = vrot.slane %v461, 5
      %v3030 = vsel %vm3013, %v3027, %v3029
      %v3031 = vrot.slane %v462, 5
      %v3032 = vsel %vm3013, %v3029, %v3031
      %v3033 = vrot.slane %v463, 5
      %v3034 = vsel %vm3013, %v3031, %v3033
      %v3035 = vrot.slane %v464, 5
      %v3036 = vsel %vm3013, %v3033, %v3035
      %v3037 = vrot.slane %v465, 5
      %v3038 = vsel %vm3013, %v3035, %v3037
      %v3039 = vrot.slane %v466, 5
      %v3040 = vsel %vm3013, %v3037, %v3039
      %v3041 = vrot.slane %v467, 5
      %v3042 = vsel %vm3013, %v3039, %v3041
      %v3043 = vrot.slane %v468, 5
      %v3044 = vsel %vm3013, %v3041, %v3043
      %v3045 = vrot.slane %v469, 5
      %v3046 = vsel %vm3013, %v3043, %v3045
      %v3047 = vrot.slane %v470, 5
      %v3048 = vsel %vm3013, %v3045, %v3047
      %v3049 = vrot.slane %v471, 5
      %v3050 = vsel %vm3013, %v3047, %v3049
      %v3051 = vrot.slane %v472, 5
      %v3052 = vsel %vm3013, %v3049, %v3051
      %v3053 = vrot.slane %v473, 5
      %v3054 = vsel %vm3013, %v3051, %v3053
      %v3055 = vrot.slane %v474, 5
      %v3056 = vsel %vm3013, %v3053, %v3055
      %v3057 = vrot.slane %v475, 5
      %v3058 = vsel %vm3013, %v3055, %v3057
      %v3059 = vrot.slane %v476, 5
      %v3060 = vsel %vm3013, %v3057, %v3059
      %v3061 = vrot.slane %v477, 5
      %v3062 = vsel %vm3013, %v3059, %v3061
      %v3063 = vrot.slane %v478, 5
      %v3064 = vsel %vm3013, %v3061, %v3063
      %v3065 = vrot.slane %v479, 5
      %v3066 = vsel %vm3013, %v3063, %v3065
      %v3067 = vrot.slane %v480, 5
      %v3068 = vsel %vm3013, %v3065, %v3067
      %v3069 = vrot.slane %v481, 5
      %v3070 = vsel %vm3013, %v3067, %v3069
      %v3071 = vrot.slane %v482, 5
      %v3072 = vsel %vm3013, %v3069, %v3071
      %v3073 = vrot.slane %v483, 5
      %v3074 = vsel %vm3013, %v3071, %v3073
      %v3075 = vrot.slane %v484, 5
      %v3076 = vsel %vm3013, %v3073, %v3075
      %v3077 = vrot.slane %v485, 5
      %v3078 = vsel %vm3013, %v3075, %v3077
      %v3079 = vrot.slane %v486, 5
      %v3080 = vsel %vm3013, %v3077, %v3079
      %v3081 = vrot.slane %v487, 5
      %v3082 = vsel %vm3013, %v3079, %v3081
      %v3083 = vrot.slane %v488, 5
      %v3084 = vsel %vm3013, %v3081, %v3083
      %v3085 = vrot.slane %v489, 5
      %v3086 = vsel %vm3013, %v3083, %v3085
      %3123 = vmatprep.subr.mxu0 0.0
      %3124 = vmatpush1.msra.mxu0 %v2997
      %3125 = vmatprep.subr.mxu0 0.0
      %3126 = vmatpush1.msra.mxu0 %v2998
      %3127 = vmatprep.subr.mxu0 0.0
      %3128 = vmatpush1.msra.mxu0 %v2999
      %3129 = vmatprep.subr.mxu0 0.0
      %3130 = vmatpush1.msra.mxu0 %v3000
      %3131 = vmatprep.subr.mxu0 0.0
      %3132 = vmatpush1.msra.mxu0 %v3001
      %3133 = vmatprep.subr.mxu0 0.0
      %3134 = vmatpush1.msra.mxu0 %v3002
      %3135 = vmatprep.subr.mxu0 0.0
      %3136 = vmatpush1.msra.mxu0 %v3003
      %3137 = vmatprep.subr.mxu0 0.0
      %3138 = vmatpush1.msra.mxu0 %v3004
      %3139 = vmatprep.subr.mxu0 0.0
      %3140 = vmatpush1.msra.mxu0 %v3005
      %3141 = vmatprep.subr.mxu0 0.0
      %3142 = vmatpush1.msra.mxu0 %v3006
      %3143 = vmatprep.subr.mxu0 0.0
      %3144 = vmatpush1.msra.mxu0 %v3007
      %3145 = vmatprep.subr.mxu0 0.0
      %3146 = vmatpush1.msra.mxu0 %v3008
      %3147 = vmatprep.subr.mxu0 0.0
      %3148 = vmatpush1.msra.mxu0 %v3009
      %3149 = vmatprep.subr.mxu0 0.0
      %3150 = vmatpush1.msra.mxu0 %v3010
      %3151 = vmatprep.subr.mxu0 0.0
      %3152 = vmatpush1.msra.mxu0 %v3011
      %3153 = vmatprep.subr.mxu0 0.0
      %3154 = vmatpush1.msra.mxu0 %v3012
      %3155 = vmatprep.subr.mxu0 0.0
      %3156 = vmatpush1.msra.mxu0 0.0
      %3157 = vmatprep.subr.mxu0 0.0
      %3158 = vmatpush1.msra.mxu0 0.0
      %3159 = vmatprep.subr.mxu0 0.0
      %3160 = vmatpush1.msra.mxu0 0.0
      %3161 = vmatprep.subr.mxu0 0.0
      %3162 = vmatpush1.msra.mxu0 0.0
      %3163 = vmatprep.subr.mxu0 0.0
      %3164 = vmatpush1.msra.mxu0 0.0
      %3165 = vmatprep.subr.mxu0 0.0
      %3166 = vmatpush1.msra.mxu0 0.0
      %3167 = vmatprep.subr.mxu0 0.0
      %3168 = vmatpush1.msra.mxu0 0.0
      %3169 = vmatprep.subr.mxu0 0.0
      %3170 = vmatpush1.msra.mxu0 0.0
      %3171 = vmatprep.subr.mxu0 0.0
      %3172 = vmatpush1.msra.mxu0 0.0
      %3173 = vmatprep.subr.mxu0 0.0
      %3174 = vmatpush1.msra.mxu0 0.0
      %3175 = vmatprep.subr.mxu0 0.0
      %3176 = vmatpush1.msra.mxu0 0.0
      %3177 = vmatprep.subr.mxu0 0.0
      %3178 = vmatpush1.msra.mxu0 0.0
      %3179 = vmatprep.subr.mxu0 0.0
      %3180 = vmatpush1.msra.mxu0 0.0
      %3181 = vmatprep.subr.mxu0 0.0
      %3182 = vmatpush1.msra.mxu0 0.0
      %3183 = vmatprep.subr.mxu0 0.0
      %3184 = vmatpush1.msra.mxu0 0.0
      %3185 = vmatprep.subr.mxu0 0.0
      %3186 = vmatpush1.msra.mxu0 0.0
      %3187 = vmatprep.mubr.f32.mxu0 0.0
      %3188 = vmatmul.mubr.f32.gmra.mrb[0].mxu0 %v3016
      %v3189 = vpop.f32.mrb[0].mxu0
      %v3190 = vadd.f32 0.0, %v3189
      %v3191 = vpop.f32.mrb[0].mxu0
      %3192 = vmatprep.mubr.f32.mxu0 0.0
      %3193 = vmatmul.mubr.f32.gmra.mrb[0].mxu0 %v3018
      %v3194 = vpop.f32.mrb[0].mxu0
      %v3195 = vadd.f32 0.0, %v3194
      %v3196 = vpop.f32.mrb[0].mxu0
      %3197 = vmatprep.mubr.f32.mxu0 0.0
      %3198 = vmatmul.mubr.f32.gmra.mrb[0].mxu0 %v3020
      %v3199 = vpop.f32.mrb[0].mxu0
      %v3200 = vadd.f32 0.0, %v3199
      %v3201 = vpop.f32.mrb[0].mxu0
      %3202 = vmatprep.mubr.f32.mxu0 0.0
      %3203 = vmatmul.mubr.f32.gmra.mrb[0].mxu0 %v3022
      %v3204 = vpop.f32.mrb[0].mxu0
      %v3205 = vadd.f32 0.0, %v3204
      %v3206 = vpop.f32.mrb[0].mxu0
      %3207 = vmatprep.mubr.f32.mxu0 0.0
      %3208 = vmatmul.mubr.f32.gmra.mrb[0].mxu0 %v3024
      %v3209 = vpop.f32.mrb[0].mxu0
      %v3210 = vadd.f32 0.0, %v3209
      %v3211 = vpop.f32.mrb[0].mxu0
      %3212 = vmatprep.mubr.f32.mxu0 0.0
      %3213 = vmatmul.mubr.f32.gmra.mrb[0].mxu0 %v3026
      %v3214 = vpop.f32.mrb[0].mxu0
      %v3215 = vadd.f32 0.0, %v3214
      %v3216 = vpop.f32.mrb[0].mxu0
      %3217 = vmatprep.mubr.f32.mxu0 0.0
      %3218 = vmatmul.mubr.f32.gmra.mrb[0].mxu0 %v3028
      %v3219 = vpop.f32.mrb[0].mxu0
      %v3220 = vadd.f32 0.0, %v3219
      %v3221 = vpop.f32.mrb[0].mxu0
      %3222 = vmatprep.mubr.f32.mxu0 0.0
      %3223 = vmatmul.mubr.f32.gmra.mrb[0].mxu0 %v3030
      %v3224 = vpop.f32.mrb[0].mxu0
      %v3225 = vadd.f32 0.0, %v3224
      %v3226 = vpop.f32.mrb[0].mxu0
      %3227 = vmatprep.mubr.f32.mxu0 0.0
      %3228 = vmatmul.mubr.f32.gmra.mrb[0].mxu0 %v3032
      %v3229 = vpop.f32.mrb[0].mxu0
      %v3230 = vadd.f32 0.0, %v3229
      %v3231 = vpop.f32.mrb[0].mxu0
      %3232 = vmatprep.mubr.f32.mxu0 0.0
      %3233 = vmatmul.mubr.f32.gmra.mrb[0].mxu0 %v3034
      %v3234 = vpop.f32.mrb[0].mxu0
      %v3235 = vadd.f32 0.0, %v3234
      %v3236 = vpop.f32.mrb[0].mxu0
      %3237 = vmatprep.mubr.f32.mxu0 0.0
      %3238 = vmatmul.mubr.f32.gmra.mrb[0].mxu0 %v3036
      %v3239 = vpop.f32.mrb[0].mxu0
      %v3240 = vadd.f32 0.0, %v3239
      %v3241 = vpop.f32.mrb[0].mxu0
      %3242 = vmatprep.mubr.f32.mxu0 0.0
      %3243 = vmatmul.mubr.f32.gmra.mrb[0].mxu0 %v3038
      %v3244 = vpop.f32.mrb[0].mxu0
      %v3245 = vadd.f32 0.0, %v3244
      %v3246 = vpop.f32.mrb[0].mxu0
      %3247 = vmatprep.mubr.f32.mxu0 0.0
      %3248 = vmatmul.mubr.f32.gmra.mrb[0].mxu0 %v3040
      %v3249 = vpop.f32.mrb[0].mxu0
      %v3250 = vadd.f32 0.0, %v3249
      %v3251 = vpop.f32.mrb[0].mxu0
      %3252 = vmatprep.mubr.f32.mxu0 0.0
      %3253 = vmatmul.mubr.f32.gmra.mrb[0].mxu0 %v3042
      %v3254 = vpop.f32.mrb[0].mxu0
      %v3255 = vadd.f32 0.0, %v3254
      %v3256 = vpop.f32.mrb[0].mxu0
      %3257 = vmatprep.mubr.f32.mxu0 0.0
      %3258 = vmatmul.mubr.f32.gmra.mrb[0].mxu0 %v3044
      %v3259 = vpop.f32.mrb[0].mxu0
      %v3260 = vadd.f32 0.0, %v3259
      %v3261 = vpop.f32.mrb[0].mxu0
      %3262 = vmatprep.mubr.f32.mxu0 0.0
      %3263 = vmatmul.mubr.f32.gmra.mrb[0].mxu0 %v3046
      %v3264 = vpop.f32.mrb[0].mxu0
      %v3265 = vadd.f32 0.0, %v3264
      %v3266 = vpop.f32.mrb[0].mxu0
      %3267 = vmatprep.mubr.f32.mxu0 0.0
      %3268 = vmatmul.mubr.f32.gmra.mrb[0].mxu0 %v3048
      %v3269 = vpop.f32.mrb[0].mxu0
      %v3270 = vadd.f32 0.0, %v3269
      %v3271 = vpop.f32.mrb[0].mxu0
      %3272 = vmatprep.mubr.f32.mxu0 0.0
      %3273 = vmatmul.mubr.f32.gmra.mrb[0].mxu0 %v3050
      %v3274 = vpop.f32.mrb[0].mxu0
      %v3275 = vadd.f32 0.0, %v3274
      %v3276 = vpop.f32.mrb[0].mxu0
      %3277 = vmatprep.mubr.f32.mxu0 0.0
      %3278 = vmatmul.mubr.f32.gmra.mrb[0].mxu0 %v3052
      %v3279 = vpop.f32.mrb[0].mxu0
      %v3280 = vadd.f32 0.0, %v3279
      %v3281 = vpop.f32.mrb[0].mxu0
      %3282 = vmatprep.mubr.f32.mxu0 0.0
      %3283 = vmatmul.mubr.f32.gmra.mrb[0].mxu0 %v3054
      %v3284 = vpop.f32.mrb[0].mxu0
      %v3285 = vadd.f32 0.0, %v3284
      %v3286 = vpop.f32.mrb[0].mxu0
      %3287 = vmatprep.mubr.f32.mxu0 0.0
      %3288 = vmatmul.mubr.f32.gmra.mrb[0].mxu0 %v3056
      %v3289 = vpop.f32.mrb[0].mxu0
      %v3290 = vadd.f32 0.0, %v3289
      %v3291 = vpop.f32.mrb[0].mxu0
      %3292 = vmatprep.mubr.f32.mxu0 0.0
      %3293 = vmatmul.mubr.f32.gmra.mrb[0].mxu0 %v3058
      %v3294 = vpop.f32.mrb[0].mxu0
      %v3295 = vadd.f32 0.0, %v3294
      %v3296 = vpop.f32.mrb[0].mxu0
      %3297 = vmatprep.mubr.f32.mxu0 0.0
      %3298 = vmatmul.mubr.f32.gmra.mrb[0].mxu0 %v3060
      %v3299 = vpop.f32.mrb[0].mxu0
      %v3300 = vadd.f32 0.0, %v3299
      %v3301 = vpop.f32.mrb[0].mxu0
      %3302 = vmatprep.mubr.f32.mxu0 0.0
      %3303 = vmatmul.mubr.f32.gmra.mrb[0].mxu0 %v3062
      %v3304 = vpop.f32.mrb[0].mxu0
      %v3305 = vadd.f32 0.0, %v3304
      %v3306 = vpop.f32.mrb[0].mxu0
      %3307 = vmatprep.mubr.f32.mxu0 0.0
      %3308 = vmatmul.mubr.f32.gmra.mrb[0].mxu0 %v3064
      %v3309 = vpop.f32.mrb[0].mxu0
      %v3310 = vadd.f32 0.0, %v3309
      %v3311 = vpop.f32.mrb[0].mxu0
      %3312 = vmatprep.mubr.f32.mxu0 0.0
      %3313 = vmatmul.mubr.f32.gmra.mrb[0].mxu0 %v3066
      %v3314 = vpop.f32.mrb[0].mxu0
      %v3315 = vadd.f32 0.0, %v3314
      %v3316 = vpop.f32.mrb[0].mxu0
      %3317 = vmatprep.mubr.f32.mxu0 0.0
      %3318 = vmatmul.mubr.f32.gmra.mrb[0].mxu0 %v3068
      %v3319 = vpop.f32.mrb[0].mxu0
      %v3320 = vadd.f32 0.0, %v3319
      %v3321 = vpop.f32.mrb[0].mxu0
      %3322 = vmatprep.mubr.f32.mxu0 0.0
      %3323 = vmatmul.mubr.f32.gmra.mrb[0].mxu0 %v3070
      %v3324 = vpop.f32.mrb[0].mxu0
      %v3325 = vadd.f32 0.0, %v3324
      %v3326 = vpop.f32.mrb[0].mxu0
      %3327 = vmatprep.mubr.f32.mxu0 0.0
      %3328 = vmatmul.mubr.f32.gmra.mrb[0].mxu0 %v3072
      %v3329 = vpop.f32.mrb[0].mxu0
      %v3330 = vadd.f32 0.0, %v3329
      %v3331 = vpop.f32.mrb[0].mxu0
      %3332 = vmatprep.mubr.f32.mxu0 0.0
      %3333 = vmatmul.mubr.f32.gmra.mrb[0].mxu0 %v3074
      %v3334 = vpop.f32.mrb[0].mxu0
      %v3335 = vadd.f32 0.0, %v3334
      %v3336 = vpop.f32.mrb[0].mxu0
      %3337 = vmatprep.mubr.f32.mxu0 0.0
      %3338 = vmatmul.mubr.f32.gmra.mrb[0].mxu0 %v3076
      %v3339 = vpop.f32.mrb[0].mxu0
      %v3340 = vadd.f32 0.0, %v3339
      %v3341 = vpop.f32.mrb[0].mxu0
      %3342 = vmatprep.mubr.f32.mxu0 0.0
      %3343 = vmatmul.mubr.f32.gmra.mrb[0].mxu0 %v3078
      %v3344 = vpop.f32.mrb[0].mxu0
      %v3345 = vadd.f32 0.0, %v3344
      %v3346 = vpop.f32.mrb[0].mxu0
      %3347 = vmatprep.mubr.f32.mxu0 0.0
      %3348 = vmatmul.mubr.f32.gmra.mrb[0].mxu0 %v3080
      %v3349 = vpop.f32.mrb[0].mxu0
      %v3350 = vadd.f32 0.0, %v3349
      %v3351 = vpop.f32.mrb[0].mxu0
      %3352 = vmatprep.mubr.f32.mxu0 0.0
      %3353 = vmatmul.mubr.f32.gmra.mrb[0].mxu0 %v3082
      %v3354 = vpop.f32.mrb[0].mxu0
      %v3355 = vadd.f32 0.0, %v3354
      %v3356 = vpop.f32.mrb[0].mxu0
      %3357 = vmatprep.mubr.f32.mxu0 0.0
      %3358 = vmatmul.mubr.f32.gmra.mrb[0].mxu0 %v3084
      %v3359 = vpop.f32.mrb[0].mxu0
      %v3360 = vadd.f32 0.0, %v3359
      %v3361 = vpop.f32.mrb[0].mxu0
      %3362 = vmatprep.mubr.f32.mxu0 0.0
      %3363 = vmatmul.mubr.f32.gmra.mrb[0].mxu0 %v3086
      %v3364 = vpop.f32.mrb[0].mxu0
      %v3365 = vadd.f32 0.0, %v3364
      %v3366 = vpop.f32.mrb[0].mxu0
      %3367 = vdwg.mxu0
      %v3368 = vadd.f32 %v2960, %v3190
      %v3369 = vadd.f32 %v2961, %v3195
      %v3370 = vadd.f32 %v2962, %v3200
      %v3371 = vadd.f32 %v2963, %v3205
      %v3372 = vadd.f32 %v2964, %v3210
      %v3373 = vadd.f32 %v2965, %v3215
      %v3374 = vadd.f32 %v2966, %v3220
      %v3375 = vadd.f32 %v2967, %v3225
      %v3376 = vadd.f32 %v2968, %v3230
      %v3377 = vadd.f32 %v2969, %v3235
      %v3378 = vadd.f32 %v2970, %v3240
      %v3379 = vadd.f32 %v2971, %v3245
      %v3380 = vadd.f32 %v2972, %v3250
      %v3381 = vadd.f32 %v2973, %v3255
      %v3382 = vadd.f32 %v2974, %v3260
      %v3383 = vadd.f32 %v2975, %v3265
      %v3384 = vadd.f32 %v2976, %v3270
      %v3385 = vadd.f32 %v2977, %v3275
      %v3386 = vadd.f32 %v2978, %v3280
      %v3387 = vadd.f32 %v2979, %v3285
      %v3388 = vadd.f32 %v2980, %v3290
      %v3389 = vadd.f32 %v2981, %v3295
      %v3390 = vadd.f32 %v2982, %v3300
      %v3391 = vadd.f32 %v2983, %v3305
      %v3392 = vadd.f32 %v2984, %v3310
      %v3393 = vadd.f32 %v2985, %v3315
      %v3394 = vadd.f32 %v2986, %v3320
      %v3395 = vadd.f32 %v2987, %v3325
      %v3396 = vadd.f32 %v2988, %v3330
      %v3397 = vadd.f32 %v2989, %v3335
      %v3398 = vadd.f32 %v2990, %v3340
      %v3399 = vadd.f32 %v2991, %v3345
      %v3400 = vadd.f32 %v2992, %v3350
      %v3401 = vadd.f32 %v2993, %v3355
      %v3402 = vadd.f32 %v2994, %v3360
      %v3403 = vadd.f32 %v2995, %v3365
      %s3404 = scalar_lea.vmem %s1, 1024
      %v3405 = vld [vmem:[%s3404] sm:$0xff]
      %v3406 = vld [vmem:[%s3404 + $0x8] sm:$0xff]
      %v3407 = vld [vmem:[%s3404 + $0x10] sm:$0xff]
      %v3408 = vld [vmem:[%s3404 + $0x18] sm:$0xff]
      %v3409 = vld [vmem:[%s3404 + $0x20] sm:$0xff]
      %v3410 = vld [vmem:[%s3404 + $0x28] sm:$0xff]
      %v3411 = vld [vmem:[%s3404 + $0x30] sm:$0xff]
      %v3412 = vld [vmem:[%s3404 + $0x38] sm:$0xff]
      %v3413 = vld [vmem:[%s3404 + $0x40] sm:$0xff]
      %v3414 = vld [vmem:[%s3404 + $0x48] sm:$0xff]
      %v3415 = vld [vmem:[%s3404 + $0x50] sm:$0xff]
      %v3416 = vld [vmem:[%s3404 + $0x58] sm:$0xff]
      %v3417 = vld [vmem:[%s3404 + $0x60] sm:$0xff]
      %v3418 = vld [vmem:[%s3404 + $0x68] sm:$0xff]
      %v3419 = vld [vmem:[%s3404 + $0x70] sm:$0xff]
      %v3420 = vld [vmem:[%s3404 + $0x78] sm:$0xff]
      %vm3421 = vcmask 1041408
      %v3422 = vrot.slane %v453, 6
      %v3423 = vrot.slane %v454, 6
      %v3424 = vsel %vm3421, %v3422, %v3423
      %v3425 = vrot.slane %v455, 6
      %v3426 = vsel %vm3421, %v3423, %v3425
      %v3427 = vrot.slane %v456, 6
      %v3428 = vsel %vm3421, %v3425, %v3427
      %v3429 = vrot.slane %v457, 6
      %v3430 = vsel %vm3421, %v3427, %v3429
      %v3431 = vrot.slane %v458, 6
      %v3432 = vsel %vm3421, %v3429, %v3431
      %v3433 = vrot.slane %v459, 6
      %v3434 = vsel %vm3421, %v3431, %v3433
      %v3435 = vrot.slane %v460, 6
      %v3436 = vsel %vm3421, %v3433, %v3435
      %v3437 = vrot.slane %v461, 6
      %v3438 = vsel %vm3421, %v3435, %v3437
      %v3439 = vrot.slane %v462, 6
      %v3440 = vsel %vm3421, %v3437, %v3439
      %v3441 = vrot.slane %v463, 6
      %v3442 = vsel %vm3421, %v3439, %v3441
      %v3443 = vrot.slane %v464, 6
      %v3444 = vsel %vm3421, %v3441, %v3443
      %v3445 = vrot.slane %v465, 6
      %v3446 = vsel %vm3421, %v3443, %v3445
      %v3447 = vrot.slane %v466, 6
      %v3448 = vsel %vm3421, %v3445, %v3447
      %v3449 = vrot.slane %v467, 6
      %v3450 = vsel %vm3421, %v3447, %v3449
      %v3451 = vrot.slane %v468, 6
      %v3452 = vsel %vm3421, %v3449, %v3451
      %v3453 = vrot.slane %v469, 6
      %v3454 = vsel %vm3421, %v3451, %v3453
      %v3455 = vrot.slane %v470, 6
      %v3456 = vsel %vm3421, %v3453, %v3455
      %v3457 = vrot.slane %v471, 6
      %v3458 = vsel %vm3421, %v3455, %v3457
      %v3459 = vrot.slane %v472, 6
      %v3460 = vsel %vm3421, %v3457, %v3459
      %v3461 = vrot.slane %v473, 6
      %v3462 = vsel %vm3421, %v3459, %v3461
      %v3463 = vrot.slane %v474, 6
      %v3464 = vsel %vm3421, %v3461, %v3463
      %v3465 = vrot.slane %v475, 6
      %v3466 = vsel %vm3421, %v3463, %v3465
      %v3467 = vrot.slane %v476, 6
      %v3468 = vsel %vm3421, %v3465, %v3467
      %v3469 = vrot.slane %v477, 6
      %v3470 = vsel %vm3421, %v3467, %v3469
      %v3471 = vrot.slane %v478, 6
      %v3472 = vsel %vm3421, %v3469, %v3471
      %v3473 = vrot.slane %v479, 6
      %v3474 = vsel %vm3421, %v3471, %v3473
      %v3475 = vrot.slane %v480, 6
      %v3476 = vsel %vm3421, %v3473, %v3475
      %v3477 = vrot.slane %v481, 6
      %v3478 = vsel %vm3421, %v3475, %v3477
      %v3479 = vrot.slane %v482, 6
      %v3480 = vsel %vm3421, %v3477, %v3479
      %v3481 = vrot.slane %v483, 6
      %v3482 = vsel %vm3421, %v3479, %v3481
      %v3483 = vrot.slane %v484, 6
      %v3484 = vsel %vm3421, %v3481, %v3483
      %v3485 = vrot.slane %v485, 6
      %v3486 = vsel %vm3421, %v3483, %v3485
      %v3487 = vrot.slane %v486, 6
      %v3488 = vsel %vm3421, %v3485, %v3487
      %v3489 = vrot.slane %v487, 6
      %v3490 = vsel %vm3421, %v3487, %v3489
      %v3491 = vrot.slane %v488, 6
      %v3492 = vsel %vm3421, %v3489, %v3491
      %v3493 = vrot.slane %v489, 6
      %v3494 = vsel %vm3421, %v3491, %v3493
      %3531 = vmatprep.subr.mxu0 0.0
      %3532 = vmatpush1.msra.mxu0 %v3405
      %3533 = vmatprep.subr.mxu0 0.0
      %3534 = vmatpush1.msra.mxu0 %v3406
      %3535 = vmatprep.subr.mxu0 0.0
      %3536 = vmatpush1.msra.mxu0 %v3407
      %3537 = vmatprep.subr.mxu0 0.0
      %3538 = vmatpush1.msra.mxu0 %v3408
      %3539 = vmatprep.subr.mxu0 0.0
      %3540 = vmatpush1.msra.mxu0 %v3409
      %3541 = vmatprep.subr.mxu0 0.0
      %3542 = vmatpush1.msra.mxu0 %v3410
      %3543 = vmatprep.subr.mxu0 0.0
      %3544 = vmatpush1.msra.mxu0 %v3411
      %3545 = vmatprep.subr.mxu0 0.0
      %3546 = vmatpush1.msra.mxu0 %v3412
      %3547 = vmatprep.subr.mxu0 0.0
      %3548 = vmatpush1.msra.mxu0 %v3413
      %3549 = vmatprep.subr.mxu0 0.0
      %3550 = vmatpush1.msra.mxu0 %v3414
      %3551 = vmatprep.subr.mxu0 0.0
      %3552 = vmatpush1.msra.mxu0 %v3415
      %3553 = vmatprep.subr.mxu0 0.0
      %3554 = vmatpush1.msra.mxu0 %v3416
      %3555 = vmatprep.subr.mxu0 0.0
      %3556 = vmatpush1.msra.mxu0 %v3417
      %3557 = vmatprep.subr.mxu0 0.0
      %3558 = vmatpush1.msra.mxu0 %v3418
      %3559 = vmatprep.subr.mxu0 0.0
      %3560 = vmatpush1.msra.mxu0 %v3419
      %3561 = vmatprep.subr.mxu0 0.0
      %3562 = vmatpush1.msra.mxu0 %v3420
      %3563 = vmatprep.subr.mxu0 0.0
      %3564 = vmatpush1.msra.mxu0 0.0
      %3565 = vmatprep.subr.mxu0 0.0
      %3566 = vmatpush1.msra.mxu0 0.0
      %3567 = vmatprep.subr.mxu0 0.0
      %3568 = vmatpush1.msra.mxu0 0.0
      %3569 = vmatprep.subr.mxu0 0.0
      %3570 = vmatpush1.msra.mxu0 0.0
      %3571 = vmatprep.subr.mxu0 0.0
      %3572 = vmatpush1.msra.mxu0 0.0
      %3573 = vmatprep.subr.mxu0 0.0
      %3574 = vmatpush1.msra.mxu0 0.0
      %3575 = vmatprep.subr.mxu0 0.0
      %3576 = vmatpush1.msra.mxu0 0.0
      %3577 = vmatprep.subr.mxu0 0.0
      %3578 = vmatpush1.msra.mxu0 0.0
      %3579 = vmatprep.subr.mxu0 0.0
      %3580 = vmatpush1.msra.mxu0 0.0
      %3581 = vmatprep.subr.mxu0 0.0
      %3582 = vmatpush1.msra.mxu0 0.0
      %3583 = vmatprep.subr.mxu0 0.0
      %3584 = vmatpush1.msra.mxu0 0.0
      %3585 = vmatprep.subr.mxu0 0.0
      %3586 = vmatpush1.msra.mxu0 0.0
      %3587 = vmatprep.subr.mxu0 0.0
      %3588 = vmatpush1.msra.mxu0 0.0
      %3589 = vmatprep.subr.mxu0 0.0
      %3590 = vmatpush1.msra.mxu0 0.0
      %3591 = vmatprep.subr.mxu0 0.0
      %3592 = vmatpush1.msra.mxu0 0.0
      %3593 = vmatprep.subr.mxu0 0.0
      %3594 = vmatpush1.msra.mxu0 0.0
      %3595 = vmatprep.mubr.f32.mxu0 0.0
      %3596 = vmatmul.mubr.f32.gmra.mrb[0].mxu0 %v3424
      %v3597 = vpop.f32.mrb[0].mxu0
      %v3598 = vadd.f32 0.0, %v3597
      %v3599 = vpop.f32.mrb[0].mxu0
      %3600 = vmatprep.mubr.f32.mxu0 0.0
      %3601 = vmatmul.mubr.f32.gmra.mrb[0].mxu0 %v3426
      %v3602 = vpop.f32.mrb[0].mxu0
      %v3603 = vadd.f32 0.0, %v3602
      %v3604 = vpop.f32.mrb[0].mxu0
      %3605 = vmatprep.mubr.f32.mxu0 0.0
      %3606 = vmatmul.mubr.f32.gmra.mrb[0].mxu0 %v3428
      %v3607 = vpop.f32.mrb[0].mxu0
      %v3608 = vadd.f32 0.0, %v3607
      %v3609 = vpop.f32.mrb[0].mxu0
      %3610 = vmatprep.mubr.f32.mxu0 0.0
      %3611 = vmatmul.mubr.f32.gmra.mrb[0].mxu0 %v3430
      %v3612 = vpop.f32.mrb[0].mxu0
      %v3613 = vadd.f32 0.0, %v3612
      %v3614 = vpop.f32.mrb[0].mxu0
      %3615 = vmatprep.mubr.f32.mxu0 0.0
      %3616 = vmatmul.mubr.f32.gmra.mrb[0].mxu0 %v3432
      %v3617 = vpop.f32.mrb[0].mxu0
      %v3618 = vadd.f32 0.0, %v3617
      %v3619 = vpop.f32.mrb[0].mxu0
      %3620 = vmatprep.mubr.f32.mxu0 0.0
      %3621 = vmatmul.mubr.f32.gmra.mrb[0].mxu0 %v3434
      %v3622 = vpop.f32.mrb[0].mxu0
      %v3623 = vadd.f32 0.0, %v3622
      %v3624 = vpop.f32.mrb[0].mxu0
      %3625 = vmatprep.mubr.f32.mxu0 0.0
      %3626 = vmatmul.mubr.f32.gmra.mrb[0].mxu0 %v3436
      %v3627 = vpop.f32.mrb[0].mxu0
      %v3628 = vadd.f32 0.0, %v3627
      %v3629 = vpop.f32.mrb[0].mxu0
      %3630 = vmatprep.mubr.f32.mxu0 0.0
      %3631 = vmatmul.mubr.f32.gmra.mrb[0].mxu0 %v3438
      %v3632 = vpop.f32.mrb[0].mxu0
      %v3633 = vadd.f32 0.0, %v3632
      %v3634 = vpop.f32.mrb[0].mxu0
      %3635 = vmatprep.mubr.f32.mxu0 0.0
      %3636 = vmatmul.mubr.f32.gmra.mrb[0].mxu0 %v3440
      %v3637 = vpop.f32.mrb[0].mxu0
      %v3638 = vadd.f32 0.0, %v3637
      %v3639 = vpop.f32.mrb[0].mxu0
      %3640 = vmatprep.mubr.f32.mxu0 0.0
      %3641 = vmatmul.mubr.f32.gmra.mrb[0].mxu0 %v3442
      %v3642 = vpop.f32.mrb[0].mxu0
      %v3643 = vadd.f32 0.0, %v3642
      %v3644 = vpop.f32.mrb[0].mxu0
      %3645 = vmatprep.mubr.f32.mxu0 0.0
      %3646 = vmatmul.mubr.f32.gmra.mrb[0].mxu0 %v3444
      %v3647 = vpop.f32.mrb[0].mxu0
      %v3648 = vadd.f32 0.0, %v3647
      %v3649 = vpop.f32.mrb[0].mxu0
      %3650 = vmatprep.mubr.f32.mxu0 0.0
      %3651 = vmatmul.mubr.f32.gmra.mrb[0].mxu0 %v3446
      %v3652 = vpop.f32.mrb[0].mxu0
      %v3653 = vadd.f32 0.0, %v3652
      %v3654 = vpop.f32.mrb[0].mxu0
      %3655 = vmatprep.mubr.f32.mxu0 0.0
      %3656 = vmatmul.mubr.f32.gmra.mrb[0].mxu0 %v3448
      %v3657 = vpop.f32.mrb[0].mxu0
      %v3658 = vadd.f32 0.0, %v3657
      %v3659 = vpop.f32.mrb[0].mxu0
      %3660 = vmatprep.mubr.f32.mxu0 0.0
      %3661 = vmatmul.mubr.f32.gmra.mrb[0].mxu0 %v3450
      %v3662 = vpop.f32.mrb[0].mxu0
      %v3663 = vadd.f32 0.0, %v3662
      %v3664 = vpop.f32.mrb[0].mxu0
      %3665 = vmatprep.mubr.f32.mxu0 0.0
      %3666 = vmatmul.mubr.f32.gmra.mrb[0].mxu0 %v3452
      %v3667 = vpop.f32.mrb[0].mxu0
      %v3668 = vadd.f32 0.0, %v3667
      %v3669 = vpop.f32.mrb[0].mxu0
      %3670 = vmatprep.mubr.f32.mxu0 0.0
      %3671 = vmatmul.mubr.f32.gmra.mrb[0].mxu0 %v3454
      %v3672 = vpop.f32.mrb[0].mxu0
      %v3673 = vadd.f32 0.0, %v3672
      %v3674 = vpop.f32.mrb[0].mxu0
      %3675 = vmatprep.mubr.f32.mxu0 0.0
      %3676 = vmatmul.mubr.f32.gmra.mrb[0].mxu0 %v3456
      %v3677 = vpop.f32.mrb[0].mxu0
      %v3678 = vadd.f32 0.0, %v3677
      %v3679 = vpop.f32.mrb[0].mxu0
      %3680 = vmatprep.mubr.f32.mxu0 0.0
      %3681 = vmatmul.mubr.f32.gmra.mrb[0].mxu0 %v3458
      %v3682 = vpop.f32.mrb[0].mxu0
      %v3683 = vadd.f32 0.0, %v3682
      %v3684 = vpop.f32.mrb[0].mxu0
      %3685 = vmatprep.mubr.f32.mxu0 0.0
      %3686 = vmatmul.mubr.f32.gmra.mrb[0].mxu0 %v3460
      %v3687 = vpop.f32.mrb[0].mxu0
      %v3688 = vadd.f32 0.0, %v3687
      %v3689 = vpop.f32.mrb[0].mxu0
      %3690 = vmatprep.mubr.f32.mxu0 0.0
      %3691 = vmatmul.mubr.f32.gmra.mrb[0].mxu0 %v3462
      %v3692 = vpop.f32.mrb[0].mxu0
      %v3693 = vadd.f32 0.0, %v3692
      %v3694 = vpop.f32.mrb[0].mxu0
      %3695 = vmatprep.mubr.f32.mxu0 0.0
      %3696 = vmatmul.mubr.f32.gmra.mrb[0].mxu0 %v3464
      %v3697 = vpop.f32.mrb[0].mxu0
      %v3698 = vadd.f32 0.0, %v3697
      %v3699 = vpop.f32.mrb[0].mxu0
      %3700 = vmatprep.mubr.f32.mxu0 0.0
      %3701 = vmatmul.mubr.f32.gmra.mrb[0].mxu0 %v3466
      %v3702 = vpop.f32.mrb[0].mxu0
      %v3703 = vadd.f32 0.0, %v3702
      %v3704 = vpop.f32.mrb[0].mxu0
      %3705 = vmatprep.mubr.f32.mxu0 0.0
      %3706 = vmatmul.mubr.f32.gmra.mrb[0].mxu0 %v3468
      %v3707 = vpop.f32.mrb[0].mxu0
      %v3708 = vadd.f32 0.0, %v3707
      %v3709 = vpop.f32.mrb[0].mxu0
      %3710 = vmatprep.mubr.f32.mxu0 0.0
      %3711 = vmatmul.mubr.f32.gmra.mrb[0].mxu0 %v3470
      %v3712 = vpop.f32.mrb[0].mxu0
      %v3713 = vadd.f32 0.0, %v3712
      %v3714 = vpop.f32.mrb[0].mxu0
      %3715 = vmatprep.mubr.f32.mxu0 0.0
      %3716 = vmatmul.mubr.f32.gmra.mrb[0].mxu0 %v3472
      %v3717 = vpop.f32.mrb[0].mxu0
      %v3718 = vadd.f32 0.0, %v3717
      %v3719 = vpop.f32.mrb[0].mxu0
      %3720 = vmatprep.mubr.f32.mxu0 0.0
      %3721 = vmatmul.mubr.f32.gmra.mrb[0].mxu0 %v3474
      %v3722 = vpop.f32.mrb[0].mxu0
      %v3723 = vadd.f32 0.0, %v3722
      %v3724 = vpop.f32.mrb[0].mxu0
      %3725 = vmatprep.mubr.f32.mxu0 0.0
      %3726 = vmatmul.mubr.f32.gmra.mrb[0].mxu0 %v3476
      %v3727 = vpop.f32.mrb[0].mxu0
      %v3728 = vadd.f32 0.0, %v3727
      %v3729 = vpop.f32.mrb[0].mxu0
      %3730 = vmatprep.mubr.f32.mxu0 0.0
      %3731 = vmatmul.mubr.f32.gmra.mrb[0].mxu0 %v3478
      %v3732 = vpop.f32.mrb[0].mxu0
      %v3733 = vadd.f32 0.0, %v3732
      %v3734 = vpop.f32.mrb[0].mxu0
      %3735 = vmatprep.mubr.f32.mxu0 0.0
      %3736 = vmatmul.mubr.f32.gmra.mrb[0].mxu0 %v3480
      %v3737 = vpop.f32.mrb[0].mxu0
      %v3738 = vadd.f32 0.0, %v3737
      %v3739 = vpop.f32.mrb[0].mxu0
      %3740 = vmatprep.mubr.f32.mxu0 0.0
      %3741 = vmatmul.mubr.f32.gmra.mrb[0].mxu0 %v3482
      %v3742 = vpop.f32.mrb[0].mxu0
      %v3743 = vadd.f32 0.0, %v3742
      %v3744 = vpop.f32.mrb[0].mxu0
      %3745 = vmatprep.mubr.f32.mxu0 0.0
      %3746 = vmatmul.mubr.f32.gmra.mrb[0].mxu0 %v3484
      %v3747 = vpop.f32.mrb[0].mxu0
      %v3748 = vadd.f32 0.0, %v3747
      %v3749 = vpop.f32.mrb[0].mxu0
      %3750 = vmatprep.mubr.f32.mxu0 0.0
      %3751 = vmatmul.mubr.f32.gmra.mrb[0].mxu0 %v3486
      %v3752 = vpop.f32.mrb[0].mxu0
      %v3753 = vadd.f32 0.0, %v3752
      %v3754 = vpop.f32.mrb[0].mxu0
      %3755 = vmatprep.mubr.f32.mxu0 0.0
      %3756 = vmatmul.mubr.f32.gmra.mrb[0].mxu0 %v3488
      %v3757 = vpop.f32.mrb[0].mxu0
      %v3758 = vadd.f32 0.0, %v3757
      %v3759 = vpop.f32.mrb[0].mxu0
      %3760 = vmatprep.mubr.f32.mxu0 0.0
      %3761 = vmatmul.mubr.f32.gmra.mrb[0].mxu0 %v3490
      %v3762 = vpop.f32.mrb[0].mxu0
      %v3763 = vadd.f32 0.0, %v3762
      %v3764 = vpop.f32.mrb[0].mxu0
      %3765 = vmatprep.mubr.f32.mxu0 0.0
      %3766 = vmatmul.mubr.f32.gmra.mrb[0].mxu0 %v3492
      %v3767 = vpop.f32.mrb[0].mxu0
      %v3768 = vadd.f32 0.0, %v3767
      %v3769 = vpop.f32.mrb[0].mxu0
      %3770 = vmatprep.mubr.f32.mxu0 0.0
      %3771 = vmatmul.mubr.f32.gmra.mrb[0].mxu0 %v3494
      %v3772 = vpop.f32.mrb[0].mxu0
      %v3773 = vadd.f32 0.0, %v3772
      %v3774 = vpop.f32.mrb[0].mxu0
      %3775 = vdwg.mxu0
      %v3776 = vadd.f32 %v3368, %v3598
      %v3777 = vadd.f32 %v3369, %v3603
      %v3778 = vadd.f32 %v3370, %v3608
      %v3779 = vadd.f32 %v3371, %v3613
      %v3780 = vadd.f32 %v3372, %v3618
      %v3781 = vadd.f32 %v3373, %v3623
      %v3782 = vadd.f32 %v3374, %v3628
      %v3783 = vadd.f32 %v3375, %v3633
      %v3784 = vadd.f32 %v3376, %v3638
      %v3785 = vadd.f32 %v3377, %v3643
      %v3786 = vadd.f32 %v3378, %v3648
      %v3787 = vadd.f32 %v3379, %v3653
      %v3788 = vadd.f32 %v3380, %v3658
      %v3789 = vadd.f32 %v3381, %v3663
      %v3790 = vadd.f32 %v3382, %v3668
      %v3791 = vadd.f32 %v3383, %v3673
      %v3792 = vadd.f32 %v3384, %v3678
      %v3793 = vadd.f32 %v3385, %v3683
      %v3794 = vadd.f32 %v3386, %v3688
      %v3795 = vadd.f32 %v3387, %v3693
      %v3796 = vadd.f32 %v3388, %v3698
      %v3797 = vadd.f32 %v3389, %v3703
      %v3798 = vadd.f32 %v3390, %v3708
      %v3799 = vadd.f32 %v3391, %v3713
      %v3800 = vadd.f32 %v3392, %v3718
      %v3801 = vadd.f32 %v3393, %v3723
      %v3802 = vadd.f32 %v3394, %v3728
      %v3803 = vadd.f32 %v3395, %v3733
      %v3804 = vadd.f32 %v3396, %v3738
      %v3805 = vadd.f32 %v3397, %v3743
      %v3806 = vadd.f32 %v3398, %v3748
      %v3807 = vadd.f32 %v3399, %v3753
      %v3808 = vadd.f32 %v3400, %v3758
      %v3809 = vadd.f32 %v3401, %v3763
      %v3810 = vadd.f32 %v3402, %v3768
      %v3811 = vadd.f32 %v3403, %v3773
      %3812 = vst [vmem:[%s435] sm:$0xff] %v3776
      %3813 = vst [vmem:[%s435 + $0x8] sm:$0xff] %v3777
      %3814 = vst [vmem:[%s435 + $0x10] sm:$0xff] %v3778
      %3815 = vst [vmem:[%s435 + $0x18] sm:$0xff] %v3779
      %3816 = vst [vmem:[%s435 + $0x20] sm:$0xff] %v3780
      %3817 = vst [vmem:[%s435 + $0x28] sm:$0xff] %v3781
      %3818 = vst [vmem:[%s435 + $0x30] sm:$0xff] %v3782
      %3819 = vst [vmem:[%s435 + $0x38] sm:$0xff] %v3783
      %3820 = vst [vmem:[%s435 + $0x40] sm:$0xff] %v3784
      %3821 = vst [vmem:[%s435 + $0x48] sm:$0xff] %v3785
      %3822 = vst [vmem:[%s435 + $0x50] sm:$0xff] %v3786
      %3823 = vst [vmem:[%s435 + $0x58] sm:$0xff] %v3787
      %3824 = vst [vmem:[%s435 + $0x60] sm:$0xff] %v3788
      %3825 = vst [vmem:[%s435 + $0x68] sm:$0xff] %v3789
      %3826 = vst [vmem:[%s435 + $0x70] sm:$0xff] %v3790
      %3827 = vst [vmem:[%s435 + $0x78] sm:$0xff] %v3791
      %3828 = vst [vmem:[%s435 + $0x80] sm:$0xff] %v3792
      %3829 = vst [vmem:[%s435 + $0x88] sm:$0xff] %v3793
      %3830 = vst [vmem:[%s435 + $0x90] sm:$0xff] %v3794
      %3831 = vst [vmem:[%s435 + $0x98] sm:$0xff] %v3795
      %3832 = vst [vmem:[%s435 + $0xa0] sm:$0xff] %v3796
      %3833 = vst [vmem:[%s435 + $0xa8] sm:$0xff] %v3797
      %3834 = vst [vmem:[%s435 + $0xb0] sm:$0xff] %v3798
      %3835 = vst [vmem:[%s435 + $0xb8] sm:$0xff] %v3799
      %3836 = vst [vmem:[%s435 + $0xc0] sm:$0xff] %v3800
      %3837 = vst [vmem:[%s435 + $0xc8] sm:$0xff] %v3801
      %3838 = vst [vmem:[%s435 + $0xd0] sm:$0xff] %v3802
      %3839 = vst [vmem:[%s435 + $0xd8] sm:$0xff] %v3803
      %3840 = vst [vmem:[%s435 + $0xe0] sm:$0xff] %v3804
      %3841 = vst [vmem:[%s435 + $0xe8] sm:$0xff] %v3805
      %3842 = vst [vmem:[%s435 + $0xf0] sm:$0xff] %v3806
      %3843 = vst [vmem:[%s435 + $0xf8] sm:$0xff] %v3807
      %3844 = vst [vmem:[%s435 + $0x100] sm:$0xff] %v3808
      %3845 = vst [vmem:[%s435 + $0x108] sm:$0xff] %v3809
      %3846 = vst [vmem:[%s435 + $0x110] sm:$0xff] %v3810
      %3847 = vst [vmem:[%s435 + $0x118] sm:$0xff] %v3811
      %v3848 = vld [vmem:[%s430] sm:$0xff]
      %v3849 = vld [vmem:[%s430 + $0x8] sm:$0xff]
      %v3850 = vld [vmem:[%s430 + $0x10] sm:$0xff]
      %v3851 = vld [vmem:[%s430 + $0x18] sm:$0xff]
      %v3852 = vld [vmem:[%s430 + $0x20] sm:$0xff]
      %v3853 = vld [vmem:[%s430 + $0x28] sm:$0xff]
      %v3854 = vld [vmem:[%s430 + $0x30] sm:$0xff]
      %v3855 = vld [vmem:[%s430 + $0x38] sm:$0xff]
      %v3856 = vld [vmem:[%s430 + $0x40] sm:$0xff]
      %v3857 = vld [vmem:[%s430 + $0x48] sm:$0xff]
      %v3858 = vld [vmem:[%s430 + $0x50] sm:$0xff]
      %v3859 = vld [vmem:[%s430 + $0x58] sm:$0xff]
      %v3860 = vld [vmem:[%s430 + $0x60] sm:$0xff]
      %v3861 = vld [vmem:[%s430 + $0x68] sm:$0xff]
      %v3862 = vld [vmem:[%s430 + $0x70] sm:$0xff]
      %v3863 = vld [vmem:[%s430 + $0x78] sm:$0xff]
      %v3864 = vld [vmem:[%s430 + $0x80] sm:$0xff]
      %v3865 = vld [vmem:[%s430 + $0x88] sm:$0xff]
      %v3866 = vld [vmem:[%s430 + $0x90] sm:$0xff]
      %v3867 = vld [vmem:[%s430 + $0x98] sm:$0xff]
      %v3868 = vld [vmem:[%s430 + $0xa0] sm:$0xff]
      %v3869 = vld [vmem:[%s430 + $0xa8] sm:$0xff]
      %v3870 = vld [vmem:[%s430 + $0xb0] sm:$0xff]
      %v3871 = vld [vmem:[%s430 + $0xb8] sm:$0xff]
      %v3872 = vld [vmem:[%s430 + $0xc0] sm:$0xff]
      %v3873 = vld [vmem:[%s430 + $0xc8] sm:$0xff]
      %v3874 = vld [vmem:[%s430 + $0xd0] sm:$0xff]
      %v3875 = vld [vmem:[%s430 + $0xd8] sm:$0xff]
      %v3876 = vld [vmem:[%s430 + $0xe0] sm:$0xff]
      %v3877 = vld [vmem:[%s430 + $0xe8] sm:$0xff]
      %v3878 = vld [vmem:[%s430 + $0xf0] sm:$0xff]
      %v3879 = vld [vmem:[%s430 + $0xf8] sm:$0xff]
      %v3880 = vld [vmem:[%s430 + $0x100] sm:$0xff]
      %v3881 = vld [vmem:[%s430 + $0x108] sm:$0xff]
      %v3882 = vld [vmem:[%s430 + $0x110] sm:$0xff]
      %v3883 = vld [vmem:[%s430 + $0x118] sm:$0xff]
      %v3884 = vld [vmem:[%s3] sm:$0xf]
      %vm3885 = vcmask 31744
      %v3887 = vsel %vm3885, %v3848, 0
      %v3890 = vsel %vm3885, %v3849, 0
      %v3893 = vsel %vm3885, %v3850, 0
      %v3896 = vsel %vm3885, %v3851, 0
      %v3899 = vsel %vm3885, %v3852, 0
      %v3902 = vsel %vm3885, %v3853, 0
      %v3905 = vsel %vm3885, %v3854, 0
      %v3908 = vsel %vm3885, %v3855, 0
      %v3911 = vsel %vm3885, %v3856, 0
      %v3914 = vsel %vm3885, %v3857, 0
      %v3917 = vsel %vm3885, %v3858, 0
      %v3920 = vsel %vm3885, %v3859, 0
      %v3923 = vsel %vm3885, %v3860, 0
      %v3926 = vsel %vm3885, %v3861, 0
      %v3929 = vsel %vm3885, %v3862, 0
      %v3932 = vsel %vm3885, %v3863, 0
      %v3935 = vsel %vm3885, %v3864, 0
      %v3938 = vsel %vm3885, %v3865, 0
      %v3941 = vsel %vm3885, %v3866, 0
      %v3944 = vsel %vm3885, %v3867, 0
      %v3947 = vsel %vm3885, %v3868, 0
      %v3950 = vsel %vm3885, %v3869, 0
      %v3953 = vsel %vm3885, %v3870, 0
      %v3956 = vsel %vm3885, %v3871, 0
      %v3959 = vsel %vm3885, %v3872, 0
      %v3962 = vsel %vm3885, %v3873, 0
      %v3965 = vsel %vm3885, %v3874, 0
      %v3968 = vsel %vm3885, %v3875, 0
      %v3971 = vsel %vm3885, %v3876, 0
      %v3974 = vsel %vm3885, %v3877, 0
      %v3977 = vsel %vm3885, %v3878, 0
      %v3980 = vsel %vm3885, %v3879, 0
      %v3983 = vsel %vm3885, %v3880, 0
      %v3986 = vsel %vm3885, %v3881, 0
      %v3989 = vsel %vm3885, %v3882, 0
      %v3992 = vsel %vm3885, %v3883, 0
      %v3995 = vsel %vm2299, %v3884, 0
      %3997 = vmatprep.subr.mxu0 0.0
      %3998 = vmatpush1.msra.mxu0 %v3995
      %3999 = vmatprep.subr.mxu0 0.0
      %4000 = vmatpush1.msra.mxu0 0.0
      %4001 = vmatprep.subr.mxu0 0.0
      %4002 = vmatpush1.msra.mxu0 0.0
      %4003 = vmatprep.subr.mxu0 0.0
      %4004 = vmatpush1.msra.mxu0 0.0
      %4005 = vmatprep.subr.mxu0 0.0
      %4006 = vmatpush1.msra.mxu0 0.0
      %4007 = vmatprep.subr.mxu0 0.0
      %4008 = vmatpush1.msra.mxu0 0.0
      %4009 = vmatprep.subr.mxu0 0.0
      %4010 = vmatpush1.msra.mxu0 0.0
      %4011 = vmatprep.subr.mxu0 0.0
      %4012 = vmatpush1.msra.mxu0 0.0
      %4013 = vmatprep.subr.mxu0 0.0
      %4014 = vmatpush1.msra.mxu0 0.0
      %4015 = vmatprep.subr.mxu0 0.0
      %4016 = vmatpush1.msra.mxu0 0.0
      %4017 = vmatprep.subr.mxu0 0.0
      %4018 = vmatpush1.msra.mxu0 0.0
      %4019 = vmatprep.subr.mxu0 0.0
      %4020 = vmatpush1.msra.mxu0 0.0
      %4021 = vmatprep.subr.mxu0 0.0
      %4022 = vmatpush1.msra.mxu0 0.0
      %4023 = vmatprep.subr.mxu0 0.0
      %4024 = vmatpush1.msra.mxu0 0.0
      %4025 = vmatprep.subr.mxu0 0.0
      %4026 = vmatpush1.msra.mxu0 0.0
      %4027 = vmatprep.subr.mxu0 0.0
      %4028 = vmatpush1.msra.mxu0 0.0
      %4029 = vmatprep.subr.mxu0 0.0
      %4030 = vmatpush1.msra.mxu0 0.0
      %4031 = vmatprep.subr.mxu0 0.0
      %4032 = vmatpush1.msra.mxu0 0.0
      %4033 = vmatprep.subr.mxu0 0.0
      %4034 = vmatpush1.msra.mxu0 0.0
      %4035 = vmatprep.subr.mxu0 0.0
      %4036 = vmatpush1.msra.mxu0 0.0
      %4037 = vmatprep.subr.mxu0 0.0
      %4038 = vmatpush1.msra.mxu0 0.0
      %4039 = vmatprep.subr.mxu0 0.0
      %4040 = vmatpush1.msra.mxu0 0.0
      %4041 = vmatprep.subr.mxu0 0.0
      %4042 = vmatpush1.msra.mxu0 0.0
      %4043 = vmatprep.subr.mxu0 0.0
      %4044 = vmatpush1.msra.mxu0 0.0
      %4045 = vmatprep.subr.mxu0 0.0
      %4046 = vmatpush1.msra.mxu0 0.0
      %4047 = vmatprep.subr.mxu0 0.0
      %4048 = vmatpush1.msra.mxu0 0.0
      %4049 = vmatprep.subr.mxu0 0.0
      %4050 = vmatpush1.msra.mxu0 0.0
      %4051 = vmatprep.subr.mxu0 0.0
      %4052 = vmatpush1.msra.mxu0 0.0
      %4053 = vmatprep.subr.mxu0 0.0
      %4054 = vmatpush1.msra.mxu0 0.0
      %4055 = vmatprep.subr.mxu0 0.0
      %4056 = vmatpush1.msra.mxu0 0.0
      %4057 = vmatprep.subr.mxu0 0.0
      %4058 = vmatpush1.msra.mxu0 0.0
      %4059 = vmatprep.subr.mxu0 0.0
      %4060 = vmatpush1.msra.mxu0 0.0
      %4061 = vmatprep.mubr.f32.mxu0 0.0
      %4062 = vmatmul.mubr.f32.gmra.mrb[0].mxu0 %v3887
      %v4063 = vpop.f32.mrb[0].mxu0
      %v4064 = vadd.f32 0.0, %v4063
      %v4065 = vpop.f32.mrb[0].mxu0
      %4066 = vmatprep.mubr.f32.mxu0 0.0
      %4067 = vmatmul.mubr.f32.gmra.mrb[0].mxu0 %v3890
      %v4068 = vpop.f32.mrb[0].mxu0
      %v4069 = vadd.f32 0.0, %v4068
      %v4070 = vpop.f32.mrb[0].mxu0
      %4071 = vmatprep.mubr.f32.mxu0 0.0
      %4072 = vmatmul.mubr.f32.gmra.mrb[0].mxu0 %v3893
      %v4073 = vpop.f32.mrb[0].mxu0
      %v4074 = vadd.f32 0.0, %v4073
      %v4075 = vpop.f32.mrb[0].mxu0
      %4076 = vmatprep.mubr.f32.mxu0 0.0
      %4077 = vmatmul.mubr.f32.gmra.mrb[0].mxu0 %v3896
      %v4078 = vpop.f32.mrb[0].mxu0
      %v4079 = vadd.f32 0.0, %v4078
      %v4080 = vpop.f32.mrb[0].mxu0
      %4081 = vmatprep.mubr.f32.mxu0 0.0
      %4082 = vmatmul.mubr.f32.gmra.mrb[0].mxu0 %v3899
      %v4083 = vpop.f32.mrb[0].mxu0
      %v4084 = vadd.f32 0.0, %v4083
      %v4085 = vpop.f32.mrb[0].mxu0
      %4086 = vmatprep.mubr.f32.mxu0 0.0
      %4087 = vmatmul.mubr.f32.gmra.mrb[0].mxu0 %v3902
      %v4088 = vpop.f32.mrb[0].mxu0
      %v4089 = vadd.f32 0.0, %v4088
      %v4090 = vpop.f32.mrb[0].mxu0
      %4091 = vmatprep.mubr.f32.mxu0 0.0
      %4092 = vmatmul.mubr.f32.gmra.mrb[0].mxu0 %v3905
      %v4093 = vpop.f32.mrb[0].mxu0
      %v4094 = vadd.f32 0.0, %v4093
      %v4095 = vpop.f32.mrb[0].mxu0
      %4096 = vmatprep.mubr.f32.mxu0 0.0
      %4097 = vmatmul.mubr.f32.gmra.mrb[0].mxu0 %v3908
      %v4098 = vpop.f32.mrb[0].mxu0
      %v4099 = vadd.f32 0.0, %v4098
      %v4100 = vpop.f32.mrb[0].mxu0
      %4101 = vmatprep.mubr.f32.mxu0 0.0
      %4102 = vmatmul.mubr.f32.gmra.mrb[0].mxu0 %v3911
      %v4103 = vpop.f32.mrb[0].mxu0
      %v4104 = vadd.f32 0.0, %v4103
      %v4105 = vpop.f32.mrb[0].mxu0
      %4106 = vmatprep.mubr.f32.mxu0 0.0
      %4107 = vmatmul.mubr.f32.gmra.mrb[0].mxu0 %v3914
      %v4108 = vpop.f32.mrb[0].mxu0
      %v4109 = vadd.f32 0.0, %v4108
      %v4110 = vpop.f32.mrb[0].mxu0
      %4111 = vmatprep.mubr.f32.mxu0 0.0
      %4112 = vmatmul.mubr.f32.gmra.mrb[0].mxu0 %v3917
      %v4113 = vpop.f32.mrb[0].mxu0
      %v4114 = vadd.f32 0.0, %v4113
      %v4115 = vpop.f32.mrb[0].mxu0
      %4116 = vmatprep.mubr.f32.mxu0 0.0
      %4117 = vmatmul.mubr.f32.gmra.mrb[0].mxu0 %v3920
      %v4118 = vpop.f32.mrb[0].mxu0
      %v4119 = vadd.f32 0.0, %v4118
      %v4120 = vpop.f32.mrb[0].mxu0
      %4121 = vmatprep.mubr.f32.mxu0 0.0
      %4122 = vmatmul.mubr.f32.gmra.mrb[0].mxu0 %v3923
      %v4123 = vpop.f32.mrb[0].mxu0
      %v4124 = vadd.f32 0.0, %v4123
      %v4125 = vpop.f32.mrb[0].mxu0
      %4126 = vmatprep.mubr.f32.mxu0 0.0
      %4127 = vmatmul.mubr.f32.gmra.mrb[0].mxu0 %v3926
      %v4128 = vpop.f32.mrb[0].mxu0
      %v4129 = vadd.f32 0.0, %v4128
      %v4130 = vpop.f32.mrb[0].mxu0
      %4131 = vmatprep.mubr.f32.mxu0 0.0
      %4132 = vmatmul.mubr.f32.gmra.mrb[0].mxu0 %v3929
      %v4133 = vpop.f32.mrb[0].mxu0
      %v4134 = vadd.f32 0.0, %v4133
      %v4135 = vpop.f32.mrb[0].mxu0
      %4136 = vmatprep.mubr.f32.mxu0 0.0
      %4137 = vmatmul.mubr.f32.gmra.mrb[0].mxu0 %v3932
      %v4138 = vpop.f32.mrb[0].mxu0
      %v4139 = vadd.f32 0.0, %v4138
      %v4140 = vpop.f32.mrb[0].mxu0
      %4141 = vmatprep.mubr.f32.mxu0 0.0
      %4142 = vmatmul.mubr.f32.gmra.mrb[0].mxu0 %v3935
      %v4143 = vpop.f32.mrb[0].mxu0
      %v4144 = vadd.f32 0.0, %v4143
      %v4145 = vpop.f32.mrb[0].mxu0
      %4146 = vmatprep.mubr.f32.mxu0 0.0
      %4147 = vmatmul.mubr.f32.gmra.mrb[0].mxu0 %v3938
      %v4148 = vpop.f32.mrb[0].mxu0
      %v4149 = vadd.f32 0.0, %v4148
      %v4150 = vpop.f32.mrb[0].mxu0
      %4151 = vmatprep.mubr.f32.mxu0 0.0
      %4152 = vmatmul.mubr.f32.gmra.mrb[0].mxu0 %v3941
      %v4153 = vpop.f32.mrb[0].mxu0
      %v4154 = vadd.f32 0.0, %v4153
      %v4155 = vpop.f32.mrb[0].mxu0
      %4156 = vmatprep.mubr.f32.mxu0 0.0
      %4157 = vmatmul.mubr.f32.gmra.mrb[0].mxu0 %v3944
      %v4158 = vpop.f32.mrb[0].mxu0
      %v4159 = vadd.f32 0.0, %v4158
      %v4160 = vpop.f32.mrb[0].mxu0
      %4161 = vmatprep.mubr.f32.mxu0 0.0
      %4162 = vmatmul.mubr.f32.gmra.mrb[0].mxu0 %v3947
      %v4163 = vpop.f32.mrb[0].mxu0
      %v4164 = vadd.f32 0.0, %v4163
      %v4165 = vpop.f32.mrb[0].mxu0
      %4166 = vmatprep.mubr.f32.mxu0 0.0
      %4167 = vmatmul.mubr.f32.gmra.mrb[0].mxu0 %v3950
      %v4168 = vpop.f32.mrb[0].mxu0
      %v4169 = vadd.f32 0.0, %v4168
      %v4170 = vpop.f32.mrb[0].mxu0
      %4171 = vmatprep.mubr.f32.mxu0 0.0
      %4172 = vmatmul.mubr.f32.gmra.mrb[0].mxu0 %v3953
      %v4173 = vpop.f32.mrb[0].mxu0
      %v4174 = vadd.f32 0.0, %v4173
      %v4175 = vpop.f32.mrb[0].mxu0
      %4176 = vmatprep.mubr.f32.mxu0 0.0
      %4177 = vmatmul.mubr.f32.gmra.mrb[0].mxu0 %v3956
      %v4178 = vpop.f32.mrb[0].mxu0
      %v4179 = vadd.f32 0.0, %v4178
      %v4180 = vpop.f32.mrb[0].mxu0
      %4181 = vmatprep.mubr.f32.mxu0 0.0
      %4182 = vmatmul.mubr.f32.gmra.mrb[0].mxu0 %v3959
      %v4183 = vpop.f32.mrb[0].mxu0
      %v4184 = vadd.f32 0.0, %v4183
      %v4185 = vpop.f32.mrb[0].mxu0
      %4186 = vmatprep.mubr.f32.mxu0 0.0
      %4187 = vmatmul.mubr.f32.gmra.mrb[0].mxu0 %v3962
      %v4188 = vpop.f32.mrb[0].mxu0
      %v4189 = vadd.f32 0.0, %v4188
      %v4190 = vpop.f32.mrb[0].mxu0
      %4191 = vmatprep.mubr.f32.mxu0 0.0
      %4192 = vmatmul.mubr.f32.gmra.mrb[0].mxu0 %v3965
      %v4193 = vpop.f32.mrb[0].mxu0
      %v4194 = vadd.f32 0.0, %v4193
      %v4195 = vpop.f32.mrb[0].mxu0
      %4196 = vmatprep.mubr.f32.mxu0 0.0
      %4197 = vmatmul.mubr.f32.gmra.mrb[0].mxu0 %v3968
      %v4198 = vpop.f32.mrb[0].mxu0
      %v4199 = vadd.f32 0.0, %v4198
      %v4200 = vpop.f32.mrb[0].mxu0
      %4201 = vmatprep.mubr.f32.mxu0 0.0
      %4202 = vmatmul.mubr.f32.gmra.mrb[0].mxu0 %v3971
      %v4203 = vpop.f32.mrb[0].mxu0
      %v4204 = vadd.f32 0.0, %v4203
      %v4205 = vpop.f32.mrb[0].mxu0
      %4206 = vmatprep.mubr.f32.mxu0 0.0
      %4207 = vmatmul.mubr.f32.gmra.mrb[0].mxu0 %v3974
      %v4208 = vpop.f32.mrb[0].mxu0
      %v4209 = vadd.f32 0.0, %v4208
      %v4210 = vpop.f32.mrb[0].mxu0
      %4211 = vmatprep.mubr.f32.mxu0 0.0
      %4212 = vmatmul.mubr.f32.gmra.mrb[0].mxu0 %v3977
      %v4213 = vpop.f32.mrb[0].mxu0
      %v4214 = vadd.f32 0.0, %v4213
      %v4215 = vpop.f32.mrb[0].mxu0
      %4216 = vmatprep.mubr.f32.mxu0 0.0
      %4217 = vmatmul.mubr.f32.gmra.mrb[0].mxu0 %v3980
      %v4218 = vpop.f32.mrb[0].mxu0
      %v4219 = vadd.f32 0.0, %v4218
      %v4220 = vpop.f32.mrb[0].mxu0
      %4221 = vmatprep.mubr.f32.mxu0 0.0
      %4222 = vmatmul.mubr.f32.gmra.mrb[0].mxu0 %v3983
      %v4223 = vpop.f32.mrb[0].mxu0
      %v4224 = vadd.f32 0.0, %v4223
      %v4225 = vpop.f32.mrb[0].mxu0
      %4226 = vmatprep.mubr.f32.mxu0 0.0
      %4227 = vmatmul.mubr.f32.gmra.mrb[0].mxu0 %v3986
      %v4228 = vpop.f32.mrb[0].mxu0
      %v4229 = vadd.f32 0.0, %v4228
      %v4230 = vpop.f32.mrb[0].mxu0
      %4231 = vmatprep.mubr.f32.mxu0 0.0
      %4232 = vmatmul.mubr.f32.gmra.mrb[0].mxu0 %v3989
      %v4233 = vpop.f32.mrb[0].mxu0
      %v4234 = vadd.f32 0.0, %v4233
      %v4235 = vpop.f32.mrb[0].mxu0
      %4236 = vmatprep.mubr.f32.mxu0 0.0
      %4237 = vmatmul.mubr.f32.gmra.mrb[0].mxu0 %v3992
      %v4238 = vpop.f32.mrb[0].mxu0
      %v4239 = vadd.f32 0.0, %v4238
      %v4240 = vpop.f32.mrb[0].mxu0
      %4241 = vdwg.mxu0
      %4242 = vst [vmem:[%s440] sm:$0xff] %v4064
      %4243 = vst [vmem:[%s440 + $0x8] sm:$0xff] %v4069
      %4244 = vst [vmem:[%s440 + $0x10] sm:$0xff] %v4074
      %4245 = vst [vmem:[%s440 + $0x18] sm:$0xff] %v4079
      %4246 = vst [vmem:[%s440 + $0x20] sm:$0xff] %v4084
      %4247 = vst [vmem:[%s440 + $0x28] sm:$0xff] %v4089
      %4248 = vst [vmem:[%s440 + $0x30] sm:$0xff] %v4094
      %4249 = vst [vmem:[%s440 + $0x38] sm:$0xff] %v4099
      %4250 = vst [vmem:[%s440 + $0x40] sm:$0xff] %v4104
      %4251 = vst [vmem:[%s440 + $0x48] sm:$0xff] %v4109
      %4252 = vst [vmem:[%s440 + $0x50] sm:$0xff] %v4114
      %4253 = vst [vmem:[%s440 + $0x58] sm:$0xff] %v4119
      %4254 = vst [vmem:[%s440 + $0x60] sm:$0xff] %v4124
      %4255 = vst [vmem:[%s440 + $0x68] sm:$0xff] %v4129
      %4256 = vst [vmem:[%s440 + $0x70] sm:$0xff] %v4134
      %4257 = vst [vmem:[%s440 + $0x78] sm:$0xff] %v4139
      %4258 = vst [vmem:[%s440 + $0x80] sm:$0xff] %v4144
      %4259 = vst [vmem:[%s440 + $0x88] sm:$0xff] %v4149
      %4260 = vst [vmem:[%s440 + $0x90] sm:$0xff] %v4154
      %4261 = vst [vmem:[%s440 + $0x98] sm:$0xff] %v4159
      %4262 = vst [vmem:[%s440 + $0xa0] sm:$0xff] %v4164
      %4263 = vst [vmem:[%s440 + $0xa8] sm:$0xff] %v4169
      %4264 = vst [vmem:[%s440 + $0xb0] sm:$0xff] %v4174
      %4265 = vst [vmem:[%s440 + $0xb8] sm:$0xff] %v4179
      %4266 = vst [vmem:[%s440 + $0xc0] sm:$0xff] %v4184
      %4267 = vst [vmem:[%s440 + $0xc8] sm:$0xff] %v4189
      %4268 = vst [vmem:[%s440 + $0xd0] sm:$0xff] %v4194
      %4269 = vst [vmem:[%s440 + $0xd8] sm:$0xff] %v4199
      %4270 = vst [vmem:[%s440 + $0xe0] sm:$0xff] %v4204
      %4271 = vst [vmem:[%s440 + $0xe8] sm:$0xff] %v4209
      %4272 = vst [vmem:[%s440 + $0xf0] sm:$0xff] %v4214
      %4273 = vst [vmem:[%s440 + $0xf8] sm:$0xff] %v4219
      %4274 = vst [vmem:[%s440 + $0x100] sm:$0xff] %v4224
      %4275 = vst [vmem:[%s440 + $0x108] sm:$0xff] %v4229
      %4276 = vst [vmem:[%s440 + $0x110] sm:$0xff] %v4234
      %4277 = vst [vmem:[%s440 + $0x118] sm:$0xff] %v4239
      %v4278 = vld [vmem:[%s4] sm:$0xff]
      %v4279 = vld [vmem:[%s4 + $0x8] sm:$0xff]
      %v4280 = vld [vmem:[%s4 + $0x10] sm:$0xff]
      %v4281 = vld [vmem:[%s4 + $0x18] sm:$0xff]
      %v4282 = vld [vmem:[%s4 + $0x20] sm:$0xff]
      %v4283 = vld [vmem:[%s4 + $0x28] sm:$0xff]
      %v4284 = vld [vmem:[%s4 + $0x30] sm:$0xff]
      %v4285 = vld [vmem:[%s4 + $0x38] sm:$0xff]
      %v4286 = vld [vmem:[%s4 + $0x40] sm:$0xff]
      %v4287 = vld [vmem:[%s4 + $0x48] sm:$0xff]
      %v4288 = vld [vmem:[%s4 + $0x50] sm:$0xff]
      %v4289 = vld [vmem:[%s4 + $0x58] sm:$0xff]
      %v4290 = vld [vmem:[%s4 + $0x60] sm:$0xff]
      %v4291 = vld [vmem:[%s4 + $0x68] sm:$0xff]
      %v4292 = vld [vmem:[%s4 + $0x70] sm:$0xff]
      %v4293 = vld [vmem:[%s4 + $0x78] sm:$0xff]
      %v4294 = vld [vmem:[%s4 + $0x80] sm:$0xff]
      %v4295 = vld [vmem:[%s4 + $0x88] sm:$0xff]
      %v4296 = vld [vmem:[%s4 + $0x90] sm:$0xff]
      %v4297 = vld [vmem:[%s4 + $0x98] sm:$0xff]
      %v4298 = vld [vmem:[%s4 + $0xa0] sm:$0xff]
      %v4299 = vld [vmem:[%s4 + $0xa8] sm:$0xff]
      %v4300 = vld [vmem:[%s4 + $0xb0] sm:$0xff]
      %v4301 = vld [vmem:[%s4 + $0xb8] sm:$0xff]
      %v4302 = vld [vmem:[%s4 + $0xc0] sm:$0xff]
      %v4303 = vld [vmem:[%s4 + $0xc8] sm:$0xff]
      %v4304 = vld [vmem:[%s4 + $0xd0] sm:$0xff]
      %v4305 = vld [vmem:[%s4 + $0xd8] sm:$0xff]
      %v4306 = vld [vmem:[%s4 + $0xe0] sm:$0xff]
      %v4307 = vld [vmem:[%s4 + $0xe8] sm:$0xff]
      %v4308 = vld [vmem:[%s4 + $0xf0] sm:$0xff]
      %v4309 = vld [vmem:[%s4 + $0xf8] sm:$0xff]
      %v4310 = vld [vmem:[%s4 + $0x100] sm:$0xff]
      %v4311 = vld [vmem:[%s4 + $0x108] sm:$0xff]
      %v4312 = vld [vmem:[%s4 + $0x110] sm:$0xff]
      %v4313 = vld [vmem:[%s4 + $0x118] sm:$0xff]
      %4315 = vset.pattern.permute.xlu0 0
      %4316 = vperm.xlu0 %4315, %v4278
      %v4317 = vpop.permute.xlu0 %4316
      %4320 = vset.pattern.permute.xlu0 0
      %4321 = vperm.xlu0 %4320, %v4279
      %v4322 = vpop.permute.xlu0 %4321
      %4325 = vset.pattern.permute.xlu0 0
      %4326 = vperm.xlu0 %4325, %v4280
      %v4327 = vpop.permute.xlu0 %4326
      %4330 = vset.pattern.permute.xlu0 0
      %4331 = vperm.xlu0 %4330, %v4281
      %v4332 = vpop.permute.xlu0 %4331
      %4335 = vset.pattern.permute.xlu0 0
      %4336 = vperm.xlu0 %4335, %v4282
      %v4337 = vpop.permute.xlu0 %4336
      %4340 = vset.pattern.permute.xlu0 0
      %4341 = vperm.xlu0 %4340, %v4283
      %v4342 = vpop.permute.xlu0 %4341
      %4345 = vset.pattern.permute.xlu0 0
      %4346 = vperm.xlu0 %4345, %v4284
      %v4347 = vpop.permute.xlu0 %4346
      %4350 = vset.pattern.permute.xlu0 0
      %4351 = vperm.xlu0 %4350, %v4285
      %v4352 = vpop.permute.xlu0 %4351
      %4355 = vset.pattern.permute.xlu0 0
      %4356 = vperm.xlu0 %4355, %v4286
      %v4357 = vpop.permute.xlu0 %4356
      %4360 = vset.pattern.permute.xlu0 0
      %4361 = vperm.xlu0 %4360, %v4287
      %v4362 = vpop.permute.xlu0 %4361
      %4365 = vset.pattern.permute.xlu0 0
      %4366 = vperm.xlu0 %4365, %v4288
      %v4367 = vpop.permute.xlu0 %4366
      %4370 = vset.pattern.permute.xlu0 0
      %4371 = vperm.xlu0 %4370, %v4289
      %v4372 = vpop.permute.xlu0 %4371
      %4375 = vset.pattern.permute.xlu0 0
      %4376 = vperm.xlu0 %4375, %v4290
      %v4377 = vpop.permute.xlu0 %4376
      %4380 = vset.pattern.permute.xlu0 0
      %4381 = vperm.xlu0 %4380, %v4291
      %v4382 = vpop.permute.xlu0 %4381
      %4385 = vset.pattern.permute.xlu0 0
      %4386 = vperm.xlu0 %4385, %v4292
      %v4387 = vpop.permute.xlu0 %4386
      %4390 = vset.pattern.permute.xlu0 0
      %4391 = vperm.xlu0 %4390, %v4293
      %v4392 = vpop.permute.xlu0 %4391
      %4395 = vset.pattern.permute.xlu0 0
      %4396 = vperm.xlu0 %4395, %v4294
      %v4397 = vpop.permute.xlu0 %4396
      %4400 = vset.pattern.permute.xlu0 0
      %4401 = vperm.xlu0 %4400, %v4295
      %v4402 = vpop.permute.xlu0 %4401
      %4405 = vset.pattern.permute.xlu0 0
      %4406 = vperm.xlu0 %4405, %v4296
      %v4407 = vpop.permute.xlu0 %4406
      %4410 = vset.pattern.permute.xlu0 0
      %4411 = vperm.xlu0 %4410, %v4297
      %v4412 = vpop.permute.xlu0 %4411
      %4415 = vset.pattern.permute.xlu0 0
      %4416 = vperm.xlu0 %4415, %v4298
      %v4417 = vpop.permute.xlu0 %4416
      %4420 = vset.pattern.permute.xlu0 0
      %4421 = vperm.xlu0 %4420, %v4299
      %v4422 = vpop.permute.xlu0 %4421
      %4425 = vset.pattern.permute.xlu0 0
      %4426 = vperm.xlu0 %4425, %v4300
      %v4427 = vpop.permute.xlu0 %4426
      %4430 = vset.pattern.permute.xlu0 0
      %4431 = vperm.xlu0 %4430, %v4301
      %v4432 = vpop.permute.xlu0 %4431
      %4435 = vset.pattern.permute.xlu0 0
      %4436 = vperm.xlu0 %4435, %v4302
      %v4437 = vpop.permute.xlu0 %4436
      %4440 = vset.pattern.permute.xlu0 0
      %4441 = vperm.xlu0 %4440, %v4303
      %v4442 = vpop.permute.xlu0 %4441
      %4445 = vset.pattern.permute.xlu0 0
      %4446 = vperm.xlu0 %4445, %v4304
      %v4447 = vpop.permute.xlu0 %4446
      %4450 = vset.pattern.permute.xlu0 0
      %4451 = vperm.xlu0 %4450, %v4305
      %v4452 = vpop.permute.xlu0 %4451
      %4455 = vset.pattern.permute.xlu0 0
      %4456 = vperm.xlu0 %4455, %v4306
      %v4457 = vpop.permute.xlu0 %4456
      %4460 = vset.pattern.permute.xlu0 0
      %4461 = vperm.xlu0 %4460, %v4307
      %v4462 = vpop.permute.xlu0 %4461
      %4465 = vset.pattern.permute.xlu0 0
      %4466 = vperm.xlu0 %4465, %v4308
      %v4467 = vpop.permute.xlu0 %4466
      %4470 = vset.pattern.permute.xlu0 0
      %4471 = vperm.xlu0 %4470, %v4309
      %v4472 = vpop.permute.xlu0 %4471
      %4475 = vset.pattern.permute.xlu0 0
      %4476 = vperm.xlu0 %4475, %v4310
      %v4477 = vpop.permute.xlu0 %4476
      %4480 = vset.pattern.permute.xlu0 0
      %4481 = vperm.xlu0 %4480, %v4311
      %v4482 = vpop.permute.xlu0 %4481
      %4485 = vset.pattern.permute.xlu0 0
      %4486 = vperm.xlu0 %4485, %v4312
      %v4487 = vpop.permute.xlu0 %4486
      %4490 = vset.pattern.permute.xlu0 0
      %4491 = vperm.xlu0 %4490, %v4313
      %v4492 = vpop.permute.xlu0 %4491
      %v4494 = vmul.f32 %v3776, %v4317
      %v4495 = vmul.f32 %v3777, %v4322
      %v4496 = vmul.f32 %v3778, %v4327
      %v4497 = vmul.f32 %v3779, %v4332
      %v4498 = vmul.f32 %v3780, %v4337
      %v4499 = vmul.f32 %v3781, %v4342
      %v4500 = vmul.f32 %v3782, %v4347
      %v4501 = vmul.f32 %v3783, %v4352
      %v4502 = vmul.f32 %v3784, %v4357
      %v4503 = vmul.f32 %v3785, %v4362
      %v4504 = vmul.f32 %v3786, %v4367
      %v4505 = vmul.f32 %v3787, %v4372
      %v4506 = vmul.f32 %v3788, %v4377
      %v4507 = vmul.f32 %v3789, %v4382
      %v4508 = vmul.f32 %v3790, %v4387
      %v4509 = vmul.f32 %v3791, %v4392
      %v4510 = vmul.f32 %v3792, %v4397
      %v4511 = vmul.f32 %v3793, %v4402
      %v4512 = vmul.f32 %v3794, %v4407
      %v4513 = vmul.f32 %v3795, %v4412
      %v4514 = vmul.f32 %v3796, %v4417
      %v4515 = vmul.f32 %v3797, %v4422
      %v4516 = vmul.f32 %v3798, %v4427
      %v4517 = vmul.f32 %v3799, %v4432
      %v4518 = vmul.f32 %v3800, %v4437
      %v4519 = vmul.f32 %v3801, %v4442
      %v4520 = vmul.f32 %v3802, %v4447
      %v4521 = vmul.f32 %v3803, %v4452
      %v4522 = vmul.f32 %v3804, %v4457
      %v4523 = vmul.f32 %v3805, %v4462
      %v4524 = vmul.f32 %v3806, %v4467
      %v4525 = vmul.f32 %v3807, %v4472
      %v4526 = vmul.f32 %v3808, %v4477
      %v4527 = vmul.f32 %v3809, %v4482
      %v4528 = vmul.f32 %v3810, %v4487
      %v4529 = vmul.f32 %v3811, %v4492
      %v4530 = vld [vmem:[#allocation2] sm:$0x1]
      %v4531 = vadd.f32 %v4494, %v4495
      %v4532 = vadd.f32 %v4531, %v4496
      %v4533 = vadd.f32 %v4532, %v4497
      %v4534 = vadd.f32 %v4533, %v4498
      %v4535 = vadd.f32 %v4534, %v4499
      %v4536 = vadd.f32 %v4535, %v4500
      %v4537 = vadd.f32 %v4536, %v4501
      %v4538 = vadd.f32 %v4537, %v4502
      %v4539 = vadd.f32 %v4538, %v4503
      %v4540 = vadd.f32 %v4539, %v4504
      %v4541 = vadd.f32 %v4540, %v4505
      %v4542 = vadd.f32 %v4541, %v4506
      %v4543 = vadd.f32 %v4542, %v4507
      %v4544 = vadd.f32 %v4543, %v4508
      %v4545 = vadd.f32 %v4544, %v4509
      %v4546 = vadd.f32 %v4545, %v4510
      %v4547 = vadd.f32 %v4546, %v4511
      %v4548 = vadd.f32 %v4547, %v4512
      %v4549 = vadd.f32 %v4548, %v4513
      %v4550 = vadd.f32 %v4549, %v4514
      %v4551 = vadd.f32 %v4550, %v4515
      %v4552 = vadd.f32 %v4551, %v4516
      %v4553 = vadd.f32 %v4552, %v4517
      %v4554 = vadd.f32 %v4553, %v4518
      %v4555 = vadd.f32 %v4554, %v4519
      %v4556 = vadd.f32 %v4555, %v4520
      %v4557 = vadd.f32 %v4556, %v4521
      %v4558 = vadd.f32 %v4557, %v4522
      %v4559 = vadd.f32 %v4558, %v4523
      %v4560 = vadd.f32 %v4559, %v4524
      %v4561 = vadd.f32 %v4560, %v4525
      %v4562 = vadd.f32 %v4561, %v4526
      %v4563 = vadd.f32 %v4562, %v4527
      %v4564 = vadd.f32 %v4563, %v4528
      %v4565 = vadd.f32 %v4564, %v4529
      %v4566 = vrot.slane %v4565, 4
      %v4567 = vadd.f32 %v4565, %v4566
      %v4568 = vrot.slane %v4567, 2
      %v4569 = vadd.f32 %v4567, %v4568
      %v4570 = vrot.slane %v4569, 1
      %v4571 = vadd.f32 %v4569, %v4570
      %v4572 = vadd.f32 %v4530, %v4571
      %4573 = vst [vmem:[#allocation2] sm:$0x1] %v4572
      %v4574 = vld [vmem:[#allocation3] sm:$0x1]
      %v4575 = vmul.f32 %v4494, %v4494
      %v4576 = vmul.f32 %v4495, %v4495
      %v4577 = vmul.f32 %v4496, %v4496
      %v4578 = vmul.f32 %v4497, %v4497
      %v4579 = vmul.f32 %v4498, %v4498
      %v4580 = vmul.f32 %v4499, %v4499
      %v4581 = vmul.f32 %v4500, %v4500
      %v4582 = vmul.f32 %v4501, %v4501
      %v4583 = vmul.f32 %v4502, %v4502
      %v4584 = vmul.f32 %v4503, %v4503
      %v4585 = vmul.f32 %v4504, %v4504
      %v4586 = vmul.f32 %v4505, %v4505
      %v4587 = vmul.f32 %v4506, %v4506
      %v4588 = vmul.f32 %v4507, %v4507
      %v4589 = vmul.f32 %v4508, %v4508
      %v4590 = vmul.f32 %v4509, %v4509
      %v4591 = vmul.f32 %v4510, %v4510
      %v4592 = vmul.f32 %v4511, %v4511
      %v4593 = vmul.f32 %v4512, %v4512
      %v4594 = vmul.f32 %v4513, %v4513
      %v4595 = vmul.f32 %v4514, %v4514
      %v4596 = vmul.f32 %v4515, %v4515
      %v4597 = vmul.f32 %v4516, %v4516
      %v4598 = vmul.f32 %v4517, %v4517
      %v4599 = vmul.f32 %v4518, %v4518
      %v4600 = vmul.f32 %v4519, %v4519
      %v4601 = vmul.f32 %v4520, %v4520
      %v4602 = vmul.f32 %v4521, %v4521
      %v4603 = vmul.f32 %v4522, %v4522
      %v4604 = vmul.f32 %v4523, %v4523
      %v4605 = vmul.f32 %v4524, %v4524
      %v4606 = vmul.f32 %v4525, %v4525
      %v4607 = vmul.f32 %v4526, %v4526
      %v4608 = vmul.f32 %v4527, %v4527
      %v4609 = vmul.f32 %v4528, %v4528
      %v4610 = vmul.f32 %v4529, %v4529
      %v4611 = vadd.f32 %v4575, %v4576
      %v4612 = vadd.f32 %v4611, %v4577
      %v4613 = vadd.f32 %v4612, %v4578
      %v4614 = vadd.f32 %v4613, %v4579
      %v4615 = vadd.f32 %v4614, %v4580
      %v4616 = vadd.f32 %v4615, %v4581
      %v4617 = vadd.f32 %v4616, %v4582
      %v4618 = vadd.f32 %v4617, %v4583
      %v4619 = vadd.f32 %v4618, %v4584
      %v4620 = vadd.f32 %v4619, %v4585
      %v4621 = vadd.f32 %v4620, %v4586
      %v4622 = vadd.f32 %v4621, %v4587
      %v4623 = vadd.f32 %v4622, %v4588
      %v4624 = vadd.f32 %v4623, %v4589
      %v4625 = vadd.f32 %v4624, %v4590
      %v4626 = vadd.f32 %v4625, %v4591
      %v4627 = vadd.f32 %v4626, %v4592
      %v4628 = vadd.f32 %v4627, %v4593
      %v4629 = vadd.f32 %v4628, %v4594
      %v4630 = vadd.f32 %v4629, %v4595
      %v4631 = vadd.f32 %v4630, %v4596
      %v4632 = vadd.f32 %v4631, %v4597
      %v4633 = vadd.f32 %v4632, %v4598
      %v4634 = vadd.f32 %v4633, %v4599
      %v4635 = vadd.f32 %v4634, %v4600
      %v4636 = vadd.f32 %v4635, %v4601
      %v4637 = vadd.f32 %v4636, %v4602
      %v4638 = vadd.f32 %v4637, %v4603
      %v4639 = vadd.f32 %v4638, %v4604
      %v4640 = vadd.f32 %v4639, %v4605
      %v4641 = vadd.f32 %v4640, %v4606
      %v4642 = vadd.f32 %v4641, %v4607
      %v4643 = vadd.f32 %v4642, %v4608
      %v4644 = vadd.f32 %v4643, %v4609
      %v4645 = vadd.f32 %v4644, %v4610
      %v4646 = vrot.slane %v4645, 4
      %v4647 = vadd.f32 %v4645, %v4646
      %v4648 = vrot.slane %v4647, 2
      %v4649 = vadd.f32 %v4647, %v4648
      %v4650 = vrot.slane %v4649, 1
      %v4651 = vadd.f32 %v4649, %v4650
      %v4652 = vadd.f32 %v4574, %v4651
      %4653 = vst [vmem:[#allocation3] sm:$0x1] %v4652
      %v4654 = vld [vmem:[#allocation4] sm:$0x1]
      %v4655 = vadd.f32 %v4064, %v4069
      %v4656 = vadd.f32 %v4655, %v4074
      %v4657 = vadd.f32 %v4656, %v4079
      %v4658 = vadd.f32 %v4657, %v4084
      %v4659 = vadd.f32 %v4658, %v4089
      %v4660 = vadd.f32 %v4659, %v4094
      %v4661 = vadd.f32 %v4660, %v4099
      %v4662 = vadd.f32 %v4661, %v4104
      %v4663 = vadd.f32 %v4662, %v4109
      %v4664 = vadd.f32 %v4663, %v4114
      %v4665 = vadd.f32 %v4664, %v4119
      %v4666 = vadd.f32 %v4665, %v4124
      %v4667 = vadd.f32 %v4666, %v4129
      %v4668 = vadd.f32 %v4667, %v4134
      %v4669 = vadd.f32 %v4668, %v4139
      %v4670 = vadd.f32 %v4669, %v4144
      %v4671 = vadd.f32 %v4670, %v4149
      %v4672 = vadd.f32 %v4671, %v4154
      %v4673 = vadd.f32 %v4672, %v4159
      %v4674 = vadd.f32 %v4673, %v4164
      %v4675 = vadd.f32 %v4674, %v4169
      %v4676 = vadd.f32 %v4675, %v4174
      %v4677 = vadd.f32 %v4676, %v4179
      %v4678 = vadd.f32 %v4677, %v4184
      %v4679 = vadd.f32 %v4678, %v4189
      %v4680 = vadd.f32 %v4679, %v4194
      %v4681 = vadd.f32 %v4680, %v4199
      %v4682 = vadd.f32 %v4681, %v4204
      %v4683 = vadd.f32 %v4682, %v4209
      %v4684 = vadd.f32 %v4683, %v4214
      %v4685 = vadd.f32 %v4684, %v4219
      %v4686 = vadd.f32 %v4685, %v4224
      %v4687 = vadd.f32 %v4686, %v4229
      %v4688 = vadd.f32 %v4687, %v4234
      %v4689 = vadd.f32 %v4688, %v4239
      %v4690 = vrot.slane %v4689, 4
      %v4691 = vadd.f32 %v4689, %v4690
      %v4692 = vrot.slane %v4691, 2
      %v4693 = vadd.f32 %v4691, %v4692
      %v4694 = vrot.slane %v4693, 1
      %v4695 = vadd.f32 %v4693, %v4694
      %v4696 = vadd.f32 %v4654, %v4695
      %4697 = vst [vmem:[#allocation4] sm:$0x1] %v4696
      %v4698 = vld [vmem:[#allocation5] sm:$0x1]
      %v4699 = vmul.f32 %v4064, %v4064
      %v4700 = vmul.f32 %v4069, %v4069
      %v4701 = vmul.f32 %v4074, %v4074
      %v4702 = vmul.f32 %v4079, %v4079
      %v4703 = vmul.f32 %v4084, %v4084
      %v4704 = vmul.f32 %v4089, %v4089
      %v4705 = vmul.f32 %v4094, %v4094
      %v4706 = vmul.f32 %v4099, %v4099
      %v4707 = vmul.f32 %v4104, %v4104
      %v4708 = vmul.f32 %v4109, %v4109
      %v4709 = vmul.f32 %v4114, %v4114
      %v4710 = vmul.f32 %v4119, %v4119
      %v4711 = vmul.f32 %v4124, %v4124
      %v4712 = vmul.f32 %v4129, %v4129
      %v4713 = vmul.f32 %v4134, %v4134
      %v4714 = vmul.f32 %v4139, %v4139
      %v4715 = vmul.f32 %v4144, %v4144
      %v4716 = vmul.f32 %v4149, %v4149
      %v4717 = vmul.f32 %v4154, %v4154
      %v4718 = vmul.f32 %v4159, %v4159
      %v4719 = vmul.f32 %v4164, %v4164
      %v4720 = vmul.f32 %v4169, %v4169
      %v4721 = vmul.f32 %v4174, %v4174
      %v4722 = vmul.f32 %v4179, %v4179
      %v4723 = vmul.f32 %v4184, %v4184
      %v4724 = vmul.f32 %v4189, %v4189
      %v4725 = vmul.f32 %v4194, %v4194
      %v4726 = vmul.f32 %v4199, %v4199
      %v4727 = vmul.f32 %v4204, %v4204
      %v4728 = vmul.f32 %v4209, %v4209
      %v4729 = vmul.f32 %v4214, %v4214
      %v4730 = vmul.f32 %v4219, %v4219
      %v4731 = vmul.f32 %v4224, %v4224
      %v4732 = vmul.f32 %v4229, %v4229
      %v4733 = vmul.f32 %v4234, %v4234
      %v4734 = vmul.f32 %v4239, %v4239
      %v4735 = vadd.f32 %v4699, %v4700
      %v4736 = vadd.f32 %v4735, %v4701
      %v4737 = vadd.f32 %v4736, %v4702
      %v4738 = vadd.f32 %v4737, %v4703
      %v4739 = vadd.f32 %v4738, %v4704
      %v4740 = vadd.f32 %v4739, %v4705
      %v4741 = vadd.f32 %v4740, %v4706
      %v4742 = vadd.f32 %v4741, %v4707
      %v4743 = vadd.f32 %v4742, %v4708
      %v4744 = vadd.f32 %v4743, %v4709
      %v4745 = vadd.f32 %v4744, %v4710
      %v4746 = vadd.f32 %v4745, %v4711
      %v4747 = vadd.f32 %v4746, %v4712
      %v4748 = vadd.f32 %v4747, %v4713
      %v4749 = vadd.f32 %v4748, %v4714
      %v4750 = vadd.f32 %v4749, %v4715
      %v4751 = vadd.f32 %v4750, %v4716
      %v4752 = vadd.f32 %v4751, %v4717
      %v4753 = vadd.f32 %v4752, %v4718
      %v4754 = vadd.f32 %v4753, %v4719
      %v4755 = vadd.f32 %v4754, %v4720
      %v4756 = vadd.f32 %v4755, %v4721
      %v4757 = vadd.f32 %v4756, %v4722
      %v4758 = vadd.f32 %v4757, %v4723
      %v4759 = vadd.f32 %v4758, %v4724
      %v4760 = vadd.f32 %v4759, %v4725
      %v4761 = vadd.f32 %v4760, %v4726
      %v4762 = vadd.f32 %v4761, %v4727
      %v4763 = vadd.f32 %v4762, %v4728
      %v4764 = vadd.f32 %v4763, %v4729
      %v4765 = vadd.f32 %v4764, %v4730
      %v4766 = vadd.f32 %v4765, %v4731
      %v4767 = vadd.f32 %v4766, %v4732
      %v4768 = vadd.f32 %v4767, %v4733
      %v4769 = vadd.f32 %v4768, %v4734
      %v4770 = vrot.slane %v4769, 4
      %v4771 = vadd.f32 %v4769, %v4770
      %v4772 = vrot.slane %v4771, 2
      %v4773 = vadd.f32 %v4771, %v4772
      %v4774 = vrot.slane %v4773, 1
      %v4775 = vadd.f32 %v4773, %v4774
      %v4776 = vadd.f32 %v4698, %v4775
      %4777 = vst [vmem:[#allocation5] sm:$0x1] %v4776
      %p4778 = scmp.eq.s32.totalorder %s24, 1
      // Predicated region
      $region61: #{residual_block_forward.6} parent=55 // pred_check
        %p4779 = pneg %p4778
      $region62: #{residual_block_forward.6} parent=55 // pred_check_branch
        %4781 = sbr.rel (%p4779) target = $region64
      $region63: #{residual_block_forward.6} parent=55 // pred_region
        %v4782 = vld [vmem:[#allocation2] sm:$0x1]
        %v4783 = vmul.f32 %v4782, 0.001953125
        %v4784 = vld [vmem:[#allocation3] sm:$0x1]
        %v4785 = vmul.f32 %v4784, 0.001953125
        %v4786 = vmul.f32 %v4783, %v4783
        %v4787 = vsub.f32 %v4785, %v4786
        %v4788 = vld [vmem:[%s5] sm:$0x1]
        %v4789 = vadd.f32 %v4787, 1e-05
        %v4790 = vrsqrt.pop %v4789
        %v4791 = vmul.f32 %v4788, %v4790
        %4792 = vst [vmem:[%s11] sm:$0x1] %v4791
        %v4793 = vld [vmem:[%s6] sm:$0x1]
        %v4794 = vmul.f32 %v4783, %v4791
        %v4795 = vsub.f32 %v4793, %v4794
        %4796 = vst [vmem:[%s11 + $0x1] sm:$0x1] %v4795
        %v4797 = vld [vmem:[#allocation4] sm:$0x1]
        %v4798 = vmul.f32 %v4797, 0.001953125
        %v4799 = vld [vmem:[#allocation5] sm:$0x1]
        %v4800 = vmul.f32 %v4799, 0.001953125
        %v4801 = vmul.f32 %v4798, %v4798
        %v4802 = vsub.f32 %v4800, %v4801
        %v4803 = vld [vmem:[%s7] sm:$0x1]
        %v4804 = vadd.f32 %v4802, 1e-05
        %v4805 = vrsqrt.pop %v4804
        %v4806 = vmul.f32 %v4803, %v4805
        %4807 = vst [vmem:[%s12] sm:$0x1] %v4806
        %v4808 = vld [vmem:[%s8] sm:$0x1]
        %v4809 = vmul.f32 %v4798, %v4806
        %v4810 = vsub.f32 %v4808, %v4809
        %4811 = vst [vmem:[%s12 + $0x1] sm:$0x1] %v4810
      $region64: #{residual_block_forward.6} parent=55 // pred_fallthru
        _
      %p4812 = scmp.lt.s32.totalorder %s24, 1
      %s4813 = scalar_select %p4812, %s24, 1
      %s4814 = smul.addr %s4813, 36
      %s4815 = smul.addr %s4814, 8
      %s4816 = scalar_lea.vmem %s9, %s4815
      %p4817 = scmp.lt.s32.totalorder %s24, 1
      %s4818 = scalar_select %p4817, %s24, 1
      %s4819 = smul.addr %s4818, 36
      %s4820 = smul.addr %s4819, 8
      %s4821 = scalar_lea.vmem %s10, %s4820
      // Predicated region
      $region65: #{residual_block_forward.6} parent=55 // pred_check
        %p4822 = pneg %p241
      $region66: #{residual_block_forward.6} parent=55 // pred_check_branch
        %4824 = sbr.rel (%p4822) target = $region68
      $region67: #{residual_block_forward.6} parent=55 // pred_region
        _
      $region68: #{residual_block_forward.6} parent=55 // pred_fallthru
        _
      // Predicated region
      $region69: #{residual_block_forward.6} parent=55 // pred_check
        %p4825 = pneg %p267
      $region70: #{residual_block_forward.6} parent=55 // pred_check_branch
        %4827 = sbr.rel (%p4825) target = $region72
      $region71: #{residual_block_forward.6} parent=55 // pred_region
        _
      $region72: #{residual_block_forward.6} parent=55 // pred_fallthru
        _
      // Predicated region
      $region73: #{residual_block_forward.6} parent=55 // pred_check
        %p4828 = pneg %p288
      $region74: #{residual_block_forward.6} parent=55 // pred_check_branch
        %4830 = sbr.rel (%p4828) target = $region76
      $region75: #{residual_block_forward.6} parent=55 // pred_region
        _
      $region76: #{residual_block_forward.6} parent=55 // pred_fallthru
        _
      // Predicated region
      $region77: #{residual_block_forward.6} parent=55 // pred_check
        %p4831 = pneg %p309
      $region78: #{residual_block_forward.6} parent=55 // pred_check_branch
        %4833 = sbr.rel (%p4831) target = $region80
      $region79: #{residual_block_forward.6} parent=55 // pred_region
        _
      $region80: #{residual_block_forward.6} parent=55 // pred_fallthru
        _
      // Predicated region
      $region81: #{residual_block_forward.6} parent=55 // pred_check
        %p4834 = pneg %p288
      $region82: #{residual_block_forward.6} parent=55 // pred_check_branch
        %4836 = sbr.rel (%p4834) target = $region84
      $region83: #{residual_block_forward.6} parent=55 // pred_region
        _
      $region84: #{residual_block_forward.6} parent=55 // pred_fallthru
        _
      // Predicated region
      $region85: #{residual_block_forward.6} parent=55 // pred_check
        %p4837 = pneg %p309
      $region86: #{residual_block_forward.6} parent=55 // pred_check_branch
        %4839 = sbr.rel (%p4837) target = $region88
      $region87: #{residual_block_forward.6} parent=55 // pred_region
        _
      $region88: #{residual_block_forward.6} parent=55 // pred_fallthru
        _
    $region56: #{residual_block_forward.6} parent=5 // pred_fallthru
      _
    %p4840 = scmp.le.s32.totalorder 2, %s19
    // Predicated region
    $region89: #{residual_block_forward.6} parent=5 // pred_check
      %p4841 = pneg %p4840
    $region90: #{residual_block_forward.6} parent=5 // pred_check_branch
      %4843 = sbr.rel (%p4841) target = $region92
    $region91: #{residual_block_forward.6} parent=5 // pred_region
      %s4844 = ssub.s32 %s19, 2
      // Predicated region
      $region93: #{residual_block_forward.6} parent=91 // pred_check
        %p4845 = pneg %p247
      $region94: #{residual_block_forward.6} parent=91 // pred_check_branch
        %4847 = sbr.rel (%p4845) target = $region96
      $region95: #{residual_block_forward.6} parent=91 // pred_region
        %p4848 = scmp.lt.s32.totalorder %s25, 1
        %s4849 = scalar_select %p4848, %s25, 1
        %s4850 = smul.addr %s4849, 36
        %s4851 = smul.addr %s4850, 8
        %s4852 = scalar_lea.vmem %s9, %s4851
      $region96: #{residual_block_forward.6} parent=91 // pred_fallthru
        _
      // Predicated region
      $region97: #{residual_block_forward.6} parent=91 // pred_check
        %p4853 = pneg %p273
      $region98: #{residual_block_forward.6} parent=91 // pred_check_branch
        %4855 = sbr.rel (%p4853) target = $region100
      $region99: #{residual_block_forward.6} parent=91 // pred_region
        %p4856 = scmp.lt.s32.totalorder %s25, 1
        %s4857 = scalar_select %p4856, %s25, 1
        %s4858 = smul.addr %s4857, 36
        %s4859 = smul.addr %s4858, 8
        %s4860 = scalar_lea.vmem %s10, %s4859
      $region100: #{residual_block_forward.6} parent=91 // pred_fallthru
        _
    $region92: #{residual_block_forward.6} parent=5 // pred_fallthru
      _
  $region6: #{residual_block_forward.6} parent=0 // loop_footer
    %s23 = sadd.s32 1, %s19
  $region7: #{residual_block_forward.6} parent=0 // loop_footer_branch
    %18 = sbr.rel target = $region3
  $region8: #{residual_block_forward.6} parent=0 // loop_exit
    _

</llo_original>
